<compile_context>
chip_gen: v7x
topology: tpu7x:2x2x1
jax: 0.10.0
libtpu: 0.0.40
codegen_flags: <defaults>
</compile_context>

<pallas_src>
import functools

import jax
import jax.numpy as jnp
from jax.experimental import pallas as pl
from jax.experimental.pallas import tpu as pltpu


_VMEM_LIMIT = 32 * 1024 * 1024  # conservative scoped-VMEM budget (ok on v5e/v6e/v7x)


def _round_up(x, m):
    return (x + m - 1) // m * m


# ----------------------------------------------------------------------------
# Pallas kernels
# ----------------------------------------------------------------------------
def _matmul_cm_kernel(w_ref, x_ref, o_ref, *, relu):
    # (Cout, K) @ (K, TM) on the MXU; fused ReLU; lane-dense (TM) output.
    acc = jnp.dot(w_ref[...], x_ref[...], preferred_element_type=jnp.float32)
    if relu:
        acc = jnp.maximum(acc, 0.0)
    o_ref[...] = acc.astype(o_ref.dtype)


def _double_matmul_cm_kernel(w1_ref, w2_ref, x_ref, o_ref):
    # Fused conv6 + conv7: relu(W2 @ relu(W1 @ X)).  Both weights stay
    # VMEM-resident; the (C_mid, TM) intermediate never touches HBM.
    a = jnp.dot(w1_ref[...], x_ref[...], preferred_element_type=jnp.float32)
    a = jnp.maximum(a, 0.0).astype(w2_ref.dtype)
    b = jnp.dot(w2_ref[...], a, preferred_element_type=jnp.float32)
    o_ref[...] = jnp.maximum(b, 0.0).astype(o_ref.dtype)


def _maxpool_matmul_cm_kernel(w_ref, x00_ref, x01_ref, x10_ref, x11_ref, o_ref):
    # Fused 2x2 max-pool (element-wise max of the 4 spatial shifts) + 1x1 conv
    # matmul + ReLU, all lane-dense over the spatial axis.
    xm = jnp.maximum(jnp.maximum(x00_ref[...], x01_ref[...]),
                     jnp.maximum(x10_ref[...], x11_ref[...]))
    acc = jnp.dot(w_ref[...], xm, preferred_element_type=jnp.float32)
    o_ref[...] = jnp.maximum(acc, 0.0).astype(o_ref.dtype)


def _matmul_logsoftmax_kernel(x_ref, w_ref, o_ref):
    # Final 7x7 conv as (TM, K) @ (K, 10) with a fused, numerically stable
    # log_softmax over the 10 output channels (last axis), in f32.
    acc = jnp.dot(x_ref[...], w_ref[...], preferred_element_type=jnp.float32)
    m = jnp.max(acc, axis=-1, keepdims=True)
    y = acc - m
    y = y - jnp.log(jnp.sum(jnp.exp(y), axis=-1, keepdims=True))
    o_ref[...] = y


# ----------------------------------------------------------------------------
# pallas_call wrappers (tiled over M, parallel dimension semantics)
# ----------------------------------------------------------------------------
def _col_tiling(m, max_tm):
    tm = min(max_tm, _round_up(m, 128))
    mp = _round_up(m, tm)
    return tm, mp


def matmul_cm(w2dT, x2dT, *, relu=True, out_dtype=jnp.bfloat16, max_tm=512):
    n, k = w2dT.shape
    k2, m = x2dT.shape
    assert k == k2
    tm, mp = _col_tiling(m, max_tm)
    if mp != m:
        x2dT = jnp.pad(x2dT, ((0, 0), (0, mp - m)))
    kern = functools.partial(_matmul_cm_kernel, relu=relu)
    y = pl.pallas_call(
        kern,
        out_shape=jax.ShapeDtypeStruct((n, mp), out_dtype),
        grid=(mp // tm,),
        in_specs=[
            pl.BlockSpec((n, k), lambda i: (0, 0)),    # weight: VMEM-resident
            pl.BlockSpec((k, tm), lambda i: (0, i)),   # activation column tile
        ],
        out_specs=pl.BlockSpec((n, tm), lambda i: (0, i)),
        compiler_params=pltpu.CompilerParams(
            dimension_semantics=("parallel",),
            vmem_limit_bytes=_VMEM_LIMIT,
        ),
    )(w2dT, x2dT)
    return y[:, :m]


def double_matmul_cm(w1_2dT, w2_2dT, x2dT, *, out_dtype=jnp.bfloat16, max_tm=512):
    n1, k1 = w1_2dT.shape
    n2, k2 = w2_2dT.shape
    assert k2 == n1
    k, m = x2dT.shape
    assert k == k1
    tm, mp = _col_tiling(m, max_tm)
    if mp != m:
        x2dT = jnp.pad(x2dT, ((0, 0), (0, mp - m)))
    y = pl.pallas_call(
        _double_matmul_cm_kernel,
        out_shape=jax.ShapeDtypeStruct((n2, mp), out_dtype),
        grid=(mp // tm,),
        in_specs=[
            pl.BlockSpec((n1, k1), lambda i: (0, 0)),  # conv6 weight (resident)
            pl.BlockSpec((n2, k2), lambda i: (0, 0)),  # conv7 weight (resident)
            pl.BlockSpec((k1, tm), lambda i: (0, i)),
        ],
        out_specs=pl.BlockSpec((n2, tm), lambda i: (0, i)),
        compiler_params=pltpu.CompilerParams(
            dimension_semantics=("parallel",),
            vmem_limit_bytes=_VMEM_LIMIT,
        ),
    )(w1_2dT, w2_2dT, x2dT)
    return y[:, :m]


def maxpool_matmul_cm(w2dT, x00, x01, x10, x11, *, out_dtype=jnp.bfloat16, max_tm=512):
    n, k = w2dT.shape
    m = x00.shape[1]
    tm, mp = _col_tiling(m, max_tm)
    if mp != m:
        pad = ((0, 0), (0, mp - m))
        x00, x01, x10, x11 = [jnp.pad(v, pad) for v in (x00, x01, x10, x11)]
    x_spec = pl.BlockSpec((k, tm), lambda i: (0, i))
    y = pl.pallas_call(
        _maxpool_matmul_cm_kernel,
        out_shape=jax.ShapeDtypeStruct((n, mp), out_dtype),
        grid=(mp // tm,),
        in_specs=[pl.BlockSpec((n, k), lambda i: (0, 0)),
                  x_spec, x_spec, x_spec, x_spec],
        out_specs=pl.BlockSpec((n, tm), lambda i: (0, i)),
        compiler_params=pltpu.CompilerParams(
            dimension_semantics=("parallel",),
            vmem_limit_bytes=_VMEM_LIMIT,
        ),
    )(w2dT, x00, x01, x10, x11)
    return y[:, :m]


def matmul_logsoftmax(x2d, w2d, *, max_tm=256):
    m, k = x2d.shape
    n = w2d.shape[1]
    tm = min(max_tm, _round_up(m, 8))
    mp = _round_up(m, tm)
    if mp != m:
        x2d = jnp.pad(x2d, ((0, mp - m), (0, 0)))
    y = pl.pallas_call(
        _matmul_logsoftmax_kernel,
        out_shape=jax.ShapeDtypeStruct((mp, n), jnp.float32),
        grid=(mp // tm,),
        in_specs=[
            pl.BlockSpec((tm, k), lambda i: (i, 0)),
            pl.BlockSpec((k, n), lambda i: (0, 0)),
        ],
        out_specs=pl.BlockSpec((tm, n), lambda i: (i, 0)),
        compiler_params=pltpu.CompilerParams(
            dimension_semantics=("parallel",),
            vmem_limit_bytes=_VMEM_LIMIT,
        ),
    )(x2d, w2d)
    return y[:m]


# ----------------------------------------------------------------------------
# Glue (channel-major im2col, layer wrappers) -- plain JAX
# ----------------------------------------------------------------------------
def im2col_cm(x_cm, kh, kw):
    # x_cm: (C, B, H, W) channel-major. Returns (K, M) with K = kh*kw*C,
    # M = B*Ho*Wo; row ordering (i*kw + j)*C + c matches prepare_params below.
    c, b, h, w = x_cm.shape
    ho, wo = h - kh + 1, w - kw + 1
    rows = []
    for i in range(kh):
        for j in range(kw):
            rows.append(x_cm[:, :, i:i + ho, j:j + wo])
    patches = jnp.concatenate(rows, axis=0) if len(rows) > 1 else rows[0]
    # TODO(synk): im2col still materializes the kh*kw-inflated patch matrix in
    # HBM; fully fusing the tap accumulation in-kernel (spatially-aware tiling
    # + accumulator grid axis) would remove that traffic for large batches.
    return patches.reshape(kh * kw * c, b * ho * wo), (b, ho, wo)


def conv_block_cm(x_cm, layer, *, relu=True):
    w2dT, kh, kw = layer["w2dT"], layer["kh"], layer["kw"]
    cout = w2dT.shape[0]
    x2dT, (b, ho, wo) = im2col_cm(x_cm, kh, kw)
    y = matmul_cm(w2dT, x2dT, relu=relu)
    return y.reshape(cout, b, ho, wo)


def conv_conv1x1_block_cm(x_cm, layer_a, layer_b):
    # Fused: 3x3 conv (+ReLU) followed by 1x1 conv (+ReLU), one pallas_call.
    wa, kh, kw = layer_a["w2dT"], layer_a["kh"], layer_a["kw"]
    wb = layer_b["w2dT"]
    cout = wb.shape[0]
    x2dT, (b, ho, wo) = im2col_cm(x_cm, kh, kw)
    y = double_matmul_cm(wa, wb, x2dT)
    return y.reshape(cout, b, ho, wo)


def pool_conv1x1_block_cm(x_cm, layer):
    # MaxPool2d(2,2) fused with the following 1x1 conv (+ReLU).
    w2dT = layer["w2dT"]
    c, b, h, w = x_cm.shape
    ho, wo = h // 2, w // 2
    cout = w2dT.shape[0]
    m = b * ho * wo
    x00 = x_cm[:, :, 0:2 * ho:2, 0:2 * wo:2].reshape(c, m)
    x01 = x_cm[:, :, 0:2 * ho:2, 1:2 * wo:2].reshape(c, m)
    x10 = x_cm[:, :, 1:2 * ho:2, 0:2 * wo:2].reshape(c, m)
    x11 = x_cm[:, :, 1:2 * ho:2, 1:2 * wo:2].reshape(c, m)
    y = maxpool_matmul_cm(w2dT, x00, x01, x10, x11)
    return y.reshape(cout, b, ho, wo)


def final_conv_logsoftmax(x_cm, layer):
    # convblock8: 7x7 conv (no ReLU) + log_softmax, row-major so the softmax
    # reduction runs over the last (lane) axis.
    w2d, kh, kw = layer["w2d"], layer["kh"], layer["kw"]
    x2dT, (b, ho, wo) = im2col_cm(x_cm, kh, kw)   # (490, B), ho = wo = 1
    x2d = x2dT.T                                  # tiny (B, 490) transpose
    return matmul_logsoftmax(x2d, w2d)            # (B, 10) float32 log-probs


# ----------------------------------------------------------------------------
# Parameters (PyTorch-equivalent Conv2d weights, bias=False everywhere)
# ----------------------------------------------------------------------------
_CONV_CFGS = [  # (kh, kw, cin, cout) for convblock1..8
    (3, 3, 1, 32), (3, 3, 32, 64), (3, 3, 64, 128),
    (1, 1, 128, 32), (3, 3, 32, 64), (3, 3, 64, 128),
    (1, 1, 128, 10), (7, 7, 10, 10),
]


def init_params(key):
    params = []
    for (kh, kw, cin, cout) in _CONV_CFGS:
        key, sub = jax.random.split(key)
        bound = 1.0 / float(cin * kh * kw) ** 0.5
        w = jax.random.uniform(sub, (cout, cin, kh, kw), jnp.float32, -bound, bound)
        params.append(w)  # OIHW, like PyTorch
    return params


def prepare_params(params):
    # One-time fold: OIHW -> (Cout, kh*kw*Cin) bf16 matrices whose column
    # ordering (i*kw + j)*Cin + c matches im2col_cm; last layer also gets the
    # (K, 10) row-major orientation for the log_softmax kernel.
    prepared = []
    for idx, (w, (kh, kw, cin, cout)) in enumerate(zip(params, _CONV_CFGS)):
        w2dT = jnp.transpose(w, (0, 2, 3, 1)).reshape(cout, kh * kw * cin)
        w2dT = w2dT.astype(jnp.bfloat16)
        layer = {"w2dT": w2dT, "kh": kh, "kw": kw}
        if idx == len(_CONV_CFGS) - 1:
            layer["w2d"] = w2dT.T
        prepared.append(layer)
    return prepared


def session7_model2_forward(x_nchw, prepared):
    # NCHW -> channel-major (C, B, H, W) bf16; stays channel-major between layers.
    x = jnp.transpose(x_nchw, (1, 0, 2, 3)).astype(jnp.bfloat16)     # (1, B, 28, 28)
    x = conv_block_cm(x, prepared[0])                  # (32,  B, 26, 26)
    x = conv_block_cm(x, prepared[1])                  # (64,  B, 24, 24)
    x = conv_block_cm(x, prepared[2])                  # (128, B, 22, 22)
    x = pool_conv1x1_block_cm(x, prepared[3])          # pool + 1x1 -> (32, B, 11, 11)
    x = conv_block_cm(x, prepared[4])                  # (64,  B, 9, 9)
    x = conv_conv1x1_block_cm(x, prepared[5], prepared[6])  # fused conv6+conv7 -> (10, B, 7, 7)
    out = final_conv_logsoftmax(x, prepared[7])        # (B, 10) == view(-1,10)+log_softmax
    return out


if __name__ == "__main__":
    key = jax.random.PRNGKey(0)
    pkey, xkey = jax.random.split(key)
    params = init_params(pkey)
    prepared = prepare_params(params)
    x = jax.random.normal(xkey, (2, 1, 28, 28), jnp.float32)

    fwd = jax.jit(lambda inp: session7_model2_forward(inp, prepared))
    out = jax.block_until_ready(fwd(x))

    assert out.shape == (2, 10)
    assert bool(jnp.all(jnp.isfinite(out)))
    # log-softmax rows must exponentiate-sum to ~1
    assert jnp.allclose(jnp.sum(jnp.exp(out), axis=-1), 1.0, atol=1e-3)
    print("KERNEL_OK")
</pallas_src>

<mosaic_0001>
module attributes {stable_mosaic.version = 11 : i64} {
  func.func @_matmul_cm_kernel(%arg0: i32, %arg1: memref<32x9xbf16, #tpu.memory_space<vmem>>, %arg2: memref<9x512xbf16, #tpu.memory_space<vmem>>, %arg3: memref<32x512xbf16, #tpu.memory_space<vmem>>) attributes {dimension_semantics = [#tpu.dimension_semantics<parallel>], iteration_bounds = array<i64: 3>, scalar_prefetch = 0 : i64, scratch_operands = 0 : i64, tpu.core_type = #tpu.core_type<tc>, window_params = [{pipeline_mode = #tpu.pipeline_mode<synchronous>, transform_indices = @transform_0, window_bounds = array<i64: 32, 9>}, {transform_indices = @transform_1, window_bounds = array<i64: 9, 512>}, {transform_indices = @transform_2, window_bounds = array<i64: 32, 512>}]} {
    %c0 = arith.constant 0 : index
    %c0_0 = arith.constant 0 : index
    %0 = vector.load %arg1[%c0, %c0_0] : memref<32x9xbf16, #tpu.memory_space<vmem>>, vector<32x9xbf16>
    %c0_1 = arith.constant 0 : index
    %c0_2 = arith.constant 0 : index
    %1 = vector.load %arg2[%c0_1, %c0_2] : memref<9x512xbf16, #tpu.memory_space<vmem>>, vector<9x512xbf16>
    %cst = arith.constant dense<0.000000e+00> : vector<32x512xf32>
    %2 = tpu.matmul %0, %1, %cst {dimension_numbers = #tpu.dot_dimension_numbers<[1], [0], [0], [1], [0, 0, 1, 1], [], []>} : vector<32x9xbf16>, vector<9x512xbf16>, vector<32x512xf32> -> vector<32x512xf32>
    %cst_3 = arith.constant 0.000000e+00 : f32
    %3 = vector.broadcast %cst_3 : f32 to vector<32x512xf32>
    %4 = arith.maximumf %2, %3 : vector<32x512xf32>
    %5 = arith.truncf %4 : vector<32x512xf32> to vector<32x512xbf16>
    %c0_4 = arith.constant 0 : index
    %c0_5 = arith.constant 0 : index
    %6 = vector.load %arg3[%c0_4, %c0_5] : memref<32x512xbf16, #tpu.memory_space<vmem>>, vector<32x512xbf16>
    tpu.vector_store %arg3[%c0_4, %c0_5], %5 {strides = array<i32>} : memref<32x512xbf16, #tpu.memory_space<vmem>>, vector<32x512xbf16>,
    return
  }
  func.func @transform_0(%arg0: i32) -> (i32, i32) {
    %c0_i32 = arith.constant 0 : i32
    %c0_i32_0 = arith.constant 0 : i32
    %c0_i32_1 = arith.constant 0 : i32
    return %c0_i32, %c0_i32_0 : i32, i32
  }
  func.func @transform_1(%arg0: i32) -> (i32, i32) {
    %c0_i32 = arith.constant 0 : i32
    %c0_i32_0 = arith.constant 0 : i32
    return %c0_i32, %arg0 : i32, i32
  }
  func.func @transform_2(%arg0: i32) -> (i32, i32) {
    %c0_i32 = arith.constant 0 : i32
    %c0_i32_0 = arith.constant 0 : i32
    return %c0_i32, %arg0 : i32, i32
  }
}

module attributes {stable_mosaic.version = 11 : i64} {
  func.func @_matmul_cm_kernel(%arg0: i32, %arg1: memref<64x288xbf16, #tpu.memory_space<vmem>>, %arg2: memref<288x512xbf16, #tpu.memory_space<vmem>>, %arg3: memref<64x512xbf16, #tpu.memory_space<vmem>>) attributes {dimension_semantics = [#tpu.dimension_semantics<parallel>], iteration_bounds = array<i64: 3>, scalar_prefetch = 0 : i64, scratch_operands = 0 : i64, tpu.core_type = #tpu.core_type<tc>, window_params = [{pipeline_mode = #tpu.pipeline_mode<synchronous>, transform_indices = @transform_0, window_bounds = array<i64: 64, 288>}, {transform_indices = @transform_1, window_bounds = array<i64: 288, 512>}, {transform_indices = @transform_2, window_bounds = array<i64: 64, 512>}]} {
    %c0 = arith.constant 0 : index
    %c0_0 = arith.constant 0 : index
    %0 = vector.load %arg1[%c0, %c0_0] : memref<64x288xbf16, #tpu.memory_space<vmem>>, vector<64x288xbf16>
    %c0_1 = arith.constant 0 : index
    %c0_2 = arith.constant 0 : index
    %1 = vector.load %arg2[%c0_1, %c0_2] : memref<288x512xbf16, #tpu.memory_space<vmem>>, vector<288x512xbf16>
    %cst = arith.constant dense<0.000000e+00> : vector<64x512xf32>
    %2 = tpu.matmul %0, %1, %cst {dimension_numbers = #tpu.dot_dimension_numbers<[1], [0], [0], [1], [0, 0, 1, 1], [], []>} : vector<64x288xbf16>, vector<288x512xbf16>, vector<64x512xf32> -> vector<64x512xf32>
    %cst_3 = arith.constant 0.000000e+00 : f32
    %3 = vector.broadcast %cst_3 : f32 to vector<64x512xf32>
    %4 = arith.maximumf %2, %3 : vector<64x512xf32>
    %5 = arith.truncf %4 : vector<64x512xf32> to vector<64x512xbf16>
    %c0_4 = arith.constant 0 : index
    %c0_5 = arith.constant 0 : index
    %6 = vector.load %arg3[%c0_4, %c0_5] : memref<64x512xbf16, #tpu.memory_space<vmem>>, vector<64x512xbf16>
    tpu.vector_store %arg3[%c0_4, %c0_5], %5 {strides = array<i32>} : memref<64x512xbf16, #tpu.memory_space<vmem>>, vector<64x512xbf16>,
    return
  }
  func.func @transform_0(%arg0: i32) -> (i32, i32) {
    %c0_i32 = arith.constant 0 : i32
    %c0_i32_0 = arith.constant 0 : i32
    %c0_i32_1 = arith.constant 0 : i32
    return %c0_i32, %c0_i32_0 : i32, i32
  }
  func.func @transform_1(%arg0: i32) -> (i32, i32) {
    %c0_i32 = arith.constant 0 : i32
    %c0_i32_0 = arith.constant 0 : i32
    return %c0_i32, %arg0 : i32, i32
  }
  func.func @transform_2(%arg0: i32) -> (i32, i32) {
    %c0_i32 = arith.constant 0 : i32
    %c0_i32_0 = arith.constant 0 : i32
    return %c0_i32, %arg0 : i32, i32
  }
}

module attributes {stable_mosaic.version = 11 : i64} {
  func.func @_matmul_cm_kernel(%arg0: i32, %arg1: memref<128x576xbf16, #tpu.memory_space<vmem>>, %arg2: memref<576x512xbf16, #tpu.memory_space<vmem>>, %arg3: memref<128x512xbf16, #tpu.memory_space<vmem>>) attributes {dimension_semantics = [#tpu.dimension_semantics<parallel>], iteration_bounds = array<i64: 2>, scalar_prefetch = 0 : i64, scratch_operands = 0 : i64, tpu.core_type = #tpu.core_type<tc>, window_params = [{pipeline_mode = #tpu.pipeline_mode<synchronous>, transform_indices = @transform_0, window_bounds = array<i64: 128, 576>}, {transform_indices = @transform_1, window_bounds = array<i64: 576, 512>}, {transform_indices = @transform_2, window_bounds = array<i64: 128, 512>}]} {
    %c0 = arith.constant 0 : index
    %c0_0 = arith.constant 0 : index
    %0 = vector.load %arg1[%c0, %c0_0] : memref<128x576xbf16, #tpu.memory_space<vmem>>, vector<128x576xbf16>
    %c0_1 = arith.constant 0 : index
    %c0_2 = arith.constant 0 : index
    %1 = vector.load %arg2[%c0_1, %c0_2] : memref<576x512xbf16, #tpu.memory_space<vmem>>, vector<576x512xbf16>
    %cst = arith.constant dense<0.000000e+00> : vector<128x512xf32>
    %2 = tpu.matmul %0, %1, %cst {dimension_numbers = #tpu.dot_dimension_numbers<[1], [0], [0], [1], [0, 0, 1, 1], [], []>} : vector<128x576xbf16>, vector<576x512xbf16>, vector<128x512xf32> -> vector<128x512xf32>
    %cst_3 = arith.constant 0.000000e+00 : f32
    %3 = vector.broadcast %cst_3 : f32 to vector<128x512xf32>
    %4 = arith.maximumf %2, %3 : vector<128x512xf32>
    %5 = arith.truncf %4 : vector<128x512xf32> to vector<128x512xbf16>
    %c0_4 = arith.constant 0 : index
    %c0_5 = arith.constant 0 : index
    %6 = vector.load %arg3[%c0_4, %c0_5] : memref<128x512xbf16, #tpu.memory_space<vmem>>, vector<128x512xbf16>
    tpu.vector_store %arg3[%c0_4, %c0_5], %5 {strides = array<i32>} : memref<128x512xbf16, #tpu.memory_space<vmem>>, vector<128x512xbf16>,
    return
  }
  func.func @transform_0(%arg0: i32) -> (i32, i32) {
    %c0_i32 = arith.constant 0 : i32
    %c0_i32_0 = arith.constant 0 : i32
    %c0_i32_1 = arith.constant 0 : i32
    return %c0_i32, %c0_i32_0 : i32, i32
  }
  func.func @transform_1(%arg0: i32) -> (i32, i32) {
    %c0_i32 = arith.constant 0 : i32
    %c0_i32_0 = arith.constant 0 : i32
    return %c0_i32, %arg0 : i32, i32
  }
  func.func @transform_2(%arg0: i32) -> (i32, i32) {
    %c0_i32 = arith.constant 0 : i32
    %c0_i32_0 = arith.constant 0 : i32
    return %c0_i32, %arg0 : i32, i32
  }
}

module attributes {stable_mosaic.version = 11 : i64} {
  func.func @_maxpool_matmul_cm_kernel(%arg0: i32, %arg1: memref<32x128xbf16, #tpu.memory_space<vmem>>, %arg2: memref<128x256xbf16, #tpu.memory_space<vmem>>, %arg3: memref<128x256xbf16, #tpu.memory_space<vmem>>, %arg4: memref<128x256xbf16, #tpu.memory_space<vmem>>, %arg5: memref<128x256xbf16, #tpu.memory_space<vmem>>, %arg6: memref<32x256xbf16, #tpu.memory_space<vmem>>) attributes {dimension_semantics = [#tpu.dimension_semantics<parallel>], iteration_bounds = array<i64: 1>, scalar_prefetch = 0 : i64, scratch_operands = 0 : i64, tpu.core_type = #tpu.core_type<tc>, window_params = [{pipeline_mode = #tpu.pipeline_mode<synchronous>, transform_indices = @transform_0, window_bounds = array<i64: 32, 128>}, {transform_indices = @transform_1, window_bounds = array<i64: 128, 256>}, {transform_indices = @transform_2, window_bounds = array<i64: 128, 256>}, {transform_indices = @transform_3, window_bounds = array<i64: 128, 256>}, {transform_indices = @transform_4, window_bounds = array<i64: 128, 256>}, {transform_indices = @transform_5, window_bounds = array<i64: 32, 256>}]} {
    %c0 = arith.constant 0 : index
    %c0_0 = arith.constant 0 : index
    %0 = vector.load %arg2[%c0, %c0_0] : memref<128x256xbf16, #tpu.memory_space<vmem>>, vector<128x256xbf16>
    %c0_1 = arith.constant 0 : index
    %c0_2 = arith.constant 0 : index
    %1 = vector.load %arg3[%c0_1, %c0_2] : memref<128x256xbf16, #tpu.memory_space<vmem>>, vector<128x256xbf16>
    %2 = arith.maximumf %0, %1 : vector<128x256xbf16>
    %c0_3 = arith.constant 0 : index
    %c0_4 = arith.constant 0 : index
    %3 = vector.load %arg4[%c0_3, %c0_4] : memref<128x256xbf16, #tpu.memory_space<vmem>>, vector<128x256xbf16>
    %c0_5 = arith.constant 0 : index
    %c0_6 = arith.constant 0 : index
    %4 = vector.load %arg5[%c0_5, %c0_6] : memref<128x256xbf16, #tpu.memory_space<vmem>>, vector<128x256xbf16>
    %5 = arith.maximumf %3, %4 : vector<128x256xbf16>
    %6 = arith.maximumf %2, %5 : vector<128x256xbf16>
    %c0_7 = arith.constant 0 : index
    %c0_8 = arith.constant 0 : index
    %7 = vector.load %arg1[%c0_7, %c0_8] : memref<32x128xbf16, #tpu.memory_space<vmem>>, vector<32x128xbf16>
    %cst = arith.constant dense<0.000000e+00> : vector<32x256xf32>
    %8 = tpu.matmul %7, %6, %cst {dimension_numbers = #tpu.dot_dimension_numbers<[1], [0], [0], [1], [0, 0, 1, 1], [], []>} : vector<32x128xbf16>, vector<128x256xbf16>, vector<32x256xf32> -> vector<32x256xf32>
    %cst_9 = arith.constant 0.000000e+00 : f32
    %9 = vector.broadcast %cst_9 : f32 to vector<32x256xf32>
    %10 = arith.maximumf %8, %9 : vector<32x256xf32>
    %11 = arith.truncf %10 : vector<32x256xf32> to vector<32x256xbf16>
    %c0_10 = arith.constant 0 : index
    %c0_11 = arith.constant 0 : index
    %12 = vector.load %arg6[%c0_10, %c0_11] : memref<32x256xbf16, #tpu.memory_space<vmem>>, vector<32x256xbf16>
    tpu.vector_store %arg6[%c0_10, %c0_11], %11 {strides = array<i32>} : memref<32x256xbf16, #tpu.memory_space<vmem>>, vector<32x256xbf16>,
    return
  }
  func.func @transform_0(%arg0: i32) -> (i32, i32) {
    %c0_i32 = arith.constant 0 : i32
    %c0_i32_0 = arith.constant 0 : i32
    %c0_i32_1 = arith.constant 0 : i32
    return %c0_i32, %c0_i32_0 : i32, i32
  }
  func.func @transform_1(%arg0: i32) -> (i32, i32) {
    %c0_i32 = arith.constant 0 : i32
    %c0_i32_0 = arith.constant 0 : i32
    return %c0_i32, %arg0 : i32, i32
  }
  func.func @transform_2(%arg0: i32) -> (i32, i32) {
    %c0_i32 = arith.constant 0 : i32
    %c0_i32_0 = arith.constant 0 : i32
    return %c0_i32, %arg0 : i32, i32
  }
  func.func @transform_3(%arg0: i32) -> (i32, i32) {
    %c0_i32 = arith.constant 0 : i32
    %c0_i32_0 = arith.constant 0 : i32
    return %c0_i32, %arg0 : i32, i32
  }
  func.func @transform_4(%arg0: i32) -> (i32, i32) {
    %c0_i32 = arith.constant 0 : i32
    %c0_i32_0 = arith.constant 0 : i32
    return %c0_i32, %arg0 : i32, i32
  }
  func.func @transform_5(%arg0: i32) -> (i32, i32) {
    %c0_i32 = arith.constant 0 : i32
    %c0_i32_0 = arith.constant 0 : i32
    return %c0_i32, %arg0 : i32, i32
  }
}

module attributes {stable_mosaic.version = 11 : i64} {
  func.func @_matmul_cm_kernel(%arg0: i32, %arg1: memref<64x288xbf16, #tpu.memory_space<vmem>>, %arg2: memref<288x256xbf16, #tpu.memory_space<vmem>>, %arg3: memref<64x256xbf16, #tpu.memory_space<vmem>>) attributes {dimension_semantics = [#tpu.dimension_semantics<parallel>], iteration_bounds = array<i64: 1>, scalar_prefetch = 0 : i64, scratch_operands = 0 : i64, tpu.core_type = #tpu.core_type<tc>, window_params = [{pipeline_mode = #tpu.pipeline_mode<synchronous>, transform_indices = @transform_0, window_bounds = array<i64: 64, 288>}, {transform_indices = @transform_1, window_bounds = array<i64: 288, 256>}, {transform_indices = @transform_2, window_bounds = array<i64: 64, 256>}]} {
    %c0 = arith.constant 0 : index
    %c0_0 = arith.constant 0 : index
    %0 = vector.load %arg1[%c0, %c0_0] : memref<64x288xbf16, #tpu.memory_space<vmem>>, vector<64x288xbf16>
    %c0_1 = arith.constant 0 : index
    %c0_2 = arith.constant 0 : index
    %1 = vector.load %arg2[%c0_1, %c0_2] : memref<288x256xbf16, #tpu.memory_space<vmem>>, vector<288x256xbf16>
    %cst = arith.constant dense<0.000000e+00> : vector<64x256xf32>
    %2 = tpu.matmul %0, %1, %cst {dimension_numbers = #tpu.dot_dimension_numbers<[1], [0], [0], [1], [0, 0, 1, 1], [], []>} : vector<64x288xbf16>, vector<288x256xbf16>, vector<64x256xf32> -> vector<64x256xf32>
    %cst_3 = arith.constant 0.000000e+00 : f32
    %3 = vector.broadcast %cst_3 : f32 to vector<64x256xf32>
    %4 = arith.maximumf %2, %3 : vector<64x256xf32>
    %5 = arith.truncf %4 : vector<64x256xf32> to vector<64x256xbf16>
    %c0_4 = arith.constant 0 : index
    %c0_5 = arith.constant 0 : index
    %6 = vector.load %arg3[%c0_4, %c0_5] : memref<64x256xbf16, #tpu.memory_space<vmem>>, vector<64x256xbf16>
    tpu.vector_store %arg3[%c0_4, %c0_5], %5 {strides = array<i32>} : memref<64x256xbf16, #tpu.memory_space<vmem>>, vector<64x256xbf16>,
    return
  }
  func.func @transform_0(%arg0: i32) -> (i32, i32) {
    %c0_i32 = arith.constant 0 : i32
    %c0_i32_0 = arith.constant 0 : i32
    %c0_i32_1 = arith.constant 0 : i32
    return %c0_i32, %c0_i32_0 : i32, i32
  }
  func.func @transform_1(%arg0: i32) -> (i32, i32) {
    %c0_i32 = arith.constant 0 : i32
    %c0_i32_0 = arith.constant 0 : i32
    return %c0_i32, %arg0 : i32, i32
  }
  func.func @transform_2(%arg0: i32) -> (i32, i32) {
    %c0_i32 = arith.constant 0 : i32
    %c0_i32_0 = arith.constant 0 : i32
    return %c0_i32, %arg0 : i32, i32
  }
}

module attributes {stable_mosaic.version = 11 : i64} {
  func.func @_double_matmul_cm_kernel(%arg0: i32, %arg1: memref<128x576xbf16, #tpu.memory_space<vmem>>, %arg2: memref<10x128xbf16, #tpu.memory_space<vmem>>, %arg3: memref<576x128xbf16, #tpu.memory_space<vmem>>, %arg4: memref<10x128xbf16, #tpu.memory_space<vmem>>) attributes {dimension_semantics = [#tpu.dimension_semantics<parallel>], iteration_bounds = array<i64: 1>, scalar_prefetch = 0 : i64, scratch_operands = 0 : i64, tpu.core_type = #tpu.core_type<tc>, window_params = [{pipeline_mode = #tpu.pipeline_mode<synchronous>, transform_indices = @transform_0, window_bounds = array<i64: 128, 576>}, {pipeline_mode = #tpu.pipeline_mode<synchronous>, transform_indices = @transform_1, window_bounds = array<i64: 10, 128>}, {transform_indices = @transform_2, window_bounds = array<i64: 576, 128>}, {transform_indices = @transform_3, window_bounds = array<i64: 10, 128>}]} {
    %c0 = arith.constant 0 : index
    %c0_0 = arith.constant 0 : index
    %0 = vector.load %arg1[%c0, %c0_0] : memref<128x576xbf16, #tpu.memory_space<vmem>>, vector<128x576xbf16>
    %c0_1 = arith.constant 0 : index
    %c0_2 = arith.constant 0 : index
    %1 = vector.load %arg3[%c0_1, %c0_2] : memref<576x128xbf16, #tpu.memory_space<vmem>>, vector<576x128xbf16>
    %cst = arith.constant dense<0.000000e+00> : vector<128x128xf32>
    %2 = tpu.matmul %0, %1, %cst {dimension_numbers = #tpu.dot_dimension_numbers<[1], [0], [0], [1], [0, 0, 1, 1], [], []>} : vector<128x576xbf16>, vector<576x128xbf16>, vector<128x128xf32> -> vector<128x128xf32>
    %cst_3 = arith.constant 0.000000e+00 : f32
    %3 = vector.broadcast %cst_3 : f32 to vector<128x128xf32>
    %4 = arith.maximumf %2, %3 : vector<128x128xf32>
    %5 = arith.truncf %4 : vector<128x128xf32> to vector<128x128xbf16>
    %c0_4 = arith.constant 0 : index
    %c0_5 = arith.constant 0 : index
    %6 = vector.load %arg2[%c0_4, %c0_5] : memref<10x128xbf16, #tpu.memory_space<vmem>>, vector<10x128xbf16>
    %cst_6 = arith.constant dense<0.000000e+00> : vector<10x128xf32>
    %7 = tpu.matmul %6, %5, %cst_6 {dimension_numbers = #tpu.dot_dimension_numbers<[1], [0], [0], [1], [0, 0, 1, 1], [], []>} : vector<10x128xbf16>, vector<128x128xbf16>, vector<10x128xf32> -> vector<10x128xf32>
    %cst_7 = arith.constant 0.000000e+00 : f32
    %8 = vector.broadcast %cst_7 : f32 to vector<10x128xf32>
    %9 = arith.maximumf %7, %8 : vector<10x128xf32>
    %10 = arith.truncf %9 : vector<10x128xf32> to vector<10x128xbf16>
    %c0_8 = arith.constant 0 : index
    %c0_9 = arith.constant 0 : index
    %11 = vector.load %arg4[%c0_8, %c0_9] : memref<10x128xbf16, #tpu.memory_space<vmem>>, vector<10x128xbf16>
    tpu.vector_store %arg4[%c0_8, %c0_9], %10 {strides = array<i32>} : memref<10x128xbf16, #tpu.memory_space<vmem>>, vector<10x128xbf16>,
    return
  }
  func.func @transform_0(%arg0: i32) -> (i32, i32) {
    %c0_i32 = arith.constant 0 : i32
    %c0_i32_0 = arith.constant 0 : i32
    %c0_i32_1 = arith.constant 0 : i32
    return %c0_i32, %c0_i32_0 : i32, i32
  }
  func.func @transform_1(%arg0: i32) -> (i32, i32) {
    %c0_i32 = arith.constant 0 : i32
    %c0_i32_0 = arith.constant 0 : i32
    %c0_i32_1 = arith.constant 0 : i32
    return %c0_i32, %c0_i32_0 : i32, i32
  }
  func.func @transform_2(%arg0: i32) -> (i32, i32) {
    %c0_i32 = arith.constant 0 : i32
    %c0_i32_0 = arith.constant 0 : i32
    return %c0_i32, %arg0 : i32, i32
  }
  func.func @transform_3(%arg0: i32) -> (i32, i32) {
    %c0_i32 = arith.constant 0 : i32
    %c0_i32_0 = arith.constant 0 : i32
    return %c0_i32, %arg0 : i32, i32
  }
}

module attributes {stable_mosaic.version = 11 : i64} {
  func.func @_matmul_logsoftmax_kernel(%arg0: i32, %arg1: memref<8x490xbf16, #tpu.memory_space<vmem>>, %arg2: memref<490x10xbf16, #tpu.memory_space<vmem>>, %arg3: memref<8x10xf32, #tpu.memory_space<vmem>>) attributes {dimension_semantics = [#tpu.dimension_semantics<parallel>], iteration_bounds = array<i64: 1>, scalar_prefetch = 0 : i64, scratch_operands = 0 : i64, tpu.core_type = #tpu.core_type<tc>, window_params = [{transform_indices = @transform_0, window_bounds = array<i64: 8, 490>}, {pipeline_mode = #tpu.pipeline_mode<synchronous>, transform_indices = @transform_1, window_bounds = array<i64: 490, 10>}, {transform_indices = @transform_2, window_bounds = array<i64: 8, 10>}]} {
    %c0 = arith.constant 0 : index
    %c0_0 = arith.constant 0 : index
    %0 = vector.load %arg1[%c0, %c0_0] : memref<8x490xbf16, #tpu.memory_space<vmem>>, vector<8x490xbf16>
    %c0_1 = arith.constant 0 : index
    %c0_2 = arith.constant 0 : index
    %1 = vector.load %arg2[%c0_1, %c0_2] : memref<490x10xbf16, #tpu.memory_space<vmem>>, vector<490x10xbf16>
    %cst = arith.constant dense<0.000000e+00> : vector<8x10xf32>
    %2 = tpu.matmul %0, %1, %cst {dimension_numbers = #tpu.dot_dimension_numbers<[1], [0], [0], [1], [0, 0, 1, 1], [], []>} : vector<8x490xbf16>, vector<490x10xbf16>, vector<8x10xf32> -> vector<8x10xf32>
    %cst_3 = arith.constant dense<0xFF800000> : vector<8xf32>
    %3 = vector.multi_reduction <maximumf>, %2, %cst_3 [1] : vector<8x10xf32> to vector<8xf32>
    %4 = vector.shape_cast %3 : vector<8xf32> to vector<8x1xf32>
    %5 = vector.broadcast %4 : vector<8x1xf32> to vector<8x10xf32>
    %6 = arith.subf %2, %5 : vector<8x10xf32>
    %7 = math.exp %6 : vector<8x10xf32>
    %cst_4 = arith.constant dense<0.000000e+00> : vector<8xf32>
    %8 = vector.multi_reduction <add>, %7, %cst_4 [1] : vector<8x10xf32> to vector<8xf32>
    %9 = vector.shape_cast %8 : vector<8xf32> to vector<8x1xf32>
    %10 = math.log %9 : vector<8x1xf32>
    %11 = vector.broadcast %10 : vector<8x1xf32> to vector<8x10xf32>
    %12 = arith.subf %6, %11 : vector<8x10xf32>
    %c0_5 = arith.constant 0 : index
    %c0_6 = arith.constant 0 : index
    %13 = vector.load %arg3[%c0_5, %c0_6] : memref<8x10xf32, #tpu.memory_space<vmem>>, vector<8x10xf32>
    tpu.vector_store %arg3[%c0_5, %c0_6], %12 {strides = array<i32>} : memref<8x10xf32, #tpu.memory_space<vmem>>, vector<8x10xf32>,
    return
  }
  func.func @transform_0(%arg0: i32) -> (i32, i32) {
    %c0_i32 = arith.constant 0 : i32
    %c0_i32_0 = arith.constant 0 : i32
    return %arg0, %c0_i32 : i32, i32
  }
  func.func @transform_1(%arg0: i32) -> (i32, i32) {
    %c0_i32 = arith.constant 0 : i32
    %c0_i32_0 = arith.constant 0 : i32
    %c0_i32_1 = arith.constant 0 : i32
    return %c0_i32, %c0_i32_0 : i32, i32
  }
  func.func @transform_2(%arg0: i32) -> (i32, i32) {
    %c0_i32 = arith.constant 0 : i32
    %c0_i32_0 = arith.constant 0 : i32
    return %arg0, %c0_i32 : i32, i32
  }
}

</mosaic_0001>

<llo_original>
// kernel: _lambda_.7
$region0: #{_lambda_.7}
  #allocation0 [shape = 'u32[]', space=smem, size = 0x4, offset = 0x4, fixed_abs, tag = 'smem constant byte address 0x4 - core index']
  #allocation1 [shape = 'u32[144,128]{1,0:T(1,128)}', space=vmem, size = 0x12000, scoped, tag = 'internal scratch']
  %s0 = inlined_call_operand.hbm [shape: bf16[32,9], index: 0, kind: input, shape index: {}]
  %s1 = inlined_call_operand.vmem [shape: bf16[9,1536], index: 1, kind: input, shape index: {}]
  %s2 = inlined_call_operand.vmem [shape: bf16[32,1536], index: 2, kind: output, shape index: {}]
  %s3 = sld [smem:[#allocation0]]
  $region87: #{_lambda_.7} parent=0
    _
  %s5 = ssub.s32 1, %s3
  %s6 = scalar_select 0, %s5, %s3
  $region1: #{_lambda_.7} parent=0
    #allocation2 [shape = 'u8[8192]{0}', space=vmem, size = 0x2000, scoped, tag = 'input window, operand 0, single buffered']
    #allocation3 [shape = 's32[2]{0}', space=sflag, size = 0x8, scoped, tag = 'scoped memory for _lambda_.7']
    #allocation4 [shape = 'u8[32768]{0}', space=vmem, size = 0x8000, scoped, tag = 'input window, operand 1']
    #allocation5 [shape = 'u8[65536]{0}', space=vmem, size = 0x10000, scoped, tag = 'output window, operand 0']
    %7 = vsyncpa [#allocation3], 0
    loop: start=0, step=1, limit=5
    $region2: #{_lambda_.7} parent=1 // loop_pre_header
      _
    $region3: #{_lambda_.7} parent=1 // loop_header
      %s9 = sphi 0, %s13
      %p10 = scmp.ge.s32.totalorder %s9, 5
      %s17 = sphi 0, %s17
      %s19 = sphi 0, %s17
      %s20 = sphi 0, %s19
      %s34 = sphi 0, %s20
      %s40 = sphi 0, %s42
      %s43 = sphi 0, %s40
      %s44 = sphi 0, %s43
      %s60 = sphi 0, %s44
      %s66 = sphi 0, %s68
      %s69 = sphi 0, %s66
      %s70 = sphi 0, %s69
      %s86 = sphi 0, %s70
    $region4: #{_lambda_.7} parent=1 // loop_header_branch
      %12 = sbr.rel (%p10) target = $region8
    $region5: #{_lambda_.7} parent=1 // loop_body
      %s14 = ssub.s32 %s9, 1
      %s15 = ssub.s32 %s9, 2
      %s16 = sadd.s32 %s9, 1
      %s18 = sadd.s32 %s17, 1
      %p21 = scmp.eq.s32.totalorder %s9, 2
      %p22 = scmp.ne.s32.totalorder %s17, %s19
      %p23 = scmp.eq.s32.totalorder %s9, 0
      %p24 = por %p22, %p23
      %p25 = scmp.ne.s32.totalorder %s17, %s19
      %p26 = scmp.eq.s32.totalorder %s14, 2
      %p27 = por %p25, %p26
      %p28 = scmp.ne.s32.totalorder %s19, %s20
      %p29 = scmp.eq.s32.totalorder %s14, 0
      %p30 = por %p28, %p29
      %p31 = scmp.ne.s32.totalorder %s19, %s20
      %p32 = scmp.eq.s32.totalorder %s15, 2
      %p33 = por %p31, %p32
      %p35 = scmp.ne.s32.totalorder %s20, %s34
      %p36 = scmp.eq.s32.totalorder %s15, 0
      %p37 = por %p35, %p36
      %s38 = ssub.s32 %s9, %s16
      %p39 = scmp.eq.s32.totalorder %s38, 0
      %s41 = sadd.s32 %s40, 1
      %s42 = scalar_select %p39, %s40, %s41
      %p45 = pneg %p39
      %p46 = scmp.eq.s32.totalorder %s9, 2
      %p47 = por %p45, %p46
      %p48 = scmp.ne.s32.totalorder %s40, %s43
      %p49 = scmp.eq.s32.totalorder %s9, 0
      %p50 = por %p48, %p49
      %p51 = scmp.ne.s32.totalorder %s40, %s43
      %p52 = scmp.eq.s32.totalorder %s14, 2
      %p53 = por %p51, %p52
      %p54 = scmp.ne.s32.totalorder %s43, %s44
      %p55 = scmp.eq.s32.totalorder %s14, 0
      %p56 = por %p54, %p55
      %p57 = scmp.ne.s32.totalorder %s43, %s44
      %p58 = scmp.eq.s32.totalorder %s15, 2
      %p59 = por %p57, %p58
      %p61 = scmp.ne.s32.totalorder %s44, %s60
      %p62 = scmp.eq.s32.totalorder %s15, 0
      %p63 = por %p61, %p62
      %s64 = ssub.s32 %s9, %s16
      %p65 = scmp.eq.s32.totalorder %s64, 0
      %s67 = sadd.s32 %s66, 1
      %s68 = scalar_select %p65, %s66, %s67
      %p71 = pneg %p65
      %p72 = scmp.eq.s32.totalorder %s9, 2
      %p73 = por %p71, %p72
      %p74 = scmp.ne.s32.totalorder %s66, %s69
      %p75 = scmp.eq.s32.totalorder %s9, 0
      %p76 = por %p74, %p75
      %p77 = scmp.ne.s32.totalorder %s66, %s69
      %p78 = scmp.eq.s32.totalorder %s14, 2
      %p79 = por %p77, %p78
      %p80 = scmp.ne.s32.totalorder %s69, %s70
      %p81 = scmp.eq.s32.totalorder %s14, 0
      %p82 = por %p80, %p81
      %p83 = scmp.ne.s32.totalorder %s69, %s70
      %p84 = scmp.eq.s32.totalorder %s15, 2
      %p85 = por %p83, %p84
      %p87 = scmp.ne.s32.totalorder %s70, %s86
      %p88 = scmp.eq.s32.totalorder %s15, 0
      %p89 = por %p87, %p88
      %p90 = scmp.le.s32.totalorder 1, %s9
      %p91 = scmp.lt.s32.totalorder %s9, 4
      %p92 = pnand %p90, %p91
      %p93 = pneg %p92
      // Predicated region
      $region9: #{_lambda_.7} parent=5 // pred_check
        _
      $region10: #{_lambda_.7} parent=5 // pred_check_branch
        %95 = sbr.rel (%p92) target = $region12
      $region11: #{_lambda_.7} parent=5 // pred_region
        %s96 = ssub.s32 %s9, 1
        // Predicated region
        $region13: #{_lambda_.7} parent=11 // pred_check
          %p97 = pneg %p30
        $region14: #{_lambda_.7} parent=11 // pred_check_branch
          %99 = sbr.rel (%p97) target = $region16
        $region15: #{_lambda_.7} parent=11 // pred_region
          %s101 = ssub.s32 256, 256
          %102 = vsyncadd [#allocation3], %s101
          %s103 = sshll.u32 [#allocation2], 4
          %s104 = int_to_ptr.vmem [resolvable:$true] %s103
          %109 = dma.hbm_to_vmem [thread:$0]  %s0, 256, %s104, [#allocation3], 64, 64, 4
        $region16: #{_lambda_.7} parent=11 // pred_fallthru
          _
      $region12: #{_lambda_.7} parent=5 // pred_fallthru
        _
      %p110 = scmp.lt.s32.totalorder %s9, 3
      // Predicated region
      $region17: #{_lambda_.7} parent=5 // pred_check
        %p111 = pneg %p110
      $region18: #{_lambda_.7} parent=5 // pred_check_branch
        %113 = sbr.rel (%p111) target = $region20
      $region19: #{_lambda_.7} parent=5 // pred_region
        // Predicated region
        $region21: #{_lambda_.7} parent=19 // pred_check
          %p114 = pneg %p50
        $region22: #{_lambda_.7} parent=19 // pred_check_branch
          %116 = sbr.rel (%p114) target = $region24
        $region23: #{_lambda_.7} parent=19 // pred_region
          %s117 = sand.u32 %s40, 1
          %s118 = sand.u32 %s40, 1
          %s119 = smul.addr %s118, 32
          %s120 = scalar_lea.vmem [#allocation4], %s119
          %s121 = smul.u32 4, %s9
          %s122 = smul.addr %s121, 4
          %s123 = scalar_lea.vmem %s1, %s122
          // Predicated region
          $region25: #{_lambda_.7} parent=23 // pred_check
            _
          $region26: #{_lambda_.7} parent=23 // pred_check_branch
            %125 = sbr.rel (0) target = $region28
          $region27: #{_lambda_.7} parent=23 // pred_region
            // Predicated region
            $region29: #{_lambda_.7} parent=27 // pred_check
              _
            $region30: #{_lambda_.7} parent=27 // pred_check_branch
              %127 = sbr.rel (0) target = $region32
            $region31: #{_lambda_.7} parent=27 // pred_region
              loop: start=0, step=1, limit=1
              $region33: #{_lambda_.7} parent=31 // loop_pre_header
                _
              $region34: #{_lambda_.7} parent=31 // loop_header
                %s129 = sphi 0, %s133
                %p130 = scmp.ge.s32.totalorder %s129, 1
                %s134 = sphi %s123, %s123
                %s135 = sphi %s120, %s120
              $region35: #{_lambda_.7} parent=31 // loop_header_branch
                %132 = sbr.rel (%p130) target = $region39
              $region36: #{_lambda_.7} parent=31 // loop_body
                %v136 = vld [vmem:[%s134] sm:$0xff]
                %137 = vst [vmem:[%s135] sm:$0xff] %v136
                %v138 = vld [vmem:[%s134 + $0x8] sm:$0xff]
                %139 = vst [vmem:[%s135 + $0x8] sm:$0xff] %v138
                %v140 = vld [vmem:[%s134 + $0x30] sm:$0xff]
                %141 = vst [vmem:[%s135 + $0x10] sm:$0xff] %v140
                %v142 = vld [vmem:[%s134 + $0x38] sm:$0xff]
                %143 = vst [vmem:[%s135 + $0x18] sm:$0xff] %v142
              $region37: #{_lambda_.7} parent=31 // loop_footer
                %s133 = sadd.s32 1, %s129
              $region38: #{_lambda_.7} parent=31 // loop_footer_branch
                %128 = sbr.rel target = $region34
              $region39: #{_lambda_.7} parent=31 // loop_exit
                _
            $region32: #{_lambda_.7} parent=27 // pred_fallthru
              _
            // Predicated region
            $region40: #{_lambda_.7} parent=27 // pred_check
              _
            $region41: #{_lambda_.7} parent=27 // pred_check_branch
              %145 = sbr.rel target = $region43
            $region42: #{_lambda_.7} parent=27 // pred_region
              _
            $region43: #{_lambda_.7} parent=27 // pred_fallthru
              _
          $region28: #{_lambda_.7} parent=23 // pred_fallthru
            _
          %146 = vnop
        $region24: #{_lambda_.7} parent=19 // pred_fallthru
          _
      $region20: #{_lambda_.7} parent=5 // pred_fallthru
        _
      %p147 = scmp.le.s32.totalorder 1, %s9
      %p148 = scmp.lt.s32.totalorder %s9, 4
      %p149 = pnand %p147, %p148
      %p150 = pneg %p149
      // Predicated region
      $region44: #{_lambda_.7} parent=5 // pred_check
        _
      $region45: #{_lambda_.7} parent=5 // pred_check_branch
        %152 = sbr.rel (%p149) target = $region47
      $region46: #{_lambda_.7} parent=5 // pred_region
        %s153 = ssub.s32 %s9, 1
        // Predicated region
        $region48: #{_lambda_.7} parent=46 // pred_check
          %p154 = pneg %p30
        $region49: #{_lambda_.7} parent=46 // pred_check_branch
          %156 = sbr.rel (%p154) target = $region51
        $region50: #{_lambda_.7} parent=46 // pred_region
          %157 = dma.done [#allocation3], 256
        $region51: #{_lambda_.7} parent=46 // pred_fallthru
          _
        %s158 = sand.u32 %s43, 1
        %s159 = sand.u32 %s43, 1
        %s160 = smul.addr %s159, 32
        %s161 = scalar_lea.vmem [#allocation4], %s160
        // Predicated region
        $region52: #{_lambda_.7} parent=46 // pred_check
          %p162 = pneg %p56
        $region53: #{_lambda_.7} parent=46 // pred_check_branch
          %164 = sbr.rel (%p162) target = $region55
        $region54: #{_lambda_.7} parent=46 // pred_region
          _
        $region55: #{_lambda_.7} parent=46 // pred_fallthru
          _
        %p165 = pneg %p30
        %p166 = pneg %p27
        %s167 = sand.u32 %s43, 1
        %s168 = sand.u32 %s43, 1
        %s169 = smul.addr %s168, 32
        %s170 = scalar_lea.vmem [#allocation4], %s169
        %p171 = pneg %p56
        %p172 = pneg %p53
        %p173 = pneg %p82
        %p174 = pneg %p79
        %s175 = sand.u32 %s69, 1
        %s176 = sand.u32 %s69, 1
        %s177 = smul.addr %s176, 64
        %s178 = scalar_lea.vmem [#allocation5], %s177
        %s179 = smul.u32 4, %s14
        %s180 = smul.u32 4, %s14
        %v182 = vld [vmem:[#allocation2] sm:$0xf]
        %v183 = vld [vmem:[#allocation2 + $0x4] sm:$0xf]
        %v184 = vld [vmem:[#allocation2 + $0x8] sm:$0xf]
        %v185 = vld [vmem:[#allocation2 + $0xc] sm:$0xf]
        %v186 = vld [vmem:[%s161] sm:$0xff]
        %v187 = vld [vmem:[%s161 + $0x8] sm:$0xff]
        %v188 = vld [vmem:[%s161 + $0x10] sm:$0x11]
        %v189 = vld [vmem:[%s161 + $0x18] sm:$0x11]
        %v194 = vunpack.c.l.b16 %v182
        %v195 = vunpack.c.l.b16 %v183
        %v196 = vunpack.c.l.b16 %v184
        %v197 = vunpack.c.l.b16 %v185
        %v198 = vpack.c.b16 %v195, %v194
        %v199 = vpack.c.b16 %v197, %v196
        %v204 = vunpack.c.l.b16 %v186
        %v205 = vunpack.c.h.b16 %v186
        %v206 = vunpack.c.l.b16 %v187
        %v207 = vunpack.c.h.b16 %v187
        %v208 = vunpack.c.l.b16 %v188
        %v209 = vunpack.c.h.b16 %v188
        %v210 = vunpack.c.l.b16 %v189
        %v211 = vunpack.c.h.b16 %v189
        %v212 = vpack.c.b16 %v208, %v204
        %v213 = vpack.c.b16 %v209, %v205
        %v214 = vpack.c.b16 %v210, %v206
        %v215 = vpack.c.b16 %v211, %v207
        %vm216 = vcmask 72704
        %v218 = vsel %vm216, %v198, 0
        %v221 = vsel %vm216, %v199, 0
        %vm223 = vcmask 1043456
        %vm224 = vcmask 1044480
        %v225 = vsel %vm223, 4294967295, 65535
        %v226 = vsel %vm224, %v225, 0
        %v228 = vand.u32 %v212, %v226
        %v231 = vand.u32 %v213, %v226
        %v234 = vand.u32 %v214, %v226
        %v237 = vand.u32 %v215, %v226
        %239 = vmatprep.subr.bf16.mxu0 %v231
        %240 = vmatpush1.bf16.msra.mxu0 %v228
        %241 = vmatprep.subr.bf16.mxu0 0
        %242 = vmatpush1.bf16.msra.mxu0 0
        %243 = vmatprep.subr.bf16.mxu0 0
        %244 = vmatpush1.bf16.msra.mxu0 0
        %245 = vmatprep.subr.bf16.mxu0 0
        %246 = vmatpush1.bf16.msra.mxu0 0
        %247 = vmatprep.subr.bf16.mxu0 0
        %248 = vmatpush1.bf16.msra.mxu0 0
        %249 = vmatprep.subr.bf16.mxu0 0
        %250 = vmatpush1.bf16.msra.mxu0 0
        %251 = vmatprep.subr.bf16.mxu0 0
        %252 = vmatpush1.bf16.msra.mxu0 0
        %253 = vmatprep.subr.bf16.mxu0 0
        %254 = vmatpush1.bf16.msra.mxu0 0
        %255 = vmatprep.subr.bf16.mxu0 0
        %256 = vmatpush1.bf16.msra.mxu0 0
        %257 = vmatprep.subr.bf16.mxu0 0
        %258 = vmatpush1.bf16.msra.mxu0 0
        %259 = vmatprep.subr.bf16.mxu0 0
        %260 = vmatpush1.bf16.msra.mxu0 0
        %261 = vmatprep.subr.bf16.mxu0 0
        %262 = vmatpush1.bf16.msra.mxu0 0
        %263 = vmatprep.subr.bf16.mxu0 0
        %264 = vmatpush1.bf16.msra.mxu0 0
        %265 = vmatprep.subr.bf16.mxu0 0
        %266 = vmatpush1.bf16.msra.mxu0 0
        %267 = vmatprep.subr.bf16.mxu0 0
        %268 = vmatpush1.bf16.msra.mxu0 0
        %269 = vmatprep.subr.bf16.mxu0 0
        %270 = vmatpush1.bf16.msra.mxu0 0
        %271 = vmatprep.mubr.bf16.mxu0 0
        %272 = vmatmul.mubr.bf16.gmra.mrb[0].mxu0 %v218
        %v273 = vpop.f32.mrb[0].mxu0
        %v274 = vadd.f32 0.0, %v273
        %v275 = vpop.f32.mrb[0].mxu0
        %v276 = vadd.f32 0.0, %v275
        %v277 = vpop.f32.mrb[0].mxu0
        %v278 = vadd.f32 0.0, %v277
        %v279 = vpop.f32.mrb[0].mxu0
        %v280 = vadd.f32 0.0, %v279
        %281 = vmatprep.mubr.bf16.mxu0 0
        %282 = vmatmul.mubr.bf16.gmra.mrb[0].mxu0 %v221
        %v283 = vpop.f32.mrb[0].mxu0
        %v284 = vadd.f32 0.0, %v283
        %v285 = vpop.f32.mrb[0].mxu0
        %v286 = vadd.f32 0.0, %v285
        %v287 = vpop.f32.mrb[0].mxu0
        %v288 = vadd.f32 0.0, %v287
        %v289 = vpop.f32.mrb[0].mxu0
        %v290 = vadd.f32 0.0, %v289
        %291 = vdwg.mxu0
        %292 = vmatprep.subr.bf16.mxu0 %v237
        %293 = vmatpush1.bf16.msra.mxu0 %v234
        %294 = vmatprep.subr.bf16.mxu0 0
        %295 = vmatpush1.bf16.msra.mxu0 0
        %296 = vmatprep.subr.bf16.mxu0 0
        %297 = vmatpush1.bf16.msra.mxu0 0
        %298 = vmatprep.subr.bf16.mxu0 0
        %299 = vmatpush1.bf16.msra.mxu0 0
        %300 = vmatprep.subr.bf16.mxu0 0
        %301 = vmatpush1.bf16.msra.mxu0 0
        %302 = vmatprep.subr.bf16.mxu0 0
        %303 = vmatpush1.bf16.msra.mxu0 0
        %304 = vmatprep.subr.bf16.mxu0 0
        %305 = vmatpush1.bf16.msra.mxu0 0
        %306 = vmatprep.subr.bf16.mxu0 0
        %307 = vmatpush1.bf16.msra.mxu0 0
        %308 = vmatprep.subr.bf16.mxu0 0
        %309 = vmatpush1.bf16.msra.mxu0 0
        %310 = vmatprep.subr.bf16.mxu0 0
        %311 = vmatpush1.bf16.msra.mxu0 0
        %312 = vmatprep.subr.bf16.mxu0 0
        %313 = vmatpush1.bf16.msra.mxu0 0
        %314 = vmatprep.subr.bf16.mxu0 0
        %315 = vmatpush1.bf16.msra.mxu0 0
        %316 = vmatprep.subr.bf16.mxu0 0
        %317 = vmatpush1.bf16.msra.mxu0 0
        %318 = vmatprep.subr.bf16.mxu0 0
        %319 = vmatpush1.bf16.msra.mxu0 0
        %320 = vmatprep.subr.bf16.mxu0 0
        %321 = vmatpush1.bf16.msra.mxu0 0
        %322 = vmatprep.subr.bf16.mxu0 0
        %323 = vmatpush1.bf16.msra.mxu0 0
        %324 = vmatprep.mubr.bf16.mxu0 0
        %325 = vmatmul.mubr.bf16.gmra.mrb[0].mxu0 %v218
        %v326 = vpop.f32.mrb[0].mxu0
        %v327 = vadd.f32 0.0, %v326
        %v328 = vpop.f32.mrb[0].mxu0
        %v329 = vadd.f32 0.0, %v328
        %v330 = vpop.f32.mrb[0].mxu0
        %v331 = vadd.f32 0.0, %v330
        %v332 = vpop.f32.mrb[0].mxu0
        %v333 = vadd.f32 0.0, %v332
        %334 = vmatprep.mubr.bf16.mxu0 0
        %335 = vmatmul.mubr.bf16.gmra.mrb[0].mxu0 %v221
        %v336 = vpop.f32.mrb[0].mxu0
        %v337 = vadd.f32 0.0, %v336
        %v338 = vpop.f32.mrb[0].mxu0
        %v339 = vadd.f32 0.0, %v338
        %v340 = vpop.f32.mrb[0].mxu0
        %v341 = vadd.f32 0.0, %v340
        %v342 = vpop.f32.mrb[0].mxu0
        %v343 = vadd.f32 0.0, %v342
        %344 = vdwg.mxu0
        %v345 = vmax.f32 %v274, 0.0
        %v346 = vmax.f32 %v276, 0.0
        %v347 = vmax.f32 %v327, 0.0
        %v348 = vmax.f32 %v329, 0.0
        %v349 = vmax.f32 %v278, 0.0
        %v350 = vmax.f32 %v280, 0.0
        %v351 = vmax.f32 %v331, 0.0
        %v352 = vmax.f32 %v333, 0.0
        %v353 = vmax.f32 %v284, 0.0
        %v354 = vmax.f32 %v286, 0.0
        %v355 = vmax.f32 %v337, 0.0
        %v356 = vmax.f32 %v339, 0.0
        %v357 = vmax.f32 %v288, 0.0
        %v358 = vmax.f32 %v290, 0.0
        %v359 = vmax.f32 %v341, 0.0
        %v360 = vmax.f32 %v343, 0.0
        %v361 = vpack.c.bf16 %v349, %v345
        %v362 = vpack.c.bf16 %v350, %v346
        %v363 = vpack.c.bf16 %v351, %v347
        %v364 = vpack.c.bf16 %v352, %v348
        %v365 = vpack.c.bf16 %v357, %v353
        %v366 = vpack.c.bf16 %v358, %v354
        %v367 = vpack.c.bf16 %v359, %v355
        %v368 = vpack.c.bf16 %v360, %v356
        %v377 = vunpack.c.l.b16 %v361
        %v378 = vunpack.c.l.b16 %v362
        %v379 = vunpack.c.l.b16 %v363
        %v380 = vunpack.c.l.b16 %v364
        %v381 = vunpack.c.h.b16 %v361
        %v382 = vunpack.c.h.b16 %v362
        %v383 = vunpack.c.h.b16 %v363
        %v384 = vunpack.c.h.b16 %v364
        %v385 = vunpack.c.l.b16 %v365
        %v386 = vunpack.c.l.b16 %v366
        %v387 = vunpack.c.l.b16 %v367
        %v388 = vunpack.c.l.b16 %v368
        %v389 = vunpack.c.h.b16 %v365
        %v390 = vunpack.c.h.b16 %v366
        %v391 = vunpack.c.h.b16 %v367
        %v392 = vunpack.c.h.b16 %v368
        %v393 = vpack.c.b16 %v378, %v377
        %v394 = vpack.c.b16 %v380, %v379
        %v395 = vpack.c.b16 %v382, %v381
        %v396 = vpack.c.b16 %v384, %v383
        %v397 = vpack.c.b16 %v386, %v385
        %v398 = vpack.c.b16 %v388, %v387
        %v399 = vpack.c.b16 %v390, %v389
        %v400 = vpack.c.b16 %v392, %v391
        %409 = vst [vmem:[%s178] sm:$0xff] %v393
        %410 = vst [vmem:[%s178 + $0x8] sm:$0xff] %v394
        %411 = vst [vmem:[%s178 + $0x10] sm:$0xff] %v395
        %412 = vst [vmem:[%s178 + $0x18] sm:$0xff] %v396
        %413 = vst [vmem:[%s178 + $0x20] sm:$0xff] %v397
        %414 = vst [vmem:[%s178 + $0x28] sm:$0xff] %v398
        %415 = vst [vmem:[%s178 + $0x30] sm:$0xff] %v399
        %416 = vst [vmem:[%s178 + $0x38] sm:$0xff] %v400
        %s417 = sand.u32 %s69, 1
        %s418 = sand.u32 %s69, 1
        %s419 = smul.addr %s418, 64
        %s420 = scalar_lea.vmem [#allocation5], %s419
        // Predicated region
        $region56: #{_lambda_.7} parent=46 // pred_check
          %p421 = pneg %p79
        $region57: #{_lambda_.7} parent=46 // pred_check_branch
          %423 = sbr.rel (%p421) target = $region59
        $region58: #{_lambda_.7} parent=46 // pred_region
          %s424 = smul.u32 4, %s14
          %s425 = smul.addr %s424, 4
          %s426 = scalar_lea.vmem %s2, %s425
          // Predicated region
          $region60: #{_lambda_.7} parent=58 // pred_check
            _
          $region61: #{_lambda_.7} parent=58 // pred_check_branch
            %428 = sbr.rel (0) target = $region63
          $region62: #{_lambda_.7} parent=58 // pred_region
            // Predicated region
            $region64: #{_lambda_.7} parent=62 // pred_check
              _
            $region65: #{_lambda_.7} parent=62 // pred_check_branch
              %430 = sbr.rel (0) target = $region67
            $region66: #{_lambda_.7} parent=62 // pred_region
              loop: start=0, step=1, limit=1
              $region68: #{_lambda_.7} parent=66 // loop_pre_header
                _
              $region69: #{_lambda_.7} parent=66 // loop_header
                %s432 = sphi 0, %s436
                %p433 = scmp.ge.s32.totalorder %s432, 1
                %s437 = sphi %s420, %s420
                %s438 = sphi %s426, %s426
              $region70: #{_lambda_.7} parent=66 // loop_header_branch
                %435 = sbr.rel (%p433) target = $region74
              $region71: #{_lambda_.7} parent=66 // loop_body
                %v439 = vld [vmem:[%s437] sm:$0xff]
                %440 = vst [vmem:[%s438] sm:$0xff] %v439
                %v441 = vld [vmem:[%s437 + $0x8] sm:$0xff]
                %442 = vst [vmem:[%s438 + $0x8] sm:$0xff] %v441
                %v443 = vld [vmem:[%s437 + $0x10] sm:$0xff]
                %444 = vst [vmem:[%s438 + $0x30] sm:$0xff] %v443
                %v445 = vld [vmem:[%s437 + $0x18] sm:$0xff]
                %446 = vst [vmem:[%s438 + $0x38] sm:$0xff] %v445
                %v447 = vld [vmem:[%s437 + $0x20] sm:$0xff]
                %448 = vst [vmem:[%s438 + $0x60] sm:$0xff] %v447
                %v449 = vld [vmem:[%s437 + $0x28] sm:$0xff]
                %450 = vst [vmem:[%s438 + $0x68] sm:$0xff] %v449
                %v451 = vld [vmem:[%s437 + $0x30] sm:$0xff]
                %452 = vst [vmem:[%s438 + $0x90] sm:$0xff] %v451
                %v453 = vld [vmem:[%s437 + $0x38] sm:$0xff]
                %454 = vst [vmem:[%s438 + $0x98] sm:$0xff] %v453
              $region72: #{_lambda_.7} parent=66 // loop_footer
                %s436 = sadd.s32 1, %s432
              $region73: #{_lambda_.7} parent=66 // loop_footer_branch
                %431 = sbr.rel target = $region69
              $region74: #{_lambda_.7} parent=66 // loop_exit
                _
            $region67: #{_lambda_.7} parent=62 // pred_fallthru
              _
            // Predicated region
            $region75: #{_lambda_.7} parent=62 // pred_check
              _
            $region76: #{_lambda_.7} parent=62 // pred_check_branch
              %456 = sbr.rel target = $region78
            $region77: #{_lambda_.7} parent=62 // pred_region
              _
            $region78: #{_lambda_.7} parent=62 // pred_fallthru
              _
          $region63: #{_lambda_.7} parent=58 // pred_fallthru
            _
          %457 = vnop
        $region59: #{_lambda_.7} parent=46 // pred_fallthru
          _
      $region47: #{_lambda_.7} parent=5 // pred_fallthru
        _
      %p458 = scmp.le.s32.totalorder 2, %s9
      // Predicated region
      $region79: #{_lambda_.7} parent=5 // pred_check
        %p459 = pneg %p458
      $region80: #{_lambda_.7} parent=5 // pred_check_branch
        %461 = sbr.rel (%p459) target = $region82
      $region81: #{_lambda_.7} parent=5 // pred_region
        %s462 = ssub.s32 %s9, 2
        // Predicated region
        $region83: #{_lambda_.7} parent=81 // pred_check
          %p463 = pneg %p85
        $region84: #{_lambda_.7} parent=81 // pred_check_branch
          %465 = sbr.rel (%p463) target = $region86
        $region85: #{_lambda_.7} parent=81 // pred_region
          %s466 = sand.u32 %s70, 1
          %s467 = sand.u32 %s70, 1
          %s468 = smul.addr %s467, 64
          %s469 = scalar_lea.vmem [#allocation5], %s468
        $region86: #{_lambda_.7} parent=81 // pred_fallthru
          _
      $region82: #{_lambda_.7} parent=5 // pred_fallthru
        _
    $region6: #{_lambda_.7} parent=1 // loop_footer
      %s13 = sadd.s32 1, %s9
    $region7: #{_lambda_.7} parent=1 // loop_footer_branch
      %8 = sbr.rel target = $region3
    $region8: #{_lambda_.7} parent=1 // loop_exit
      _
    %470 = vsyncpa [#allocation3], 1
    %s471 = scalar_lea.sflag [#allocation3], 1
    %472 = vsyncpa %s471, 1

// kernel: _lambda_.8
$region0: #{_lambda_.8}
  #allocation0 [shape = 'u32[]', space=smem, size = 0x4, offset = 0x4, fixed_abs, tag = 'smem constant byte address 0x4 - core index']
  #allocation1 [shape = 'u32[144,128]{1,0:T(1,128)}', space=vmem, size = 0x12000, scoped, tag = 'internal scratch']
  %s0 = inlined_call_operand.vmem [shape: bf16[64,288], index: 0, kind: input, shape index: {}]
  %s1 = inlined_call_operand.vmem [shape: bf16[288,1536], index: 1, kind: input, shape index: {}]
  %s2 = inlined_call_operand.vmem [shape: bf16[64,1536], index: 2, kind: output, shape index: {}]
  %s3 = sld [smem:[#allocation0]]
  $region83: #{_lambda_.8} parent=0
    _
  %s5 = ssub.s32 1, %s3
  %s6 = scalar_select 0, %s5, %s3
  $region1: #{_lambda_.8} parent=0
    #allocation2 [shape = 'u8[589824]{0}', space=vmem, size = 0x90000, scoped, tag = 'input window, operand 1']
    #allocation3 [shape = 'u8[131072]{0}', space=vmem, size = 0x20000, scoped, tag = 'output window, operand 0']
    loop: start=0, step=1, limit=5
    $region2: #{_lambda_.8} parent=1 // loop_pre_header
      _
    $region3: #{_lambda_.8} parent=1 // loop_header
      %s8 = sphi 0, %s12
      %p9 = scmp.ge.s32.totalorder %s8, 5
      %s16 = sphi 0, %s16
      %s18 = sphi 0, %s16
      %s19 = sphi 0, %s18
      %s33 = sphi 0, %s19
      %s39 = sphi 0, %s41
      %s42 = sphi 0, %s39
      %s43 = sphi 0, %s42
      %s59 = sphi 0, %s43
      %s65 = sphi 0, %s67
      %s68 = sphi 0, %s65
      %s69 = sphi 0, %s68
      %s85 = sphi 0, %s69
    $region4: #{_lambda_.8} parent=1 // loop_header_branch
      %11 = sbr.rel (%p9) target = $region8
    $region5: #{_lambda_.8} parent=1 // loop_body
      %s13 = ssub.s32 %s8, 1
      %s14 = ssub.s32 %s8, 2
      %s15 = sadd.s32 %s8, 1
      %s17 = sadd.s32 %s16, 1
      %p20 = scmp.eq.s32.totalorder %s8, 2
      %p21 = scmp.ne.s32.totalorder %s16, %s18
      %p22 = scmp.eq.s32.totalorder %s8, 0
      %p23 = por %p21, %p22
      %p24 = scmp.ne.s32.totalorder %s16, %s18
      %p25 = scmp.eq.s32.totalorder %s13, 2
      %p26 = por %p24, %p25
      %p27 = scmp.ne.s32.totalorder %s18, %s19
      %p28 = scmp.eq.s32.totalorder %s13, 0
      %p29 = por %p27, %p28
      %p30 = scmp.ne.s32.totalorder %s18, %s19
      %p31 = scmp.eq.s32.totalorder %s14, 2
      %p32 = por %p30, %p31
      %p34 = scmp.ne.s32.totalorder %s19, %s33
      %p35 = scmp.eq.s32.totalorder %s14, 0
      %p36 = por %p34, %p35
      %s37 = ssub.s32 %s8, %s15
      %p38 = scmp.eq.s32.totalorder %s37, 0
      %s40 = sadd.s32 %s39, 1
      %s41 = scalar_select %p38, %s39, %s40
      %p44 = pneg %p38
      %p45 = scmp.eq.s32.totalorder %s8, 2
      %p46 = por %p44, %p45
      %p47 = scmp.ne.s32.totalorder %s39, %s42
      %p48 = scmp.eq.s32.totalorder %s8, 0
      %p49 = por %p47, %p48
      %p50 = scmp.ne.s32.totalorder %s39, %s42
      %p51 = scmp.eq.s32.totalorder %s13, 2
      %p52 = por %p50, %p51
      %p53 = scmp.ne.s32.totalorder %s42, %s43
      %p54 = scmp.eq.s32.totalorder %s13, 0
      %p55 = por %p53, %p54
      %p56 = scmp.ne.s32.totalorder %s42, %s43
      %p57 = scmp.eq.s32.totalorder %s14, 2
      %p58 = por %p56, %p57
      %p60 = scmp.ne.s32.totalorder %s43, %s59
      %p61 = scmp.eq.s32.totalorder %s14, 0
      %p62 = por %p60, %p61
      %s63 = ssub.s32 %s8, %s15
      %p64 = scmp.eq.s32.totalorder %s63, 0
      %s66 = sadd.s32 %s65, 1
      %s67 = scalar_select %p64, %s65, %s66
      %p70 = pneg %p64
      %p71 = scmp.eq.s32.totalorder %s8, 2
      %p72 = por %p70, %p71
      %p73 = scmp.ne.s32.totalorder %s65, %s68
      %p74 = scmp.eq.s32.totalorder %s8, 0
      %p75 = por %p73, %p74
      %p76 = scmp.ne.s32.totalorder %s65, %s68
      %p77 = scmp.eq.s32.totalorder %s13, 2
      %p78 = por %p76, %p77
      %p79 = scmp.ne.s32.totalorder %s68, %s69
      %p80 = scmp.eq.s32.totalorder %s13, 0
      %p81 = por %p79, %p80
      %p82 = scmp.ne.s32.totalorder %s68, %s69
      %p83 = scmp.eq.s32.totalorder %s14, 2
      %p84 = por %p82, %p83
      %p86 = scmp.ne.s32.totalorder %s69, %s85
      %p87 = scmp.eq.s32.totalorder %s14, 0
      %p88 = por %p86, %p87
      %p89 = scmp.le.s32.totalorder 1, %s8
      %p90 = scmp.lt.s32.totalorder %s8, 4
      %p91 = pnand %p89, %p90
      %p92 = pneg %p91
      // Predicated region
      $region9: #{_lambda_.8} parent=5 // pred_check
        _
      $region10: #{_lambda_.8} parent=5 // pred_check_branch
        %94 = sbr.rel (%p91) target = $region12
      $region11: #{_lambda_.8} parent=5 // pred_region
        %s95 = ssub.s32 %s8, 1
        // Predicated region
        $region13: #{_lambda_.8} parent=11 // pred_check
          %p96 = pneg %p29
        $region14: #{_lambda_.8} parent=11 // pred_check_branch
          %98 = sbr.rel (%p96) target = $region16
        $region15: #{_lambda_.8} parent=11 // pred_region
          _
        $region16: #{_lambda_.8} parent=11 // pred_fallthru
          _
      $region12: #{_lambda_.8} parent=5 // pred_fallthru
        _
      %p99 = scmp.lt.s32.totalorder %s8, 3
      // Predicated region
      $region17: #{_lambda_.8} parent=5 // pred_check
        %p100 = pneg %p99
      $region18: #{_lambda_.8} parent=5 // pred_check_branch
        %102 = sbr.rel (%p100) target = $region20
      $region19: #{_lambda_.8} parent=5 // pred_region
        // Predicated region
        $region21: #{_lambda_.8} parent=19 // pred_check
          %p103 = pneg %p49
        $region22: #{_lambda_.8} parent=19 // pred_check_branch
          %105 = sbr.rel (%p103) target = $region24
        $region23: #{_lambda_.8} parent=19 // pred_region
          %s106 = sand.u32 %s39, 1
          %s107 = sand.u32 %s39, 1
          %s108 = smul.addr %s107, 576
          %s109 = scalar_lea.vmem [#allocation2], %s108
          %s110 = smul.u32 4, %s8
          %s111 = smul.addr %s110, 4
          %s112 = scalar_lea.vmem %s1, %s111
          // Predicated region
          $region25: #{_lambda_.8} parent=23 // pred_check
            _
          $region26: #{_lambda_.8} parent=23 // pred_check_branch
            %114 = sbr.rel (0) target = $region28
          $region27: #{_lambda_.8} parent=23 // pred_region
            // Predicated region
            $region29: #{_lambda_.8} parent=27 // pred_check
              _
            $region30: #{_lambda_.8} parent=27 // pred_check_branch
              %116 = sbr.rel (0) target = $region32
            $region31: #{_lambda_.8} parent=27 // pred_region
              loop: start=0, step=1, limit=1
              $region33: #{_lambda_.8} parent=31 // loop_pre_header
                _
              $region34: #{_lambda_.8} parent=31 // loop_header
                %s118 = sphi 0, %s122
                %p119 = scmp.ge.s32.totalorder %s118, 1
                %s123 = sphi %s112, %s112
                %s124 = sphi %s109, %s109
              $region35: #{_lambda_.8} parent=31 // loop_header_branch
                %121 = sbr.rel (%p119) target = $region39
              $region36: #{_lambda_.8} parent=31 // loop_body
                %v125 = vld [vmem:[%s123] sm:$0xff]
                %126 = vst [vmem:[%s124] sm:$0xff] %v125
                %v127 = vld [vmem:[%s123 + $0x8] sm:$0xff]
                %128 = vst [vmem:[%s124 + $0x8] sm:$0xff] %v127
                %v129 = vld [vmem:[%s123 + $0x30] sm:$0xff]
                %130 = vst [vmem:[%s124 + $0x10] sm:$0xff] %v129
                %v131 = vld [vmem:[%s123 + $0x38] sm:$0xff]
                %132 = vst [vmem:[%s124 + $0x18] sm:$0xff] %v131
                %v133 = vld [vmem:[%s123 + $0x60] sm:$0xff]
                %134 = vst [vmem:[%s124 + $0x20] sm:$0xff] %v133
                %v135 = vld [vmem:[%s123 + $0x68] sm:$0xff]
                %136 = vst [vmem:[%s124 + $0x28] sm:$0xff] %v135
                %v137 = vld [vmem:[%s123 + $0x90] sm:$0xff]
                %138 = vst [vmem:[%s124 + $0x30] sm:$0xff] %v137
                %v139 = vld [vmem:[%s123 + $0x98] sm:$0xff]
                %140 = vst [vmem:[%s124 + $0x38] sm:$0xff] %v139
                %v141 = vld [vmem:[%s123 + $0xc0] sm:$0xff]
                %142 = vst [vmem:[%s124 + $0x40] sm:$0xff] %v141
                %v143 = vld [vmem:[%s123 + $0xc8] sm:$0xff]
                %144 = vst [vmem:[%s124 + $0x48] sm:$0xff] %v143
                %v145 = vld [vmem:[%s123 + $0xf0] sm:$0xff]
                %146 = vst [vmem:[%s124 + $0x50] sm:$0xff] %v145
                %v147 = vld [vmem:[%s123 + $0xf8] sm:$0xff]
                %148 = vst [vmem:[%s124 + $0x58] sm:$0xff] %v147
                %v149 = vld [vmem:[%s123 + $0x120] sm:$0xff]
                %150 = vst [vmem:[%s124 + $0x60] sm:$0xff] %v149
                %v151 = vld [vmem:[%s123 + $0x128] sm:$0xff]
                %152 = vst [vmem:[%s124 + $0x68] sm:$0xff] %v151
                %v153 = vld [vmem:[%s123 + $0x150] sm:$0xff]
                %154 = vst [vmem:[%s124 + $0x70] sm:$0xff] %v153
                %v155 = vld [vmem:[%s123 + $0x158] sm:$0xff]
                %156 = vst [vmem:[%s124 + $0x78] sm:$0xff] %v155
                %v157 = vld [vmem:[%s123 + $0x180] sm:$0xff]
                %158 = vst [vmem:[%s124 + $0x80] sm:$0xff] %v157
                %v159 = vld [vmem:[%s123 + $0x188] sm:$0xff]
                %160 = vst [vmem:[%s124 + $0x88] sm:$0xff] %v159
                %v161 = vld [vmem:[%s123 + $0x1b0] sm:$0xff]
                %162 = vst [vmem:[%s124 + $0x90] sm:$0xff] %v161
                %v163 = vld [vmem:[%s123 + $0x1b8] sm:$0xff]
                %164 = vst [vmem:[%s124 + $0x98] sm:$0xff] %v163
                %v165 = vld [vmem:[%s123 + $0x1e0] sm:$0xff]
                %166 = vst [vmem:[%s124 + $0xa0] sm:$0xff] %v165
                %v167 = vld [vmem:[%s123 + $0x1e8] sm:$0xff]
                %168 = vst [vmem:[%s124 + $0xa8] sm:$0xff] %v167
                %v169 = vld [vmem:[%s123 + $0x210] sm:$0xff]
                %170 = vst [vmem:[%s124 + $0xb0] sm:$0xff] %v169
                %v171 = vld [vmem:[%s123 + $0x218] sm:$0xff]
                %172 = vst [vmem:[%s124 + $0xb8] sm:$0xff] %v171
                %v173 = vld [vmem:[%s123 + $0x240] sm:$0xff]
                %174 = vst [vmem:[%s124 + $0xc0] sm:$0xff] %v173
                %v175 = vld [vmem:[%s123 + $0x248] sm:$0xff]
                %176 = vst [vmem:[%s124 + $0xc8] sm:$0xff] %v175
                %v177 = vld [vmem:[%s123 + $0x270] sm:$0xff]
                %178 = vst [vmem:[%s124 + $0xd0] sm:$0xff] %v177
                %v179 = vld [vmem:[%s123 + $0x278] sm:$0xff]
                %180 = vst [vmem:[%s124 + $0xd8] sm:$0xff] %v179
                %v181 = vld [vmem:[%s123 + $0x2a0] sm:$0xff]
                %182 = vst [vmem:[%s124 + $0xe0] sm:$0xff] %v181
                %v183 = vld [vmem:[%s123 + $0x2a8] sm:$0xff]
                %184 = vst [vmem:[%s124 + $0xe8] sm:$0xff] %v183
                %v185 = vld [vmem:[%s123 + $0x2d0] sm:$0xff]
                %186 = vst [vmem:[%s124 + $0xf0] sm:$0xff] %v185
                %v187 = vld [vmem:[%s123 + $0x2d8] sm:$0xff]
                %188 = vst [vmem:[%s124 + $0xf8] sm:$0xff] %v187
                %v189 = vld [vmem:[%s123 + $0x300] sm:$0xff]
                %190 = vst [vmem:[%s124 + $0x100] sm:$0xff] %v189
                %v191 = vld [vmem:[%s123 + $0x308] sm:$0xff]
                %192 = vst [vmem:[%s124 + $0x108] sm:$0xff] %v191
                %v193 = vld [vmem:[%s123 + $0x330] sm:$0xff]
                %194 = vst [vmem:[%s124 + $0x110] sm:$0xff] %v193
                %v195 = vld [vmem:[%s123 + $0x338] sm:$0xff]
                %196 = vst [vmem:[%s124 + $0x118] sm:$0xff] %v195
                %v197 = vld [vmem:[%s123 + $0x360] sm:$0xff]
                %198 = vst [vmem:[%s124 + $0x120] sm:$0xff] %v197
                %v199 = vld [vmem:[%s123 + $0x368] sm:$0xff]
                %200 = vst [vmem:[%s124 + $0x128] sm:$0xff] %v199
                %v201 = vld [vmem:[%s123 + $0x390] sm:$0xff]
                %202 = vst [vmem:[%s124 + $0x130] sm:$0xff] %v201
                %v203 = vld [vmem:[%s123 + $0x398] sm:$0xff]
                %204 = vst [vmem:[%s124 + $0x138] sm:$0xff] %v203
                %v205 = vld [vmem:[%s123 + $0x3c0] sm:$0xff]
                %206 = vst [vmem:[%s124 + $0x140] sm:$0xff] %v205
                %v207 = vld [vmem:[%s123 + $0x3c8] sm:$0xff]
                %208 = vst [vmem:[%s124 + $0x148] sm:$0xff] %v207
                %v209 = vld [vmem:[%s123 + $0x3f0] sm:$0xff]
                %210 = vst [vmem:[%s124 + $0x150] sm:$0xff] %v209
                %v211 = vld [vmem:[%s123 + $0x3f8] sm:$0xff]
                %212 = vst [vmem:[%s124 + $0x158] sm:$0xff] %v211
                %v213 = vld [vmem:[%s123 + $0x420] sm:$0xff]
                %214 = vst [vmem:[%s124 + $0x160] sm:$0xff] %v213
                %v215 = vld [vmem:[%s123 + $0x428] sm:$0xff]
                %216 = vst [vmem:[%s124 + $0x168] sm:$0xff] %v215
                %v217 = vld [vmem:[%s123 + $0x450] sm:$0xff]
                %218 = vst [vmem:[%s124 + $0x170] sm:$0xff] %v217
                %v219 = vld [vmem:[%s123 + $0x458] sm:$0xff]
                %220 = vst [vmem:[%s124 + $0x178] sm:$0xff] %v219
                %v221 = vld [vmem:[%s123 + $0x480] sm:$0xff]
                %222 = vst [vmem:[%s124 + $0x180] sm:$0xff] %v221
                %v223 = vld [vmem:[%s123 + $0x488] sm:$0xff]
                %224 = vst [vmem:[%s124 + $0x188] sm:$0xff] %v223
                %v225 = vld [vmem:[%s123 + $0x4b0] sm:$0xff]
                %226 = vst [vmem:[%s124 + $0x190] sm:$0xff] %v225
                %v227 = vld [vmem:[%s123 + $0x4b8] sm:$0xff]
                %228 = vst [vmem:[%s124 + $0x198] sm:$0xff] %v227
                %v229 = vld [vmem:[%s123 + $0x4e0] sm:$0xff]
                %230 = vst [vmem:[%s124 + $0x1a0] sm:$0xff] %v229
                %v231 = vld [vmem:[%s123 + $0x4e8] sm:$0xff]
                %232 = vst [vmem:[%s124 + $0x1a8] sm:$0xff] %v231
                %v233 = vld [vmem:[%s123 + $0x510] sm:$0xff]
                %234 = vst [vmem:[%s124 + $0x1b0] sm:$0xff] %v233
                %v235 = vld [vmem:[%s123 + $0x518] sm:$0xff]
                %236 = vst [vmem:[%s124 + $0x1b8] sm:$0xff] %v235
                %v237 = vld [vmem:[%s123 + $0x540] sm:$0xff]
                %238 = vst [vmem:[%s124 + $0x1c0] sm:$0xff] %v237
                %v239 = vld [vmem:[%s123 + $0x548] sm:$0xff]
                %240 = vst [vmem:[%s124 + $0x1c8] sm:$0xff] %v239
                %v241 = vld [vmem:[%s123 + $0x570] sm:$0xff]
                %242 = vst [vmem:[%s124 + $0x1d0] sm:$0xff] %v241
                %v243 = vld [vmem:[%s123 + $0x578] sm:$0xff]
                %244 = vst [vmem:[%s124 + $0x1d8] sm:$0xff] %v243
                %v245 = vld [vmem:[%s123 + $0x5a0] sm:$0xff]
                %246 = vst [vmem:[%s124 + $0x1e0] sm:$0xff] %v245
                %v247 = vld [vmem:[%s123 + $0x5a8] sm:$0xff]
                %248 = vst [vmem:[%s124 + $0x1e8] sm:$0xff] %v247
                %v249 = vld [vmem:[%s123 + $0x5d0] sm:$0xff]
                %250 = vst [vmem:[%s124 + $0x1f0] sm:$0xff] %v249
                %v251 = vld [vmem:[%s123 + $0x5d8] sm:$0xff]
                %252 = vst [vmem:[%s124 + $0x1f8] sm:$0xff] %v251
                %v253 = vld [vmem:[%s123 + $0x600] sm:$0xff]
                %254 = vst [vmem:[%s124 + $0x200] sm:$0xff] %v253
                %v255 = vld [vmem:[%s123 + $0x608] sm:$0xff]
                %256 = vst [vmem:[%s124 + $0x208] sm:$0xff] %v255
                %v257 = vld [vmem:[%s123 + $0x630] sm:$0xff]
                %258 = vst [vmem:[%s124 + $0x210] sm:$0xff] %v257
                %v259 = vld [vmem:[%s123 + $0x638] sm:$0xff]
                %260 = vst [vmem:[%s124 + $0x218] sm:$0xff] %v259
                %v261 = vld [vmem:[%s123 + $0x660] sm:$0xff]
                %262 = vst [vmem:[%s124 + $0x220] sm:$0xff] %v261
                %v263 = vld [vmem:[%s123 + $0x668] sm:$0xff]
                %264 = vst [vmem:[%s124 + $0x228] sm:$0xff] %v263
                %v265 = vld [vmem:[%s123 + $0x690] sm:$0xff]
                %266 = vst [vmem:[%s124 + $0x230] sm:$0xff] %v265
                %v267 = vld [vmem:[%s123 + $0x698] sm:$0xff]
                %268 = vst [vmem:[%s124 + $0x238] sm:$0xff] %v267
              $region37: #{_lambda_.8} parent=31 // loop_footer
                %s122 = sadd.s32 1, %s118
              $region38: #{_lambda_.8} parent=31 // loop_footer_branch
                %117 = sbr.rel target = $region34
              $region39: #{_lambda_.8} parent=31 // loop_exit
                _
            $region32: #{_lambda_.8} parent=27 // pred_fallthru
              _
            // Predicated region
            $region40: #{_lambda_.8} parent=27 // pred_check
              _
            $region41: #{_lambda_.8} parent=27 // pred_check_branch
              %270 = sbr.rel target = $region43
            $region42: #{_lambda_.8} parent=27 // pred_region
              _
            $region43: #{_lambda_.8} parent=27 // pred_fallthru
              _
          $region28: #{_lambda_.8} parent=23 // pred_fallthru
            _
          %271 = vnop
        $region24: #{_lambda_.8} parent=19 // pred_fallthru
          _
      $region20: #{_lambda_.8} parent=5 // pred_fallthru
        _
      %p272 = scmp.le.s32.totalorder 1, %s8
      %p273 = scmp.lt.s32.totalorder %s8, 4
      %p274 = pnand %p272, %p273
      %p275 = pneg %p274
      // Predicated region
      $region44: #{_lambda_.8} parent=5 // pred_check
        _
      $region45: #{_lambda_.8} parent=5 // pred_check_branch
        %277 = sbr.rel (%p274) target = $region47
      $region46: #{_lambda_.8} parent=5 // pred_region
        %s278 = ssub.s32 %s8, 1
        %s279 = sand.u32 %s42, 1
        %s280 = sand.u32 %s42, 1
        %s281 = smul.addr %s280, 576
        %s282 = scalar_lea.vmem [#allocation2], %s281
        // Predicated region
        $region48: #{_lambda_.8} parent=46 // pred_check
          %p283 = pneg %p55
        $region49: #{_lambda_.8} parent=46 // pred_check_branch
          %285 = sbr.rel (%p283) target = $region51
        $region50: #{_lambda_.8} parent=46 // pred_region
          _
        $region51: #{_lambda_.8} parent=46 // pred_fallthru
          _
        %p286 = pneg %p29
        %p287 = pneg %p26
        %s288 = sand.u32 %s42, 1
        %s289 = sand.u32 %s42, 1
        %s290 = smul.addr %s289, 576
        %s291 = scalar_lea.vmem [#allocation2], %s290
        %p292 = pneg %p55
        %p293 = pneg %p52
        %p294 = pneg %p81
        %p295 = pneg %p78
        %s296 = sand.u32 %s68, 1
        %s297 = sand.u32 %s68, 1
        %s298 = smul.addr %s297, 128
        %s299 = scalar_lea.vmem [#allocation3], %s298
        %s300 = smul.u32 4, %s13
        %s301 = smul.u32 4, %s13
        %v303 = vld [vmem:[%s0] sm:$0xff]
        %v304 = vld [vmem:[%s0 + $0x8] sm:$0xf]
        %v305 = vld [vmem:[%s0 + $0xc] sm:$0xff]
        %v306 = vld [vmem:[%s0 + $0x14] sm:$0xf]
        %v307 = vld [vmem:[%s0 + $0x18] sm:$0xff]
        %v308 = vld [vmem:[%s0 + $0x20] sm:$0xf]
        %v309 = vld [vmem:[%s0 + $0x24] sm:$0xff]
        %v310 = vld [vmem:[%s0 + $0x2c] sm:$0xf]
        %v311 = vld [vmem:[%s0 + $0x30] sm:$0xff]
        %v312 = vld [vmem:[%s0 + $0x38] sm:$0xf]
        %v313 = vld [vmem:[%s0 + $0x3c] sm:$0xff]
        %v314 = vld [vmem:[%s0 + $0x44] sm:$0xf]
        %v315 = vld [vmem:[%s0 + $0x48] sm:$0xff]
        %v316 = vld [vmem:[%s0 + $0x50] sm:$0xf]
        %v317 = vld [vmem:[%s0 + $0x54] sm:$0xff]
        %v318 = vld [vmem:[%s0 + $0x5c] sm:$0xf]
        %v319 = vld [vmem:[%s282] sm:$0xff]
        %v320 = vld [vmem:[%s282 + $0x8] sm:$0xff]
        %v321 = vld [vmem:[%s282 + $0x10] sm:$0xff]
        %v322 = vld [vmem:[%s282 + $0x18] sm:$0xff]
        %v323 = vld [vmem:[%s282 + $0x20] sm:$0xff]
        %v324 = vld [vmem:[%s282 + $0x28] sm:$0xff]
        %v325 = vld [vmem:[%s282 + $0x30] sm:$0xff]
        %v326 = vld [vmem:[%s282 + $0x38] sm:$0xff]
        %v327 = vld [vmem:[%s282 + $0x40] sm:$0xff]
        %v328 = vld [vmem:[%s282 + $0x48] sm:$0xff]
        %v329 = vld [vmem:[%s282 + $0x50] sm:$0xff]
        %v330 = vld [vmem:[%s282 + $0x58] sm:$0xff]
        %v331 = vld [vmem:[%s282 + $0x60] sm:$0xff]
        %v332 = vld [vmem:[%s282 + $0x68] sm:$0xff]
        %v333 = vld [vmem:[%s282 + $0x70] sm:$0xff]
        %v334 = vld [vmem:[%s282 + $0x78] sm:$0xff]
        %v335 = vld [vmem:[%s282 + $0x80] sm:$0xff]
        %v336 = vld [vmem:[%s282 + $0x88] sm:$0xff]
        %v337 = vld [vmem:[%s282 + $0x90] sm:$0xff]
        %v338 = vld [vmem:[%s282 + $0x98] sm:$0xff]
        %v339 = vld [vmem:[%s282 + $0xa0] sm:$0xff]
        %v340 = vld [vmem:[%s282 + $0xa8] sm:$0xff]
        %v341 = vld [vmem:[%s282 + $0xb0] sm:$0xff]
        %v342 = vld [vmem:[%s282 + $0xb8] sm:$0xff]
        %v343 = vld [vmem:[%s282 + $0xc0] sm:$0xff]
        %v344 = vld [vmem:[%s282 + $0xc8] sm:$0xff]
        %v345 = vld [vmem:[%s282 + $0xd0] sm:$0xff]
        %v346 = vld [vmem:[%s282 + $0xd8] sm:$0xff]
        %v347 = vld [vmem:[%s282 + $0xe0] sm:$0xff]
        %v348 = vld [vmem:[%s282 + $0xe8] sm:$0xff]
        %v349 = vld [vmem:[%s282 + $0xf0] sm:$0xff]
        %v350 = vld [vmem:[%s282 + $0xf8] sm:$0xff]
        %v351 = vld [vmem:[%s282 + $0x100] sm:$0xff]
        %v352 = vld [vmem:[%s282 + $0x108] sm:$0xff]
        %v353 = vld [vmem:[%s282 + $0x110] sm:$0xff]
        %v354 = vld [vmem:[%s282 + $0x118] sm:$0xff]
        %v355 = vld [vmem:[%s282 + $0x120] sm:$0xff]
        %v356 = vld [vmem:[%s282 + $0x128] sm:$0xff]
        %v357 = vld [vmem:[%s282 + $0x130] sm:$0xff]
        %v358 = vld [vmem:[%s282 + $0x138] sm:$0xff]
        %v359 = vld [vmem:[%s282 + $0x140] sm:$0xff]
        %v360 = vld [vmem:[%s282 + $0x148] sm:$0xff]
        %v361 = vld [vmem:[%s282 + $0x150] sm:$0xff]
        %v362 = vld [vmem:[%s282 + $0x158] sm:$0xff]
        %v363 = vld [vmem:[%s282 + $0x160] sm:$0xff]
        %v364 = vld [vmem:[%s282 + $0x168] sm:$0xff]
        %v365 = vld [vmem:[%s282 + $0x170] sm:$0xff]
        %v366 = vld [vmem:[%s282 + $0x178] sm:$0xff]
        %v367 = vld [vmem:[%s282 + $0x180] sm:$0xff]
        %v368 = vld [vmem:[%s282 + $0x188] sm:$0xff]
        %v369 = vld [vmem:[%s282 + $0x190] sm:$0xff]
        %v370 = vld [vmem:[%s282 + $0x198] sm:$0xff]
        %v371 = vld [vmem:[%s282 + $0x1a0] sm:$0xff]
        %v372 = vld [vmem:[%s282 + $0x1a8] sm:$0xff]
        %v373 = vld [vmem:[%s282 + $0x1b0] sm:$0xff]
        %v374 = vld [vmem:[%s282 + $0x1b8] sm:$0xff]
        %v375 = vld [vmem:[%s282 + $0x1c0] sm:$0xff]
        %v376 = vld [vmem:[%s282 + $0x1c8] sm:$0xff]
        %v377 = vld [vmem:[%s282 + $0x1d0] sm:$0xff]
        %v378 = vld [vmem:[%s282 + $0x1d8] sm:$0xff]
        %v379 = vld [vmem:[%s282 + $0x1e0] sm:$0xff]
        %v380 = vld [vmem:[%s282 + $0x1e8] sm:$0xff]
        %v381 = vld [vmem:[%s282 + $0x1f0] sm:$0xff]
        %v382 = vld [vmem:[%s282 + $0x1f8] sm:$0xff]
        %v383 = vld [vmem:[%s282 + $0x200] sm:$0xff]
        %v384 = vld [vmem:[%s282 + $0x208] sm:$0xff]
        %v385 = vld [vmem:[%s282 + $0x210] sm:$0xff]
        %v386 = vld [vmem:[%s282 + $0x218] sm:$0xff]
        %v387 = vld [vmem:[%s282 + $0x220] sm:$0xff]
        %v388 = vld [vmem:[%s282 + $0x228] sm:$0xff]
        %v389 = vld [vmem:[%s282 + $0x230] sm:$0xff]
        %v390 = vld [vmem:[%s282 + $0x238] sm:$0xff]
        %v407 = vunpack.c.l.b16 %v303
        %v408 = vunpack.c.h.b16 %v303
        %v409 = vunpack.c.l.b16 %v304
        %v410 = vunpack.c.l.b16 %v305
        %v411 = vunpack.c.h.b16 %v305
        %v412 = vunpack.c.l.b16 %v306
        %v413 = vunpack.c.l.b16 %v307
        %v414 = vunpack.c.h.b16 %v307
        %v415 = vunpack.c.l.b16 %v308
        %v416 = vunpack.c.l.b16 %v309
        %v417 = vunpack.c.h.b16 %v309
        %v418 = vunpack.c.l.b16 %v310
        %v419 = vunpack.c.l.b16 %v311
        %v420 = vunpack.c.h.b16 %v311
        %v421 = vunpack.c.l.b16 %v312
        %v422 = vunpack.c.l.b16 %v313
        %v423 = vunpack.c.h.b16 %v313
        %v424 = vunpack.c.l.b16 %v314
        %v425 = vunpack.c.l.b16 %v315
        %v426 = vunpack.c.h.b16 %v315
        %v427 = vunpack.c.l.b16 %v316
        %v428 = vunpack.c.l.b16 %v317
        %v429 = vunpack.c.h.b16 %v317
        %v430 = vunpack.c.l.b16 %v318
        %v431 = vpack.c.b16 %v410, %v407
        %v432 = vpack.c.b16 %v411, %v408
        %v433 = vpack.c.b16 %v412, %v409
        %v434 = vpack.c.b16 %v416, %v413
        %v435 = vpack.c.b16 %v417, %v414
        %v436 = vpack.c.b16 %v418, %v415
        %v437 = vpack.c.b16 %v422, %v419
        %v438 = vpack.c.b16 %v423, %v420
        %v439 = vpack.c.b16 %v424, %v421
        %v440 = vpack.c.b16 %v428, %v425
        %v441 = vpack.c.b16 %v429, %v426
        %v442 = vpack.c.b16 %v430, %v427
        %v523 = vunpack.c.l.b16 %v319
        %v524 = vunpack.c.h.b16 %v319
        %v525 = vunpack.c.l.b16 %v320
        %v526 = vunpack.c.h.b16 %v320
        %v527 = vunpack.c.l.b16 %v321
        %v528 = vunpack.c.h.b16 %v321
        %v529 = vunpack.c.l.b16 %v322
        %v530 = vunpack.c.h.b16 %v322
        %v531 = vunpack.c.l.b16 %v323
        %v532 = vunpack.c.h.b16 %v323
        %v533 = vunpack.c.l.b16 %v324
        %v534 = vunpack.c.h.b16 %v324
        %v535 = vunpack.c.l.b16 %v325
        %v536 = vunpack.c.h.b16 %v325
        %v537 = vunpack.c.l.b16 %v326
        %v538 = vunpack.c.h.b16 %v326
        %v539 = vunpack.c.l.b16 %v327
        %v540 = vunpack.c.h.b16 %v327
        %v541 = vunpack.c.l.b16 %v328
        %v542 = vunpack.c.h.b16 %v328
        %v543 = vunpack.c.l.b16 %v329
        %v544 = vunpack.c.h.b16 %v329
        %v545 = vunpack.c.l.b16 %v330
        %v546 = vunpack.c.h.b16 %v330
        %v547 = vunpack.c.l.b16 %v331
        %v548 = vunpack.c.h.b16 %v331
        %v549 = vunpack.c.l.b16 %v332
        %v550 = vunpack.c.h.b16 %v332
        %v551 = vunpack.c.l.b16 %v333
        %v552 = vunpack.c.h.b16 %v333
        %v553 = vunpack.c.l.b16 %v334
        %v554 = vunpack.c.h.b16 %v334
        %v555 = vunpack.c.l.b16 %v335
        %v556 = vunpack.c.h.b16 %v335
        %v557 = vunpack.c.l.b16 %v336
        %v558 = vunpack.c.h.b16 %v336
        %v559 = vunpack.c.l.b16 %v337
        %v560 = vunpack.c.h.b16 %v337
        %v561 = vunpack.c.l.b16 %v338
        %v562 = vunpack.c.h.b16 %v338
        %v563 = vunpack.c.l.b16 %v339
        %v564 = vunpack.c.h.b16 %v339
        %v565 = vunpack.c.l.b16 %v340
        %v566 = vunpack.c.h.b16 %v340
        %v567 = vunpack.c.l.b16 %v341
        %v568 = vunpack.c.h.b16 %v341
        %v569 = vunpack.c.l.b16 %v342
        %v570 = vunpack.c.h.b16 %v342
        %v571 = vunpack.c.l.b16 %v343
        %v572 = vunpack.c.h.b16 %v343
        %v573 = vunpack.c.l.b16 %v344
        %v574 = vunpack.c.h.b16 %v344
        %v575 = vunpack.c.l.b16 %v345
        %v576 = vunpack.c.h.b16 %v345
        %v577 = vunpack.c.l.b16 %v346
        %v578 = vunpack.c.h.b16 %v346
        %v579 = vunpack.c.l.b16 %v347
        %v580 = vunpack.c.h.b16 %v347
        %v581 = vunpack.c.l.b16 %v348
        %v582 = vunpack.c.h.b16 %v348
        %v583 = vunpack.c.l.b16 %v349
        %v584 = vunpack.c.h.b16 %v349
        %v585 = vunpack.c.l.b16 %v350
        %v586 = vunpack.c.h.b16 %v350
        %v587 = vunpack.c.l.b16 %v351
        %v588 = vunpack.c.h.b16 %v351
        %v589 = vunpack.c.l.b16 %v352
        %v590 = vunpack.c.h.b16 %v352
        %v591 = vunpack.c.l.b16 %v353
        %v592 = vunpack.c.h.b16 %v353
        %v593 = vunpack.c.l.b16 %v354
        %v594 = vunpack.c.h.b16 %v354
        %v595 = vunpack.c.l.b16 %v355
        %v596 = vunpack.c.h.b16 %v355
        %v597 = vunpack.c.l.b16 %v356
        %v598 = vunpack.c.h.b16 %v356
        %v599 = vunpack.c.l.b16 %v357
        %v600 = vunpack.c.h.b16 %v357
        %v601 = vunpack.c.l.b16 %v358
        %v602 = vunpack.c.h.b16 %v358
        %v603 = vunpack.c.l.b16 %v359
        %v604 = vunpack.c.h.b16 %v359
        %v605 = vunpack.c.l.b16 %v360
        %v606 = vunpack.c.h.b16 %v360
        %v607 = vunpack.c.l.b16 %v361
        %v608 = vunpack.c.h.b16 %v361
        %v609 = vunpack.c.l.b16 %v362
        %v610 = vunpack.c.h.b16 %v362
        %v611 = vunpack.c.l.b16 %v363
        %v612 = vunpack.c.h.b16 %v363
        %v613 = vunpack.c.l.b16 %v364
        %v614 = vunpack.c.h.b16 %v364
        %v615 = vunpack.c.l.b16 %v365
        %v616 = vunpack.c.h.b16 %v365
        %v617 = vunpack.c.l.b16 %v366
        %v618 = vunpack.c.h.b16 %v366
        %v619 = vunpack.c.l.b16 %v367
        %v620 = vunpack.c.h.b16 %v367
        %v621 = vunpack.c.l.b16 %v368
        %v622 = vunpack.c.h.b16 %v368
        %v623 = vunpack.c.l.b16 %v369
        %v624 = vunpack.c.h.b16 %v369
        %v625 = vunpack.c.l.b16 %v370
        %v626 = vunpack.c.h.b16 %v370
        %v627 = vunpack.c.l.b16 %v371
        %v628 = vunpack.c.h.b16 %v371
        %v629 = vunpack.c.l.b16 %v372
        %v630 = vunpack.c.h.b16 %v372
        %v631 = vunpack.c.l.b16 %v373
        %v632 = vunpack.c.h.b16 %v373
        %v633 = vunpack.c.l.b16 %v374
        %v634 = vunpack.c.h.b16 %v374
        %v635 = vunpack.c.l.b16 %v375
        %v636 = vunpack.c.h.b16 %v375
        %v637 = vunpack.c.l.b16 %v376
        %v638 = vunpack.c.h.b16 %v376
        %v639 = vunpack.c.l.b16 %v377
        %v640 = vunpack.c.h.b16 %v377
        %v641 = vunpack.c.l.b16 %v378
        %v642 = vunpack.c.h.b16 %v378
        %v643 = vunpack.c.l.b16 %v379
        %v644 = vunpack.c.h.b16 %v379
        %v645 = vunpack.c.l.b16 %v380
        %v646 = vunpack.c.h.b16 %v380
        %v647 = vunpack.c.l.b16 %v381
        %v648 = vunpack.c.h.b16 %v381
        %v649 = vunpack.c.l.b16 %v382
        %v650 = vunpack.c.h.b16 %v382
        %v651 = vunpack.c.l.b16 %v383
        %v652 = vunpack.c.h.b16 %v383
        %v653 = vunpack.c.l.b16 %v384
        %v654 = vunpack.c.h.b16 %v384
        %v655 = vunpack.c.l.b16 %v385
        %v656 = vunpack.c.h.b16 %v385
        %v657 = vunpack.c.l.b16 %v386
        %v658 = vunpack.c.h.b16 %v386
        %v659 = vunpack.c.l.b16 %v387
        %v660 = vunpack.c.h.b16 %v387
        %v661 = vunpack.c.l.b16 %v388
        %v662 = vunpack.c.h.b16 %v388
        %v663 = vunpack.c.l.b16 %v389
        %v664 = vunpack.c.h.b16 %v389
        %v665 = vunpack.c.l.b16 %v390
        %v666 = vunpack.c.h.b16 %v390
        %v667 = vpack.c.b16 %v527, %v523
        %v668 = vpack.c.b16 %v528, %v524
        %v669 = vpack.c.b16 %v529, %v525
        %v670 = vpack.c.b16 %v530, %v526
        %v671 = vpack.c.b16 %v535, %v531
        %v672 = vpack.c.b16 %v536, %v532
        %v673 = vpack.c.b16 %v537, %v533
        %v674 = vpack.c.b16 %v538, %v534
        %v675 = vpack.c.b16 %v543, %v539
        %v676 = vpack.c.b16 %v544, %v540
        %v677 = vpack.c.b16 %v545, %v541
        %v678 = vpack.c.b16 %v546, %v542
        %v679 = vpack.c.b16 %v551, %v547
        %v680 = vpack.c.b16 %v552, %v548
        %v681 = vpack.c.b16 %v553, %v549
        %v682 = vpack.c.b16 %v554, %v550
        %v683 = vpack.c.b16 %v559, %v555
        %v684 = vpack.c.b16 %v560, %v556
        %v685 = vpack.c.b16 %v561, %v557
        %v686 = vpack.c.b16 %v562, %v558
        %v687 = vpack.c.b16 %v567, %v563
        %v688 = vpack.c.b16 %v568, %v564
        %v689 = vpack.c.b16 %v569, %v565
        %v690 = vpack.c.b16 %v570, %v566
        %v691 = vpack.c.b16 %v575, %v571
        %v692 = vpack.c.b16 %v576, %v572
        %v693 = vpack.c.b16 %v577, %v573
        %v694 = vpack.c.b16 %v578, %v574
        %v695 = vpack.c.b16 %v583, %v579
        %v696 = vpack.c.b16 %v584, %v580
        %v697 = vpack.c.b16 %v585, %v581
        %v698 = vpack.c.b16 %v586, %v582
        %v699 = vpack.c.b16 %v591, %v587
        %v700 = vpack.c.b16 %v592, %v588
        %v701 = vpack.c.b16 %v593, %v589
        %v702 = vpack.c.b16 %v594, %v590
        %v703 = vpack.c.b16 %v599, %v595
        %v704 = vpack.c.b16 %v600, %v596
        %v705 = vpack.c.b16 %v601, %v597
        %v706 = vpack.c.b16 %v602, %v598
        %v707 = vpack.c.b16 %v607, %v603
        %v708 = vpack.c.b16 %v608, %v604
        %v709 = vpack.c.b16 %v609, %v605
        %v710 = vpack.c.b16 %v610, %v606
        %v711 = vpack.c.b16 %v615, %v611
        %v712 = vpack.c.b16 %v616, %v612
        %v713 = vpack.c.b16 %v617, %v613
        %v714 = vpack.c.b16 %v618, %v614
        %v715 = vpack.c.b16 %v623, %v619
        %v716 = vpack.c.b16 %v624, %v620
        %v717 = vpack.c.b16 %v625, %v621
        %v718 = vpack.c.b16 %v626, %v622
        %v719 = vpack.c.b16 %v631, %v627
        %v720 = vpack.c.b16 %v632, %v628
        %v721 = vpack.c.b16 %v633, %v629
        %v722 = vpack.c.b16 %v634, %v630
        %v723 = vpack.c.b16 %v639, %v635
        %v724 = vpack.c.b16 %v640, %v636
        %v725 = vpack.c.b16 %v641, %v637
        %v726 = vpack.c.b16 %v642, %v638
        %v727 = vpack.c.b16 %v647, %v643
        %v728 = vpack.c.b16 %v648, %v644
        %v729 = vpack.c.b16 %v649, %v645
        %v730 = vpack.c.b16 %v650, %v646
        %v731 = vpack.c.b16 %v655, %v651
        %v732 = vpack.c.b16 %v656, %v652
        %v733 = vpack.c.b16 %v657, %v653
        %v734 = vpack.c.b16 %v658, %v654
        %v735 = vpack.c.b16 %v663, %v659
        %v736 = vpack.c.b16 %v664, %v660
        %v737 = vpack.c.b16 %v665, %v661
        %v738 = vpack.c.b16 %v666, %v662
        %vm811 = vcmask 261120
        %v813 = vsel %vm811, %v433, 0
        %v816 = vsel %vm811, %v436, 0
        %v819 = vsel %vm811, %v439, 0
        %v822 = vsel %vm811, %v442, 0
        %824 = vmatprep.subr.bf16.mxu0 %v668
        %825 = vmatpush1.bf16.msra.mxu0 %v667
        %826 = vmatprep.subr.bf16.mxu0 %v672
        %827 = vmatpush1.bf16.msra.mxu0 %v671
        %828 = vmatprep.subr.bf16.mxu0 %v676
        %829 = vmatpush1.bf16.msra.mxu0 %v675
        %830 = vmatprep.subr.bf16.mxu0 %v680
        %831 = vmatpush1.bf16.msra.mxu0 %v679
        %832 = vmatprep.subr.bf16.mxu0 %v684
        %833 = vmatpush1.bf16.msra.mxu0 %v683
        %834 = vmatprep.subr.bf16.mxu0 %v688
        %835 = vmatpush1.bf16.msra.mxu0 %v687
        %836 = vmatprep.subr.bf16.mxu0 %v692
        %837 = vmatpush1.bf16.msra.mxu0 %v691
        %838 = vmatprep.subr.bf16.mxu0 %v696
        %839 = vmatpush1.bf16.msra.mxu0 %v695
        %840 = vmatprep.subr.bf16.mxu0 %v700
        %841 = vmatpush1.bf16.msra.mxu0 %v699
        %842 = vmatprep.subr.bf16.mxu0 %v704
        %843 = vmatpush1.bf16.msra.mxu0 %v703
        %844 = vmatprep.subr.bf16.mxu0 %v708
        %845 = vmatpush1.bf16.msra.mxu0 %v707
        %846 = vmatprep.subr.bf16.mxu0 %v712
        %847 = vmatpush1.bf16.msra.mxu0 %v711
        %848 = vmatprep.subr.bf16.mxu0 %v716
        %849 = vmatpush1.bf16.msra.mxu0 %v715
        %850 = vmatprep.subr.bf16.mxu0 %v720
        %851 = vmatpush1.bf16.msra.mxu0 %v719
        %852 = vmatprep.subr.bf16.mxu0 %v724
        %853 = vmatpush1.bf16.msra.mxu0 %v723
        %854 = vmatprep.subr.bf16.mxu0 %v728
        %855 = vmatpush1.bf16.msra.mxu0 %v727
        %856 = vmatprep.mubr.bf16.mxu0 %v432
        %857 = vmatmul.mubr.bf16.gmra.mrb[0].mxu0 %v431
        %v858 = vpop.f32.mrb[0].mxu0
        %v859 = vadd.f32 0.0, %v858
        %v860 = vpop.f32.mrb[0].mxu0
        %v861 = vadd.f32 0.0, %v860
        %v862 = vpop.f32.mrb[0].mxu0
        %v863 = vadd.f32 0.0, %v862
        %v864 = vpop.f32.mrb[0].mxu0
        %v865 = vadd.f32 0.0, %v864
        %866 = vmatprep.mubr.bf16.mxu0 %v435
        %867 = vmatmul.mubr.bf16.gmra.mrb[0].mxu0 %v434
        %v868 = vpop.f32.mrb[0].mxu0
        %v869 = vadd.f32 0.0, %v868
        %v870 = vpop.f32.mrb[0].mxu0
        %v871 = vadd.f32 0.0, %v870
        %v872 = vpop.f32.mrb[0].mxu0
        %v873 = vadd.f32 0.0, %v872
        %v874 = vpop.f32.mrb[0].mxu0
        %v875 = vadd.f32 0.0, %v874
        %876 = vmatprep.mubr.bf16.mxu0 %v438
        %877 = vmatmul.mubr.bf16.gmra.mrb[0].mxu0 %v437
        %v878 = vpop.f32.mrb[0].mxu0
        %v879 = vadd.f32 0.0, %v878
        %v880 = vpop.f32.mrb[0].mxu0
        %v881 = vadd.f32 0.0, %v880
        %v882 = vpop.f32.mrb[0].mxu0
        %v883 = vadd.f32 0.0, %v882
        %v884 = vpop.f32.mrb[0].mxu0
        %v885 = vadd.f32 0.0, %v884
        %886 = vmatprep.mubr.bf16.mxu0 %v441
        %887 = vmatmul.mubr.bf16.gmra.mrb[0].mxu0 %v440
        %v888 = vpop.f32.mrb[0].mxu0
        %v889 = vadd.f32 0.0, %v888
        %v890 = vpop.f32.mrb[0].mxu0
        %v891 = vadd.f32 0.0, %v890
        %v892 = vpop.f32.mrb[0].mxu0
        %v893 = vadd.f32 0.0, %v892
        %v894 = vpop.f32.mrb[0].mxu0
        %v895 = vadd.f32 0.0, %v894
        %896 = vdwg.mxu0
        %897 = vmatprep.subr.bf16.mxu0 %v732
        %898 = vmatpush1.bf16.msra.mxu0 %v731
        %899 = vmatprep.subr.bf16.mxu0 %v736
        %900 = vmatpush1.bf16.msra.mxu0 %v735
        %901 = vmatprep.subr.bf16.mxu0 0
        %902 = vmatpush1.bf16.msra.mxu0 0
        %903 = vmatprep.subr.bf16.mxu0 0
        %904 = vmatpush1.bf16.msra.mxu0 0
        %905 = vmatprep.subr.bf16.mxu0 0
        %906 = vmatpush1.bf16.msra.mxu0 0
        %907 = vmatprep.subr.bf16.mxu0 0
        %908 = vmatpush1.bf16.msra.mxu0 0
        %909 = vmatprep.subr.bf16.mxu0 0
        %910 = vmatpush1.bf16.msra.mxu0 0
        %911 = vmatprep.subr.bf16.mxu0 0
        %912 = vmatpush1.bf16.msra.mxu0 0
        %913 = vmatprep.subr.bf16.mxu0 0
        %914 = vmatpush1.bf16.msra.mxu0 0
        %915 = vmatprep.subr.bf16.mxu0 0
        %916 = vmatpush1.bf16.msra.mxu0 0
        %917 = vmatprep.subr.bf16.mxu0 0
        %918 = vmatpush1.bf16.msra.mxu0 0
        %919 = vmatprep.subr.bf16.mxu0 0
        %920 = vmatpush1.bf16.msra.mxu0 0
        %921 = vmatprep.subr.bf16.mxu0 0
        %922 = vmatpush1.bf16.msra.mxu0 0
        %923 = vmatprep.subr.bf16.mxu0 0
        %924 = vmatpush1.bf16.msra.mxu0 0
        %925 = vmatprep.subr.bf16.mxu0 0
        %926 = vmatpush1.bf16.msra.mxu0 0
        %927 = vmatprep.subr.bf16.mxu0 0
        %928 = vmatpush1.bf16.msra.mxu0 0
        %929 = vmatprep.mubr.bf16.mxu0 0
        %930 = vmatmul.mubr.bf16.gmra.mrb[0].mxu0 %v813
        %v931 = vpop.f32.mrb[0].mxu0
        %v932 = vadd.f32 %v859, %v931
        %v933 = vpop.f32.mrb[0].mxu0
        %v934 = vadd.f32 %v861, %v933
        %v935 = vpop.f32.mrb[0].mxu0
        %v936 = vadd.f32 %v863, %v935
        %v937 = vpop.f32.mrb[0].mxu0
        %v938 = vadd.f32 %v865, %v937
        %939 = vmatprep.mubr.bf16.mxu0 0
        %940 = vmatmul.mubr.bf16.gmra.mrb[0].mxu0 %v816
        %v941 = vpop.f32.mrb[0].mxu0
        %v942 = vadd.f32 %v869, %v941
        %v943 = vpop.f32.mrb[0].mxu0
        %v944 = vadd.f32 %v871, %v943
        %v945 = vpop.f32.mrb[0].mxu0
        %v946 = vadd.f32 %v873, %v945
        %v947 = vpop.f32.mrb[0].mxu0
        %v948 = vadd.f32 %v875, %v947
        %949 = vmatprep.mubr.bf16.mxu0 0
        %950 = vmatmul.mubr.bf16.gmra.mrb[0].mxu0 %v819
        %v951 = vpop.f32.mrb[0].mxu0
        %v952 = vadd.f32 %v879, %v951
        %v953 = vpop.f32.mrb[0].mxu0
        %v954 = vadd.f32 %v881, %v953
        %v955 = vpop.f32.mrb[0].mxu0
        %v956 = vadd.f32 %v883, %v955
        %v957 = vpop.f32.mrb[0].mxu0
        %v958 = vadd.f32 %v885, %v957
        %959 = vmatprep.mubr.bf16.mxu0 0
        %960 = vmatmul.mubr.bf16.gmra.mrb[0].mxu0 %v822
        %v961 = vpop.f32.mrb[0].mxu0
        %v962 = vadd.f32 %v889, %v961
        %v963 = vpop.f32.mrb[0].mxu0
        %v964 = vadd.f32 %v891, %v963
        %v965 = vpop.f32.mrb[0].mxu0
        %v966 = vadd.f32 %v893, %v965
        %v967 = vpop.f32.mrb[0].mxu0
        %v968 = vadd.f32 %v895, %v967
        %969 = vdwg.mxu0
        %970 = vmatprep.subr.bf16.mxu0 %v670
        %971 = vmatpush1.bf16.msra.mxu0 %v669
        %972 = vmatprep.subr.bf16.mxu0 %v674
        %973 = vmatpush1.bf16.msra.mxu0 %v673
        %974 = vmatprep.subr.bf16.mxu0 %v678
        %975 = vmatpush1.bf16.msra.mxu0 %v677
        %976 = vmatprep.subr.bf16.mxu0 %v682
        %977 = vmatpush1.bf16.msra.mxu0 %v681
        %978 = vmatprep.subr.bf16.mxu0 %v686
        %979 = vmatpush1.bf16.msra.mxu0 %v685
        %980 = vmatprep.subr.bf16.mxu0 %v690
        %981 = vmatpush1.bf16.msra.mxu0 %v689
        %982 = vmatprep.subr.bf16.mxu0 %v694
        %983 = vmatpush1.bf16.msra.mxu0 %v693
        %984 = vmatprep.subr.bf16.mxu0 %v698
        %985 = vmatpush1.bf16.msra.mxu0 %v697
        %986 = vmatprep.subr.bf16.mxu0 %v702
        %987 = vmatpush1.bf16.msra.mxu0 %v701
        %988 = vmatprep.subr.bf16.mxu0 %v706
        %989 = vmatpush1.bf16.msra.mxu0 %v705
        %990 = vmatprep.subr.bf16.mxu0 %v710
        %991 = vmatpush1.bf16.msra.mxu0 %v709
        %992 = vmatprep.subr.bf16.mxu0 %v714
        %993 = vmatpush1.bf16.msra.mxu0 %v713
        %994 = vmatprep.subr.bf16.mxu0 %v718
        %995 = vmatpush1.bf16.msra.mxu0 %v717
        %996 = vmatprep.subr.bf16.mxu0 %v722
        %997 = vmatpush1.bf16.msra.mxu0 %v721
        %998 = vmatprep.subr.bf16.mxu0 %v726
        %999 = vmatpush1.bf16.msra.mxu0 %v725
        %1000 = vmatprep.subr.bf16.mxu0 %v730
        %1001 = vmatpush1.bf16.msra.mxu0 %v729
        %1002 = vmatprep.mubr.bf16.mxu0 %v432
        %1003 = vmatmul.mubr.bf16.gmra.mrb[0].mxu0 %v431
        %v1004 = vpop.f32.mrb[0].mxu0
        %v1005 = vadd.f32 0.0, %v1004
        %v1006 = vpop.f32.mrb[0].mxu0
        %v1007 = vadd.f32 0.0, %v1006
        %v1008 = vpop.f32.mrb[0].mxu0
        %v1009 = vadd.f32 0.0, %v1008
        %v1010 = vpop.f32.mrb[0].mxu0
        %v1011 = vadd.f32 0.0, %v1010
        %1012 = vmatprep.mubr.bf16.mxu0 %v435
        %1013 = vmatmul.mubr.bf16.gmra.mrb[0].mxu0 %v434
        %v1014 = vpop.f32.mrb[0].mxu0
        %v1015 = vadd.f32 0.0, %v1014
        %v1016 = vpop.f32.mrb[0].mxu0
        %v1017 = vadd.f32 0.0, %v1016
        %v1018 = vpop.f32.mrb[0].mxu0
        %v1019 = vadd.f32 0.0, %v1018
        %v1020 = vpop.f32.mrb[0].mxu0
        %v1021 = vadd.f32 0.0, %v1020
        %1022 = vmatprep.mubr.bf16.mxu0 %v438
        %1023 = vmatmul.mubr.bf16.gmra.mrb[0].mxu0 %v437
        %v1024 = vpop.f32.mrb[0].mxu0
        %v1025 = vadd.f32 0.0, %v1024
        %v1026 = vpop.f32.mrb[0].mxu0
        %v1027 = vadd.f32 0.0, %v1026
        %v1028 = vpop.f32.mrb[0].mxu0
        %v1029 = vadd.f32 0.0, %v1028
        %v1030 = vpop.f32.mrb[0].mxu0
        %v1031 = vadd.f32 0.0, %v1030
        %1032 = vmatprep.mubr.bf16.mxu0 %v441
        %1033 = vmatmul.mubr.bf16.gmra.mrb[0].mxu0 %v440
        %v1034 = vpop.f32.mrb[0].mxu0
        %v1035 = vadd.f32 0.0, %v1034
        %v1036 = vpop.f32.mrb[0].mxu0
        %v1037 = vadd.f32 0.0, %v1036
        %v1038 = vpop.f32.mrb[0].mxu0
        %v1039 = vadd.f32 0.0, %v1038
        %v1040 = vpop.f32.mrb[0].mxu0
        %v1041 = vadd.f32 0.0, %v1040
        %1042 = vdwg.mxu0
        %1043 = vmatprep.subr.bf16.mxu0 %v734
        %1044 = vmatpush1.bf16.msra.mxu0 %v733
        %1045 = vmatprep.subr.bf16.mxu0 %v738
        %1046 = vmatpush1.bf16.msra.mxu0 %v737
        %1047 = vmatprep.subr.bf16.mxu0 0
        %1048 = vmatpush1.bf16.msra.mxu0 0
        %1049 = vmatprep.subr.bf16.mxu0 0
        %1050 = vmatpush1.bf16.msra.mxu0 0
        %1051 = vmatprep.subr.bf16.mxu0 0
        %1052 = vmatpush1.bf16.msra.mxu0 0
        %1053 = vmatprep.subr.bf16.mxu0 0
        %1054 = vmatpush1.bf16.msra.mxu0 0
        %1055 = vmatprep.subr.bf16.mxu0 0
        %1056 = vmatpush1.bf16.msra.mxu0 0
        %1057 = vmatprep.subr.bf16.mxu0 0
        %1058 = vmatpush1.bf16.msra.mxu0 0
        %1059 = vmatprep.subr.bf16.mxu0 0
        %1060 = vmatpush1.bf16.msra.mxu0 0
        %1061 = vmatprep.subr.bf16.mxu0 0
        %1062 = vmatpush1.bf16.msra.mxu0 0
        %1063 = vmatprep.subr.bf16.mxu0 0
        %1064 = vmatpush1.bf16.msra.mxu0 0
        %1065 = vmatprep.subr.bf16.mxu0 0
        %1066 = vmatpush1.bf16.msra.mxu0 0
        %1067 = vmatprep.subr.bf16.mxu0 0
        %1068 = vmatpush1.bf16.msra.mxu0 0
        %1069 = vmatprep.subr.bf16.mxu0 0
        %1070 = vmatpush1.bf16.msra.mxu0 0
        %1071 = vmatprep.subr.bf16.mxu0 0
        %1072 = vmatpush1.bf16.msra.mxu0 0
        %1073 = vmatprep.subr.bf16.mxu0 0
        %1074 = vmatpush1.bf16.msra.mxu0 0
        %1075 = vmatprep.mubr.bf16.mxu0 0
        %1076 = vmatmul.mubr.bf16.gmra.mrb[0].mxu0 %v813
        %v1077 = vpop.f32.mrb[0].mxu0
        %v1078 = vadd.f32 %v1005, %v1077
        %v1079 = vpop.f32.mrb[0].mxu0
        %v1080 = vadd.f32 %v1007, %v1079
        %v1081 = vpop.f32.mrb[0].mxu0
        %v1082 = vadd.f32 %v1009, %v1081
        %v1083 = vpop.f32.mrb[0].mxu0
        %v1084 = vadd.f32 %v1011, %v1083
        %1085 = vmatprep.mubr.bf16.mxu0 0
        %1086 = vmatmul.mubr.bf16.gmra.mrb[0].mxu0 %v816
        %v1087 = vpop.f32.mrb[0].mxu0
        %v1088 = vadd.f32 %v1015, %v1087
        %v1089 = vpop.f32.mrb[0].mxu0
        %v1090 = vadd.f32 %v1017, %v1089
        %v1091 = vpop.f32.mrb[0].mxu0
        %v1092 = vadd.f32 %v1019, %v1091
        %v1093 = vpop.f32.mrb[0].mxu0
        %v1094 = vadd.f32 %v1021, %v1093
        %1095 = vmatprep.mubr.bf16.mxu0 0
        %1096 = vmatmul.mubr.bf16.gmra.mrb[0].mxu0 %v819
        %v1097 = vpop.f32.mrb[0].mxu0
        %v1098 = vadd.f32 %v1025, %v1097
        %v1099 = vpop.f32.mrb[0].mxu0
        %v1100 = vadd.f32 %v1027, %v1099
        %v1101 = vpop.f32.mrb[0].mxu0
        %v1102 = vadd.f32 %v1029, %v1101
        %v1103 = vpop.f32.mrb[0].mxu0
        %v1104 = vadd.f32 %v1031, %v1103
        %1105 = vmatprep.mubr.bf16.mxu0 0
        %1106 = vmatmul.mubr.bf16.gmra.mrb[0].mxu0 %v822
        %v1107 = vpop.f32.mrb[0].mxu0
        %v1108 = vadd.f32 %v1035, %v1107
        %v1109 = vpop.f32.mrb[0].mxu0
        %v1110 = vadd.f32 %v1037, %v1109
        %v1111 = vpop.f32.mrb[0].mxu0
        %v1112 = vadd.f32 %v1039, %v1111
        %v1113 = vpop.f32.mrb[0].mxu0
        %v1114 = vadd.f32 %v1041, %v1113
        %1115 = vdwg.mxu0
        %v1116 = vmax.f32 %v932, 0.0
        %v1117 = vmax.f32 %v934, 0.0
        %v1118 = vmax.f32 %v1078, 0.0
        %v1119 = vmax.f32 %v1080, 0.0
        %v1120 = vmax.f32 %v936, 0.0
        %v1121 = vmax.f32 %v938, 0.0
        %v1122 = vmax.f32 %v1082, 0.0
        %v1123 = vmax.f32 %v1084, 0.0
        %v1124 = vmax.f32 %v942, 0.0
        %v1125 = vmax.f32 %v944, 0.0
        %v1126 = vmax.f32 %v1088, 0.0
        %v1127 = vmax.f32 %v1090, 0.0
        %v1128 = vmax.f32 %v946, 0.0
        %v1129 = vmax.f32 %v948, 0.0
        %v1130 = vmax.f32 %v1092, 0.0
        %v1131 = vmax.f32 %v1094, 0.0
        %v1132 = vmax.f32 %v952, 0.0
        %v1133 = vmax.f32 %v954, 0.0
        %v1134 = vmax.f32 %v1098, 0.0
        %v1135 = vmax.f32 %v1100, 0.0
        %v1136 = vmax.f32 %v956, 0.0
        %v1137 = vmax.f32 %v958, 0.0
        %v1138 = vmax.f32 %v1102, 0.0
        %v1139 = vmax.f32 %v1104, 0.0
        %v1140 = vmax.f32 %v962, 0.0
        %v1141 = vmax.f32 %v964, 0.0
        %v1142 = vmax.f32 %v1108, 0.0
        %v1143 = vmax.f32 %v1110, 0.0
        %v1144 = vmax.f32 %v966, 0.0
        %v1145 = vmax.f32 %v968, 0.0
        %v1146 = vmax.f32 %v1112, 0.0
        %v1147 = vmax.f32 %v1114, 0.0
        %v1148 = vpack.c.bf16 %v1120, %v1116
        %v1149 = vpack.c.bf16 %v1121, %v1117
        %v1150 = vpack.c.bf16 %v1122, %v1118
        %v1151 = vpack.c.bf16 %v1123, %v1119
        %v1152 = vpack.c.bf16 %v1128, %v1124
        %v1153 = vpack.c.bf16 %v1129, %v1125
        %v1154 = vpack.c.bf16 %v1130, %v1126
        %v1155 = vpack.c.bf16 %v1131, %v1127
        %v1156 = vpack.c.bf16 %v1136, %v1132
        %v1157 = vpack.c.bf16 %v1137, %v1133
        %v1158 = vpack.c.bf16 %v1138, %v1134
        %v1159 = vpack.c.bf16 %v1139, %v1135
        %v1160 = vpack.c.bf16 %v1144, %v1140
        %v1161 = vpack.c.bf16 %v1145, %v1141
        %v1162 = vpack.c.bf16 %v1146, %v1142
        %v1163 = vpack.c.bf16 %v1147, %v1143
        %v1180 = vunpack.c.l.b16 %v1148
        %v1181 = vunpack.c.l.b16 %v1149
        %v1182 = vunpack.c.l.b16 %v1150
        %v1183 = vunpack.c.l.b16 %v1151
        %v1184 = vunpack.c.h.b16 %v1148
        %v1185 = vunpack.c.h.b16 %v1149
        %v1186 = vunpack.c.h.b16 %v1150
        %v1187 = vunpack.c.h.b16 %v1151
        %v1188 = vunpack.c.l.b16 %v1152
        %v1189 = vunpack.c.l.b16 %v1153
        %v1190 = vunpack.c.l.b16 %v1154
        %v1191 = vunpack.c.l.b16 %v1155
        %v1192 = vunpack.c.h.b16 %v1152
        %v1193 = vunpack.c.h.b16 %v1153
        %v1194 = vunpack.c.h.b16 %v1154
        %v1195 = vunpack.c.h.b16 %v1155
        %v1196 = vunpack.c.l.b16 %v1156
        %v1197 = vunpack.c.l.b16 %v1157
        %v1198 = vunpack.c.l.b16 %v1158
        %v1199 = vunpack.c.l.b16 %v1159
        %v1200 = vunpack.c.h.b16 %v1156
        %v1201 = vunpack.c.h.b16 %v1157
        %v1202 = vunpack.c.h.b16 %v1158
        %v1203 = vunpack.c.h.b16 %v1159
        %v1204 = vunpack.c.l.b16 %v1160
        %v1205 = vunpack.c.l.b16 %v1161
        %v1206 = vunpack.c.l.b16 %v1162
        %v1207 = vunpack.c.l.b16 %v1163
        %v1208 = vunpack.c.h.b16 %v1160
        %v1209 = vunpack.c.h.b16 %v1161
        %v1210 = vunpack.c.h.b16 %v1162
        %v1211 = vunpack.c.h.b16 %v1163
        %v1212 = vpack.c.b16 %v1181, %v1180
        %v1213 = vpack.c.b16 %v1183, %v1182
        %v1214 = vpack.c.b16 %v1185, %v1184
        %v1215 = vpack.c.b16 %v1187, %v1186
        %v1216 = vpack.c.b16 %v1189, %v1188
        %v1217 = vpack.c.b16 %v1191, %v1190
        %v1218 = vpack.c.b16 %v1193, %v1192
        %v1219 = vpack.c.b16 %v1195, %v1194
        %v1220 = vpack.c.b16 %v1197, %v1196
        %v1221 = vpack.c.b16 %v1199, %v1198
        %v1222 = vpack.c.b16 %v1201, %v1200
        %v1223 = vpack.c.b16 %v1203, %v1202
        %v1224 = vpack.c.b16 %v1205, %v1204
        %v1225 = vpack.c.b16 %v1207, %v1206
        %v1226 = vpack.c.b16 %v1209, %v1208
        %v1227 = vpack.c.b16 %v1211, %v1210
        %1244 = vst [vmem:[%s299] sm:$0xff] %v1212
        %1245 = vst [vmem:[%s299 + $0x8] sm:$0xff] %v1213
        %1246 = vst [vmem:[%s299 + $0x10] sm:$0xff] %v1214
        %1247 = vst [vmem:[%s299 + $0x18] sm:$0xff] %v1215
        %1248 = vst [vmem:[%s299 + $0x20] sm:$0xff] %v1216
        %1249 = vst [vmem:[%s299 + $0x28] sm:$0xff] %v1217
        %1250 = vst [vmem:[%s299 + $0x30] sm:$0xff] %v1218
        %1251 = vst [vmem:[%s299 + $0x38] sm:$0xff] %v1219
        %1252 = vst [vmem:[%s299 + $0x40] sm:$0xff] %v1220
        %1253 = vst [vmem:[%s299 + $0x48] sm:$0xff] %v1221
        %1254 = vst [vmem:[%s299 + $0x50] sm:$0xff] %v1222
        %1255 = vst [vmem:[%s299 + $0x58] sm:$0xff] %v1223
        %1256 = vst [vmem:[%s299 + $0x60] sm:$0xff] %v1224
        %1257 = vst [vmem:[%s299 + $0x68] sm:$0xff] %v1225
        %1258 = vst [vmem:[%s299 + $0x70] sm:$0xff] %v1226
        %1259 = vst [vmem:[%s299 + $0x78] sm:$0xff] %v1227
        %s1260 = sand.u32 %s68, 1
        %s1261 = sand.u32 %s68, 1
        %s1262 = smul.addr %s1261, 128
        %s1263 = scalar_lea.vmem [#allocation3], %s1262
        // Predicated region
        $region52: #{_lambda_.8} parent=46 // pred_check
          %p1264 = pneg %p78
        $region53: #{_lambda_.8} parent=46 // pred_check_branch
          %1266 = sbr.rel (%p1264) target = $region55
        $region54: #{_lambda_.8} parent=46 // pred_region
          %s1267 = smul.u32 4, %s13
          %s1268 = smul.addr %s1267, 4
          %s1269 = scalar_lea.vmem %s2, %s1268
          // Predicated region
          $region56: #{_lambda_.8} parent=54 // pred_check
            _
          $region57: #{_lambda_.8} parent=54 // pred_check_branch
            %1271 = sbr.rel (0) target = $region59
          $region58: #{_lambda_.8} parent=54 // pred_region
            // Predicated region
            $region60: #{_lambda_.8} parent=58 // pred_check
              _
            $region61: #{_lambda_.8} parent=58 // pred_check_branch
              %1273 = sbr.rel (0) target = $region63
            $region62: #{_lambda_.8} parent=58 // pred_region
              loop: start=0, step=1, limit=1
              $region64: #{_lambda_.8} parent=62 // loop_pre_header
                _
              $region65: #{_lambda_.8} parent=62 // loop_header
                %s1275 = sphi 0, %s1279
                %p1276 = scmp.ge.s32.totalorder %s1275, 1
                %s1280 = sphi %s1263, %s1263
                %s1281 = sphi %s1269, %s1269
              $region66: #{_lambda_.8} parent=62 // loop_header_branch
                %1278 = sbr.rel (%p1276) target = $region70
              $region67: #{_lambda_.8} parent=62 // loop_body
                %v1282 = vld [vmem:[%s1280] sm:$0xff]
                %1283 = vst [vmem:[%s1281] sm:$0xff] %v1282
                %v1284 = vld [vmem:[%s1280 + $0x8] sm:$0xff]
                %1285 = vst [vmem:[%s1281 + $0x8] sm:$0xff] %v1284
                %v1286 = vld [vmem:[%s1280 + $0x10] sm:$0xff]
                %1287 = vst [vmem:[%s1281 + $0x30] sm:$0xff] %v1286
                %v1288 = vld [vmem:[%s1280 + $0x18] sm:$0xff]
                %1289 = vst [vmem:[%s1281 + $0x38] sm:$0xff] %v1288
                %v1290 = vld [vmem:[%s1280 + $0x20] sm:$0xff]
                %1291 = vst [vmem:[%s1281 + $0x60] sm:$0xff] %v1290
                %v1292 = vld [vmem:[%s1280 + $0x28] sm:$0xff]
                %1293 = vst [vmem:[%s1281 + $0x68] sm:$0xff] %v1292
                %v1294 = vld [vmem:[%s1280 + $0x30] sm:$0xff]
                %1295 = vst [vmem:[%s1281 + $0x90] sm:$0xff] %v1294
                %v1296 = vld [vmem:[%s1280 + $0x38] sm:$0xff]
                %1297 = vst [vmem:[%s1281 + $0x98] sm:$0xff] %v1296
                %v1298 = vld [vmem:[%s1280 + $0x40] sm:$0xff]
                %1299 = vst [vmem:[%s1281 + $0xc0] sm:$0xff] %v1298
                %v1300 = vld [vmem:[%s1280 + $0x48] sm:$0xff]
                %1301 = vst [vmem:[%s1281 + $0xc8] sm:$0xff] %v1300
                %v1302 = vld [vmem:[%s1280 + $0x50] sm:$0xff]
                %1303 = vst [vmem:[%s1281 + $0xf0] sm:$0xff] %v1302
                %v1304 = vld [vmem:[%s1280 + $0x58] sm:$0xff]
                %1305 = vst [vmem:[%s1281 + $0xf8] sm:$0xff] %v1304
                %v1306 = vld [vmem:[%s1280 + $0x60] sm:$0xff]
                %1307 = vst [vmem:[%s1281 + $0x120] sm:$0xff] %v1306
                %v1308 = vld [vmem:[%s1280 + $0x68] sm:$0xff]
                %1309 = vst [vmem:[%s1281 + $0x128] sm:$0xff] %v1308
                %v1310 = vld [vmem:[%s1280 + $0x70] sm:$0xff]
                %1311 = vst [vmem:[%s1281 + $0x150] sm:$0xff] %v1310
                %v1312 = vld [vmem:[%s1280 + $0x78] sm:$0xff]
                %1313 = vst [vmem:[%s1281 + $0x158] sm:$0xff] %v1312
              $region68: #{_lambda_.8} parent=62 // loop_footer
                %s1279 = sadd.s32 1, %s1275
              $region69: #{_lambda_.8} parent=62 // loop_footer_branch
                %1274 = sbr.rel target = $region65
              $region70: #{_lambda_.8} parent=62 // loop_exit
                _
            $region63: #{_lambda_.8} parent=58 // pred_fallthru
              _
            // Predicated region
            $region71: #{_lambda_.8} parent=58 // pred_check
              _
            $region72: #{_lambda_.8} parent=58 // pred_check_branch
              %1315 = sbr.rel target = $region74
            $region73: #{_lambda_.8} parent=58 // pred_region
              _
            $region74: #{_lambda_.8} parent=58 // pred_fallthru
              _
          $region59: #{_lambda_.8} parent=54 // pred_fallthru
            _
          %1316 = vnop
        $region55: #{_lambda_.8} parent=46 // pred_fallthru
          _
      $region47: #{_lambda_.8} parent=5 // pred_fallthru
        _
      %p1317 = scmp.le.s32.totalorder 2, %s8
      // Predicated region
      $region75: #{_lambda_.8} parent=5 // pred_check
        %p1318 = pneg %p1317
      $region76: #{_lambda_.8} parent=5 // pred_check_branch
        %1320 = sbr.rel (%p1318) target = $region78
      $region77: #{_lambda_.8} parent=5 // pred_region
        %s1321 = ssub.s32 %s8, 2
        // Predicated region
        $region79: #{_lambda_.8} parent=77 // pred_check
          %p1322 = pneg %p84
        $region80: #{_lambda_.8} parent=77 // pred_check_branch
          %1324 = sbr.rel (%p1322) target = $region82
        $region81: #{_lambda_.8} parent=77 // pred_region
          %s1325 = sand.u32 %s69, 1
          %s1326 = sand.u32 %s69, 1
          %s1327 = smul.addr %s1326, 128
          %s1328 = scalar_lea.vmem [#allocation3], %s1327
        $region82: #{_lambda_.8} parent=77 // pred_fallthru
          _
      $region78: #{_lambda_.8} parent=5 // pred_fallthru
        _
    $region6: #{_lambda_.8} parent=1 // loop_footer
      %s12 = sadd.s32 1, %s8
    $region7: #{_lambda_.8} parent=1 // loop_footer_branch
      %7 = sbr.rel target = $region3
    $region8: #{_lambda_.8} parent=1 // loop_exit
      _

// kernel: _lambda_.9
$region0: #{_lambda_.9}
  #allocation0 [shape = 'u32[]', space=smem, size = 0x4, offset = 0x4, fixed_abs, tag = 'smem constant byte address 0x4 - core index']
  #allocation1 [shape = 'u32[144,128]{1,0:T(1,128)}', space=vmem, size = 0x12000, scoped, tag = 'internal scratch']
  %s0 = inlined_call_operand.vmem [shape: bf16[128,576], index: 0, kind: input, shape index: {}]
  %s1 = inlined_call_operand.vmem [shape: bf16[576,1024], index: 1, kind: input, shape index: {}]
  %s2 = inlined_call_operand.vmem [shape: bf16[128,1024], index: 2, kind: output, shape index: {}]
  %s3 = sld [smem:[#allocation0]]
  $region83: #{_lambda_.9} parent=0
    _
  %s5 = ssub.s32 1, %s3
  %s6 = scalar_select 0, %s5, %s3
  $region1: #{_lambda_.9} parent=0
    #allocation2 [shape = 'u8[1179648]{0}', space=vmem, size = 0x120000, scoped, tag = 'input window, operand 1']
    #allocation3 [shape = 'u8[262144]{0}', space=vmem, size = 0x40000, scoped, tag = 'output window, operand 0']
    loop: start=0, step=1, limit=4
    $region2: #{_lambda_.9} parent=1 // loop_pre_header
      _
    $region3: #{_lambda_.9} parent=1 // loop_header
      %s8 = sphi 0, %s12
      %p9 = scmp.ge.s32.totalorder %s8, 4
      %s16 = sphi 0, %s16
      %s18 = sphi 0, %s16
      %s19 = sphi 0, %s18
      %s33 = sphi 0, %s19
      %s39 = sphi 0, %s41
      %s42 = sphi 0, %s39
      %s43 = sphi 0, %s42
      %s59 = sphi 0, %s43
      %s65 = sphi 0, %s67
      %s68 = sphi 0, %s65
      %s69 = sphi 0, %s68
      %s85 = sphi 0, %s69
    $region4: #{_lambda_.9} parent=1 // loop_header_branch
      %11 = sbr.rel (%p9) target = $region8
    $region5: #{_lambda_.9} parent=1 // loop_body
      %s13 = ssub.s32 %s8, 1
      %s14 = ssub.s32 %s8, 2
      %s15 = sadd.s32 %s8, 1
      %s17 = sadd.s32 %s16, 1
      %p20 = scmp.eq.s32.totalorder %s8, 1
      %p21 = scmp.ne.s32.totalorder %s16, %s18
      %p22 = scmp.eq.s32.totalorder %s8, 0
      %p23 = por %p21, %p22
      %p24 = scmp.ne.s32.totalorder %s16, %s18
      %p25 = scmp.eq.s32.totalorder %s13, 1
      %p26 = por %p24, %p25
      %p27 = scmp.ne.s32.totalorder %s18, %s19
      %p28 = scmp.eq.s32.totalorder %s13, 0
      %p29 = por %p27, %p28
      %p30 = scmp.ne.s32.totalorder %s18, %s19
      %p31 = scmp.eq.s32.totalorder %s14, 1
      %p32 = por %p30, %p31
      %p34 = scmp.ne.s32.totalorder %s19, %s33
      %p35 = scmp.eq.s32.totalorder %s14, 0
      %p36 = por %p34, %p35
      %s37 = ssub.s32 %s8, %s15
      %p38 = scmp.eq.s32.totalorder %s37, 0
      %s40 = sadd.s32 %s39, 1
      %s41 = scalar_select %p38, %s39, %s40
      %p44 = pneg %p38
      %p45 = scmp.eq.s32.totalorder %s8, 1
      %p46 = por %p44, %p45
      %p47 = scmp.ne.s32.totalorder %s39, %s42
      %p48 = scmp.eq.s32.totalorder %s8, 0
      %p49 = por %p47, %p48
      %p50 = scmp.ne.s32.totalorder %s39, %s42
      %p51 = scmp.eq.s32.totalorder %s13, 1
      %p52 = por %p50, %p51
      %p53 = scmp.ne.s32.totalorder %s42, %s43
      %p54 = scmp.eq.s32.totalorder %s13, 0
      %p55 = por %p53, %p54
      %p56 = scmp.ne.s32.totalorder %s42, %s43
      %p57 = scmp.eq.s32.totalorder %s14, 1
      %p58 = por %p56, %p57
      %p60 = scmp.ne.s32.totalorder %s43, %s59
      %p61 = scmp.eq.s32.totalorder %s14, 0
      %p62 = por %p60, %p61
      %s63 = ssub.s32 %s8, %s15
      %p64 = scmp.eq.s32.totalorder %s63, 0
      %s66 = sadd.s32 %s65, 1
      %s67 = scalar_select %p64, %s65, %s66
      %p70 = pneg %p64
      %p71 = scmp.eq.s32.totalorder %s8, 1
      %p72 = por %p70, %p71
      %p73 = scmp.ne.s32.totalorder %s65, %s68
      %p74 = scmp.eq.s32.totalorder %s8, 0
      %p75 = por %p73, %p74
      %p76 = scmp.ne.s32.totalorder %s65, %s68
      %p77 = scmp.eq.s32.totalorder %s13, 1
      %p78 = por %p76, %p77
      %p79 = scmp.ne.s32.totalorder %s68, %s69
      %p80 = scmp.eq.s32.totalorder %s13, 0
      %p81 = por %p79, %p80
      %p82 = scmp.ne.s32.totalorder %s68, %s69
      %p83 = scmp.eq.s32.totalorder %s14, 1
      %p84 = por %p82, %p83
      %p86 = scmp.ne.s32.totalorder %s69, %s85
      %p87 = scmp.eq.s32.totalorder %s14, 0
      %p88 = por %p86, %p87
      %p89 = scmp.le.s32.totalorder 1, %s8
      %p90 = scmp.lt.s32.totalorder %s8, 3
      %p91 = pnand %p89, %p90
      %p92 = pneg %p91
      // Predicated region
      $region9: #{_lambda_.9} parent=5 // pred_check
        _
      $region10: #{_lambda_.9} parent=5 // pred_check_branch
        %94 = sbr.rel (%p91) target = $region12
      $region11: #{_lambda_.9} parent=5 // pred_region
        %s95 = ssub.s32 %s8, 1
        // Predicated region
        $region13: #{_lambda_.9} parent=11 // pred_check
          %p96 = pneg %p29
        $region14: #{_lambda_.9} parent=11 // pred_check_branch
          %98 = sbr.rel (%p96) target = $region16
        $region15: #{_lambda_.9} parent=11 // pred_region
          _
        $region16: #{_lambda_.9} parent=11 // pred_fallthru
          _
      $region12: #{_lambda_.9} parent=5 // pred_fallthru
        _
      %p99 = scmp.lt.s32.totalorder %s8, 2
      // Predicated region
      $region17: #{_lambda_.9} parent=5 // pred_check
        %p100 = pneg %p99
      $region18: #{_lambda_.9} parent=5 // pred_check_branch
        %102 = sbr.rel (%p100) target = $region20
      $region19: #{_lambda_.9} parent=5 // pred_region
        // Predicated region
        $region21: #{_lambda_.9} parent=19 // pred_check
          %p103 = pneg %p49
        $region22: #{_lambda_.9} parent=19 // pred_check_branch
          %105 = sbr.rel (%p103) target = $region24
        $region23: #{_lambda_.9} parent=19 // pred_region
          %s106 = sand.u32 %s39, 1
          %s107 = sand.u32 %s39, 1
          %s108 = smul.addr %s107, 1152
          %s109 = scalar_lea.vmem [#allocation2], %s108
          %s110 = smul.u32 4, %s8
          %s111 = smul.addr %s110, 4
          %s112 = scalar_lea.vmem %s1, %s111
          // Predicated region
          $region25: #{_lambda_.9} parent=23 // pred_check
            _
          $region26: #{_lambda_.9} parent=23 // pred_check_branch
            %114 = sbr.rel (0) target = $region28
          $region27: #{_lambda_.9} parent=23 // pred_region
            // Predicated region
            $region29: #{_lambda_.9} parent=27 // pred_check
              _
            $region30: #{_lambda_.9} parent=27 // pred_check_branch
              %116 = sbr.rel (0) target = $region32
            $region31: #{_lambda_.9} parent=27 // pred_region
              loop: start=0, step=1, limit=1
              $region33: #{_lambda_.9} parent=31 // loop_pre_header
                _
              $region34: #{_lambda_.9} parent=31 // loop_header
                %s118 = sphi 0, %s122
                %p119 = scmp.ge.s32.totalorder %s118, 1
                %s123 = sphi %s112, %s112
                %s124 = sphi %s109, %s109
              $region35: #{_lambda_.9} parent=31 // loop_header_branch
                %121 = sbr.rel (%p119) target = $region39
              $region36: #{_lambda_.9} parent=31 // loop_body
                %v125 = vld [vmem:[%s123] sm:$0xff]
                %126 = vst [vmem:[%s124] sm:$0xff] %v125
                %v127 = vld [vmem:[%s123 + $0x8] sm:$0xff]
                %128 = vst [vmem:[%s124 + $0x8] sm:$0xff] %v127
                %v129 = vld [vmem:[%s123 + $0x20] sm:$0xff]
                %130 = vst [vmem:[%s124 + $0x10] sm:$0xff] %v129
                %v131 = vld [vmem:[%s123 + $0x28] sm:$0xff]
                %132 = vst [vmem:[%s124 + $0x18] sm:$0xff] %v131
                %v133 = vld [vmem:[%s123 + $0x40] sm:$0xff]
                %134 = vst [vmem:[%s124 + $0x20] sm:$0xff] %v133
                %v135 = vld [vmem:[%s123 + $0x48] sm:$0xff]
                %136 = vst [vmem:[%s124 + $0x28] sm:$0xff] %v135
                %v137 = vld [vmem:[%s123 + $0x60] sm:$0xff]
                %138 = vst [vmem:[%s124 + $0x30] sm:$0xff] %v137
                %v139 = vld [vmem:[%s123 + $0x68] sm:$0xff]
                %140 = vst [vmem:[%s124 + $0x38] sm:$0xff] %v139
                %v141 = vld [vmem:[%s123 + $0x80] sm:$0xff]
                %142 = vst [vmem:[%s124 + $0x40] sm:$0xff] %v141
                %v143 = vld [vmem:[%s123 + $0x88] sm:$0xff]
                %144 = vst [vmem:[%s124 + $0x48] sm:$0xff] %v143
                %v145 = vld [vmem:[%s123 + $0xa0] sm:$0xff]
                %146 = vst [vmem:[%s124 + $0x50] sm:$0xff] %v145
                %v147 = vld [vmem:[%s123 + $0xa8] sm:$0xff]
                %148 = vst [vmem:[%s124 + $0x58] sm:$0xff] %v147
                %v149 = vld [vmem:[%s123 + $0xc0] sm:$0xff]
                %150 = vst [vmem:[%s124 + $0x60] sm:$0xff] %v149
                %v151 = vld [vmem:[%s123 + $0xc8] sm:$0xff]
                %152 = vst [vmem:[%s124 + $0x68] sm:$0xff] %v151
                %v153 = vld [vmem:[%s123 + $0xe0] sm:$0xff]
                %154 = vst [vmem:[%s124 + $0x70] sm:$0xff] %v153
                %v155 = vld [vmem:[%s123 + $0xe8] sm:$0xff]
                %156 = vst [vmem:[%s124 + $0x78] sm:$0xff] %v155
                %v157 = vld [vmem:[%s123 + $0x100] sm:$0xff]
                %158 = vst [vmem:[%s124 + $0x80] sm:$0xff] %v157
                %v159 = vld [vmem:[%s123 + $0x108] sm:$0xff]
                %160 = vst [vmem:[%s124 + $0x88] sm:$0xff] %v159
                %v161 = vld [vmem:[%s123 + $0x120] sm:$0xff]
                %162 = vst [vmem:[%s124 + $0x90] sm:$0xff] %v161
                %v163 = vld [vmem:[%s123 + $0x128] sm:$0xff]
                %164 = vst [vmem:[%s124 + $0x98] sm:$0xff] %v163
                %v165 = vld [vmem:[%s123 + $0x140] sm:$0xff]
                %166 = vst [vmem:[%s124 + $0xa0] sm:$0xff] %v165
                %v167 = vld [vmem:[%s123 + $0x148] sm:$0xff]
                %168 = vst [vmem:[%s124 + $0xa8] sm:$0xff] %v167
                %v169 = vld [vmem:[%s123 + $0x160] sm:$0xff]
                %170 = vst [vmem:[%s124 + $0xb0] sm:$0xff] %v169
                %v171 = vld [vmem:[%s123 + $0x168] sm:$0xff]
                %172 = vst [vmem:[%s124 + $0xb8] sm:$0xff] %v171
                %v173 = vld [vmem:[%s123 + $0x180] sm:$0xff]
                %174 = vst [vmem:[%s124 + $0xc0] sm:$0xff] %v173
                %v175 = vld [vmem:[%s123 + $0x188] sm:$0xff]
                %176 = vst [vmem:[%s124 + $0xc8] sm:$0xff] %v175
                %v177 = vld [vmem:[%s123 + $0x1a0] sm:$0xff]
                %178 = vst [vmem:[%s124 + $0xd0] sm:$0xff] %v177
                %v179 = vld [vmem:[%s123 + $0x1a8] sm:$0xff]
                %180 = vst [vmem:[%s124 + $0xd8] sm:$0xff] %v179
                %v181 = vld [vmem:[%s123 + $0x1c0] sm:$0xff]
                %182 = vst [vmem:[%s124 + $0xe0] sm:$0xff] %v181
                %v183 = vld [vmem:[%s123 + $0x1c8] sm:$0xff]
                %184 = vst [vmem:[%s124 + $0xe8] sm:$0xff] %v183
                %v185 = vld [vmem:[%s123 + $0x1e0] sm:$0xff]
                %186 = vst [vmem:[%s124 + $0xf0] sm:$0xff] %v185
                %v187 = vld [vmem:[%s123 + $0x1e8] sm:$0xff]
                %188 = vst [vmem:[%s124 + $0xf8] sm:$0xff] %v187
                %v189 = vld [vmem:[%s123 + $0x200] sm:$0xff]
                %190 = vst [vmem:[%s124 + $0x100] sm:$0xff] %v189
                %v191 = vld [vmem:[%s123 + $0x208] sm:$0xff]
                %192 = vst [vmem:[%s124 + $0x108] sm:$0xff] %v191
                %v193 = vld [vmem:[%s123 + $0x220] sm:$0xff]
                %194 = vst [vmem:[%s124 + $0x110] sm:$0xff] %v193
                %v195 = vld [vmem:[%s123 + $0x228] sm:$0xff]
                %196 = vst [vmem:[%s124 + $0x118] sm:$0xff] %v195
                %v197 = vld [vmem:[%s123 + $0x240] sm:$0xff]
                %198 = vst [vmem:[%s124 + $0x120] sm:$0xff] %v197
                %v199 = vld [vmem:[%s123 + $0x248] sm:$0xff]
                %200 = vst [vmem:[%s124 + $0x128] sm:$0xff] %v199
                %v201 = vld [vmem:[%s123 + $0x260] sm:$0xff]
                %202 = vst [vmem:[%s124 + $0x130] sm:$0xff] %v201
                %v203 = vld [vmem:[%s123 + $0x268] sm:$0xff]
                %204 = vst [vmem:[%s124 + $0x138] sm:$0xff] %v203
                %v205 = vld [vmem:[%s123 + $0x280] sm:$0xff]
                %206 = vst [vmem:[%s124 + $0x140] sm:$0xff] %v205
                %v207 = vld [vmem:[%s123 + $0x288] sm:$0xff]
                %208 = vst [vmem:[%s124 + $0x148] sm:$0xff] %v207
                %v209 = vld [vmem:[%s123 + $0x2a0] sm:$0xff]
                %210 = vst [vmem:[%s124 + $0x150] sm:$0xff] %v209
                %v211 = vld [vmem:[%s123 + $0x2a8] sm:$0xff]
                %212 = vst [vmem:[%s124 + $0x158] sm:$0xff] %v211
                %v213 = vld [vmem:[%s123 + $0x2c0] sm:$0xff]
                %214 = vst [vmem:[%s124 + $0x160] sm:$0xff] %v213
                %v215 = vld [vmem:[%s123 + $0x2c8] sm:$0xff]
                %216 = vst [vmem:[%s124 + $0x168] sm:$0xff] %v215
                %v217 = vld [vmem:[%s123 + $0x2e0] sm:$0xff]
                %218 = vst [vmem:[%s124 + $0x170] sm:$0xff] %v217
                %v219 = vld [vmem:[%s123 + $0x2e8] sm:$0xff]
                %220 = vst [vmem:[%s124 + $0x178] sm:$0xff] %v219
                %v221 = vld [vmem:[%s123 + $0x300] sm:$0xff]
                %222 = vst [vmem:[%s124 + $0x180] sm:$0xff] %v221
                %v223 = vld [vmem:[%s123 + $0x308] sm:$0xff]
                %224 = vst [vmem:[%s124 + $0x188] sm:$0xff] %v223
                %v225 = vld [vmem:[%s123 + $0x320] sm:$0xff]
                %226 = vst [vmem:[%s124 + $0x190] sm:$0xff] %v225
                %v227 = vld [vmem:[%s123 + $0x328] sm:$0xff]
                %228 = vst [vmem:[%s124 + $0x198] sm:$0xff] %v227
                %v229 = vld [vmem:[%s123 + $0x340] sm:$0xff]
                %230 = vst [vmem:[%s124 + $0x1a0] sm:$0xff] %v229
                %v231 = vld [vmem:[%s123 + $0x348] sm:$0xff]
                %232 = vst [vmem:[%s124 + $0x1a8] sm:$0xff] %v231
                %v233 = vld [vmem:[%s123 + $0x360] sm:$0xff]
                %234 = vst [vmem:[%s124 + $0x1b0] sm:$0xff] %v233
                %v235 = vld [vmem:[%s123 + $0x368] sm:$0xff]
                %236 = vst [vmem:[%s124 + $0x1b8] sm:$0xff] %v235
                %v237 = vld [vmem:[%s123 + $0x380] sm:$0xff]
                %238 = vst [vmem:[%s124 + $0x1c0] sm:$0xff] %v237
                %v239 = vld [vmem:[%s123 + $0x388] sm:$0xff]
                %240 = vst [vmem:[%s124 + $0x1c8] sm:$0xff] %v239
                %v241 = vld [vmem:[%s123 + $0x3a0] sm:$0xff]
                %242 = vst [vmem:[%s124 + $0x1d0] sm:$0xff] %v241
                %v243 = vld [vmem:[%s123 + $0x3a8] sm:$0xff]
                %244 = vst [vmem:[%s124 + $0x1d8] sm:$0xff] %v243
                %v245 = vld [vmem:[%s123 + $0x3c0] sm:$0xff]
                %246 = vst [vmem:[%s124 + $0x1e0] sm:$0xff] %v245
                %v247 = vld [vmem:[%s123 + $0x3c8] sm:$0xff]
                %248 = vst [vmem:[%s124 + $0x1e8] sm:$0xff] %v247
                %v249 = vld [vmem:[%s123 + $0x3e0] sm:$0xff]
                %250 = vst [vmem:[%s124 + $0x1f0] sm:$0xff] %v249
                %v251 = vld [vmem:[%s123 + $0x3e8] sm:$0xff]
                %252 = vst [vmem:[%s124 + $0x1f8] sm:$0xff] %v251
                %v253 = vld [vmem:[%s123 + $0x400] sm:$0xff]
                %254 = vst [vmem:[%s124 + $0x200] sm:$0xff] %v253
                %v255 = vld [vmem:[%s123 + $0x408] sm:$0xff]
                %256 = vst [vmem:[%s124 + $0x208] sm:$0xff] %v255
                %v257 = vld [vmem:[%s123 + $0x420] sm:$0xff]
                %258 = vst [vmem:[%s124 + $0x210] sm:$0xff] %v257
                %v259 = vld [vmem:[%s123 + $0x428] sm:$0xff]
                %260 = vst [vmem:[%s124 + $0x218] sm:$0xff] %v259
                %v261 = vld [vmem:[%s123 + $0x440] sm:$0xff]
                %262 = vst [vmem:[%s124 + $0x220] sm:$0xff] %v261
                %v263 = vld [vmem:[%s123 + $0x448] sm:$0xff]
                %264 = vst [vmem:[%s124 + $0x228] sm:$0xff] %v263
                %v265 = vld [vmem:[%s123 + $0x460] sm:$0xff]
                %266 = vst [vmem:[%s124 + $0x230] sm:$0xff] %v265
                %v267 = vld [vmem:[%s123 + $0x468] sm:$0xff]
                %268 = vst [vmem:[%s124 + $0x238] sm:$0xff] %v267
                %v269 = vld [vmem:[%s123 + $0x480] sm:$0xff]
                %270 = vst [vmem:[%s124 + $0x240] sm:$0xff] %v269
                %v271 = vld [vmem:[%s123 + $0x488] sm:$0xff]
                %272 = vst [vmem:[%s124 + $0x248] sm:$0xff] %v271
                %v273 = vld [vmem:[%s123 + $0x4a0] sm:$0xff]
                %274 = vst [vmem:[%s124 + $0x250] sm:$0xff] %v273
                %v275 = vld [vmem:[%s123 + $0x4a8] sm:$0xff]
                %276 = vst [vmem:[%s124 + $0x258] sm:$0xff] %v275
                %v277 = vld [vmem:[%s123 + $0x4c0] sm:$0xff]
                %278 = vst [vmem:[%s124 + $0x260] sm:$0xff] %v277
                %v279 = vld [vmem:[%s123 + $0x4c8] sm:$0xff]
                %280 = vst [vmem:[%s124 + $0x268] sm:$0xff] %v279
                %v281 = vld [vmem:[%s123 + $0x4e0] sm:$0xff]
                %282 = vst [vmem:[%s124 + $0x270] sm:$0xff] %v281
                %v283 = vld [vmem:[%s123 + $0x4e8] sm:$0xff]
                %284 = vst [vmem:[%s124 + $0x278] sm:$0xff] %v283
                %v285 = vld [vmem:[%s123 + $0x500] sm:$0xff]
                %286 = vst [vmem:[%s124 + $0x280] sm:$0xff] %v285
                %v287 = vld [vmem:[%s123 + $0x508] sm:$0xff]
                %288 = vst [vmem:[%s124 + $0x288] sm:$0xff] %v287
                %v289 = vld [vmem:[%s123 + $0x520] sm:$0xff]
                %290 = vst [vmem:[%s124 + $0x290] sm:$0xff] %v289
                %v291 = vld [vmem:[%s123 + $0x528] sm:$0xff]
                %292 = vst [vmem:[%s124 + $0x298] sm:$0xff] %v291
                %v293 = vld [vmem:[%s123 + $0x540] sm:$0xff]
                %294 = vst [vmem:[%s124 + $0x2a0] sm:$0xff] %v293
                %v295 = vld [vmem:[%s123 + $0x548] sm:$0xff]
                %296 = vst [vmem:[%s124 + $0x2a8] sm:$0xff] %v295
                %v297 = vld [vmem:[%s123 + $0x560] sm:$0xff]
                %298 = vst [vmem:[%s124 + $0x2b0] sm:$0xff] %v297
                %v299 = vld [vmem:[%s123 + $0x568] sm:$0xff]
                %300 = vst [vmem:[%s124 + $0x2b8] sm:$0xff] %v299
                %v301 = vld [vmem:[%s123 + $0x580] sm:$0xff]
                %302 = vst [vmem:[%s124 + $0x2c0] sm:$0xff] %v301
                %v303 = vld [vmem:[%s123 + $0x588] sm:$0xff]
                %304 = vst [vmem:[%s124 + $0x2c8] sm:$0xff] %v303
                %v305 = vld [vmem:[%s123 + $0x5a0] sm:$0xff]
                %306 = vst [vmem:[%s124 + $0x2d0] sm:$0xff] %v305
                %v307 = vld [vmem:[%s123 + $0x5a8] sm:$0xff]
                %308 = vst [vmem:[%s124 + $0x2d8] sm:$0xff] %v307
                %v309 = vld [vmem:[%s123 + $0x5c0] sm:$0xff]
                %310 = vst [vmem:[%s124 + $0x2e0] sm:$0xff] %v309
                %v311 = vld [vmem:[%s123 + $0x5c8] sm:$0xff]
                %312 = vst [vmem:[%s124 + $0x2e8] sm:$0xff] %v311
                %v313 = vld [vmem:[%s123 + $0x5e0] sm:$0xff]
                %314 = vst [vmem:[%s124 + $0x2f0] sm:$0xff] %v313
                %v315 = vld [vmem:[%s123 + $0x5e8] sm:$0xff]
                %316 = vst [vmem:[%s124 + $0x2f8] sm:$0xff] %v315
                %v317 = vld [vmem:[%s123 + $0x600] sm:$0xff]
                %318 = vst [vmem:[%s124 + $0x300] sm:$0xff] %v317
                %v319 = vld [vmem:[%s123 + $0x608] sm:$0xff]
                %320 = vst [vmem:[%s124 + $0x308] sm:$0xff] %v319
                %v321 = vld [vmem:[%s123 + $0x620] sm:$0xff]
                %322 = vst [vmem:[%s124 + $0x310] sm:$0xff] %v321
                %v323 = vld [vmem:[%s123 + $0x628] sm:$0xff]
                %324 = vst [vmem:[%s124 + $0x318] sm:$0xff] %v323
                %v325 = vld [vmem:[%s123 + $0x640] sm:$0xff]
                %326 = vst [vmem:[%s124 + $0x320] sm:$0xff] %v325
                %v327 = vld [vmem:[%s123 + $0x648] sm:$0xff]
                %328 = vst [vmem:[%s124 + $0x328] sm:$0xff] %v327
                %v329 = vld [vmem:[%s123 + $0x660] sm:$0xff]
                %330 = vst [vmem:[%s124 + $0x330] sm:$0xff] %v329
                %v331 = vld [vmem:[%s123 + $0x668] sm:$0xff]
                %332 = vst [vmem:[%s124 + $0x338] sm:$0xff] %v331
                %v333 = vld [vmem:[%s123 + $0x680] sm:$0xff]
                %334 = vst [vmem:[%s124 + $0x340] sm:$0xff] %v333
                %v335 = vld [vmem:[%s123 + $0x688] sm:$0xff]
                %336 = vst [vmem:[%s124 + $0x348] sm:$0xff] %v335
                %v337 = vld [vmem:[%s123 + $0x6a0] sm:$0xff]
                %338 = vst [vmem:[%s124 + $0x350] sm:$0xff] %v337
                %v339 = vld [vmem:[%s123 + $0x6a8] sm:$0xff]
                %340 = vst [vmem:[%s124 + $0x358] sm:$0xff] %v339
                %v341 = vld [vmem:[%s123 + $0x6c0] sm:$0xff]
                %342 = vst [vmem:[%s124 + $0x360] sm:$0xff] %v341
                %v343 = vld [vmem:[%s123 + $0x6c8] sm:$0xff]
                %344 = vst [vmem:[%s124 + $0x368] sm:$0xff] %v343
                %v345 = vld [vmem:[%s123 + $0x6e0] sm:$0xff]
                %346 = vst [vmem:[%s124 + $0x370] sm:$0xff] %v345
                %v347 = vld [vmem:[%s123 + $0x6e8] sm:$0xff]
                %348 = vst [vmem:[%s124 + $0x378] sm:$0xff] %v347
                %v349 = vld [vmem:[%s123 + $0x700] sm:$0xff]
                %350 = vst [vmem:[%s124 + $0x380] sm:$0xff] %v349
                %v351 = vld [vmem:[%s123 + $0x708] sm:$0xff]
                %352 = vst [vmem:[%s124 + $0x388] sm:$0xff] %v351
                %v353 = vld [vmem:[%s123 + $0x720] sm:$0xff]
                %354 = vst [vmem:[%s124 + $0x390] sm:$0xff] %v353
                %v355 = vld [vmem:[%s123 + $0x728] sm:$0xff]
                %356 = vst [vmem:[%s124 + $0x398] sm:$0xff] %v355
                %v357 = vld [vmem:[%s123 + $0x740] sm:$0xff]
                %358 = vst [vmem:[%s124 + $0x3a0] sm:$0xff] %v357
                %v359 = vld [vmem:[%s123 + $0x748] sm:$0xff]
                %360 = vst [vmem:[%s124 + $0x3a8] sm:$0xff] %v359
                %v361 = vld [vmem:[%s123 + $0x760] sm:$0xff]
                %362 = vst [vmem:[%s124 + $0x3b0] sm:$0xff] %v361
                %v363 = vld [vmem:[%s123 + $0x768] sm:$0xff]
                %364 = vst [vmem:[%s124 + $0x3b8] sm:$0xff] %v363
                %v365 = vld [vmem:[%s123 + $0x780] sm:$0xff]
                %366 = vst [vmem:[%s124 + $0x3c0] sm:$0xff] %v365
                %v367 = vld [vmem:[%s123 + $0x788] sm:$0xff]
                %368 = vst [vmem:[%s124 + $0x3c8] sm:$0xff] %v367
                %v369 = vld [vmem:[%s123 + $0x7a0] sm:$0xff]
                %370 = vst [vmem:[%s124 + $0x3d0] sm:$0xff] %v369
                %v371 = vld [vmem:[%s123 + $0x7a8] sm:$0xff]
                %372 = vst [vmem:[%s124 + $0x3d8] sm:$0xff] %v371
                %v373 = vld [vmem:[%s123 + $0x7c0] sm:$0xff]
                %374 = vst [vmem:[%s124 + $0x3e0] sm:$0xff] %v373
                %v375 = vld [vmem:[%s123 + $0x7c8] sm:$0xff]
                %376 = vst [vmem:[%s124 + $0x3e8] sm:$0xff] %v375
                %v377 = vld [vmem:[%s123 + $0x7e0] sm:$0xff]
                %378 = vst [vmem:[%s124 + $0x3f0] sm:$0xff] %v377
                %v379 = vld [vmem:[%s123 + $0x7e8] sm:$0xff]
                %380 = vst [vmem:[%s124 + $0x3f8] sm:$0xff] %v379
                %v381 = vld [vmem:[%s123 + $0x800] sm:$0xff]
                %382 = vst [vmem:[%s124 + $0x400] sm:$0xff] %v381
                %v383 = vld [vmem:[%s123 + $0x808] sm:$0xff]
                %384 = vst [vmem:[%s124 + $0x408] sm:$0xff] %v383
                %v385 = vld [vmem:[%s123 + $0x820] sm:$0xff]
                %386 = vst [vmem:[%s124 + $0x410] sm:$0xff] %v385
                %v387 = vld [vmem:[%s123 + $0x828] sm:$0xff]
                %388 = vst [vmem:[%s124 + $0x418] sm:$0xff] %v387
                %v389 = vld [vmem:[%s123 + $0x840] sm:$0xff]
                %390 = vst [vmem:[%s124 + $0x420] sm:$0xff] %v389
                %v391 = vld [vmem:[%s123 + $0x848] sm:$0xff]
                %392 = vst [vmem:[%s124 + $0x428] sm:$0xff] %v391
                %v393 = vld [vmem:[%s123 + $0x860] sm:$0xff]
                %394 = vst [vmem:[%s124 + $0x430] sm:$0xff] %v393
                %v395 = vld [vmem:[%s123 + $0x868] sm:$0xff]
                %396 = vst [vmem:[%s124 + $0x438] sm:$0xff] %v395
                %v397 = vld [vmem:[%s123 + $0x880] sm:$0xff]
                %398 = vst [vmem:[%s124 + $0x440] sm:$0xff] %v397
                %v399 = vld [vmem:[%s123 + $0x888] sm:$0xff]
                %400 = vst [vmem:[%s124 + $0x448] sm:$0xff] %v399
                %v401 = vld [vmem:[%s123 + $0x8a0] sm:$0xff]
                %402 = vst [vmem:[%s124 + $0x450] sm:$0xff] %v401
                %v403 = vld [vmem:[%s123 + $0x8a8] sm:$0xff]
                %404 = vst [vmem:[%s124 + $0x458] sm:$0xff] %v403
                %v405 = vld [vmem:[%s123 + $0x8c0] sm:$0xff]
                %406 = vst [vmem:[%s124 + $0x460] sm:$0xff] %v405
                %v407 = vld [vmem:[%s123 + $0x8c8] sm:$0xff]
                %408 = vst [vmem:[%s124 + $0x468] sm:$0xff] %v407
                %v409 = vld [vmem:[%s123 + $0x8e0] sm:$0xff]
                %410 = vst [vmem:[%s124 + $0x470] sm:$0xff] %v409
                %v411 = vld [vmem:[%s123 + $0x8e8] sm:$0xff]
                %412 = vst [vmem:[%s124 + $0x478] sm:$0xff] %v411
              $region37: #{_lambda_.9} parent=31 // loop_footer
                %s122 = sadd.s32 1, %s118
              $region38: #{_lambda_.9} parent=31 // loop_footer_branch
                %117 = sbr.rel target = $region34
              $region39: #{_lambda_.9} parent=31 // loop_exit
                _
            $region32: #{_lambda_.9} parent=27 // pred_fallthru
              _
            // Predicated region
            $region40: #{_lambda_.9} parent=27 // pred_check
              _
            $region41: #{_lambda_.9} parent=27 // pred_check_branch
              %414 = sbr.rel target = $region43
            $region42: #{_lambda_.9} parent=27 // pred_region
              _
            $region43: #{_lambda_.9} parent=27 // pred_fallthru
              _
          $region28: #{_lambda_.9} parent=23 // pred_fallthru
            _
          %415 = vnop
        $region24: #{_lambda_.9} parent=19 // pred_fallthru
          _
      $region20: #{_lambda_.9} parent=5 // pred_fallthru
        _
      %p416 = scmp.le.s32.totalorder 1, %s8
      %p417 = scmp.lt.s32.totalorder %s8, 3
      %p418 = pnand %p416, %p417
      %p419 = pneg %p418
      // Predicated region
      $region44: #{_lambda_.9} parent=5 // pred_check
        _
      $region45: #{_lambda_.9} parent=5 // pred_check_branch
        %421 = sbr.rel (%p418) target = $region47
      $region46: #{_lambda_.9} parent=5 // pred_region
        %s422 = ssub.s32 %s8, 1
        %s423 = sand.u32 %s42, 1
        %s424 = sand.u32 %s42, 1
        %s425 = smul.addr %s424, 1152
        %s426 = scalar_lea.vmem [#allocation2], %s425
        // Predicated region
        $region48: #{_lambda_.9} parent=46 // pred_check
          %p427 = pneg %p55
        $region49: #{_lambda_.9} parent=46 // pred_check_branch
          %429 = sbr.rel (%p427) target = $region51
        $region50: #{_lambda_.9} parent=46 // pred_region
          _
        $region51: #{_lambda_.9} parent=46 // pred_fallthru
          _
        %p430 = pneg %p29
        %p431 = pneg %p26
        %s432 = sand.u32 %s42, 1
        %s433 = sand.u32 %s42, 1
        %s434 = smul.addr %s433, 1152
        %s435 = scalar_lea.vmem [#allocation2], %s434
        %p436 = pneg %p55
        %p437 = pneg %p52
        %p438 = pneg %p81
        %p439 = pneg %p78
        %s440 = sand.u32 %s68, 1
        %s441 = sand.u32 %s68, 1
        %s442 = smul.addr %s441, 256
        %s443 = scalar_lea.vmem [#allocation3], %s442
        %s444 = smul.u32 4, %s13
        %s445 = smul.u32 4, %s13
        %v447 = vld [vmem:[%s0] sm:$0xff]
        %v448 = vld [vmem:[%s0 + $0x8] sm:$0xff]
        %v449 = vld [vmem:[%s0 + $0x10] sm:$0xf]
        %v450 = vld [vmem:[%s0 + $0x14] sm:$0xff]
        %v451 = vld [vmem:[%s0 + $0x1c] sm:$0xff]
        %v452 = vld [vmem:[%s0 + $0x24] sm:$0xf]
        %v453 = vld [vmem:[%s0 + $0x28] sm:$0xff]
        %v454 = vld [vmem:[%s0 + $0x30] sm:$0xff]
        %v455 = vld [vmem:[%s0 + $0x38] sm:$0xf]
        %v456 = vld [vmem:[%s0 + $0x3c] sm:$0xff]
        %v457 = vld [vmem:[%s0 + $0x44] sm:$0xff]
        %v458 = vld [vmem:[%s0 + $0x4c] sm:$0xf]
        %v459 = vld [vmem:[%s0 + $0x50] sm:$0xff]
        %v460 = vld [vmem:[%s0 + $0x58] sm:$0xff]
        %v461 = vld [vmem:[%s0 + $0x60] sm:$0xf]
        %v462 = vld [vmem:[%s0 + $0x64] sm:$0xff]
        %v463 = vld [vmem:[%s0 + $0x6c] sm:$0xff]
        %v464 = vld [vmem:[%s0 + $0x74] sm:$0xf]
        %v465 = vld [vmem:[%s0 + $0x78] sm:$0xff]
        %v466 = vld [vmem:[%s0 + $0x80] sm:$0xff]
        %v467 = vld [vmem:[%s0 + $0x88] sm:$0xf]
        %v468 = vld [vmem:[%s0 + $0x8c] sm:$0xff]
        %v469 = vld [vmem:[%s0 + $0x94] sm:$0xff]
        %v470 = vld [vmem:[%s0 + $0x9c] sm:$0xf]
        %v471 = vld [vmem:[%s0 + $0xa0] sm:$0xff]
        %v472 = vld [vmem:[%s0 + $0xa8] sm:$0xff]
        %v473 = vld [vmem:[%s0 + $0xb0] sm:$0xf]
        %v474 = vld [vmem:[%s0 + $0xb4] sm:$0xff]
        %v475 = vld [vmem:[%s0 + $0xbc] sm:$0xff]
        %v476 = vld [vmem:[%s0 + $0xc4] sm:$0xf]
        %v477 = vld [vmem:[%s0 + $0xc8] sm:$0xff]
        %v478 = vld [vmem:[%s0 + $0xd0] sm:$0xff]
        %v479 = vld [vmem:[%s0 + $0xd8] sm:$0xf]
        %v480 = vld [vmem:[%s0 + $0xdc] sm:$0xff]
        %v481 = vld [vmem:[%s0 + $0xe4] sm:$0xff]
        %v482 = vld [vmem:[%s0 + $0xec] sm:$0xf]
        %v483 = vld [vmem:[%s0 + $0xf0] sm:$0xff]
        %v484 = vld [vmem:[%s0 + $0xf8] sm:$0xff]
        %v485 = vld [vmem:[%s0 + $0x100] sm:$0xf]
        %v486 = vld [vmem:[%s0 + $0x104] sm:$0xff]
        %v487 = vld [vmem:[%s0 + $0x10c] sm:$0xff]
        %v488 = vld [vmem:[%s0 + $0x114] sm:$0xf]
        %v489 = vld [vmem:[%s0 + $0x118] sm:$0xff]
        %v490 = vld [vmem:[%s0 + $0x120] sm:$0xff]
        %v491 = vld [vmem:[%s0 + $0x128] sm:$0xf]
        %v492 = vld [vmem:[%s0 + $0x12c] sm:$0xff]
        %v493 = vld [vmem:[%s0 + $0x134] sm:$0xff]
        %v494 = vld [vmem:[%s0 + $0x13c] sm:$0xf]
        %v495 = vld [vmem:[%s426] sm:$0xff]
        %v496 = vld [vmem:[%s426 + $0x8] sm:$0xff]
        %v497 = vld [vmem:[%s426 + $0x10] sm:$0xff]
        %v498 = vld [vmem:[%s426 + $0x18] sm:$0xff]
        %v499 = vld [vmem:[%s426 + $0x20] sm:$0xff]
        %v500 = vld [vmem:[%s426 + $0x28] sm:$0xff]
        %v501 = vld [vmem:[%s426 + $0x30] sm:$0xff]
        %v502 = vld [vmem:[%s426 + $0x38] sm:$0xff]
        %v503 = vld [vmem:[%s426 + $0x40] sm:$0xff]
        %v504 = vld [vmem:[%s426 + $0x48] sm:$0xff]
        %v505 = vld [vmem:[%s426 + $0x50] sm:$0xff]
        %v506 = vld [vmem:[%s426 + $0x58] sm:$0xff]
        %v507 = vld [vmem:[%s426 + $0x60] sm:$0xff]
        %v508 = vld [vmem:[%s426 + $0x68] sm:$0xff]
        %v509 = vld [vmem:[%s426 + $0x70] sm:$0xff]
        %v510 = vld [vmem:[%s426 + $0x78] sm:$0xff]
        %v511 = vld [vmem:[%s426 + $0x80] sm:$0xff]
        %v512 = vld [vmem:[%s426 + $0x88] sm:$0xff]
        %v513 = vld [vmem:[%s426 + $0x90] sm:$0xff]
        %v514 = vld [vmem:[%s426 + $0x98] sm:$0xff]
        %v515 = vld [vmem:[%s426 + $0xa0] sm:$0xff]
        %v516 = vld [vmem:[%s426 + $0xa8] sm:$0xff]
        %v517 = vld [vmem:[%s426 + $0xb0] sm:$0xff]
        %v518 = vld [vmem:[%s426 + $0xb8] sm:$0xff]
        %v519 = vld [vmem:[%s426 + $0xc0] sm:$0xff]
        %v520 = vld [vmem:[%s426 + $0xc8] sm:$0xff]
        %v521 = vld [vmem:[%s426 + $0xd0] sm:$0xff]
        %v522 = vld [vmem:[%s426 + $0xd8] sm:$0xff]
        %v523 = vld [vmem:[%s426 + $0xe0] sm:$0xff]
        %v524 = vld [vmem:[%s426 + $0xe8] sm:$0xff]
        %v525 = vld [vmem:[%s426 + $0xf0] sm:$0xff]
        %v526 = vld [vmem:[%s426 + $0xf8] sm:$0xff]
        %v527 = vld [vmem:[%s426 + $0x100] sm:$0xff]
        %v528 = vld [vmem:[%s426 + $0x108] sm:$0xff]
        %v529 = vld [vmem:[%s426 + $0x110] sm:$0xff]
        %v530 = vld [vmem:[%s426 + $0x118] sm:$0xff]
        %v531 = vld [vmem:[%s426 + $0x120] sm:$0xff]
        %v532 = vld [vmem:[%s426 + $0x128] sm:$0xff]
        %v533 = vld [vmem:[%s426 + $0x130] sm:$0xff]
        %v534 = vld [vmem:[%s426 + $0x138] sm:$0xff]
        %v535 = vld [vmem:[%s426 + $0x140] sm:$0xff]
        %v536 = vld [vmem:[%s426 + $0x148] sm:$0xff]
        %v537 = vld [vmem:[%s426 + $0x150] sm:$0xff]
        %v538 = vld [vmem:[%s426 + $0x158] sm:$0xff]
        %v539 = vld [vmem:[%s426 + $0x160] sm:$0xff]
        %v540 = vld [vmem:[%s426 + $0x168] sm:$0xff]
        %v541 = vld [vmem:[%s426 + $0x170] sm:$0xff]
        %v542 = vld [vmem:[%s426 + $0x178] sm:$0xff]
        %v543 = vld [vmem:[%s426 + $0x180] sm:$0xff]
        %v544 = vld [vmem:[%s426 + $0x188] sm:$0xff]
        %v545 = vld [vmem:[%s426 + $0x190] sm:$0xff]
        %v546 = vld [vmem:[%s426 + $0x198] sm:$0xff]
        %v547 = vld [vmem:[%s426 + $0x1a0] sm:$0xff]
        %v548 = vld [vmem:[%s426 + $0x1a8] sm:$0xff]
        %v549 = vld [vmem:[%s426 + $0x1b0] sm:$0xff]
        %v550 = vld [vmem:[%s426 + $0x1b8] sm:$0xff]
        %v551 = vld [vmem:[%s426 + $0x1c0] sm:$0xff]
        %v552 = vld [vmem:[%s426 + $0x1c8] sm:$0xff]
        %v553 = vld [vmem:[%s426 + $0x1d0] sm:$0xff]
        %v554 = vld [vmem:[%s426 + $0x1d8] sm:$0xff]
        %v555 = vld [vmem:[%s426 + $0x1e0] sm:$0xff]
        %v556 = vld [vmem:[%s426 + $0x1e8] sm:$0xff]
        %v557 = vld [vmem:[%s426 + $0x1f0] sm:$0xff]
        %v558 = vld [vmem:[%s426 + $0x1f8] sm:$0xff]
        %v559 = vld [vmem:[%s426 + $0x200] sm:$0xff]
        %v560 = vld [vmem:[%s426 + $0x208] sm:$0xff]
        %v561 = vld [vmem:[%s426 + $0x210] sm:$0xff]
        %v562 = vld [vmem:[%s426 + $0x218] sm:$0xff]
        %v563 = vld [vmem:[%s426 + $0x220] sm:$0xff]
        %v564 = vld [vmem:[%s426 + $0x228] sm:$0xff]
        %v565 = vld [vmem:[%s426 + $0x230] sm:$0xff]
        %v566 = vld [vmem:[%s426 + $0x238] sm:$0xff]
        %v567 = vld [vmem:[%s426 + $0x240] sm:$0xff]
        %v568 = vld [vmem:[%s426 + $0x248] sm:$0xff]
        %v569 = vld [vmem:[%s426 + $0x250] sm:$0xff]
        %v570 = vld [vmem:[%s426 + $0x258] sm:$0xff]
        %v571 = vld [vmem:[%s426 + $0x260] sm:$0xff]
        %v572 = vld [vmem:[%s426 + $0x268] sm:$0xff]
        %v573 = vld [vmem:[%s426 + $0x270] sm:$0xff]
        %v574 = vld [vmem:[%s426 + $0x278] sm:$0xff]
        %v575 = vld [vmem:[%s426 + $0x280] sm:$0xff]
        %v576 = vld [vmem:[%s426 + $0x288] sm:$0xff]
        %v577 = vld [vmem:[%s426 + $0x290] sm:$0xff]
        %v578 = vld [vmem:[%s426 + $0x298] sm:$0xff]
        %v579 = vld [vmem:[%s426 + $0x2a0] sm:$0xff]
        %v580 = vld [vmem:[%s426 + $0x2a8] sm:$0xff]
        %v581 = vld [vmem:[%s426 + $0x2b0] sm:$0xff]
        %v582 = vld [vmem:[%s426 + $0x2b8] sm:$0xff]
        %v583 = vld [vmem:[%s426 + $0x2c0] sm:$0xff]
        %v584 = vld [vmem:[%s426 + $0x2c8] sm:$0xff]
        %v585 = vld [vmem:[%s426 + $0x2d0] sm:$0xff]
        %v586 = vld [vmem:[%s426 + $0x2d8] sm:$0xff]
        %v587 = vld [vmem:[%s426 + $0x2e0] sm:$0xff]
        %v588 = vld [vmem:[%s426 + $0x2e8] sm:$0xff]
        %v589 = vld [vmem:[%s426 + $0x2f0] sm:$0xff]
        %v590 = vld [vmem:[%s426 + $0x2f8] sm:$0xff]
        %v591 = vld [vmem:[%s426 + $0x300] sm:$0xff]
        %v592 = vld [vmem:[%s426 + $0x308] sm:$0xff]
        %v593 = vld [vmem:[%s426 + $0x310] sm:$0xff]
        %v594 = vld [vmem:[%s426 + $0x318] sm:$0xff]
        %v595 = vld [vmem:[%s426 + $0x320] sm:$0xff]
        %v596 = vld [vmem:[%s426 + $0x328] sm:$0xff]
        %v597 = vld [vmem:[%s426 + $0x330] sm:$0xff]
        %v598 = vld [vmem:[%s426 + $0x338] sm:$0xff]
        %v599 = vld [vmem:[%s426 + $0x340] sm:$0xff]
        %v600 = vld [vmem:[%s426 + $0x348] sm:$0xff]
        %v601 = vld [vmem:[%s426 + $0x350] sm:$0xff]
        %v602 = vld [vmem:[%s426 + $0x358] sm:$0xff]
        %v603 = vld [vmem:[%s426 + $0x360] sm:$0xff]
        %v604 = vld [vmem:[%s426 + $0x368] sm:$0xff]
        %v605 = vld [vmem:[%s426 + $0x370] sm:$0xff]
        %v606 = vld [vmem:[%s426 + $0x378] sm:$0xff]
        %v607 = vld [vmem:[%s426 + $0x380] sm:$0xff]
        %v608 = vld [vmem:[%s426 + $0x388] sm:$0xff]
        %v609 = vld [vmem:[%s426 + $0x390] sm:$0xff]
        %v610 = vld [vmem:[%s426 + $0x398] sm:$0xff]
        %v611 = vld [vmem:[%s426 + $0x3a0] sm:$0xff]
        %v612 = vld [vmem:[%s426 + $0x3a8] sm:$0xff]
        %v613 = vld [vmem:[%s426 + $0x3b0] sm:$0xff]
        %v614 = vld [vmem:[%s426 + $0x3b8] sm:$0xff]
        %v615 = vld [vmem:[%s426 + $0x3c0] sm:$0xff]
        %v616 = vld [vmem:[%s426 + $0x3c8] sm:$0xff]
        %v617 = vld [vmem:[%s426 + $0x3d0] sm:$0xff]
        %v618 = vld [vmem:[%s426 + $0x3d8] sm:$0xff]
        %v619 = vld [vmem:[%s426 + $0x3e0] sm:$0xff]
        %v620 = vld [vmem:[%s426 + $0x3e8] sm:$0xff]
        %v621 = vld [vmem:[%s426 + $0x3f0] sm:$0xff]
        %v622 = vld [vmem:[%s426 + $0x3f8] sm:$0xff]
        %v623 = vld [vmem:[%s426 + $0x400] sm:$0xff]
        %v624 = vld [vmem:[%s426 + $0x408] sm:$0xff]
        %v625 = vld [vmem:[%s426 + $0x410] sm:$0xff]
        %v626 = vld [vmem:[%s426 + $0x418] sm:$0xff]
        %v627 = vld [vmem:[%s426 + $0x420] sm:$0xff]
        %v628 = vld [vmem:[%s426 + $0x428] sm:$0xff]
        %v629 = vld [vmem:[%s426 + $0x430] sm:$0xff]
        %v630 = vld [vmem:[%s426 + $0x438] sm:$0xff]
        %v631 = vld [vmem:[%s426 + $0x440] sm:$0xff]
        %v632 = vld [vmem:[%s426 + $0x448] sm:$0xff]
        %v633 = vld [vmem:[%s426 + $0x450] sm:$0xff]
        %v634 = vld [vmem:[%s426 + $0x458] sm:$0xff]
        %v635 = vld [vmem:[%s426 + $0x460] sm:$0xff]
        %v636 = vld [vmem:[%s426 + $0x468] sm:$0xff]
        %v637 = vld [vmem:[%s426 + $0x470] sm:$0xff]
        %v638 = vld [vmem:[%s426 + $0x478] sm:$0xff]
        %v687 = vunpack.c.l.b16 %v447
        %v688 = vunpack.c.h.b16 %v447
        %v689 = vunpack.c.l.b16 %v448
        %v690 = vunpack.c.h.b16 %v448
        %v691 = vunpack.c.l.b16 %v449
        %v692 = vunpack.c.l.b16 %v450
        %v693 = vunpack.c.h.b16 %v450
        %v694 = vunpack.c.l.b16 %v451
        %v695 = vunpack.c.h.b16 %v451
        %v696 = vunpack.c.l.b16 %v452
        %v697 = vunpack.c.l.b16 %v453
        %v698 = vunpack.c.h.b16 %v453
        %v699 = vunpack.c.l.b16 %v454
        %v700 = vunpack.c.h.b16 %v454
        %v701 = vunpack.c.l.b16 %v455
        %v702 = vunpack.c.l.b16 %v456
        %v703 = vunpack.c.h.b16 %v456
        %v704 = vunpack.c.l.b16 %v457
        %v705 = vunpack.c.h.b16 %v457
        %v706 = vunpack.c.l.b16 %v458
        %v707 = vunpack.c.l.b16 %v459
        %v708 = vunpack.c.h.b16 %v459
        %v709 = vunpack.c.l.b16 %v460
        %v710 = vunpack.c.h.b16 %v460
        %v711 = vunpack.c.l.b16 %v461
        %v712 = vunpack.c.l.b16 %v462
        %v713 = vunpack.c.h.b16 %v462
        %v714 = vunpack.c.l.b16 %v463
        %v715 = vunpack.c.h.b16 %v463
        %v716 = vunpack.c.l.b16 %v464
        %v717 = vunpack.c.l.b16 %v465
        %v718 = vunpack.c.h.b16 %v465
        %v719 = vunpack.c.l.b16 %v466
        %v720 = vunpack.c.h.b16 %v466
        %v721 = vunpack.c.l.b16 %v467
        %v722 = vunpack.c.l.b16 %v468
        %v723 = vunpack.c.h.b16 %v468
        %v724 = vunpack.c.l.b16 %v469
        %v725 = vunpack.c.h.b16 %v469
        %v726 = vunpack.c.l.b16 %v470
        %v727 = vunpack.c.l.b16 %v471
        %v728 = vunpack.c.h.b16 %v471
        %v729 = vunpack.c.l.b16 %v472
        %v730 = vunpack.c.h.b16 %v472
        %v731 = vunpack.c.l.b16 %v473
        %v732 = vunpack.c.l.b16 %v474
        %v733 = vunpack.c.h.b16 %v474
        %v734 = vunpack.c.l.b16 %v475
        %v735 = vunpack.c.h.b16 %v475
        %v736 = vunpack.c.l.b16 %v476
        %v737 = vunpack.c.l.b16 %v477
        %v738 = vunpack.c.h.b16 %v477
        %v739 = vunpack.c.l.b16 %v478
        %v740 = vunpack.c.h.b16 %v478
        %v741 = vunpack.c.l.b16 %v479
        %v742 = vunpack.c.l.b16 %v480
        %v743 = vunpack.c.h.b16 %v480
        %v744 = vunpack.c.l.b16 %v481
        %v745 = vunpack.c.h.b16 %v481
        %v746 = vunpack.c.l.b16 %v482
        %v747 = vunpack.c.l.b16 %v483
        %v748 = vunpack.c.h.b16 %v483
        %v749 = vunpack.c.l.b16 %v484
        %v750 = vunpack.c.h.b16 %v484
        %v751 = vunpack.c.l.b16 %v485
        %v752 = vunpack.c.l.b16 %v486
        %v753 = vunpack.c.h.b16 %v486
        %v754 = vunpack.c.l.b16 %v487
        %v755 = vunpack.c.h.b16 %v487
        %v756 = vunpack.c.l.b16 %v488
        %v757 = vunpack.c.l.b16 %v489
        %v758 = vunpack.c.h.b16 %v489
        %v759 = vunpack.c.l.b16 %v490
        %v760 = vunpack.c.h.b16 %v490
        %v761 = vunpack.c.l.b16 %v491
        %v762 = vunpack.c.l.b16 %v492
        %v763 = vunpack.c.h.b16 %v492
        %v764 = vunpack.c.l.b16 %v493
        %v765 = vunpack.c.h.b16 %v493
        %v766 = vunpack.c.l.b16 %v494
        %v767 = vpack.c.b16 %v692, %v687
        %v768 = vpack.c.b16 %v693, %v688
        %v769 = vpack.c.b16 %v694, %v689
        %v770 = vpack.c.b16 %v695, %v690
        %v771 = vpack.c.b16 %v696, %v691
        %v772 = vpack.c.b16 %v702, %v697
        %v773 = vpack.c.b16 %v703, %v698
        %v774 = vpack.c.b16 %v704, %v699
        %v775 = vpack.c.b16 %v705, %v700
        %v776 = vpack.c.b16 %v706, %v701
        %v777 = vpack.c.b16 %v712, %v707
        %v778 = vpack.c.b16 %v713, %v708
        %v779 = vpack.c.b16 %v714, %v709
        %v780 = vpack.c.b16 %v715, %v710
        %v781 = vpack.c.b16 %v716, %v711
        %v782 = vpack.c.b16 %v722, %v717
        %v783 = vpack.c.b16 %v723, %v718
        %v784 = vpack.c.b16 %v724, %v719
        %v785 = vpack.c.b16 %v725, %v720
        %v786 = vpack.c.b16 %v726, %v721
        %v787 = vpack.c.b16 %v732, %v727
        %v788 = vpack.c.b16 %v733, %v728
        %v789 = vpack.c.b16 %v734, %v729
        %v790 = vpack.c.b16 %v735, %v730
        %v791 = vpack.c.b16 %v736, %v731
        %v792 = vpack.c.b16 %v742, %v737
        %v793 = vpack.c.b16 %v743, %v738
        %v794 = vpack.c.b16 %v744, %v739
        %v795 = vpack.c.b16 %v745, %v740
        %v796 = vpack.c.b16 %v746, %v741
        %v797 = vpack.c.b16 %v752, %v747
        %v798 = vpack.c.b16 %v753, %v748
        %v799 = vpack.c.b16 %v754, %v749
        %v800 = vpack.c.b16 %v755, %v750
        %v801 = vpack.c.b16 %v756, %v751
        %v802 = vpack.c.b16 %v762, %v757
        %v803 = vpack.c.b16 %v763, %v758
        %v804 = vpack.c.b16 %v764, %v759
        %v805 = vpack.c.b16 %v765, %v760
        %v806 = vpack.c.b16 %v766, %v761
        %v983 = vunpack.c.l.b16 %v495
        %v984 = vunpack.c.h.b16 %v495
        %v985 = vunpack.c.l.b16 %v496
        %v986 = vunpack.c.h.b16 %v496
        %v987 = vunpack.c.l.b16 %v497
        %v988 = vunpack.c.h.b16 %v497
        %v989 = vunpack.c.l.b16 %v498
        %v990 = vunpack.c.h.b16 %v498
        %v991 = vunpack.c.l.b16 %v499
        %v992 = vunpack.c.h.b16 %v499
        %v993 = vunpack.c.l.b16 %v500
        %v994 = vunpack.c.h.b16 %v500
        %v995 = vunpack.c.l.b16 %v501
        %v996 = vunpack.c.h.b16 %v501
        %v997 = vunpack.c.l.b16 %v502
        %v998 = vunpack.c.h.b16 %v502
        %v999 = vunpack.c.l.b16 %v503
        %v1000 = vunpack.c.h.b16 %v503
        %v1001 = vunpack.c.l.b16 %v504
        %v1002 = vunpack.c.h.b16 %v504
        %v1003 = vunpack.c.l.b16 %v505
        %v1004 = vunpack.c.h.b16 %v505
        %v1005 = vunpack.c.l.b16 %v506
        %v1006 = vunpack.c.h.b16 %v506
        %v1007 = vunpack.c.l.b16 %v507
        %v1008 = vunpack.c.h.b16 %v507
        %v1009 = vunpack.c.l.b16 %v508
        %v1010 = vunpack.c.h.b16 %v508
        %v1011 = vunpack.c.l.b16 %v509
        %v1012 = vunpack.c.h.b16 %v509
        %v1013 = vunpack.c.l.b16 %v510
        %v1014 = vunpack.c.h.b16 %v510
        %v1015 = vunpack.c.l.b16 %v511
        %v1016 = vunpack.c.h.b16 %v511
        %v1017 = vunpack.c.l.b16 %v512
        %v1018 = vunpack.c.h.b16 %v512
        %v1019 = vunpack.c.l.b16 %v513
        %v1020 = vunpack.c.h.b16 %v513
        %v1021 = vunpack.c.l.b16 %v514
        %v1022 = vunpack.c.h.b16 %v514
        %v1023 = vunpack.c.l.b16 %v515
        %v1024 = vunpack.c.h.b16 %v515
        %v1025 = vunpack.c.l.b16 %v516
        %v1026 = vunpack.c.h.b16 %v516
        %v1027 = vunpack.c.l.b16 %v517
        %v1028 = vunpack.c.h.b16 %v517
        %v1029 = vunpack.c.l.b16 %v518
        %v1030 = vunpack.c.h.b16 %v518
        %v1031 = vunpack.c.l.b16 %v519
        %v1032 = vunpack.c.h.b16 %v519
        %v1033 = vunpack.c.l.b16 %v520
        %v1034 = vunpack.c.h.b16 %v520
        %v1035 = vunpack.c.l.b16 %v521
        %v1036 = vunpack.c.h.b16 %v521
        %v1037 = vunpack.c.l.b16 %v522
        %v1038 = vunpack.c.h.b16 %v522
        %v1039 = vunpack.c.l.b16 %v523
        %v1040 = vunpack.c.h.b16 %v523
        %v1041 = vunpack.c.l.b16 %v524
        %v1042 = vunpack.c.h.b16 %v524
        %v1043 = vunpack.c.l.b16 %v525
        %v1044 = vunpack.c.h.b16 %v525
        %v1045 = vunpack.c.l.b16 %v526
        %v1046 = vunpack.c.h.b16 %v526
        %v1047 = vunpack.c.l.b16 %v527
        %v1048 = vunpack.c.h.b16 %v527
        %v1049 = vunpack.c.l.b16 %v528
        %v1050 = vunpack.c.h.b16 %v528
        %v1051 = vunpack.c.l.b16 %v529
        %v1052 = vunpack.c.h.b16 %v529
        %v1053 = vunpack.c.l.b16 %v530
        %v1054 = vunpack.c.h.b16 %v530
        %v1055 = vunpack.c.l.b16 %v531
        %v1056 = vunpack.c.h.b16 %v531
        %v1057 = vunpack.c.l.b16 %v532
        %v1058 = vunpack.c.h.b16 %v532
        %v1059 = vunpack.c.l.b16 %v533
        %v1060 = vunpack.c.h.b16 %v533
        %v1061 = vunpack.c.l.b16 %v534
        %v1062 = vunpack.c.h.b16 %v534
        %v1063 = vunpack.c.l.b16 %v535
        %v1064 = vunpack.c.h.b16 %v535
        %v1065 = vunpack.c.l.b16 %v536
        %v1066 = vunpack.c.h.b16 %v536
        %v1067 = vunpack.c.l.b16 %v537
        %v1068 = vunpack.c.h.b16 %v537
        %v1069 = vunpack.c.l.b16 %v538
        %v1070 = vunpack.c.h.b16 %v538
        %v1071 = vunpack.c.l.b16 %v539
        %v1072 = vunpack.c.h.b16 %v539
        %v1073 = vunpack.c.l.b16 %v540
        %v1074 = vunpack.c.h.b16 %v540
        %v1075 = vunpack.c.l.b16 %v541
        %v1076 = vunpack.c.h.b16 %v541
        %v1077 = vunpack.c.l.b16 %v542
        %v1078 = vunpack.c.h.b16 %v542
        %v1079 = vunpack.c.l.b16 %v543
        %v1080 = vunpack.c.h.b16 %v543
        %v1081 = vunpack.c.l.b16 %v544
        %v1082 = vunpack.c.h.b16 %v544
        %v1083 = vunpack.c.l.b16 %v545
        %v1084 = vunpack.c.h.b16 %v545
        %v1085 = vunpack.c.l.b16 %v546
        %v1086 = vunpack.c.h.b16 %v546
        %v1087 = vunpack.c.l.b16 %v547
        %v1088 = vunpack.c.h.b16 %v547
        %v1089 = vunpack.c.l.b16 %v548
        %v1090 = vunpack.c.h.b16 %v548
        %v1091 = vunpack.c.l.b16 %v549
        %v1092 = vunpack.c.h.b16 %v549
        %v1093 = vunpack.c.l.b16 %v550
        %v1094 = vunpack.c.h.b16 %v550
        %v1095 = vunpack.c.l.b16 %v551
        %v1096 = vunpack.c.h.b16 %v551
        %v1097 = vunpack.c.l.b16 %v552
        %v1098 = vunpack.c.h.b16 %v552
        %v1099 = vunpack.c.l.b16 %v553
        %v1100 = vunpack.c.h.b16 %v553
        %v1101 = vunpack.c.l.b16 %v554
        %v1102 = vunpack.c.h.b16 %v554
        %v1103 = vunpack.c.l.b16 %v555
        %v1104 = vunpack.c.h.b16 %v555
        %v1105 = vunpack.c.l.b16 %v556
        %v1106 = vunpack.c.h.b16 %v556
        %v1107 = vunpack.c.l.b16 %v557
        %v1108 = vunpack.c.h.b16 %v557
        %v1109 = vunpack.c.l.b16 %v558
        %v1110 = vunpack.c.h.b16 %v558
        %v1111 = vunpack.c.l.b16 %v559
        %v1112 = vunpack.c.h.b16 %v559
        %v1113 = vunpack.c.l.b16 %v560
        %v1114 = vunpack.c.h.b16 %v560
        %v1115 = vunpack.c.l.b16 %v561
        %v1116 = vunpack.c.h.b16 %v561
        %v1117 = vunpack.c.l.b16 %v562
        %v1118 = vunpack.c.h.b16 %v562
        %v1119 = vunpack.c.l.b16 %v563
        %v1120 = vunpack.c.h.b16 %v563
        %v1121 = vunpack.c.l.b16 %v564
        %v1122 = vunpack.c.h.b16 %v564
        %v1123 = vunpack.c.l.b16 %v565
        %v1124 = vunpack.c.h.b16 %v565
        %v1125 = vunpack.c.l.b16 %v566
        %v1126 = vunpack.c.h.b16 %v566
        %v1127 = vunpack.c.l.b16 %v567
        %v1128 = vunpack.c.h.b16 %v567
        %v1129 = vunpack.c.l.b16 %v568
        %v1130 = vunpack.c.h.b16 %v568
        %v1131 = vunpack.c.l.b16 %v569
        %v1132 = vunpack.c.h.b16 %v569
        %v1133 = vunpack.c.l.b16 %v570
        %v1134 = vunpack.c.h.b16 %v570
        %v1135 = vunpack.c.l.b16 %v571
        %v1136 = vunpack.c.h.b16 %v571
        %v1137 = vunpack.c.l.b16 %v572
        %v1138 = vunpack.c.h.b16 %v572
        %v1139 = vunpack.c.l.b16 %v573
        %v1140 = vunpack.c.h.b16 %v573
        %v1141 = vunpack.c.l.b16 %v574
        %v1142 = vunpack.c.h.b16 %v574
        %v1143 = vunpack.c.l.b16 %v575
        %v1144 = vunpack.c.h.b16 %v575
        %v1145 = vunpack.c.l.b16 %v576
        %v1146 = vunpack.c.h.b16 %v576
        %v1147 = vunpack.c.l.b16 %v577
        %v1148 = vunpack.c.h.b16 %v577
        %v1149 = vunpack.c.l.b16 %v578
        %v1150 = vunpack.c.h.b16 %v578
        %v1151 = vunpack.c.l.b16 %v579
        %v1152 = vunpack.c.h.b16 %v579
        %v1153 = vunpack.c.l.b16 %v580
        %v1154 = vunpack.c.h.b16 %v580
        %v1155 = vunpack.c.l.b16 %v581
        %v1156 = vunpack.c.h.b16 %v581
        %v1157 = vunpack.c.l.b16 %v582
        %v1158 = vunpack.c.h.b16 %v582
        %v1159 = vunpack.c.l.b16 %v583
        %v1160 = vunpack.c.h.b16 %v583
        %v1161 = vunpack.c.l.b16 %v584
        %v1162 = vunpack.c.h.b16 %v584
        %v1163 = vunpack.c.l.b16 %v585
        %v1164 = vunpack.c.h.b16 %v585
        %v1165 = vunpack.c.l.b16 %v586
        %v1166 = vunpack.c.h.b16 %v586
        %v1167 = vunpack.c.l.b16 %v587
        %v1168 = vunpack.c.h.b16 %v587
        %v1169 = vunpack.c.l.b16 %v588
        %v1170 = vunpack.c.h.b16 %v588
        %v1171 = vunpack.c.l.b16 %v589
        %v1172 = vunpack.c.h.b16 %v589
        %v1173 = vunpack.c.l.b16 %v590
        %v1174 = vunpack.c.h.b16 %v590
        %v1175 = vunpack.c.l.b16 %v591
        %v1176 = vunpack.c.h.b16 %v591
        %v1177 = vunpack.c.l.b16 %v592
        %v1178 = vunpack.c.h.b16 %v592
        %v1179 = vunpack.c.l.b16 %v593
        %v1180 = vunpack.c.h.b16 %v593
        %v1181 = vunpack.c.l.b16 %v594
        %v1182 = vunpack.c.h.b16 %v594
        %v1183 = vunpack.c.l.b16 %v595
        %v1184 = vunpack.c.h.b16 %v595
        %v1185 = vunpack.c.l.b16 %v596
        %v1186 = vunpack.c.h.b16 %v596
        %v1187 = vunpack.c.l.b16 %v597
        %v1188 = vunpack.c.h.b16 %v597
        %v1189 = vunpack.c.l.b16 %v598
        %v1190 = vunpack.c.h.b16 %v598
        %v1191 = vunpack.c.l.b16 %v599
        %v1192 = vunpack.c.h.b16 %v599
        %v1193 = vunpack.c.l.b16 %v600
        %v1194 = vunpack.c.h.b16 %v600
        %v1195 = vunpack.c.l.b16 %v601
        %v1196 = vunpack.c.h.b16 %v601
        %v1197 = vunpack.c.l.b16 %v602
        %v1198 = vunpack.c.h.b16 %v602
        %v1199 = vunpack.c.l.b16 %v603
        %v1200 = vunpack.c.h.b16 %v603
        %v1201 = vunpack.c.l.b16 %v604
        %v1202 = vunpack.c.h.b16 %v604
        %v1203 = vunpack.c.l.b16 %v605
        %v1204 = vunpack.c.h.b16 %v605
        %v1205 = vunpack.c.l.b16 %v606
        %v1206 = vunpack.c.h.b16 %v606
        %v1207 = vunpack.c.l.b16 %v607
        %v1208 = vunpack.c.h.b16 %v607
        %v1209 = vunpack.c.l.b16 %v608
        %v1210 = vunpack.c.h.b16 %v608
        %v1211 = vunpack.c.l.b16 %v609
        %v1212 = vunpack.c.h.b16 %v609
        %v1213 = vunpack.c.l.b16 %v610
        %v1214 = vunpack.c.h.b16 %v610
        %v1215 = vunpack.c.l.b16 %v611
        %v1216 = vunpack.c.h.b16 %v611
        %v1217 = vunpack.c.l.b16 %v612
        %v1218 = vunpack.c.h.b16 %v612
        %v1219 = vunpack.c.l.b16 %v613
        %v1220 = vunpack.c.h.b16 %v613
        %v1221 = vunpack.c.l.b16 %v614
        %v1222 = vunpack.c.h.b16 %v614
        %v1223 = vunpack.c.l.b16 %v615
        %v1224 = vunpack.c.h.b16 %v615
        %v1225 = vunpack.c.l.b16 %v616
        %v1226 = vunpack.c.h.b16 %v616
        %v1227 = vunpack.c.l.b16 %v617
        %v1228 = vunpack.c.h.b16 %v617
        %v1229 = vunpack.c.l.b16 %v618
        %v1230 = vunpack.c.h.b16 %v618
        %v1231 = vunpack.c.l.b16 %v619
        %v1232 = vunpack.c.h.b16 %v619
        %v1233 = vunpack.c.l.b16 %v620
        %v1234 = vunpack.c.h.b16 %v620
        %v1235 = vunpack.c.l.b16 %v621
        %v1236 = vunpack.c.h.b16 %v621
        %v1237 = vunpack.c.l.b16 %v622
        %v1238 = vunpack.c.h.b16 %v622
        %v1239 = vunpack.c.l.b16 %v623
        %v1240 = vunpack.c.h.b16 %v623
        %v1241 = vunpack.c.l.b16 %v624
        %v1242 = vunpack.c.h.b16 %v624
        %v1243 = vunpack.c.l.b16 %v625
        %v1244 = vunpack.c.h.b16 %v625
        %v1245 = vunpack.c.l.b16 %v626
        %v1246 = vunpack.c.h.b16 %v626
        %v1247 = vunpack.c.l.b16 %v627
        %v1248 = vunpack.c.h.b16 %v627
        %v1249 = vunpack.c.l.b16 %v628
        %v1250 = vunpack.c.h.b16 %v628
        %v1251 = vunpack.c.l.b16 %v629
        %v1252 = vunpack.c.h.b16 %v629
        %v1253 = vunpack.c.l.b16 %v630
        %v1254 = vunpack.c.h.b16 %v630
        %v1255 = vunpack.c.l.b16 %v631
        %v1256 = vunpack.c.h.b16 %v631
        %v1257 = vunpack.c.l.b16 %v632
        %v1258 = vunpack.c.h.b16 %v632
        %v1259 = vunpack.c.l.b16 %v633
        %v1260 = vunpack.c.h.b16 %v633
        %v1261 = vunpack.c.l.b16 %v634
        %v1262 = vunpack.c.h.b16 %v634
        %v1263 = vunpack.c.l.b16 %v635
        %v1264 = vunpack.c.h.b16 %v635
        %v1265 = vunpack.c.l.b16 %v636
        %v1266 = vunpack.c.h.b16 %v636
        %v1267 = vunpack.c.l.b16 %v637
        %v1268 = vunpack.c.h.b16 %v637
        %v1269 = vunpack.c.l.b16 %v638
        %v1270 = vunpack.c.h.b16 %v638
        %v1271 = vpack.c.b16 %v987, %v983
        %v1272 = vpack.c.b16 %v988, %v984
        %v1273 = vpack.c.b16 %v989, %v985
        %v1274 = vpack.c.b16 %v990, %v986
        %v1275 = vpack.c.b16 %v995, %v991
        %v1276 = vpack.c.b16 %v996, %v992
        %v1277 = vpack.c.b16 %v997, %v993
        %v1278 = vpack.c.b16 %v998, %v994
        %v1279 = vpack.c.b16 %v1003, %v999
        %v1280 = vpack.c.b16 %v1004, %v1000
        %v1281 = vpack.c.b16 %v1005, %v1001
        %v1282 = vpack.c.b16 %v1006, %v1002
        %v1283 = vpack.c.b16 %v1011, %v1007
        %v1284 = vpack.c.b16 %v1012, %v1008
        %v1285 = vpack.c.b16 %v1013, %v1009
        %v1286 = vpack.c.b16 %v1014, %v1010
        %v1287 = vpack.c.b16 %v1019, %v1015
        %v1288 = vpack.c.b16 %v1020, %v1016
        %v1289 = vpack.c.b16 %v1021, %v1017
        %v1290 = vpack.c.b16 %v1022, %v1018
        %v1291 = vpack.c.b16 %v1027, %v1023
        %v1292 = vpack.c.b16 %v1028, %v1024
        %v1293 = vpack.c.b16 %v1029, %v1025
        %v1294 = vpack.c.b16 %v1030, %v1026
        %v1295 = vpack.c.b16 %v1035, %v1031
        %v1296 = vpack.c.b16 %v1036, %v1032
        %v1297 = vpack.c.b16 %v1037, %v1033
        %v1298 = vpack.c.b16 %v1038, %v1034
        %v1299 = vpack.c.b16 %v1043, %v1039
        %v1300 = vpack.c.b16 %v1044, %v1040
        %v1301 = vpack.c.b16 %v1045, %v1041
        %v1302 = vpack.c.b16 %v1046, %v1042
        %v1303 = vpack.c.b16 %v1051, %v1047
        %v1304 = vpack.c.b16 %v1052, %v1048
        %v1305 = vpack.c.b16 %v1053, %v1049
        %v1306 = vpack.c.b16 %v1054, %v1050
        %v1307 = vpack.c.b16 %v1059, %v1055
        %v1308 = vpack.c.b16 %v1060, %v1056
        %v1309 = vpack.c.b16 %v1061, %v1057
        %v1310 = vpack.c.b16 %v1062, %v1058
        %v1311 = vpack.c.b16 %v1067, %v1063
        %v1312 = vpack.c.b16 %v1068, %v1064
        %v1313 = vpack.c.b16 %v1069, %v1065
        %v1314 = vpack.c.b16 %v1070, %v1066
        %v1315 = vpack.c.b16 %v1075, %v1071
        %v1316 = vpack.c.b16 %v1076, %v1072
        %v1317 = vpack.c.b16 %v1077, %v1073
        %v1318 = vpack.c.b16 %v1078, %v1074
        %v1319 = vpack.c.b16 %v1083, %v1079
        %v1320 = vpack.c.b16 %v1084, %v1080
        %v1321 = vpack.c.b16 %v1085, %v1081
        %v1322 = vpack.c.b16 %v1086, %v1082
        %v1323 = vpack.c.b16 %v1091, %v1087
        %v1324 = vpack.c.b16 %v1092, %v1088
        %v1325 = vpack.c.b16 %v1093, %v1089
        %v1326 = vpack.c.b16 %v1094, %v1090
        %v1327 = vpack.c.b16 %v1099, %v1095
        %v1328 = vpack.c.b16 %v1100, %v1096
        %v1329 = vpack.c.b16 %v1101, %v1097
        %v1330 = vpack.c.b16 %v1102, %v1098
        %v1331 = vpack.c.b16 %v1107, %v1103
        %v1332 = vpack.c.b16 %v1108, %v1104
        %v1333 = vpack.c.b16 %v1109, %v1105
        %v1334 = vpack.c.b16 %v1110, %v1106
        %v1335 = vpack.c.b16 %v1115, %v1111
        %v1336 = vpack.c.b16 %v1116, %v1112
        %v1337 = vpack.c.b16 %v1117, %v1113
        %v1338 = vpack.c.b16 %v1118, %v1114
        %v1339 = vpack.c.b16 %v1123, %v1119
        %v1340 = vpack.c.b16 %v1124, %v1120
        %v1341 = vpack.c.b16 %v1125, %v1121
        %v1342 = vpack.c.b16 %v1126, %v1122
        %v1343 = vpack.c.b16 %v1131, %v1127
        %v1344 = vpack.c.b16 %v1132, %v1128
        %v1345 = vpack.c.b16 %v1133, %v1129
        %v1346 = vpack.c.b16 %v1134, %v1130
        %v1347 = vpack.c.b16 %v1139, %v1135
        %v1348 = vpack.c.b16 %v1140, %v1136
        %v1349 = vpack.c.b16 %v1141, %v1137
        %v1350 = vpack.c.b16 %v1142, %v1138
        %v1351 = vpack.c.b16 %v1147, %v1143
        %v1352 = vpack.c.b16 %v1148, %v1144
        %v1353 = vpack.c.b16 %v1149, %v1145
        %v1354 = vpack.c.b16 %v1150, %v1146
        %v1355 = vpack.c.b16 %v1155, %v1151
        %v1356 = vpack.c.b16 %v1156, %v1152
        %v1357 = vpack.c.b16 %v1157, %v1153
        %v1358 = vpack.c.b16 %v1158, %v1154
        %v1359 = vpack.c.b16 %v1163, %v1159
        %v1360 = vpack.c.b16 %v1164, %v1160
        %v1361 = vpack.c.b16 %v1165, %v1161
        %v1362 = vpack.c.b16 %v1166, %v1162
        %v1363 = vpack.c.b16 %v1171, %v1167
        %v1364 = vpack.c.b16 %v1172, %v1168
        %v1365 = vpack.c.b16 %v1173, %v1169
        %v1366 = vpack.c.b16 %v1174, %v1170
        %v1367 = vpack.c.b16 %v1179, %v1175
        %v1368 = vpack.c.b16 %v1180, %v1176
        %v1369 = vpack.c.b16 %v1181, %v1177
        %v1370 = vpack.c.b16 %v1182, %v1178
        %v1371 = vpack.c.b16 %v1187, %v1183
        %v1372 = vpack.c.b16 %v1188, %v1184
        %v1373 = vpack.c.b16 %v1189, %v1185
        %v1374 = vpack.c.b16 %v1190, %v1186
        %v1375 = vpack.c.b16 %v1195, %v1191
        %v1376 = vpack.c.b16 %v1196, %v1192
        %v1377 = vpack.c.b16 %v1197, %v1193
        %v1378 = vpack.c.b16 %v1198, %v1194
        %v1379 = vpack.c.b16 %v1203, %v1199
        %v1380 = vpack.c.b16 %v1204, %v1200
        %v1381 = vpack.c.b16 %v1205, %v1201
        %v1382 = vpack.c.b16 %v1206, %v1202
        %v1383 = vpack.c.b16 %v1211, %v1207
        %v1384 = vpack.c.b16 %v1212, %v1208
        %v1385 = vpack.c.b16 %v1213, %v1209
        %v1386 = vpack.c.b16 %v1214, %v1210
        %v1387 = vpack.c.b16 %v1219, %v1215
        %v1388 = vpack.c.b16 %v1220, %v1216
        %v1389 = vpack.c.b16 %v1221, %v1217
        %v1390 = vpack.c.b16 %v1222, %v1218
        %v1391 = vpack.c.b16 %v1227, %v1223
        %v1392 = vpack.c.b16 %v1228, %v1224
        %v1393 = vpack.c.b16 %v1229, %v1225
        %v1394 = vpack.c.b16 %v1230, %v1226
        %v1395 = vpack.c.b16 %v1235, %v1231
        %v1396 = vpack.c.b16 %v1236, %v1232
        %v1397 = vpack.c.b16 %v1237, %v1233
        %v1398 = vpack.c.b16 %v1238, %v1234
        %v1399 = vpack.c.b16 %v1243, %v1239
        %v1400 = vpack.c.b16 %v1244, %v1240
        %v1401 = vpack.c.b16 %v1245, %v1241
        %v1402 = vpack.c.b16 %v1246, %v1242
        %v1403 = vpack.c.b16 %v1251, %v1247
        %v1404 = vpack.c.b16 %v1252, %v1248
        %v1405 = vpack.c.b16 %v1253, %v1249
        %v1406 = vpack.c.b16 %v1254, %v1250
        %v1407 = vpack.c.b16 %v1259, %v1255
        %v1408 = vpack.c.b16 %v1260, %v1256
        %v1409 = vpack.c.b16 %v1261, %v1257
        %v1410 = vpack.c.b16 %v1262, %v1258
        %v1411 = vpack.c.b16 %v1267, %v1263
        %v1412 = vpack.c.b16 %v1268, %v1264
        %v1413 = vpack.c.b16 %v1269, %v1265
        %v1414 = vpack.c.b16 %v1270, %v1266
        %vm1559 = vcmask 523264
        %v1561 = vsel %vm1559, %v771, 0
        %v1564 = vsel %vm1559, %v776, 0
        %v1567 = vsel %vm1559, %v781, 0
        %v1570 = vsel %vm1559, %v786, 0
        %v1573 = vsel %vm1559, %v791, 0
        %v1576 = vsel %vm1559, %v796, 0
        %v1579 = vsel %vm1559, %v801, 0
        %v1582 = vsel %vm1559, %v806, 0
        %1584 = vmatprep.subr.bf16.mxu0 %v1272
        %1585 = vmatpush1.bf16.msra.mxu0 %v1271
        %1586 = vmatprep.subr.bf16.mxu0 %v1276
        %1587 = vmatpush1.bf16.msra.mxu0 %v1275
        %1588 = vmatprep.subr.bf16.mxu0 %v1280
        %1589 = vmatpush1.bf16.msra.mxu0 %v1279
        %1590 = vmatprep.subr.bf16.mxu0 %v1284
        %1591 = vmatpush1.bf16.msra.mxu0 %v1283
        %1592 = vmatprep.subr.bf16.mxu0 %v1288
        %1593 = vmatpush1.bf16.msra.mxu0 %v1287
        %1594 = vmatprep.subr.bf16.mxu0 %v1292
        %1595 = vmatpush1.bf16.msra.mxu0 %v1291
        %1596 = vmatprep.subr.bf16.mxu0 %v1296
        %1597 = vmatpush1.bf16.msra.mxu0 %v1295
        %1598 = vmatprep.subr.bf16.mxu0 %v1300
        %1599 = vmatpush1.bf16.msra.mxu0 %v1299
        %1600 = vmatprep.subr.bf16.mxu0 %v1304
        %1601 = vmatpush1.bf16.msra.mxu0 %v1303
        %1602 = vmatprep.subr.bf16.mxu0 %v1308
        %1603 = vmatpush1.bf16.msra.mxu0 %v1307
        %1604 = vmatprep.subr.bf16.mxu0 %v1312
        %1605 = vmatpush1.bf16.msra.mxu0 %v1311
        %1606 = vmatprep.subr.bf16.mxu0 %v1316
        %1607 = vmatpush1.bf16.msra.mxu0 %v1315
        %1608 = vmatprep.subr.bf16.mxu0 %v1320
        %1609 = vmatpush1.bf16.msra.mxu0 %v1319
        %1610 = vmatprep.subr.bf16.mxu0 %v1324
        %1611 = vmatpush1.bf16.msra.mxu0 %v1323
        %1612 = vmatprep.subr.bf16.mxu0 %v1328
        %1613 = vmatpush1.bf16.msra.mxu0 %v1327
        %1614 = vmatprep.subr.bf16.mxu0 %v1332
        %1615 = vmatpush1.bf16.msra.mxu0 %v1331
        %1616 = vmatprep.mubr.bf16.mxu0 %v768
        %1617 = vmatmul.mubr.bf16.gmra.mrb[0].mxu0 %v767
        %v1618 = vpop.f32.mrb[0].mxu0
        %v1619 = vadd.f32 0.0, %v1618
        %v1620 = vpop.f32.mrb[0].mxu0
        %v1621 = vadd.f32 0.0, %v1620
        %v1622 = vpop.f32.mrb[0].mxu0
        %v1623 = vadd.f32 0.0, %v1622
        %v1624 = vpop.f32.mrb[0].mxu0
        %v1625 = vadd.f32 0.0, %v1624
        %1626 = vmatprep.mubr.bf16.mxu0 %v773
        %1627 = vmatmul.mubr.bf16.gmra.mrb[0].mxu0 %v772
        %v1628 = vpop.f32.mrb[0].mxu0
        %v1629 = vadd.f32 0.0, %v1628
        %v1630 = vpop.f32.mrb[0].mxu0
        %v1631 = vadd.f32 0.0, %v1630
        %v1632 = vpop.f32.mrb[0].mxu0
        %v1633 = vadd.f32 0.0, %v1632
        %v1634 = vpop.f32.mrb[0].mxu0
        %v1635 = vadd.f32 0.0, %v1634
        %1636 = vmatprep.mubr.bf16.mxu0 %v778
        %1637 = vmatmul.mubr.bf16.gmra.mrb[0].mxu0 %v777
        %v1638 = vpop.f32.mrb[0].mxu0
        %v1639 = vadd.f32 0.0, %v1638
        %v1640 = vpop.f32.mrb[0].mxu0
        %v1641 = vadd.f32 0.0, %v1640
        %v1642 = vpop.f32.mrb[0].mxu0
        %v1643 = vadd.f32 0.0, %v1642
        %v1644 = vpop.f32.mrb[0].mxu0
        %v1645 = vadd.f32 0.0, %v1644
        %1646 = vmatprep.mubr.bf16.mxu0 %v783
        %1647 = vmatmul.mubr.bf16.gmra.mrb[0].mxu0 %v782
        %v1648 = vpop.f32.mrb[0].mxu0
        %v1649 = vadd.f32 0.0, %v1648
        %v1650 = vpop.f32.mrb[0].mxu0
        %v1651 = vadd.f32 0.0, %v1650
        %v1652 = vpop.f32.mrb[0].mxu0
        %v1653 = vadd.f32 0.0, %v1652
        %v1654 = vpop.f32.mrb[0].mxu0
        %v1655 = vadd.f32 0.0, %v1654
        %1656 = vmatprep.mubr.bf16.mxu0 %v788
        %1657 = vmatmul.mubr.bf16.gmra.mrb[0].mxu0 %v787
        %v1658 = vpop.f32.mrb[0].mxu0
        %v1659 = vadd.f32 0.0, %v1658
        %v1660 = vpop.f32.mrb[0].mxu0
        %v1661 = vadd.f32 0.0, %v1660
        %v1662 = vpop.f32.mrb[0].mxu0
        %v1663 = vadd.f32 0.0, %v1662
        %v1664 = vpop.f32.mrb[0].mxu0
        %v1665 = vadd.f32 0.0, %v1664
        %1666 = vmatprep.mubr.bf16.mxu0 %v793
        %1667 = vmatmul.mubr.bf16.gmra.mrb[0].mxu0 %v792
        %v1668 = vpop.f32.mrb[0].mxu0
        %v1669 = vadd.f32 0.0, %v1668
        %v1670 = vpop.f32.mrb[0].mxu0
        %v1671 = vadd.f32 0.0, %v1670
        %v1672 = vpop.f32.mrb[0].mxu0
        %v1673 = vadd.f32 0.0, %v1672
        %v1674 = vpop.f32.mrb[0].mxu0
        %v1675 = vadd.f32 0.0, %v1674
        %1676 = vmatprep.mubr.bf16.mxu0 %v798
        %1677 = vmatmul.mubr.bf16.gmra.mrb[0].mxu0 %v797
        %v1678 = vpop.f32.mrb[0].mxu0
        %v1679 = vadd.f32 0.0, %v1678
        %v1680 = vpop.f32.mrb[0].mxu0
        %v1681 = vadd.f32 0.0, %v1680
        %v1682 = vpop.f32.mrb[0].mxu0
        %v1683 = vadd.f32 0.0, %v1682
        %v1684 = vpop.f32.mrb[0].mxu0
        %v1685 = vadd.f32 0.0, %v1684
        %1686 = vmatprep.mubr.bf16.mxu0 %v803
        %1687 = vmatmul.mubr.bf16.gmra.mrb[0].mxu0 %v802
        %v1688 = vpop.f32.mrb[0].mxu0
        %v1689 = vadd.f32 0.0, %v1688
        %v1690 = vpop.f32.mrb[0].mxu0
        %v1691 = vadd.f32 0.0, %v1690
        %v1692 = vpop.f32.mrb[0].mxu0
        %v1693 = vadd.f32 0.0, %v1692
        %v1694 = vpop.f32.mrb[0].mxu0
        %v1695 = vadd.f32 0.0, %v1694
        %1696 = vdwg.mxu0
        %1697 = vmatprep.subr.bf16.mxu0 %v1336
        %1698 = vmatpush1.bf16.msra.mxu0 %v1335
        %1699 = vmatprep.subr.bf16.mxu0 %v1340
        %1700 = vmatpush1.bf16.msra.mxu0 %v1339
        %1701 = vmatprep.subr.bf16.mxu0 %v1344
        %1702 = vmatpush1.bf16.msra.mxu0 %v1343
        %1703 = vmatprep.subr.bf16.mxu0 %v1348
        %1704 = vmatpush1.bf16.msra.mxu0 %v1347
        %1705 = vmatprep.subr.bf16.mxu0 %v1352
        %1706 = vmatpush1.bf16.msra.mxu0 %v1351
        %1707 = vmatprep.subr.bf16.mxu0 %v1356
        %1708 = vmatpush1.bf16.msra.mxu0 %v1355
        %1709 = vmatprep.subr.bf16.mxu0 %v1360
        %1710 = vmatpush1.bf16.msra.mxu0 %v1359
        %1711 = vmatprep.subr.bf16.mxu0 %v1364
        %1712 = vmatpush1.bf16.msra.mxu0 %v1363
        %1713 = vmatprep.subr.bf16.mxu0 %v1368
        %1714 = vmatpush1.bf16.msra.mxu0 %v1367
        %1715 = vmatprep.subr.bf16.mxu0 %v1372
        %1716 = vmatpush1.bf16.msra.mxu0 %v1371
        %1717 = vmatprep.subr.bf16.mxu0 %v1376
        %1718 = vmatpush1.bf16.msra.mxu0 %v1375
        %1719 = vmatprep.subr.bf16.mxu0 %v1380
        %1720 = vmatpush1.bf16.msra.mxu0 %v1379
        %1721 = vmatprep.subr.bf16.mxu0 %v1384
        %1722 = vmatpush1.bf16.msra.mxu0 %v1383
        %1723 = vmatprep.subr.bf16.mxu0 %v1388
        %1724 = vmatpush1.bf16.msra.mxu0 %v1387
        %1725 = vmatprep.subr.bf16.mxu0 %v1392
        %1726 = vmatpush1.bf16.msra.mxu0 %v1391
        %1727 = vmatprep.subr.bf16.mxu0 %v1396
        %1728 = vmatpush1.bf16.msra.mxu0 %v1395
        %1729 = vmatprep.mubr.bf16.mxu0 %v770
        %1730 = vmatmul.mubr.bf16.gmra.mrb[0].mxu0 %v769
        %v1731 = vpop.f32.mrb[0].mxu0
        %v1732 = vadd.f32 %v1619, %v1731
        %v1733 = vpop.f32.mrb[0].mxu0
        %v1734 = vadd.f32 %v1621, %v1733
        %v1735 = vpop.f32.mrb[0].mxu0
        %v1736 = vadd.f32 %v1623, %v1735
        %v1737 = vpop.f32.mrb[0].mxu0
        %v1738 = vadd.f32 %v1625, %v1737
        %1739 = vmatprep.mubr.bf16.mxu0 %v775
        %1740 = vmatmul.mubr.bf16.gmra.mrb[0].mxu0 %v774
        %v1741 = vpop.f32.mrb[0].mxu0
        %v1742 = vadd.f32 %v1629, %v1741
        %v1743 = vpop.f32.mrb[0].mxu0
        %v1744 = vadd.f32 %v1631, %v1743
        %v1745 = vpop.f32.mrb[0].mxu0
        %v1746 = vadd.f32 %v1633, %v1745
        %v1747 = vpop.f32.mrb[0].mxu0
        %v1748 = vadd.f32 %v1635, %v1747
        %1749 = vmatprep.mubr.bf16.mxu0 %v780
        %1750 = vmatmul.mubr.bf16.gmra.mrb[0].mxu0 %v779
        %v1751 = vpop.f32.mrb[0].mxu0
        %v1752 = vadd.f32 %v1639, %v1751
        %v1753 = vpop.f32.mrb[0].mxu0
        %v1754 = vadd.f32 %v1641, %v1753
        %v1755 = vpop.f32.mrb[0].mxu0
        %v1756 = vadd.f32 %v1643, %v1755
        %v1757 = vpop.f32.mrb[0].mxu0
        %v1758 = vadd.f32 %v1645, %v1757
        %1759 = vmatprep.mubr.bf16.mxu0 %v785
        %1760 = vmatmul.mubr.bf16.gmra.mrb[0].mxu0 %v784
        %v1761 = vpop.f32.mrb[0].mxu0
        %v1762 = vadd.f32 %v1649, %v1761
        %v1763 = vpop.f32.mrb[0].mxu0
        %v1764 = vadd.f32 %v1651, %v1763
        %v1765 = vpop.f32.mrb[0].mxu0
        %v1766 = vadd.f32 %v1653, %v1765
        %v1767 = vpop.f32.mrb[0].mxu0
        %v1768 = vadd.f32 %v1655, %v1767
        %1769 = vmatprep.mubr.bf16.mxu0 %v790
        %1770 = vmatmul.mubr.bf16.gmra.mrb[0].mxu0 %v789
        %v1771 = vpop.f32.mrb[0].mxu0
        %v1772 = vadd.f32 %v1659, %v1771
        %v1773 = vpop.f32.mrb[0].mxu0
        %v1774 = vadd.f32 %v1661, %v1773
        %v1775 = vpop.f32.mrb[0].mxu0
        %v1776 = vadd.f32 %v1663, %v1775
        %v1777 = vpop.f32.mrb[0].mxu0
        %v1778 = vadd.f32 %v1665, %v1777
        %1779 = vmatprep.mubr.bf16.mxu0 %v795
        %1780 = vmatmul.mubr.bf16.gmra.mrb[0].mxu0 %v794
        %v1781 = vpop.f32.mrb[0].mxu0
        %v1782 = vadd.f32 %v1669, %v1781
        %v1783 = vpop.f32.mrb[0].mxu0
        %v1784 = vadd.f32 %v1671, %v1783
        %v1785 = vpop.f32.mrb[0].mxu0
        %v1786 = vadd.f32 %v1673, %v1785
        %v1787 = vpop.f32.mrb[0].mxu0
        %v1788 = vadd.f32 %v1675, %v1787
        %1789 = vmatprep.mubr.bf16.mxu0 %v800
        %1790 = vmatmul.mubr.bf16.gmra.mrb[0].mxu0 %v799
        %v1791 = vpop.f32.mrb[0].mxu0
        %v1792 = vadd.f32 %v1679, %v1791
        %v1793 = vpop.f32.mrb[0].mxu0
        %v1794 = vadd.f32 %v1681, %v1793
        %v1795 = vpop.f32.mrb[0].mxu0
        %v1796 = vadd.f32 %v1683, %v1795
        %v1797 = vpop.f32.mrb[0].mxu0
        %v1798 = vadd.f32 %v1685, %v1797
        %1799 = vmatprep.mubr.bf16.mxu0 %v805
        %1800 = vmatmul.mubr.bf16.gmra.mrb[0].mxu0 %v804
        %v1801 = vpop.f32.mrb[0].mxu0
        %v1802 = vadd.f32 %v1689, %v1801
        %v1803 = vpop.f32.mrb[0].mxu0
        %v1804 = vadd.f32 %v1691, %v1803
        %v1805 = vpop.f32.mrb[0].mxu0
        %v1806 = vadd.f32 %v1693, %v1805
        %v1807 = vpop.f32.mrb[0].mxu0
        %v1808 = vadd.f32 %v1695, %v1807
        %1809 = vdwg.mxu0
        %1810 = vmatprep.subr.bf16.mxu0 %v1400
        %1811 = vmatpush1.bf16.msra.mxu0 %v1399
        %1812 = vmatprep.subr.bf16.mxu0 %v1404
        %1813 = vmatpush1.bf16.msra.mxu0 %v1403
        %1814 = vmatprep.subr.bf16.mxu0 %v1408
        %1815 = vmatpush1.bf16.msra.mxu0 %v1407
        %1816 = vmatprep.subr.bf16.mxu0 %v1412
        %1817 = vmatpush1.bf16.msra.mxu0 %v1411
        %1818 = vmatprep.subr.bf16.mxu0 0
        %1819 = vmatpush1.bf16.msra.mxu0 0
        %1820 = vmatprep.subr.bf16.mxu0 0
        %1821 = vmatpush1.bf16.msra.mxu0 0
        %1822 = vmatprep.subr.bf16.mxu0 0
        %1823 = vmatpush1.bf16.msra.mxu0 0
        %1824 = vmatprep.subr.bf16.mxu0 0
        %1825 = vmatpush1.bf16.msra.mxu0 0
        %1826 = vmatprep.subr.bf16.mxu0 0
        %1827 = vmatpush1.bf16.msra.mxu0 0
        %1828 = vmatprep.subr.bf16.mxu0 0
        %1829 = vmatpush1.bf16.msra.mxu0 0
        %1830 = vmatprep.subr.bf16.mxu0 0
        %1831 = vmatpush1.bf16.msra.mxu0 0
        %1832 = vmatprep.subr.bf16.mxu0 0
        %1833 = vmatpush1.bf16.msra.mxu0 0
        %1834 = vmatprep.subr.bf16.mxu0 0
        %1835 = vmatpush1.bf16.msra.mxu0 0
        %1836 = vmatprep.subr.bf16.mxu0 0
        %1837 = vmatpush1.bf16.msra.mxu0 0
        %1838 = vmatprep.subr.bf16.mxu0 0
        %1839 = vmatpush1.bf16.msra.mxu0 0
        %1840 = vmatprep.subr.bf16.mxu0 0
        %1841 = vmatpush1.bf16.msra.mxu0 0
        %1842 = vmatprep.mubr.bf16.mxu0 0
        %1843 = vmatmul.mubr.bf16.gmra.mrb[0].mxu0 %v1561
        %v1844 = vpop.f32.mrb[0].mxu0
        %v1845 = vadd.f32 %v1732, %v1844
        %v1846 = vpop.f32.mrb[0].mxu0
        %v1847 = vadd.f32 %v1734, %v1846
        %v1848 = vpop.f32.mrb[0].mxu0
        %v1849 = vadd.f32 %v1736, %v1848
        %v1850 = vpop.f32.mrb[0].mxu0
        %v1851 = vadd.f32 %v1738, %v1850
        %1852 = vmatprep.mubr.bf16.mxu0 0
        %1853 = vmatmul.mubr.bf16.gmra.mrb[0].mxu0 %v1564
        %v1854 = vpop.f32.mrb[0].mxu0
        %v1855 = vadd.f32 %v1742, %v1854
        %v1856 = vpop.f32.mrb[0].mxu0
        %v1857 = vadd.f32 %v1744, %v1856
        %v1858 = vpop.f32.mrb[0].mxu0
        %v1859 = vadd.f32 %v1746, %v1858
        %v1860 = vpop.f32.mrb[0].mxu0
        %v1861 = vadd.f32 %v1748, %v1860
        %1862 = vmatprep.mubr.bf16.mxu0 0
        %1863 = vmatmul.mubr.bf16.gmra.mrb[0].mxu0 %v1567
        %v1864 = vpop.f32.mrb[0].mxu0
        %v1865 = vadd.f32 %v1752, %v1864
        %v1866 = vpop.f32.mrb[0].mxu0
        %v1867 = vadd.f32 %v1754, %v1866
        %v1868 = vpop.f32.mrb[0].mxu0
        %v1869 = vadd.f32 %v1756, %v1868
        %v1870 = vpop.f32.mrb[0].mxu0
        %v1871 = vadd.f32 %v1758, %v1870
        %1872 = vmatprep.mubr.bf16.mxu0 0
        %1873 = vmatmul.mubr.bf16.gmra.mrb[0].mxu0 %v1570
        %v1874 = vpop.f32.mrb[0].mxu0
        %v1875 = vadd.f32 %v1762, %v1874
        %v1876 = vpop.f32.mrb[0].mxu0
        %v1877 = vadd.f32 %v1764, %v1876
        %v1878 = vpop.f32.mrb[0].mxu0
        %v1879 = vadd.f32 %v1766, %v1878
        %v1880 = vpop.f32.mrb[0].mxu0
        %v1881 = vadd.f32 %v1768, %v1880
        %1882 = vmatprep.mubr.bf16.mxu0 0
        %1883 = vmatmul.mubr.bf16.gmra.mrb[0].mxu0 %v1573
        %v1884 = vpop.f32.mrb[0].mxu0
        %v1885 = vadd.f32 %v1772, %v1884
        %v1886 = vpop.f32.mrb[0].mxu0
        %v1887 = vadd.f32 %v1774, %v1886
        %v1888 = vpop.f32.mrb[0].mxu0
        %v1889 = vadd.f32 %v1776, %v1888
        %v1890 = vpop.f32.mrb[0].mxu0
        %v1891 = vadd.f32 %v1778, %v1890
        %1892 = vmatprep.mubr.bf16.mxu0 0
        %1893 = vmatmul.mubr.bf16.gmra.mrb[0].mxu0 %v1576
        %v1894 = vpop.f32.mrb[0].mxu0
        %v1895 = vadd.f32 %v1782, %v1894
        %v1896 = vpop.f32.mrb[0].mxu0
        %v1897 = vadd.f32 %v1784, %v1896
        %v1898 = vpop.f32.mrb[0].mxu0
        %v1899 = vadd.f32 %v1786, %v1898
        %v1900 = vpop.f32.mrb[0].mxu0
        %v1901 = vadd.f32 %v1788, %v1900
        %1902 = vmatprep.mubr.bf16.mxu0 0
        %1903 = vmatmul.mubr.bf16.gmra.mrb[0].mxu0 %v1579
        %v1904 = vpop.f32.mrb[0].mxu0
        %v1905 = vadd.f32 %v1792, %v1904
        %v1906 = vpop.f32.mrb[0].mxu0
        %v1907 = vadd.f32 %v1794, %v1906
        %v1908 = vpop.f32.mrb[0].mxu0
        %v1909 = vadd.f32 %v1796, %v1908
        %v1910 = vpop.f32.mrb[0].mxu0
        %v1911 = vadd.f32 %v1798, %v1910
        %1912 = vmatprep.mubr.bf16.mxu0 0
        %1913 = vmatmul.mubr.bf16.gmra.mrb[0].mxu0 %v1582
        %v1914 = vpop.f32.mrb[0].mxu0
        %v1915 = vadd.f32 %v1802, %v1914
        %v1916 = vpop.f32.mrb[0].mxu0
        %v1917 = vadd.f32 %v1804, %v1916
        %v1918 = vpop.f32.mrb[0].mxu0
        %v1919 = vadd.f32 %v1806, %v1918
        %v1920 = vpop.f32.mrb[0].mxu0
        %v1921 = vadd.f32 %v1808, %v1920
        %1922 = vdwg.mxu0
        %1923 = vmatprep.subr.bf16.mxu0 %v1274
        %1924 = vmatpush1.bf16.msra.mxu0 %v1273
        %1925 = vmatprep.subr.bf16.mxu0 %v1278
        %1926 = vmatpush1.bf16.msra.mxu0 %v1277
        %1927 = vmatprep.subr.bf16.mxu0 %v1282
        %1928 = vmatpush1.bf16.msra.mxu0 %v1281
        %1929 = vmatprep.subr.bf16.mxu0 %v1286
        %1930 = vmatpush1.bf16.msra.mxu0 %v1285
        %1931 = vmatprep.subr.bf16.mxu0 %v1290
        %1932 = vmatpush1.bf16.msra.mxu0 %v1289
        %1933 = vmatprep.subr.bf16.mxu0 %v1294
        %1934 = vmatpush1.bf16.msra.mxu0 %v1293
        %1935 = vmatprep.subr.bf16.mxu0 %v1298
        %1936 = vmatpush1.bf16.msra.mxu0 %v1297
        %1937 = vmatprep.subr.bf16.mxu0 %v1302
        %1938 = vmatpush1.bf16.msra.mxu0 %v1301
        %1939 = vmatprep.subr.bf16.mxu0 %v1306
        %1940 = vmatpush1.bf16.msra.mxu0 %v1305
        %1941 = vmatprep.subr.bf16.mxu0 %v1310
        %1942 = vmatpush1.bf16.msra.mxu0 %v1309
        %1943 = vmatprep.subr.bf16.mxu0 %v1314
        %1944 = vmatpush1.bf16.msra.mxu0 %v1313
        %1945 = vmatprep.subr.bf16.mxu0 %v1318
        %1946 = vmatpush1.bf16.msra.mxu0 %v1317
        %1947 = vmatprep.subr.bf16.mxu0 %v1322
        %1948 = vmatpush1.bf16.msra.mxu0 %v1321
        %1949 = vmatprep.subr.bf16.mxu0 %v1326
        %1950 = vmatpush1.bf16.msra.mxu0 %v1325
        %1951 = vmatprep.subr.bf16.mxu0 %v1330
        %1952 = vmatpush1.bf16.msra.mxu0 %v1329
        %1953 = vmatprep.subr.bf16.mxu0 %v1334
        %1954 = vmatpush1.bf16.msra.mxu0 %v1333
        %1955 = vmatprep.mubr.bf16.mxu0 %v768
        %1956 = vmatmul.mubr.bf16.gmra.mrb[0].mxu0 %v767
        %v1957 = vpop.f32.mrb[0].mxu0
        %v1958 = vadd.f32 0.0, %v1957
        %v1959 = vpop.f32.mrb[0].mxu0
        %v1960 = vadd.f32 0.0, %v1959
        %v1961 = vpop.f32.mrb[0].mxu0
        %v1962 = vadd.f32 0.0, %v1961
        %v1963 = vpop.f32.mrb[0].mxu0
        %v1964 = vadd.f32 0.0, %v1963
        %1965 = vmatprep.mubr.bf16.mxu0 %v773
        %1966 = vmatmul.mubr.bf16.gmra.mrb[0].mxu0 %v772
        %v1967 = vpop.f32.mrb[0].mxu0
        %v1968 = vadd.f32 0.0, %v1967
        %v1969 = vpop.f32.mrb[0].mxu0
        %v1970 = vadd.f32 0.0, %v1969
        %v1971 = vpop.f32.mrb[0].mxu0
        %v1972 = vadd.f32 0.0, %v1971
        %v1973 = vpop.f32.mrb[0].mxu0
        %v1974 = vadd.f32 0.0, %v1973
        %1975 = vmatprep.mubr.bf16.mxu0 %v778
        %1976 = vmatmul.mubr.bf16.gmra.mrb[0].mxu0 %v777
        %v1977 = vpop.f32.mrb[0].mxu0
        %v1978 = vadd.f32 0.0, %v1977
        %v1979 = vpop.f32.mrb[0].mxu0
        %v1980 = vadd.f32 0.0, %v1979
        %v1981 = vpop.f32.mrb[0].mxu0
        %v1982 = vadd.f32 0.0, %v1981
        %v1983 = vpop.f32.mrb[0].mxu0
        %v1984 = vadd.f32 0.0, %v1983
        %1985 = vmatprep.mubr.bf16.mxu0 %v783
        %1986 = vmatmul.mubr.bf16.gmra.mrb[0].mxu0 %v782
        %v1987 = vpop.f32.mrb[0].mxu0
        %v1988 = vadd.f32 0.0, %v1987
        %v1989 = vpop.f32.mrb[0].mxu0
        %v1990 = vadd.f32 0.0, %v1989
        %v1991 = vpop.f32.mrb[0].mxu0
        %v1992 = vadd.f32 0.0, %v1991
        %v1993 = vpop.f32.mrb[0].mxu0
        %v1994 = vadd.f32 0.0, %v1993
        %1995 = vmatprep.mubr.bf16.mxu0 %v788
        %1996 = vmatmul.mubr.bf16.gmra.mrb[0].mxu0 %v787
        %v1997 = vpop.f32.mrb[0].mxu0
        %v1998 = vadd.f32 0.0, %v1997
        %v1999 = vpop.f32.mrb[0].mxu0
        %v2000 = vadd.f32 0.0, %v1999
        %v2001 = vpop.f32.mrb[0].mxu0
        %v2002 = vadd.f32 0.0, %v2001
        %v2003 = vpop.f32.mrb[0].mxu0
        %v2004 = vadd.f32 0.0, %v2003
        %2005 = vmatprep.mubr.bf16.mxu0 %v793
        %2006 = vmatmul.mubr.bf16.gmra.mrb[0].mxu0 %v792
        %v2007 = vpop.f32.mrb[0].mxu0
        %v2008 = vadd.f32 0.0, %v2007
        %v2009 = vpop.f32.mrb[0].mxu0
        %v2010 = vadd.f32 0.0, %v2009
        %v2011 = vpop.f32.mrb[0].mxu0
        %v2012 = vadd.f32 0.0, %v2011
        %v2013 = vpop.f32.mrb[0].mxu0
        %v2014 = vadd.f32 0.0, %v2013
        %2015 = vmatprep.mubr.bf16.mxu0 %v798
        %2016 = vmatmul.mubr.bf16.gmra.mrb[0].mxu0 %v797
        %v2017 = vpop.f32.mrb[0].mxu0
        %v2018 = vadd.f32 0.0, %v2017
        %v2019 = vpop.f32.mrb[0].mxu0
        %v2020 = vadd.f32 0.0, %v2019
        %v2021 = vpop.f32.mrb[0].mxu0
        %v2022 = vadd.f32 0.0, %v2021
        %v2023 = vpop.f32.mrb[0].mxu0
        %v2024 = vadd.f32 0.0, %v2023
        %2025 = vmatprep.mubr.bf16.mxu0 %v803
        %2026 = vmatmul.mubr.bf16.gmra.mrb[0].mxu0 %v802
        %v2027 = vpop.f32.mrb[0].mxu0
        %v2028 = vadd.f32 0.0, %v2027
        %v2029 = vpop.f32.mrb[0].mxu0
        %v2030 = vadd.f32 0.0, %v2029
        %v2031 = vpop.f32.mrb[0].mxu0
        %v2032 = vadd.f32 0.0, %v2031
        %v2033 = vpop.f32.mrb[0].mxu0
        %v2034 = vadd.f32 0.0, %v2033
        %2035 = vdwg.mxu0
        %2036 = vmatprep.subr.bf16.mxu0 %v1338
        %2037 = vmatpush1.bf16.msra.mxu0 %v1337
        %2038 = vmatprep.subr.bf16.mxu0 %v1342
        %2039 = vmatpush1.bf16.msra.mxu0 %v1341
        %2040 = vmatprep.subr.bf16.mxu0 %v1346
        %2041 = vmatpush1.bf16.msra.mxu0 %v1345
        %2042 = vmatprep.subr.bf16.mxu0 %v1350
        %2043 = vmatpush1.bf16.msra.mxu0 %v1349
        %2044 = vmatprep.subr.bf16.mxu0 %v1354
        %2045 = vmatpush1.bf16.msra.mxu0 %v1353
        %2046 = vmatprep.subr.bf16.mxu0 %v1358
        %2047 = vmatpush1.bf16.msra.mxu0 %v1357
        %2048 = vmatprep.subr.bf16.mxu0 %v1362
        %2049 = vmatpush1.bf16.msra.mxu0 %v1361
        %2050 = vmatprep.subr.bf16.mxu0 %v1366
        %2051 = vmatpush1.bf16.msra.mxu0 %v1365
        %2052 = vmatprep.subr.bf16.mxu0 %v1370
        %2053 = vmatpush1.bf16.msra.mxu0 %v1369
        %2054 = vmatprep.subr.bf16.mxu0 %v1374
        %2055 = vmatpush1.bf16.msra.mxu0 %v1373
        %2056 = vmatprep.subr.bf16.mxu0 %v1378
        %2057 = vmatpush1.bf16.msra.mxu0 %v1377
        %2058 = vmatprep.subr.bf16.mxu0 %v1382
        %2059 = vmatpush1.bf16.msra.mxu0 %v1381
        %2060 = vmatprep.subr.bf16.mxu0 %v1386
        %2061 = vmatpush1.bf16.msra.mxu0 %v1385
        %2062 = vmatprep.subr.bf16.mxu0 %v1390
        %2063 = vmatpush1.bf16.msra.mxu0 %v1389
        %2064 = vmatprep.subr.bf16.mxu0 %v1394
        %2065 = vmatpush1.bf16.msra.mxu0 %v1393
        %2066 = vmatprep.subr.bf16.mxu0 %v1398
        %2067 = vmatpush1.bf16.msra.mxu0 %v1397
        %2068 = vmatprep.mubr.bf16.mxu0 %v770
        %2069 = vmatmul.mubr.bf16.gmra.mrb[0].mxu0 %v769
        %v2070 = vpop.f32.mrb[0].mxu0
        %v2071 = vadd.f32 %v1958, %v2070
        %v2072 = vpop.f32.mrb[0].mxu0
        %v2073 = vadd.f32 %v1960, %v2072
        %v2074 = vpop.f32.mrb[0].mxu0
        %v2075 = vadd.f32 %v1962, %v2074
        %v2076 = vpop.f32.mrb[0].mxu0
        %v2077 = vadd.f32 %v1964, %v2076
        %2078 = vmatprep.mubr.bf16.mxu0 %v775
        %2079 = vmatmul.mubr.bf16.gmra.mrb[0].mxu0 %v774
        %v2080 = vpop.f32.mrb[0].mxu0
        %v2081 = vadd.f32 %v1968, %v2080
        %v2082 = vpop.f32.mrb[0].mxu0
        %v2083 = vadd.f32 %v1970, %v2082
        %v2084 = vpop.f32.mrb[0].mxu0
        %v2085 = vadd.f32 %v1972, %v2084
        %v2086 = vpop.f32.mrb[0].mxu0
        %v2087 = vadd.f32 %v1974, %v2086
        %2088 = vmatprep.mubr.bf16.mxu0 %v780
        %2089 = vmatmul.mubr.bf16.gmra.mrb[0].mxu0 %v779
        %v2090 = vpop.f32.mrb[0].mxu0
        %v2091 = vadd.f32 %v1978, %v2090
        %v2092 = vpop.f32.mrb[0].mxu0
        %v2093 = vadd.f32 %v1980, %v2092
        %v2094 = vpop.f32.mrb[0].mxu0
        %v2095 = vadd.f32 %v1982, %v2094
        %v2096 = vpop.f32.mrb[0].mxu0
        %v2097 = vadd.f32 %v1984, %v2096
        %2098 = vmatprep.mubr.bf16.mxu0 %v785
        %2099 = vmatmul.mubr.bf16.gmra.mrb[0].mxu0 %v784
        %v2100 = vpop.f32.mrb[0].mxu0
        %v2101 = vadd.f32 %v1988, %v2100
        %v2102 = vpop.f32.mrb[0].mxu0
        %v2103 = vadd.f32 %v1990, %v2102
        %v2104 = vpop.f32.mrb[0].mxu0
        %v2105 = vadd.f32 %v1992, %v2104
        %v2106 = vpop.f32.mrb[0].mxu0
        %v2107 = vadd.f32 %v1994, %v2106
        %2108 = vmatprep.mubr.bf16.mxu0 %v790
        %2109 = vmatmul.mubr.bf16.gmra.mrb[0].mxu0 %v789
        %v2110 = vpop.f32.mrb[0].mxu0
        %v2111 = vadd.f32 %v1998, %v2110
        %v2112 = vpop.f32.mrb[0].mxu0
        %v2113 = vadd.f32 %v2000, %v2112
        %v2114 = vpop.f32.mrb[0].mxu0
        %v2115 = vadd.f32 %v2002, %v2114
        %v2116 = vpop.f32.mrb[0].mxu0
        %v2117 = vadd.f32 %v2004, %v2116
        %2118 = vmatprep.mubr.bf16.mxu0 %v795
        %2119 = vmatmul.mubr.bf16.gmra.mrb[0].mxu0 %v794
        %v2120 = vpop.f32.mrb[0].mxu0
        %v2121 = vadd.f32 %v2008, %v2120
        %v2122 = vpop.f32.mrb[0].mxu0
        %v2123 = vadd.f32 %v2010, %v2122
        %v2124 = vpop.f32.mrb[0].mxu0
        %v2125 = vadd.f32 %v2012, %v2124
        %v2126 = vpop.f32.mrb[0].mxu0
        %v2127 = vadd.f32 %v2014, %v2126
        %2128 = vmatprep.mubr.bf16.mxu0 %v800
        %2129 = vmatmul.mubr.bf16.gmra.mrb[0].mxu0 %v799
        %v2130 = vpop.f32.mrb[0].mxu0
        %v2131 = vadd.f32 %v2018, %v2130
        %v2132 = vpop.f32.mrb[0].mxu0
        %v2133 = vadd.f32 %v2020, %v2132
        %v2134 = vpop.f32.mrb[0].mxu0
        %v2135 = vadd.f32 %v2022, %v2134
        %v2136 = vpop.f32.mrb[0].mxu0
        %v2137 = vadd.f32 %v2024, %v2136
        %2138 = vmatprep.mubr.bf16.mxu0 %v805
        %2139 = vmatmul.mubr.bf16.gmra.mrb[0].mxu0 %v804
        %v2140 = vpop.f32.mrb[0].mxu0
        %v2141 = vadd.f32 %v2028, %v2140
        %v2142 = vpop.f32.mrb[0].mxu0
        %v2143 = vadd.f32 %v2030, %v2142
        %v2144 = vpop.f32.mrb[0].mxu0
        %v2145 = vadd.f32 %v2032, %v2144
        %v2146 = vpop.f32.mrb[0].mxu0
        %v2147 = vadd.f32 %v2034, %v2146
        %2148 = vdwg.mxu0
        %2149 = vmatprep.subr.bf16.mxu0 %v1402
        %2150 = vmatpush1.bf16.msra.mxu0 %v1401
        %2151 = vmatprep.subr.bf16.mxu0 %v1406
        %2152 = vmatpush1.bf16.msra.mxu0 %v1405
        %2153 = vmatprep.subr.bf16.mxu0 %v1410
        %2154 = vmatpush1.bf16.msra.mxu0 %v1409
        %2155 = vmatprep.subr.bf16.mxu0 %v1414
        %2156 = vmatpush1.bf16.msra.mxu0 %v1413
        %2157 = vmatprep.subr.bf16.mxu0 0
        %2158 = vmatpush1.bf16.msra.mxu0 0
        %2159 = vmatprep.subr.bf16.mxu0 0
        %2160 = vmatpush1.bf16.msra.mxu0 0
        %2161 = vmatprep.subr.bf16.mxu0 0
        %2162 = vmatpush1.bf16.msra.mxu0 0
        %2163 = vmatprep.subr.bf16.mxu0 0
        %2164 = vmatpush1.bf16.msra.mxu0 0
        %2165 = vmatprep.subr.bf16.mxu0 0
        %2166 = vmatpush1.bf16.msra.mxu0 0
        %2167 = vmatprep.subr.bf16.mxu0 0
        %2168 = vmatpush1.bf16.msra.mxu0 0
        %2169 = vmatprep.subr.bf16.mxu0 0
        %2170 = vmatpush1.bf16.msra.mxu0 0
        %2171 = vmatprep.subr.bf16.mxu0 0
        %2172 = vmatpush1.bf16.msra.mxu0 0
        %2173 = vmatprep.subr.bf16.mxu0 0
        %2174 = vmatpush1.bf16.msra.mxu0 0
        %2175 = vmatprep.subr.bf16.mxu0 0
        %2176 = vmatpush1.bf16.msra.mxu0 0
        %2177 = vmatprep.subr.bf16.mxu0 0
        %2178 = vmatpush1.bf16.msra.mxu0 0
        %2179 = vmatprep.subr.bf16.mxu0 0
        %2180 = vmatpush1.bf16.msra.mxu0 0
        %2181 = vmatprep.mubr.bf16.mxu0 0
        %2182 = vmatmul.mubr.bf16.gmra.mrb[0].mxu0 %v1561
        %v2183 = vpop.f32.mrb[0].mxu0
        %v2184 = vadd.f32 %v2071, %v2183
        %v2185 = vpop.f32.mrb[0].mxu0
        %v2186 = vadd.f32 %v2073, %v2185
        %v2187 = vpop.f32.mrb[0].mxu0
        %v2188 = vadd.f32 %v2075, %v2187
        %v2189 = vpop.f32.mrb[0].mxu0
        %v2190 = vadd.f32 %v2077, %v2189
        %2191 = vmatprep.mubr.bf16.mxu0 0
        %2192 = vmatmul.mubr.bf16.gmra.mrb[0].mxu0 %v1564
        %v2193 = vpop.f32.mrb[0].mxu0
        %v2194 = vadd.f32 %v2081, %v2193
        %v2195 = vpop.f32.mrb[0].mxu0
        %v2196 = vadd.f32 %v2083, %v2195
        %v2197 = vpop.f32.mrb[0].mxu0
        %v2198 = vadd.f32 %v2085, %v2197
        %v2199 = vpop.f32.mrb[0].mxu0
        %v2200 = vadd.f32 %v2087, %v2199
        %2201 = vmatprep.mubr.bf16.mxu0 0
        %2202 = vmatmul.mubr.bf16.gmra.mrb[0].mxu0 %v1567
        %v2203 = vpop.f32.mrb[0].mxu0
        %v2204 = vadd.f32 %v2091, %v2203
        %v2205 = vpop.f32.mrb[0].mxu0
        %v2206 = vadd.f32 %v2093, %v2205
        %v2207 = vpop.f32.mrb[0].mxu0
        %v2208 = vadd.f32 %v2095, %v2207
        %v2209 = vpop.f32.mrb[0].mxu0
        %v2210 = vadd.f32 %v2097, %v2209
        %2211 = vmatprep.mubr.bf16.mxu0 0
        %2212 = vmatmul.mubr.bf16.gmra.mrb[0].mxu0 %v1570
        %v2213 = vpop.f32.mrb[0].mxu0
        %v2214 = vadd.f32 %v2101, %v2213
        %v2215 = vpop.f32.mrb[0].mxu0
        %v2216 = vadd.f32 %v2103, %v2215
        %v2217 = vpop.f32.mrb[0].mxu0
        %v2218 = vadd.f32 %v2105, %v2217
        %v2219 = vpop.f32.mrb[0].mxu0
        %v2220 = vadd.f32 %v2107, %v2219
        %2221 = vmatprep.mubr.bf16.mxu0 0
        %2222 = vmatmul.mubr.bf16.gmra.mrb[0].mxu0 %v1573
        %v2223 = vpop.f32.mrb[0].mxu0
        %v2224 = vadd.f32 %v2111, %v2223
        %v2225 = vpop.f32.mrb[0].mxu0
        %v2226 = vadd.f32 %v2113, %v2225
        %v2227 = vpop.f32.mrb[0].mxu0
        %v2228 = vadd.f32 %v2115, %v2227
        %v2229 = vpop.f32.mrb[0].mxu0
        %v2230 = vadd.f32 %v2117, %v2229
        %2231 = vmatprep.mubr.bf16.mxu0 0
        %2232 = vmatmul.mubr.bf16.gmra.mrb[0].mxu0 %v1576
        %v2233 = vpop.f32.mrb[0].mxu0
        %v2234 = vadd.f32 %v2121, %v2233
        %v2235 = vpop.f32.mrb[0].mxu0
        %v2236 = vadd.f32 %v2123, %v2235
        %v2237 = vpop.f32.mrb[0].mxu0
        %v2238 = vadd.f32 %v2125, %v2237
        %v2239 = vpop.f32.mrb[0].mxu0
        %v2240 = vadd.f32 %v2127, %v2239
        %2241 = vmatprep.mubr.bf16.mxu0 0
        %2242 = vmatmul.mubr.bf16.gmra.mrb[0].mxu0 %v1579
        %v2243 = vpop.f32.mrb[0].mxu0
        %v2244 = vadd.f32 %v2131, %v2243
        %v2245 = vpop.f32.mrb[0].mxu0
        %v2246 = vadd.f32 %v2133, %v2245
        %v2247 = vpop.f32.mrb[0].mxu0
        %v2248 = vadd.f32 %v2135, %v2247
        %v2249 = vpop.f32.mrb[0].mxu0
        %v2250 = vadd.f32 %v2137, %v2249
        %2251 = vmatprep.mubr.bf16.mxu0 0
        %2252 = vmatmul.mubr.bf16.gmra.mrb[0].mxu0 %v1582
        %v2253 = vpop.f32.mrb[0].mxu0
        %v2254 = vadd.f32 %v2141, %v2253
        %v2255 = vpop.f32.mrb[0].mxu0
        %v2256 = vadd.f32 %v2143, %v2255
        %v2257 = vpop.f32.mrb[0].mxu0
        %v2258 = vadd.f32 %v2145, %v2257
        %v2259 = vpop.f32.mrb[0].mxu0
        %v2260 = vadd.f32 %v2147, %v2259
        %2261 = vdwg.mxu0
        %v2262 = vmax.f32 %v1845, 0.0
        %v2263 = vmax.f32 %v1847, 0.0
        %v2264 = vmax.f32 %v2184, 0.0
        %v2265 = vmax.f32 %v2186, 0.0
        %v2266 = vmax.f32 %v1849, 0.0
        %v2267 = vmax.f32 %v1851, 0.0
        %v2268 = vmax.f32 %v2188, 0.0
        %v2269 = vmax.f32 %v2190, 0.0
        %v2270 = vmax.f32 %v1855, 0.0
        %v2271 = vmax.f32 %v1857, 0.0
        %v2272 = vmax.f32 %v2194, 0.0
        %v2273 = vmax.f32 %v2196, 0.0
        %v2274 = vmax.f32 %v1859, 0.0
        %v2275 = vmax.f32 %v1861, 0.0
        %v2276 = vmax.f32 %v2198, 0.0
        %v2277 = vmax.f32 %v2200, 0.0
        %v2278 = vmax.f32 %v1865, 0.0
        %v2279 = vmax.f32 %v1867, 0.0
        %v2280 = vmax.f32 %v2204, 0.0
        %v2281 = vmax.f32 %v2206, 0.0
        %v2282 = vmax.f32 %v1869, 0.0
        %v2283 = vmax.f32 %v1871, 0.0
        %v2284 = vmax.f32 %v2208, 0.0
        %v2285 = vmax.f32 %v2210, 0.0
        %v2286 = vmax.f32 %v1875, 0.0
        %v2287 = vmax.f32 %v1877, 0.0
        %v2288 = vmax.f32 %v2214, 0.0
        %v2289 = vmax.f32 %v2216, 0.0
        %v2290 = vmax.f32 %v1879, 0.0
        %v2291 = vmax.f32 %v1881, 0.0
        %v2292 = vmax.f32 %v2218, 0.0
        %v2293 = vmax.f32 %v2220, 0.0
        %v2294 = vmax.f32 %v1885, 0.0
        %v2295 = vmax.f32 %v1887, 0.0
        %v2296 = vmax.f32 %v2224, 0.0
        %v2297 = vmax.f32 %v2226, 0.0
        %v2298 = vmax.f32 %v1889, 0.0
        %v2299 = vmax.f32 %v1891, 0.0
        %v2300 = vmax.f32 %v2228, 0.0
        %v2301 = vmax.f32 %v2230, 0.0
        %v2302 = vmax.f32 %v1895, 0.0
        %v2303 = vmax.f32 %v1897, 0.0
        %v2304 = vmax.f32 %v2234, 0.0
        %v2305 = vmax.f32 %v2236, 0.0
        %v2306 = vmax.f32 %v1899, 0.0
        %v2307 = vmax.f32 %v1901, 0.0
        %v2308 = vmax.f32 %v2238, 0.0
        %v2309 = vmax.f32 %v2240, 0.0
        %v2310 = vmax.f32 %v1905, 0.0
        %v2311 = vmax.f32 %v1907, 0.0
        %v2312 = vmax.f32 %v2244, 0.0
        %v2313 = vmax.f32 %v2246, 0.0
        %v2314 = vmax.f32 %v1909, 0.0
        %v2315 = vmax.f32 %v1911, 0.0
        %v2316 = vmax.f32 %v2248, 0.0
        %v2317 = vmax.f32 %v2250, 0.0
        %v2318 = vmax.f32 %v1915, 0.0
        %v2319 = vmax.f32 %v1917, 0.0
        %v2320 = vmax.f32 %v2254, 0.0
        %v2321 = vmax.f32 %v2256, 0.0
        %v2322 = vmax.f32 %v1919, 0.0
        %v2323 = vmax.f32 %v1921, 0.0
        %v2324 = vmax.f32 %v2258, 0.0
        %v2325 = vmax.f32 %v2260, 0.0
        %v2326 = vpack.c.bf16 %v2266, %v2262
        %v2327 = vpack.c.bf16 %v2267, %v2263
        %v2328 = vpack.c.bf16 %v2268, %v2264
        %v2329 = vpack.c.bf16 %v2269, %v2265
        %v2330 = vpack.c.bf16 %v2274, %v2270
        %v2331 = vpack.c.bf16 %v2275, %v2271
        %v2332 = vpack.c.bf16 %v2276, %v2272
        %v2333 = vpack.c.bf16 %v2277, %v2273
        %v2334 = vpack.c.bf16 %v2282, %v2278
        %v2335 = vpack.c.bf16 %v2283, %v2279
        %v2336 = vpack.c.bf16 %v2284, %v2280
        %v2337 = vpack.c.bf16 %v2285, %v2281
        %v2338 = vpack.c.bf16 %v2290, %v2286
        %v2339 = vpack.c.bf16 %v2291, %v2287
        %v2340 = vpack.c.bf16 %v2292, %v2288
        %v2341 = vpack.c.bf16 %v2293, %v2289
        %v2342 = vpack.c.bf16 %v2298, %v2294
        %v2343 = vpack.c.bf16 %v2299, %v2295
        %v2344 = vpack.c.bf16 %v2300, %v2296
        %v2345 = vpack.c.bf16 %v2301, %v2297
        %v2346 = vpack.c.bf16 %v2306, %v2302
        %v2347 = vpack.c.bf16 %v2307, %v2303
        %v2348 = vpack.c.bf16 %v2308, %v2304
        %v2349 = vpack.c.bf16 %v2309, %v2305
        %v2350 = vpack.c.bf16 %v2314, %v2310
        %v2351 = vpack.c.bf16 %v2315, %v2311
        %v2352 = vpack.c.bf16 %v2316, %v2312
        %v2353 = vpack.c.bf16 %v2317, %v2313
        %v2354 = vpack.c.bf16 %v2322, %v2318
        %v2355 = vpack.c.bf16 %v2323, %v2319
        %v2356 = vpack.c.bf16 %v2324, %v2320
        %v2357 = vpack.c.bf16 %v2325, %v2321
        %v2390 = vunpack.c.l.b16 %v2326
        %v2391 = vunpack.c.l.b16 %v2327
        %v2392 = vunpack.c.l.b16 %v2328
        %v2393 = vunpack.c.l.b16 %v2329
        %v2394 = vunpack.c.h.b16 %v2326
        %v2395 = vunpack.c.h.b16 %v2327
        %v2396 = vunpack.c.h.b16 %v2328
        %v2397 = vunpack.c.h.b16 %v2329
        %v2398 = vunpack.c.l.b16 %v2330
        %v2399 = vunpack.c.l.b16 %v2331
        %v2400 = vunpack.c.l.b16 %v2332
        %v2401 = vunpack.c.l.b16 %v2333
        %v2402 = vunpack.c.h.b16 %v2330
        %v2403 = vunpack.c.h.b16 %v2331
        %v2404 = vunpack.c.h.b16 %v2332
        %v2405 = vunpack.c.h.b16 %v2333
        %v2406 = vunpack.c.l.b16 %v2334
        %v2407 = vunpack.c.l.b16 %v2335
        %v2408 = vunpack.c.l.b16 %v2336
        %v2409 = vunpack.c.l.b16 %v2337
        %v2410 = vunpack.c.h.b16 %v2334
        %v2411 = vunpack.c.h.b16 %v2335
        %v2412 = vunpack.c.h.b16 %v2336
        %v2413 = vunpack.c.h.b16 %v2337
        %v2414 = vunpack.c.l.b16 %v2338
        %v2415 = vunpack.c.l.b16 %v2339
        %v2416 = vunpack.c.l.b16 %v2340
        %v2417 = vunpack.c.l.b16 %v2341
        %v2418 = vunpack.c.h.b16 %v2338
        %v2419 = vunpack.c.h.b16 %v2339
        %v2420 = vunpack.c.h.b16 %v2340
        %v2421 = vunpack.c.h.b16 %v2341
        %v2422 = vunpack.c.l.b16 %v2342
        %v2423 = vunpack.c.l.b16 %v2343
        %v2424 = vunpack.c.l.b16 %v2344
        %v2425 = vunpack.c.l.b16 %v2345
        %v2426 = vunpack.c.h.b16 %v2342
        %v2427 = vunpack.c.h.b16 %v2343
        %v2428 = vunpack.c.h.b16 %v2344
        %v2429 = vunpack.c.h.b16 %v2345
        %v2430 = vunpack.c.l.b16 %v2346
        %v2431 = vunpack.c.l.b16 %v2347
        %v2432 = vunpack.c.l.b16 %v2348
        %v2433 = vunpack.c.l.b16 %v2349
        %v2434 = vunpack.c.h.b16 %v2346
        %v2435 = vunpack.c.h.b16 %v2347
        %v2436 = vunpack.c.h.b16 %v2348
        %v2437 = vunpack.c.h.b16 %v2349
        %v2438 = vunpack.c.l.b16 %v2350
        %v2439 = vunpack.c.l.b16 %v2351
        %v2440 = vunpack.c.l.b16 %v2352
        %v2441 = vunpack.c.l.b16 %v2353
        %v2442 = vunpack.c.h.b16 %v2350
        %v2443 = vunpack.c.h.b16 %v2351
        %v2444 = vunpack.c.h.b16 %v2352
        %v2445 = vunpack.c.h.b16 %v2353
        %v2446 = vunpack.c.l.b16 %v2354
        %v2447 = vunpack.c.l.b16 %v2355
        %v2448 = vunpack.c.l.b16 %v2356
        %v2449 = vunpack.c.l.b16 %v2357
        %v2450 = vunpack.c.h.b16 %v2354
        %v2451 = vunpack.c.h.b16 %v2355
        %v2452 = vunpack.c.h.b16 %v2356
        %v2453 = vunpack.c.h.b16 %v2357
        %v2454 = vpack.c.b16 %v2391, %v2390
        %v2455 = vpack.c.b16 %v2393, %v2392
        %v2456 = vpack.c.b16 %v2395, %v2394
        %v2457 = vpack.c.b16 %v2397, %v2396
        %v2458 = vpack.c.b16 %v2399, %v2398
        %v2459 = vpack.c.b16 %v2401, %v2400
        %v2460 = vpack.c.b16 %v2403, %v2402
        %v2461 = vpack.c.b16 %v2405, %v2404
        %v2462 = vpack.c.b16 %v2407, %v2406
        %v2463 = vpack.c.b16 %v2409, %v2408
        %v2464 = vpack.c.b16 %v2411, %v2410
        %v2465 = vpack.c.b16 %v2413, %v2412
        %v2466 = vpack.c.b16 %v2415, %v2414
        %v2467 = vpack.c.b16 %v2417, %v2416
        %v2468 = vpack.c.b16 %v2419, %v2418
        %v2469 = vpack.c.b16 %v2421, %v2420
        %v2470 = vpack.c.b16 %v2423, %v2422
        %v2471 = vpack.c.b16 %v2425, %v2424
        %v2472 = vpack.c.b16 %v2427, %v2426
        %v2473 = vpack.c.b16 %v2429, %v2428
        %v2474 = vpack.c.b16 %v2431, %v2430
        %v2475 = vpack.c.b16 %v2433, %v2432
        %v2476 = vpack.c.b16 %v2435, %v2434
        %v2477 = vpack.c.b16 %v2437, %v2436
        %v2478 = vpack.c.b16 %v2439, %v2438
        %v2479 = vpack.c.b16 %v2441, %v2440
        %v2480 = vpack.c.b16 %v2443, %v2442
        %v2481 = vpack.c.b16 %v2445, %v2444
        %v2482 = vpack.c.b16 %v2447, %v2446
        %v2483 = vpack.c.b16 %v2449, %v2448
        %v2484 = vpack.c.b16 %v2451, %v2450
        %v2485 = vpack.c.b16 %v2453, %v2452
        %2518 = vst [vmem:[%s443] sm:$0xff] %v2454
        %2519 = vst [vmem:[%s443 + $0x8] sm:$0xff] %v2455
        %2520 = vst [vmem:[%s443 + $0x10] sm:$0xff] %v2456
        %2521 = vst [vmem:[%s443 + $0x18] sm:$0xff] %v2457
        %2522 = vst [vmem:[%s443 + $0x20] sm:$0xff] %v2458
        %2523 = vst [vmem:[%s443 + $0x28] sm:$0xff] %v2459
        %2524 = vst [vmem:[%s443 + $0x30] sm:$0xff] %v2460
        %2525 = vst [vmem:[%s443 + $0x38] sm:$0xff] %v2461
        %2526 = vst [vmem:[%s443 + $0x40] sm:$0xff] %v2462
        %2527 = vst [vmem:[%s443 + $0x48] sm:$0xff] %v2463
        %2528 = vst [vmem:[%s443 + $0x50] sm:$0xff] %v2464
        %2529 = vst [vmem:[%s443 + $0x58] sm:$0xff] %v2465
        %2530 = vst [vmem:[%s443 + $0x60] sm:$0xff] %v2466
        %2531 = vst [vmem:[%s443 + $0x68] sm:$0xff] %v2467
        %2532 = vst [vmem:[%s443 + $0x70] sm:$0xff] %v2468
        %2533 = vst [vmem:[%s443 + $0x78] sm:$0xff] %v2469
        %2534 = vst [vmem:[%s443 + $0x80] sm:$0xff] %v2470
        %2535 = vst [vmem:[%s443 + $0x88] sm:$0xff] %v2471
        %2536 = vst [vmem:[%s443 + $0x90] sm:$0xff] %v2472
        %2537 = vst [vmem:[%s443 + $0x98] sm:$0xff] %v2473
        %2538 = vst [vmem:[%s443 + $0xa0] sm:$0xff] %v2474
        %2539 = vst [vmem:[%s443 + $0xa8] sm:$0xff] %v2475
        %2540 = vst [vmem:[%s443 + $0xb0] sm:$0xff] %v2476
        %2541 = vst [vmem:[%s443 + $0xb8] sm:$0xff] %v2477
        %2542 = vst [vmem:[%s443 + $0xc0] sm:$0xff] %v2478
        %2543 = vst [vmem:[%s443 + $0xc8] sm:$0xff] %v2479
        %2544 = vst [vmem:[%s443 + $0xd0] sm:$0xff] %v2480
        %2545 = vst [vmem:[%s443 + $0xd8] sm:$0xff] %v2481
        %2546 = vst [vmem:[%s443 + $0xe0] sm:$0xff] %v2482
        %2547 = vst [vmem:[%s443 + $0xe8] sm:$0xff] %v2483
        %2548 = vst [vmem:[%s443 + $0xf0] sm:$0xff] %v2484
        %2549 = vst [vmem:[%s443 + $0xf8] sm:$0xff] %v2485
        %s2550 = sand.u32 %s68, 1
        %s2551 = sand.u32 %s68, 1
        %s2552 = smul.addr %s2551, 256
        %s2553 = scalar_lea.vmem [#allocation3], %s2552
        // Predicated region
        $region52: #{_lambda_.9} parent=46 // pred_check
          %p2554 = pneg %p78
        $region53: #{_lambda_.9} parent=46 // pred_check_branch
          %2556 = sbr.rel (%p2554) target = $region55
        $region54: #{_lambda_.9} parent=46 // pred_region
          %s2557 = smul.u32 4, %s13
          %s2558 = smul.addr %s2557, 4
          %s2559 = scalar_lea.vmem %s2, %s2558
          // Predicated region
          $region56: #{_lambda_.9} parent=54 // pred_check
            _
          $region57: #{_lambda_.9} parent=54 // pred_check_branch
            %2561 = sbr.rel (0) target = $region59
          $region58: #{_lambda_.9} parent=54 // pred_region
            // Predicated region
            $region60: #{_lambda_.9} parent=58 // pred_check
              _
            $region61: #{_lambda_.9} parent=58 // pred_check_branch
              %2563 = sbr.rel (0) target = $region63
            $region62: #{_lambda_.9} parent=58 // pred_region
              loop: start=0, step=1, limit=1
              $region64: #{_lambda_.9} parent=62 // loop_pre_header
                _
              $region65: #{_lambda_.9} parent=62 // loop_header
                %s2565 = sphi 0, %s2569
                %p2566 = scmp.ge.s32.totalorder %s2565, 1
                %s2570 = sphi %s2553, %s2553
                %s2571 = sphi %s2559, %s2559
              $region66: #{_lambda_.9} parent=62 // loop_header_branch
                %2568 = sbr.rel (%p2566) target = $region70
              $region67: #{_lambda_.9} parent=62 // loop_body
                %v2572 = vld [vmem:[%s2570] sm:$0xff]
                %2573 = vst [vmem:[%s2571] sm:$0xff] %v2572
                %v2574 = vld [vmem:[%s2570 + $0x8] sm:$0xff]
                %2575 = vst [vmem:[%s2571 + $0x8] sm:$0xff] %v2574
                %v2576 = vld [vmem:[%s2570 + $0x10] sm:$0xff]
                %2577 = vst [vmem:[%s2571 + $0x20] sm:$0xff] %v2576
                %v2578 = vld [vmem:[%s2570 + $0x18] sm:$0xff]
                %2579 = vst [vmem:[%s2571 + $0x28] sm:$0xff] %v2578
                %v2580 = vld [vmem:[%s2570 + $0x20] sm:$0xff]
                %2581 = vst [vmem:[%s2571 + $0x40] sm:$0xff] %v2580
                %v2582 = vld [vmem:[%s2570 + $0x28] sm:$0xff]
                %2583 = vst [vmem:[%s2571 + $0x48] sm:$0xff] %v2582
                %v2584 = vld [vmem:[%s2570 + $0x30] sm:$0xff]
                %2585 = vst [vmem:[%s2571 + $0x60] sm:$0xff] %v2584
                %v2586 = vld [vmem:[%s2570 + $0x38] sm:$0xff]
                %2587 = vst [vmem:[%s2571 + $0x68] sm:$0xff] %v2586
                %v2588 = vld [vmem:[%s2570 + $0x40] sm:$0xff]
                %2589 = vst [vmem:[%s2571 + $0x80] sm:$0xff] %v2588
                %v2590 = vld [vmem:[%s2570 + $0x48] sm:$0xff]
                %2591 = vst [vmem:[%s2571 + $0x88] sm:$0xff] %v2590
                %v2592 = vld [vmem:[%s2570 + $0x50] sm:$0xff]
                %2593 = vst [vmem:[%s2571 + $0xa0] sm:$0xff] %v2592
                %v2594 = vld [vmem:[%s2570 + $0x58] sm:$0xff]
                %2595 = vst [vmem:[%s2571 + $0xa8] sm:$0xff] %v2594
                %v2596 = vld [vmem:[%s2570 + $0x60] sm:$0xff]
                %2597 = vst [vmem:[%s2571 + $0xc0] sm:$0xff] %v2596
                %v2598 = vld [vmem:[%s2570 + $0x68] sm:$0xff]
                %2599 = vst [vmem:[%s2571 + $0xc8] sm:$0xff] %v2598
                %v2600 = vld [vmem:[%s2570 + $0x70] sm:$0xff]
                %2601 = vst [vmem:[%s2571 + $0xe0] sm:$0xff] %v2600
                %v2602 = vld [vmem:[%s2570 + $0x78] sm:$0xff]
                %2603 = vst [vmem:[%s2571 + $0xe8] sm:$0xff] %v2602
                %v2604 = vld [vmem:[%s2570 + $0x80] sm:$0xff]
                %2605 = vst [vmem:[%s2571 + $0x100] sm:$0xff] %v2604
                %v2606 = vld [vmem:[%s2570 + $0x88] sm:$0xff]
                %2607 = vst [vmem:[%s2571 + $0x108] sm:$0xff] %v2606
                %v2608 = vld [vmem:[%s2570 + $0x90] sm:$0xff]
                %2609 = vst [vmem:[%s2571 + $0x120] sm:$0xff] %v2608
                %v2610 = vld [vmem:[%s2570 + $0x98] sm:$0xff]
                %2611 = vst [vmem:[%s2571 + $0x128] sm:$0xff] %v2610
                %v2612 = vld [vmem:[%s2570 + $0xa0] sm:$0xff]
                %2613 = vst [vmem:[%s2571 + $0x140] sm:$0xff] %v2612
                %v2614 = vld [vmem:[%s2570 + $0xa8] sm:$0xff]
                %2615 = vst [vmem:[%s2571 + $0x148] sm:$0xff] %v2614
                %v2616 = vld [vmem:[%s2570 + $0xb0] sm:$0xff]
                %2617 = vst [vmem:[%s2571 + $0x160] sm:$0xff] %v2616
                %v2618 = vld [vmem:[%s2570 + $0xb8] sm:$0xff]
                %2619 = vst [vmem:[%s2571 + $0x168] sm:$0xff] %v2618
                %v2620 = vld [vmem:[%s2570 + $0xc0] sm:$0xff]
                %2621 = vst [vmem:[%s2571 + $0x180] sm:$0xff] %v2620
                %v2622 = vld [vmem:[%s2570 + $0xc8] sm:$0xff]
                %2623 = vst [vmem:[%s2571 + $0x188] sm:$0xff] %v2622
                %v2624 = vld [vmem:[%s2570 + $0xd0] sm:$0xff]
                %2625 = vst [vmem:[%s2571 + $0x1a0] sm:$0xff] %v2624
                %v2626 = vld [vmem:[%s2570 + $0xd8] sm:$0xff]
                %2627 = vst [vmem:[%s2571 + $0x1a8] sm:$0xff] %v2626
                %v2628 = vld [vmem:[%s2570 + $0xe0] sm:$0xff]
                %2629 = vst [vmem:[%s2571 + $0x1c0] sm:$0xff] %v2628
                %v2630 = vld [vmem:[%s2570 + $0xe8] sm:$0xff]
                %2631 = vst [vmem:[%s2571 + $0x1c8] sm:$0xff] %v2630
                %v2632 = vld [vmem:[%s2570 + $0xf0] sm:$0xff]
                %2633 = vst [vmem:[%s2571 + $0x1e0] sm:$0xff] %v2632
                %v2634 = vld [vmem:[%s2570 + $0xf8] sm:$0xff]
                %2635 = vst [vmem:[%s2571 + $0x1e8] sm:$0xff] %v2634
              $region68: #{_lambda_.9} parent=62 // loop_footer
                %s2569 = sadd.s32 1, %s2565
              $region69: #{_lambda_.9} parent=62 // loop_footer_branch
                %2564 = sbr.rel target = $region65
              $region70: #{_lambda_.9} parent=62 // loop_exit
                _
            $region63: #{_lambda_.9} parent=58 // pred_fallthru
              _
            // Predicated region
            $region71: #{_lambda_.9} parent=58 // pred_check
              _
            $region72: #{_lambda_.9} parent=58 // pred_check_branch
              %2637 = sbr.rel target = $region74
            $region73: #{_lambda_.9} parent=58 // pred_region
              _
            $region74: #{_lambda_.9} parent=58 // pred_fallthru
              _
          $region59: #{_lambda_.9} parent=54 // pred_fallthru
            _
          %2638 = vnop
        $region55: #{_lambda_.9} parent=46 // pred_fallthru
          _
      $region47: #{_lambda_.9} parent=5 // pred_fallthru
        _
      %p2639 = scmp.le.s32.totalorder 2, %s8
      // Predicated region
      $region75: #{_lambda_.9} parent=5 // pred_check
        %p2640 = pneg %p2639
      $region76: #{_lambda_.9} parent=5 // pred_check_branch
        %2642 = sbr.rel (%p2640) target = $region78
      $region77: #{_lambda_.9} parent=5 // pred_region
        %s2643 = ssub.s32 %s8, 2
        // Predicated region
        $region79: #{_lambda_.9} parent=77 // pred_check
          %p2644 = pneg %p84
        $region80: #{_lambda_.9} parent=77 // pred_check_branch
          %2646 = sbr.rel (%p2644) target = $region82
        $region81: #{_lambda_.9} parent=77 // pred_region
          %s2647 = sand.u32 %s69, 1
          %s2648 = sand.u32 %s69, 1
          %s2649 = smul.addr %s2648, 256
          %s2650 = scalar_lea.vmem [#allocation3], %s2649
        $region82: #{_lambda_.9} parent=77 // pred_fallthru
          _
      $region78: #{_lambda_.9} parent=5 // pred_fallthru
        _
    $region6: #{_lambda_.9} parent=1 // loop_footer
      %s12 = sadd.s32 1, %s8
    $region7: #{_lambda_.9} parent=1 // loop_footer_branch
      %7 = sbr.rel target = $region3
    $region8: #{_lambda_.9} parent=1 // loop_exit
      _

// kernel: _lambda_.10
$region0: #{_lambda_.10}
  #allocation0 [shape = 'u32[]', space=smem, size = 0x4, offset = 0x4, fixed_abs, tag = 'smem constant byte address 0x4 - core index']
  #allocation1 [shape = 'u32[144,128]{1,0:T(1,128)}', space=vmem, size = 0x12000, scoped, tag = 'internal scratch']
  %s0 = inlined_call_operand.vmem [shape: bf16[32,128], index: 0, kind: input, shape index: {}]
  %s1 = inlined_call_operand.vmem [shape: bf16[128,256], index: 1, kind: input, shape index: {}]
  %s2 = inlined_call_operand.vmem [shape: bf16[128,256], index: 2, kind: input, shape index: {}]
  %s3 = inlined_call_operand.vmem [shape: bf16[128,256], index: 3, kind: input, shape index: {}]
  %s4 = inlined_call_operand.vmem [shape: bf16[128,256], index: 4, kind: input, shape index: {}]
  %s5 = inlined_call_operand.vmem [shape: bf16[32,256], index: 5, kind: output, shape index: {}]
  %s6 = sld [smem:[#allocation0]]
  $region30: #{_lambda_.10} parent=0
    _
  %s8 = ssub.s32 1, %s6
  %s9 = scalar_select 0, %s8, %s6
  // Predicated region
  $region2: #{_lambda_.10} parent=0 // pred_check
    _
  $region3: #{_lambda_.10} parent=0 // pred_check_branch
    %11 = sbr.rel (0) target = $region5
  $region4: #{_lambda_.10} parent=0 // pred_region
    _
  $region5: #{_lambda_.10} parent=0 // pred_fallthru
    _
  // Predicated region
  $region6: #{_lambda_.10} parent=0 // pred_check
    _
  $region7: #{_lambda_.10} parent=0 // pred_check_branch
    %13 = sbr.rel (0) target = $region9
  $region8: #{_lambda_.10} parent=0 // pred_region
    _
  $region9: #{_lambda_.10} parent=0 // pred_fallthru
    _
  // Predicated region
  $region10: #{_lambda_.10} parent=0 // pred_check
    _
  $region11: #{_lambda_.10} parent=0 // pred_check_branch
    %15 = sbr.rel (0) target = $region13
  $region12: #{_lambda_.10} parent=0 // pred_region
    _
  $region13: #{_lambda_.10} parent=0 // pred_fallthru
    _
  // Predicated region
  $region14: #{_lambda_.10} parent=0 // pred_check
    _
  $region15: #{_lambda_.10} parent=0 // pred_check_branch
    %17 = sbr.rel (0) target = $region17
  $region16: #{_lambda_.10} parent=0 // pred_region
    _
  $region17: #{_lambda_.10} parent=0 // pred_fallthru
    _
  // Predicated region
  $region18: #{_lambda_.10} parent=0 // pred_check
    _
  $region19: #{_lambda_.10} parent=0 // pred_check_branch
    %19 = sbr.rel (0) target = $region21
  $region20: #{_lambda_.10} parent=0 // pred_region
    _
  $region21: #{_lambda_.10} parent=0 // pred_fallthru
    _
  %v21 = vld [vmem:[%s1] sm:$0xff]
  %v22 = vld [vmem:[%s1 + $0x8] sm:$0xff]
  %v23 = vld [vmem:[%s1 + $0x10] sm:$0xff]
  %v24 = vld [vmem:[%s1 + $0x18] sm:$0xff]
  %v25 = vld [vmem:[%s1 + $0x20] sm:$0xff]
  %v26 = vld [vmem:[%s1 + $0x28] sm:$0xff]
  %v27 = vld [vmem:[%s1 + $0x30] sm:$0xff]
  %v28 = vld [vmem:[%s1 + $0x38] sm:$0xff]
  %v29 = vld [vmem:[%s1 + $0x40] sm:$0xff]
  %v30 = vld [vmem:[%s1 + $0x48] sm:$0xff]
  %v31 = vld [vmem:[%s1 + $0x50] sm:$0xff]
  %v32 = vld [vmem:[%s1 + $0x58] sm:$0xff]
  %v33 = vld [vmem:[%s1 + $0x60] sm:$0xff]
  %v34 = vld [vmem:[%s1 + $0x68] sm:$0xff]
  %v35 = vld [vmem:[%s1 + $0x70] sm:$0xff]
  %v36 = vld [vmem:[%s1 + $0x78] sm:$0xff]
  %v37 = vld [vmem:[%s2] sm:$0xff]
  %v38 = vld [vmem:[%s2 + $0x8] sm:$0xff]
  %v39 = vld [vmem:[%s2 + $0x10] sm:$0xff]
  %v40 = vld [vmem:[%s2 + $0x18] sm:$0xff]
  %v41 = vld [vmem:[%s2 + $0x20] sm:$0xff]
  %v42 = vld [vmem:[%s2 + $0x28] sm:$0xff]
  %v43 = vld [vmem:[%s2 + $0x30] sm:$0xff]
  %v44 = vld [vmem:[%s2 + $0x38] sm:$0xff]
  %v45 = vld [vmem:[%s2 + $0x40] sm:$0xff]
  %v46 = vld [vmem:[%s2 + $0x48] sm:$0xff]
  %v47 = vld [vmem:[%s2 + $0x50] sm:$0xff]
  %v48 = vld [vmem:[%s2 + $0x58] sm:$0xff]
  %v49 = vld [vmem:[%s2 + $0x60] sm:$0xff]
  %v50 = vld [vmem:[%s2 + $0x68] sm:$0xff]
  %v51 = vld [vmem:[%s2 + $0x70] sm:$0xff]
  %v52 = vld [vmem:[%s2 + $0x78] sm:$0xff]
  %v53 = vmax.bf16 %v21, %v37
  %v54 = vmax.bf16 %v22, %v38
  %v55 = vmax.bf16 %v23, %v39
  %v56 = vmax.bf16 %v24, %v40
  %v57 = vmax.bf16 %v25, %v41
  %v58 = vmax.bf16 %v26, %v42
  %v59 = vmax.bf16 %v27, %v43
  %v60 = vmax.bf16 %v28, %v44
  %v61 = vmax.bf16 %v29, %v45
  %v62 = vmax.bf16 %v30, %v46
  %v63 = vmax.bf16 %v31, %v47
  %v64 = vmax.bf16 %v32, %v48
  %v65 = vmax.bf16 %v33, %v49
  %v66 = vmax.bf16 %v34, %v50
  %v67 = vmax.bf16 %v35, %v51
  %v68 = vmax.bf16 %v36, %v52
  %v69 = vld [vmem:[%s3] sm:$0xff]
  %v70 = vld [vmem:[%s3 + $0x8] sm:$0xff]
  %v71 = vld [vmem:[%s3 + $0x10] sm:$0xff]
  %v72 = vld [vmem:[%s3 + $0x18] sm:$0xff]
  %v73 = vld [vmem:[%s3 + $0x20] sm:$0xff]
  %v74 = vld [vmem:[%s3 + $0x28] sm:$0xff]
  %v75 = vld [vmem:[%s3 + $0x30] sm:$0xff]
  %v76 = vld [vmem:[%s3 + $0x38] sm:$0xff]
  %v77 = vld [vmem:[%s3 + $0x40] sm:$0xff]
  %v78 = vld [vmem:[%s3 + $0x48] sm:$0xff]
  %v79 = vld [vmem:[%s3 + $0x50] sm:$0xff]
  %v80 = vld [vmem:[%s3 + $0x58] sm:$0xff]
  %v81 = vld [vmem:[%s3 + $0x60] sm:$0xff]
  %v82 = vld [vmem:[%s3 + $0x68] sm:$0xff]
  %v83 = vld [vmem:[%s3 + $0x70] sm:$0xff]
  %v84 = vld [vmem:[%s3 + $0x78] sm:$0xff]
  %v85 = vld [vmem:[%s4] sm:$0xff]
  %v86 = vld [vmem:[%s4 + $0x8] sm:$0xff]
  %v87 = vld [vmem:[%s4 + $0x10] sm:$0xff]
  %v88 = vld [vmem:[%s4 + $0x18] sm:$0xff]
  %v89 = vld [vmem:[%s4 + $0x20] sm:$0xff]
  %v90 = vld [vmem:[%s4 + $0x28] sm:$0xff]
  %v91 = vld [vmem:[%s4 + $0x30] sm:$0xff]
  %v92 = vld [vmem:[%s4 + $0x38] sm:$0xff]
  %v93 = vld [vmem:[%s4 + $0x40] sm:$0xff]
  %v94 = vld [vmem:[%s4 + $0x48] sm:$0xff]
  %v95 = vld [vmem:[%s4 + $0x50] sm:$0xff]
  %v96 = vld [vmem:[%s4 + $0x58] sm:$0xff]
  %v97 = vld [vmem:[%s4 + $0x60] sm:$0xff]
  %v98 = vld [vmem:[%s4 + $0x68] sm:$0xff]
  %v99 = vld [vmem:[%s4 + $0x70] sm:$0xff]
  %v100 = vld [vmem:[%s4 + $0x78] sm:$0xff]
  %v101 = vmax.bf16 %v69, %v85
  %v102 = vmax.bf16 %v70, %v86
  %v103 = vmax.bf16 %v71, %v87
  %v104 = vmax.bf16 %v72, %v88
  %v105 = vmax.bf16 %v73, %v89
  %v106 = vmax.bf16 %v74, %v90
  %v107 = vmax.bf16 %v75, %v91
  %v108 = vmax.bf16 %v76, %v92
  %v109 = vmax.bf16 %v77, %v93
  %v110 = vmax.bf16 %v78, %v94
  %v111 = vmax.bf16 %v79, %v95
  %v112 = vmax.bf16 %v80, %v96
  %v113 = vmax.bf16 %v81, %v97
  %v114 = vmax.bf16 %v82, %v98
  %v115 = vmax.bf16 %v83, %v99
  %v116 = vmax.bf16 %v84, %v100
  %v117 = vmax.bf16 %v53, %v101
  %v118 = vmax.bf16 %v54, %v102
  %v119 = vmax.bf16 %v55, %v103
  %v120 = vmax.bf16 %v56, %v104
  %v121 = vmax.bf16 %v57, %v105
  %v122 = vmax.bf16 %v58, %v106
  %v123 = vmax.bf16 %v59, %v107
  %v124 = vmax.bf16 %v60, %v108
  %v125 = vmax.bf16 %v61, %v109
  %v126 = vmax.bf16 %v62, %v110
  %v127 = vmax.bf16 %v63, %v111
  %v128 = vmax.bf16 %v64, %v112
  %v129 = vmax.bf16 %v65, %v113
  %v130 = vmax.bf16 %v66, %v114
  %v131 = vmax.bf16 %v67, %v115
  %v132 = vmax.bf16 %v68, %v116
  %v133 = vld [vmem:[%s0] sm:$0xf]
  %v134 = vld [vmem:[%s0 + $0x4] sm:$0xf]
  %v135 = vld [vmem:[%s0 + $0x8] sm:$0xf]
  %v136 = vld [vmem:[%s0 + $0xc] sm:$0xf]
  %v141 = vunpack.c.l.b16 %v133
  %v142 = vunpack.c.l.b16 %v134
  %v143 = vunpack.c.l.b16 %v135
  %v144 = vunpack.c.l.b16 %v136
  %v145 = vpack.c.b16 %v142, %v141
  %v146 = vpack.c.b16 %v144, %v143
  %v165 = vunpack.c.l.b16 %v117
  %v166 = vunpack.c.h.b16 %v117
  %v167 = vunpack.c.l.b16 %v118
  %v168 = vunpack.c.h.b16 %v118
  %v169 = vunpack.c.l.b16 %v119
  %v170 = vunpack.c.h.b16 %v119
  %v171 = vunpack.c.l.b16 %v120
  %v172 = vunpack.c.h.b16 %v120
  %v173 = vunpack.c.l.b16 %v121
  %v174 = vunpack.c.h.b16 %v121
  %v175 = vunpack.c.l.b16 %v122
  %v176 = vunpack.c.h.b16 %v122
  %v177 = vunpack.c.l.b16 %v123
  %v178 = vunpack.c.h.b16 %v123
  %v179 = vunpack.c.l.b16 %v124
  %v180 = vunpack.c.h.b16 %v124
  %v181 = vunpack.c.l.b16 %v125
  %v182 = vunpack.c.h.b16 %v125
  %v183 = vunpack.c.l.b16 %v126
  %v184 = vunpack.c.h.b16 %v126
  %v185 = vunpack.c.l.b16 %v127
  %v186 = vunpack.c.h.b16 %v127
  %v187 = vunpack.c.l.b16 %v128
  %v188 = vunpack.c.h.b16 %v128
  %v189 = vunpack.c.l.b16 %v129
  %v190 = vunpack.c.h.b16 %v129
  %v191 = vunpack.c.l.b16 %v130
  %v192 = vunpack.c.h.b16 %v130
  %v193 = vunpack.c.l.b16 %v131
  %v194 = vunpack.c.h.b16 %v131
  %v195 = vunpack.c.l.b16 %v132
  %v196 = vunpack.c.h.b16 %v132
  %v197 = vpack.c.b16 %v167, %v165
  %v198 = vpack.c.b16 %v168, %v166
  %v199 = vpack.c.b16 %v171, %v169
  %v200 = vpack.c.b16 %v172, %v170
  %v201 = vpack.c.b16 %v175, %v173
  %v202 = vpack.c.b16 %v176, %v174
  %v203 = vpack.c.b16 %v179, %v177
  %v204 = vpack.c.b16 %v180, %v178
  %v205 = vpack.c.b16 %v183, %v181
  %v206 = vpack.c.b16 %v184, %v182
  %v207 = vpack.c.b16 %v187, %v185
  %v208 = vpack.c.b16 %v188, %v186
  %v209 = vpack.c.b16 %v191, %v189
  %v210 = vpack.c.b16 %v192, %v190
  %v211 = vpack.c.b16 %v195, %v193
  %v212 = vpack.c.b16 %v196, %v194
  %229 = vmatprep.subr.bf16.mxu0 %v198
  %230 = vmatpush1.bf16.msra.mxu0 %v197
  %231 = vmatprep.subr.bf16.mxu0 %v200
  %232 = vmatpush1.bf16.msra.mxu0 %v199
  %233 = vmatprep.subr.bf16.mxu0 %v202
  %234 = vmatpush1.bf16.msra.mxu0 %v201
  %235 = vmatprep.subr.bf16.mxu0 %v204
  %236 = vmatpush1.bf16.msra.mxu0 %v203
  %237 = vmatprep.subr.bf16.mxu0 %v206
  %238 = vmatpush1.bf16.msra.mxu0 %v205
  %239 = vmatprep.subr.bf16.mxu0 %v208
  %240 = vmatpush1.bf16.msra.mxu0 %v207
  %241 = vmatprep.subr.bf16.mxu0 %v210
  %242 = vmatpush1.bf16.msra.mxu0 %v209
  %243 = vmatprep.subr.bf16.mxu0 %v212
  %244 = vmatpush1.bf16.msra.mxu0 %v211
  %245 = vmatprep.subr.bf16.mxu0 0
  %246 = vmatpush1.bf16.msra.mxu0 0
  %247 = vmatprep.subr.bf16.mxu0 0
  %248 = vmatpush1.bf16.msra.mxu0 0
  %249 = vmatprep.subr.bf16.mxu0 0
  %250 = vmatpush1.bf16.msra.mxu0 0
  %251 = vmatprep.subr.bf16.mxu0 0
  %252 = vmatpush1.bf16.msra.mxu0 0
  %253 = vmatprep.subr.bf16.mxu0 0
  %254 = vmatpush1.bf16.msra.mxu0 0
  %255 = vmatprep.subr.bf16.mxu0 0
  %256 = vmatpush1.bf16.msra.mxu0 0
  %257 = vmatprep.subr.bf16.mxu0 0
  %258 = vmatpush1.bf16.msra.mxu0 0
  %259 = vmatprep.subr.bf16.mxu0 0
  %260 = vmatpush1.bf16.msra.mxu0 0
  %261 = vmatprep.mubr.bf16.mxu0 0
  %262 = vmatmul.mubr.bf16.gmra.mrb[0].mxu0 %v145
  %v263 = vpop.f32.mrb[0].mxu0
  %v264 = vadd.f32 0.0, %v263
  %v265 = vpop.f32.mrb[0].mxu0
  %v266 = vadd.f32 0.0, %v265
  %v267 = vpop.f32.mrb[0].mxu0
  %v268 = vadd.f32 0.0, %v267
  %v269 = vpop.f32.mrb[0].mxu0
  %v270 = vadd.f32 0.0, %v269
  %271 = vmatprep.mubr.bf16.mxu0 0
  %272 = vmatmul.mubr.bf16.gmra.mrb[0].mxu0 %v146
  %v273 = vpop.f32.mrb[0].mxu0
  %v274 = vadd.f32 0.0, %v273
  %v275 = vpop.f32.mrb[0].mxu0
  %v276 = vadd.f32 0.0, %v275
  %v277 = vpop.f32.mrb[0].mxu0
  %v278 = vadd.f32 0.0, %v277
  %v279 = vpop.f32.mrb[0].mxu0
  %v280 = vadd.f32 0.0, %v279
  %281 = vdwg.mxu0
  %v282 = vmax.f32 %v264, 0.0
  %v283 = vmax.f32 %v266, 0.0
  %v284 = vmax.f32 %v268, 0.0
  %v285 = vmax.f32 %v270, 0.0
  %v286 = vmax.f32 %v274, 0.0
  %v287 = vmax.f32 %v276, 0.0
  %v288 = vmax.f32 %v278, 0.0
  %v289 = vmax.f32 %v280, 0.0
  %v290 = vpack.c.bf16 %v284, %v282
  %v291 = vpack.c.bf16 %v285, %v283
  %v292 = vpack.c.bf16 %v288, %v286
  %v293 = vpack.c.bf16 %v289, %v287
  %v298 = vunpack.c.l.b16 %v290
  %v299 = vunpack.c.l.b16 %v291
  %v300 = vunpack.c.h.b16 %v290
  %v301 = vunpack.c.h.b16 %v291
  %v302 = vunpack.c.l.b16 %v292
  %v303 = vunpack.c.l.b16 %v293
  %v304 = vunpack.c.h.b16 %v292
  %v305 = vunpack.c.h.b16 %v293
  %v306 = vpack.c.b16 %v299, %v298
  %v307 = vpack.c.b16 %v301, %v300
  %v308 = vpack.c.b16 %v303, %v302
  %v309 = vpack.c.b16 %v305, %v304
  %314 = vst [vmem:[%s5] sm:$0xff] %v306
  %315 = vst [vmem:[%s5 + $0x8] sm:$0xff] %v307
  %316 = vst [vmem:[%s5 + $0x10] sm:$0xff] %v308
  %317 = vst [vmem:[%s5 + $0x18] sm:$0xff] %v309
  // Predicated region
  $region22: #{_lambda_.10} parent=0 // pred_check
    _
  $region23: #{_lambda_.10} parent=0 // pred_check_branch
    %319 = sbr.rel (0) target = $region25
  $region24: #{_lambda_.10} parent=0 // pred_region
    _
  $region25: #{_lambda_.10} parent=0 // pred_fallthru
    _
  // Predicated region
  $region26: #{_lambda_.10} parent=0 // pred_check
    _
  $region27: #{_lambda_.10} parent=0 // pred_check_branch
    %321 = sbr.rel (0) target = $region29
  $region28: #{_lambda_.10} parent=0 // pred_region
    _
  $region29: #{_lambda_.10} parent=0 // pred_fallthru
    _

// kernel: _lambda_.11
$region0: #{_lambda_.11}
  #allocation0 [shape = 'u32[]', space=smem, size = 0x4, offset = 0x4, fixed_abs, tag = 'smem constant byte address 0x4 - core index']
  #allocation1 [shape = 'u32[144,128]{1,0:T(1,128)}', space=vmem, size = 0x12000, scoped, tag = 'internal scratch']
  %s0 = inlined_call_operand.vmem [shape: bf16[64,288], index: 0, kind: input, shape index: {}]
  %s1 = inlined_call_operand.vmem [shape: bf16[288,256], index: 1, kind: input, shape index: {}]
  %s2 = inlined_call_operand.vmem [shape: bf16[64,256], index: 2, kind: output, shape index: {}]
  %s3 = sld [smem:[#allocation0]]
  $region18: #{_lambda_.11} parent=0
    _
  %s5 = ssub.s32 1, %s3
  %s6 = scalar_select 0, %s5, %s3
  // Predicated region
  $region2: #{_lambda_.11} parent=0 // pred_check
    _
  $region3: #{_lambda_.11} parent=0 // pred_check_branch
    %8 = sbr.rel (0) target = $region5
  $region4: #{_lambda_.11} parent=0 // pred_region
    _
  $region5: #{_lambda_.11} parent=0 // pred_fallthru
    _
  // Predicated region
  $region6: #{_lambda_.11} parent=0 // pred_check
    _
  $region7: #{_lambda_.11} parent=0 // pred_check_branch
    %10 = sbr.rel (0) target = $region9
  $region8: #{_lambda_.11} parent=0 // pred_region
    _
  $region9: #{_lambda_.11} parent=0 // pred_fallthru
    _
  %v12 = vld [vmem:[%s0] sm:$0xff]
  %v13 = vld [vmem:[%s0 + $0x8] sm:$0xf]
  %v14 = vld [vmem:[%s0 + $0xc] sm:$0xff]
  %v15 = vld [vmem:[%s0 + $0x14] sm:$0xf]
  %v16 = vld [vmem:[%s0 + $0x18] sm:$0xff]
  %v17 = vld [vmem:[%s0 + $0x20] sm:$0xf]
  %v18 = vld [vmem:[%s0 + $0x24] sm:$0xff]
  %v19 = vld [vmem:[%s0 + $0x2c] sm:$0xf]
  %v20 = vld [vmem:[%s0 + $0x30] sm:$0xff]
  %v21 = vld [vmem:[%s0 + $0x38] sm:$0xf]
  %v22 = vld [vmem:[%s0 + $0x3c] sm:$0xff]
  %v23 = vld [vmem:[%s0 + $0x44] sm:$0xf]
  %v24 = vld [vmem:[%s0 + $0x48] sm:$0xff]
  %v25 = vld [vmem:[%s0 + $0x50] sm:$0xf]
  %v26 = vld [vmem:[%s0 + $0x54] sm:$0xff]
  %v27 = vld [vmem:[%s0 + $0x5c] sm:$0xf]
  %v28 = vld [vmem:[%s1] sm:$0xff]
  %v29 = vld [vmem:[%s1 + $0x8] sm:$0xff]
  %v30 = vld [vmem:[%s1 + $0x10] sm:$0xff]
  %v31 = vld [vmem:[%s1 + $0x18] sm:$0xff]
  %v32 = vld [vmem:[%s1 + $0x20] sm:$0xff]
  %v33 = vld [vmem:[%s1 + $0x28] sm:$0xff]
  %v34 = vld [vmem:[%s1 + $0x30] sm:$0xff]
  %v35 = vld [vmem:[%s1 + $0x38] sm:$0xff]
  %v36 = vld [vmem:[%s1 + $0x40] sm:$0xff]
  %v37 = vld [vmem:[%s1 + $0x48] sm:$0xff]
  %v38 = vld [vmem:[%s1 + $0x50] sm:$0xff]
  %v39 = vld [vmem:[%s1 + $0x58] sm:$0xff]
  %v40 = vld [vmem:[%s1 + $0x60] sm:$0xff]
  %v41 = vld [vmem:[%s1 + $0x68] sm:$0xff]
  %v42 = vld [vmem:[%s1 + $0x70] sm:$0xff]
  %v43 = vld [vmem:[%s1 + $0x78] sm:$0xff]
  %v44 = vld [vmem:[%s1 + $0x80] sm:$0xff]
  %v45 = vld [vmem:[%s1 + $0x88] sm:$0xff]
  %v46 = vld [vmem:[%s1 + $0x90] sm:$0xff]
  %v47 = vld [vmem:[%s1 + $0x98] sm:$0xff]
  %v48 = vld [vmem:[%s1 + $0xa0] sm:$0xff]
  %v49 = vld [vmem:[%s1 + $0xa8] sm:$0xff]
  %v50 = vld [vmem:[%s1 + $0xb0] sm:$0xff]
  %v51 = vld [vmem:[%s1 + $0xb8] sm:$0xff]
  %v52 = vld [vmem:[%s1 + $0xc0] sm:$0xff]
  %v53 = vld [vmem:[%s1 + $0xc8] sm:$0xff]
  %v54 = vld [vmem:[%s1 + $0xd0] sm:$0xff]
  %v55 = vld [vmem:[%s1 + $0xd8] sm:$0xff]
  %v56 = vld [vmem:[%s1 + $0xe0] sm:$0xff]
  %v57 = vld [vmem:[%s1 + $0xe8] sm:$0xff]
  %v58 = vld [vmem:[%s1 + $0xf0] sm:$0xff]
  %v59 = vld [vmem:[%s1 + $0xf8] sm:$0xff]
  %v60 = vld [vmem:[%s1 + $0x100] sm:$0xff]
  %v61 = vld [vmem:[%s1 + $0x108] sm:$0xff]
  %v62 = vld [vmem:[%s1 + $0x110] sm:$0xff]
  %v63 = vld [vmem:[%s1 + $0x118] sm:$0xff]
  %v80 = vunpack.c.l.b16 %v12
  %v81 = vunpack.c.h.b16 %v12
  %v82 = vunpack.c.l.b16 %v13
  %v83 = vunpack.c.l.b16 %v14
  %v84 = vunpack.c.h.b16 %v14
  %v85 = vunpack.c.l.b16 %v15
  %v86 = vunpack.c.l.b16 %v16
  %v87 = vunpack.c.h.b16 %v16
  %v88 = vunpack.c.l.b16 %v17
  %v89 = vunpack.c.l.b16 %v18
  %v90 = vunpack.c.h.b16 %v18
  %v91 = vunpack.c.l.b16 %v19
  %v92 = vunpack.c.l.b16 %v20
  %v93 = vunpack.c.h.b16 %v20
  %v94 = vunpack.c.l.b16 %v21
  %v95 = vunpack.c.l.b16 %v22
  %v96 = vunpack.c.h.b16 %v22
  %v97 = vunpack.c.l.b16 %v23
  %v98 = vunpack.c.l.b16 %v24
  %v99 = vunpack.c.h.b16 %v24
  %v100 = vunpack.c.l.b16 %v25
  %v101 = vunpack.c.l.b16 %v26
  %v102 = vunpack.c.h.b16 %v26
  %v103 = vunpack.c.l.b16 %v27
  %v104 = vpack.c.b16 %v83, %v80
  %v105 = vpack.c.b16 %v84, %v81
  %v106 = vpack.c.b16 %v85, %v82
  %v107 = vpack.c.b16 %v89, %v86
  %v108 = vpack.c.b16 %v90, %v87
  %v109 = vpack.c.b16 %v91, %v88
  %v110 = vpack.c.b16 %v95, %v92
  %v111 = vpack.c.b16 %v96, %v93
  %v112 = vpack.c.b16 %v97, %v94
  %v113 = vpack.c.b16 %v101, %v98
  %v114 = vpack.c.b16 %v102, %v99
  %v115 = vpack.c.b16 %v103, %v100
  %v160 = vunpack.c.l.b16 %v28
  %v161 = vunpack.c.h.b16 %v28
  %v162 = vunpack.c.l.b16 %v29
  %v163 = vunpack.c.h.b16 %v29
  %v164 = vunpack.c.l.b16 %v30
  %v165 = vunpack.c.h.b16 %v30
  %v166 = vunpack.c.l.b16 %v31
  %v167 = vunpack.c.h.b16 %v31
  %v168 = vunpack.c.l.b16 %v32
  %v169 = vunpack.c.h.b16 %v32
  %v170 = vunpack.c.l.b16 %v33
  %v171 = vunpack.c.h.b16 %v33
  %v172 = vunpack.c.l.b16 %v34
  %v173 = vunpack.c.h.b16 %v34
  %v174 = vunpack.c.l.b16 %v35
  %v175 = vunpack.c.h.b16 %v35
  %v176 = vunpack.c.l.b16 %v36
  %v177 = vunpack.c.h.b16 %v36
  %v178 = vunpack.c.l.b16 %v37
  %v179 = vunpack.c.h.b16 %v37
  %v180 = vunpack.c.l.b16 %v38
  %v181 = vunpack.c.h.b16 %v38
  %v182 = vunpack.c.l.b16 %v39
  %v183 = vunpack.c.h.b16 %v39
  %v184 = vunpack.c.l.b16 %v40
  %v185 = vunpack.c.h.b16 %v40
  %v186 = vunpack.c.l.b16 %v41
  %v187 = vunpack.c.h.b16 %v41
  %v188 = vunpack.c.l.b16 %v42
  %v189 = vunpack.c.h.b16 %v42
  %v190 = vunpack.c.l.b16 %v43
  %v191 = vunpack.c.h.b16 %v43
  %v192 = vunpack.c.l.b16 %v44
  %v193 = vunpack.c.h.b16 %v44
  %v194 = vunpack.c.l.b16 %v45
  %v195 = vunpack.c.h.b16 %v45
  %v196 = vunpack.c.l.b16 %v46
  %v197 = vunpack.c.h.b16 %v46
  %v198 = vunpack.c.l.b16 %v47
  %v199 = vunpack.c.h.b16 %v47
  %v200 = vunpack.c.l.b16 %v48
  %v201 = vunpack.c.h.b16 %v48
  %v202 = vunpack.c.l.b16 %v49
  %v203 = vunpack.c.h.b16 %v49
  %v204 = vunpack.c.l.b16 %v50
  %v205 = vunpack.c.h.b16 %v50
  %v206 = vunpack.c.l.b16 %v51
  %v207 = vunpack.c.h.b16 %v51
  %v208 = vunpack.c.l.b16 %v52
  %v209 = vunpack.c.h.b16 %v52
  %v210 = vunpack.c.l.b16 %v53
  %v211 = vunpack.c.h.b16 %v53
  %v212 = vunpack.c.l.b16 %v54
  %v213 = vunpack.c.h.b16 %v54
  %v214 = vunpack.c.l.b16 %v55
  %v215 = vunpack.c.h.b16 %v55
  %v216 = vunpack.c.l.b16 %v56
  %v217 = vunpack.c.h.b16 %v56
  %v218 = vunpack.c.l.b16 %v57
  %v219 = vunpack.c.h.b16 %v57
  %v220 = vunpack.c.l.b16 %v58
  %v221 = vunpack.c.h.b16 %v58
  %v222 = vunpack.c.l.b16 %v59
  %v223 = vunpack.c.h.b16 %v59
  %v224 = vunpack.c.l.b16 %v60
  %v225 = vunpack.c.h.b16 %v60
  %v226 = vunpack.c.l.b16 %v61
  %v227 = vunpack.c.h.b16 %v61
  %v228 = vunpack.c.l.b16 %v62
  %v229 = vunpack.c.h.b16 %v62
  %v230 = vunpack.c.l.b16 %v63
  %v231 = vunpack.c.h.b16 %v63
  %v232 = vpack.c.b16 %v162, %v160
  %v233 = vpack.c.b16 %v163, %v161
  %v234 = vpack.c.b16 %v166, %v164
  %v235 = vpack.c.b16 %v167, %v165
  %v236 = vpack.c.b16 %v170, %v168
  %v237 = vpack.c.b16 %v171, %v169
  %v238 = vpack.c.b16 %v174, %v172
  %v239 = vpack.c.b16 %v175, %v173
  %v240 = vpack.c.b16 %v178, %v176
  %v241 = vpack.c.b16 %v179, %v177
  %v242 = vpack.c.b16 %v182, %v180
  %v243 = vpack.c.b16 %v183, %v181
  %v244 = vpack.c.b16 %v186, %v184
  %v245 = vpack.c.b16 %v187, %v185
  %v246 = vpack.c.b16 %v190, %v188
  %v247 = vpack.c.b16 %v191, %v189
  %v248 = vpack.c.b16 %v194, %v192
  %v249 = vpack.c.b16 %v195, %v193
  %v250 = vpack.c.b16 %v198, %v196
  %v251 = vpack.c.b16 %v199, %v197
  %v252 = vpack.c.b16 %v202, %v200
  %v253 = vpack.c.b16 %v203, %v201
  %v254 = vpack.c.b16 %v206, %v204
  %v255 = vpack.c.b16 %v207, %v205
  %v256 = vpack.c.b16 %v210, %v208
  %v257 = vpack.c.b16 %v211, %v209
  %v258 = vpack.c.b16 %v214, %v212
  %v259 = vpack.c.b16 %v215, %v213
  %v260 = vpack.c.b16 %v218, %v216
  %v261 = vpack.c.b16 %v219, %v217
  %v262 = vpack.c.b16 %v222, %v220
  %v263 = vpack.c.b16 %v223, %v221
  %v264 = vpack.c.b16 %v226, %v224
  %v265 = vpack.c.b16 %v227, %v225
  %v266 = vpack.c.b16 %v230, %v228
  %v267 = vpack.c.b16 %v231, %v229
  %vm304 = vcmask 261120
  %v306 = vsel %vm304, %v106, 0
  %v309 = vsel %vm304, %v109, 0
  %v312 = vsel %vm304, %v112, 0
  %v315 = vsel %vm304, %v115, 0
  %317 = vmatprep.subr.bf16.mxu0 %v233
  %318 = vmatpush1.bf16.msra.mxu0 %v232
  %319 = vmatprep.subr.bf16.mxu0 %v235
  %320 = vmatpush1.bf16.msra.mxu0 %v234
  %321 = vmatprep.subr.bf16.mxu0 %v237
  %322 = vmatpush1.bf16.msra.mxu0 %v236
  %323 = vmatprep.subr.bf16.mxu0 %v239
  %324 = vmatpush1.bf16.msra.mxu0 %v238
  %325 = vmatprep.subr.bf16.mxu0 %v241
  %326 = vmatpush1.bf16.msra.mxu0 %v240
  %327 = vmatprep.subr.bf16.mxu0 %v243
  %328 = vmatpush1.bf16.msra.mxu0 %v242
  %329 = vmatprep.subr.bf16.mxu0 %v245
  %330 = vmatpush1.bf16.msra.mxu0 %v244
  %331 = vmatprep.subr.bf16.mxu0 %v247
  %332 = vmatpush1.bf16.msra.mxu0 %v246
  %333 = vmatprep.subr.bf16.mxu0 %v249
  %334 = vmatpush1.bf16.msra.mxu0 %v248
  %335 = vmatprep.subr.bf16.mxu0 %v251
  %336 = vmatpush1.bf16.msra.mxu0 %v250
  %337 = vmatprep.subr.bf16.mxu0 %v253
  %338 = vmatpush1.bf16.msra.mxu0 %v252
  %339 = vmatprep.subr.bf16.mxu0 %v255
  %340 = vmatpush1.bf16.msra.mxu0 %v254
  %341 = vmatprep.subr.bf16.mxu0 %v257
  %342 = vmatpush1.bf16.msra.mxu0 %v256
  %343 = vmatprep.subr.bf16.mxu0 %v259
  %344 = vmatpush1.bf16.msra.mxu0 %v258
  %345 = vmatprep.subr.bf16.mxu0 %v261
  %346 = vmatpush1.bf16.msra.mxu0 %v260
  %347 = vmatprep.subr.bf16.mxu0 %v263
  %348 = vmatpush1.bf16.msra.mxu0 %v262
  %349 = vmatprep.mubr.bf16.mxu0 %v105
  %350 = vmatmul.mubr.bf16.gmra.mrb[0].mxu0 %v104
  %v351 = vpop.f32.mrb[0].mxu0
  %v352 = vadd.f32 0.0, %v351
  %v353 = vpop.f32.mrb[0].mxu0
  %v354 = vadd.f32 0.0, %v353
  %v355 = vpop.f32.mrb[0].mxu0
  %v356 = vadd.f32 0.0, %v355
  %v357 = vpop.f32.mrb[0].mxu0
  %v358 = vadd.f32 0.0, %v357
  %359 = vmatprep.mubr.bf16.mxu0 %v108
  %360 = vmatmul.mubr.bf16.gmra.mrb[0].mxu0 %v107
  %v361 = vpop.f32.mrb[0].mxu0
  %v362 = vadd.f32 0.0, %v361
  %v363 = vpop.f32.mrb[0].mxu0
  %v364 = vadd.f32 0.0, %v363
  %v365 = vpop.f32.mrb[0].mxu0
  %v366 = vadd.f32 0.0, %v365
  %v367 = vpop.f32.mrb[0].mxu0
  %v368 = vadd.f32 0.0, %v367
  %369 = vmatprep.mubr.bf16.mxu0 %v111
  %370 = vmatmul.mubr.bf16.gmra.mrb[0].mxu0 %v110
  %v371 = vpop.f32.mrb[0].mxu0
  %v372 = vadd.f32 0.0, %v371
  %v373 = vpop.f32.mrb[0].mxu0
  %v374 = vadd.f32 0.0, %v373
  %v375 = vpop.f32.mrb[0].mxu0
  %v376 = vadd.f32 0.0, %v375
  %v377 = vpop.f32.mrb[0].mxu0
  %v378 = vadd.f32 0.0, %v377
  %379 = vmatprep.mubr.bf16.mxu0 %v114
  %380 = vmatmul.mubr.bf16.gmra.mrb[0].mxu0 %v113
  %v381 = vpop.f32.mrb[0].mxu0
  %v382 = vadd.f32 0.0, %v381
  %v383 = vpop.f32.mrb[0].mxu0
  %v384 = vadd.f32 0.0, %v383
  %v385 = vpop.f32.mrb[0].mxu0
  %v386 = vadd.f32 0.0, %v385
  %v387 = vpop.f32.mrb[0].mxu0
  %v388 = vadd.f32 0.0, %v387
  %389 = vdwg.mxu0
  %390 = vmatprep.subr.bf16.mxu0 %v265
  %391 = vmatpush1.bf16.msra.mxu0 %v264
  %392 = vmatprep.subr.bf16.mxu0 %v267
  %393 = vmatpush1.bf16.msra.mxu0 %v266
  %394 = vmatprep.subr.bf16.mxu0 0
  %395 = vmatpush1.bf16.msra.mxu0 0
  %396 = vmatprep.subr.bf16.mxu0 0
  %397 = vmatpush1.bf16.msra.mxu0 0
  %398 = vmatprep.subr.bf16.mxu0 0
  %399 = vmatpush1.bf16.msra.mxu0 0
  %400 = vmatprep.subr.bf16.mxu0 0
  %401 = vmatpush1.bf16.msra.mxu0 0
  %402 = vmatprep.subr.bf16.mxu0 0
  %403 = vmatpush1.bf16.msra.mxu0 0
  %404 = vmatprep.subr.bf16.mxu0 0
  %405 = vmatpush1.bf16.msra.mxu0 0
  %406 = vmatprep.subr.bf16.mxu0 0
  %407 = vmatpush1.bf16.msra.mxu0 0
  %408 = vmatprep.subr.bf16.mxu0 0
  %409 = vmatpush1.bf16.msra.mxu0 0
  %410 = vmatprep.subr.bf16.mxu0 0
  %411 = vmatpush1.bf16.msra.mxu0 0
  %412 = vmatprep.subr.bf16.mxu0 0
  %413 = vmatpush1.bf16.msra.mxu0 0
  %414 = vmatprep.subr.bf16.mxu0 0
  %415 = vmatpush1.bf16.msra.mxu0 0
  %416 = vmatprep.subr.bf16.mxu0 0
  %417 = vmatpush1.bf16.msra.mxu0 0
  %418 = vmatprep.subr.bf16.mxu0 0
  %419 = vmatpush1.bf16.msra.mxu0 0
  %420 = vmatprep.subr.bf16.mxu0 0
  %421 = vmatpush1.bf16.msra.mxu0 0
  %422 = vmatprep.mubr.bf16.mxu0 0
  %423 = vmatmul.mubr.bf16.gmra.mrb[0].mxu0 %v306
  %v424 = vpop.f32.mrb[0].mxu0
  %v425 = vadd.f32 %v352, %v424
  %v426 = vpop.f32.mrb[0].mxu0
  %v427 = vadd.f32 %v354, %v426
  %v428 = vpop.f32.mrb[0].mxu0
  %v429 = vadd.f32 %v356, %v428
  %v430 = vpop.f32.mrb[0].mxu0
  %v431 = vadd.f32 %v358, %v430
  %432 = vmatprep.mubr.bf16.mxu0 0
  %433 = vmatmul.mubr.bf16.gmra.mrb[0].mxu0 %v309
  %v434 = vpop.f32.mrb[0].mxu0
  %v435 = vadd.f32 %v362, %v434
  %v436 = vpop.f32.mrb[0].mxu0
  %v437 = vadd.f32 %v364, %v436
  %v438 = vpop.f32.mrb[0].mxu0
  %v439 = vadd.f32 %v366, %v438
  %v440 = vpop.f32.mrb[0].mxu0
  %v441 = vadd.f32 %v368, %v440
  %442 = vmatprep.mubr.bf16.mxu0 0
  %443 = vmatmul.mubr.bf16.gmra.mrb[0].mxu0 %v312
  %v444 = vpop.f32.mrb[0].mxu0
  %v445 = vadd.f32 %v372, %v444
  %v446 = vpop.f32.mrb[0].mxu0
  %v447 = vadd.f32 %v374, %v446
  %v448 = vpop.f32.mrb[0].mxu0
  %v449 = vadd.f32 %v376, %v448
  %v450 = vpop.f32.mrb[0].mxu0
  %v451 = vadd.f32 %v378, %v450
  %452 = vmatprep.mubr.bf16.mxu0 0
  %453 = vmatmul.mubr.bf16.gmra.mrb[0].mxu0 %v315
  %v454 = vpop.f32.mrb[0].mxu0
  %v455 = vadd.f32 %v382, %v454
  %v456 = vpop.f32.mrb[0].mxu0
  %v457 = vadd.f32 %v384, %v456
  %v458 = vpop.f32.mrb[0].mxu0
  %v459 = vadd.f32 %v386, %v458
  %v460 = vpop.f32.mrb[0].mxu0
  %v461 = vadd.f32 %v388, %v460
  %462 = vdwg.mxu0
  %v463 = vmax.f32 %v425, 0.0
  %v464 = vmax.f32 %v427, 0.0
  %v465 = vmax.f32 %v429, 0.0
  %v466 = vmax.f32 %v431, 0.0
  %v467 = vmax.f32 %v435, 0.0
  %v468 = vmax.f32 %v437, 0.0
  %v469 = vmax.f32 %v439, 0.0
  %v470 = vmax.f32 %v441, 0.0
  %v471 = vmax.f32 %v445, 0.0
  %v472 = vmax.f32 %v447, 0.0
  %v473 = vmax.f32 %v449, 0.0
  %v474 = vmax.f32 %v451, 0.0
  %v475 = vmax.f32 %v455, 0.0
  %v476 = vmax.f32 %v457, 0.0
  %v477 = vmax.f32 %v459, 0.0
  %v478 = vmax.f32 %v461, 0.0
  %v479 = vpack.c.bf16 %v465, %v463
  %v480 = vpack.c.bf16 %v466, %v464
  %v481 = vpack.c.bf16 %v469, %v467
  %v482 = vpack.c.bf16 %v470, %v468
  %v483 = vpack.c.bf16 %v473, %v471
  %v484 = vpack.c.bf16 %v474, %v472
  %v485 = vpack.c.bf16 %v477, %v475
  %v486 = vpack.c.bf16 %v478, %v476
  %v495 = vunpack.c.l.b16 %v479
  %v496 = vunpack.c.l.b16 %v480
  %v497 = vunpack.c.h.b16 %v479
  %v498 = vunpack.c.h.b16 %v480
  %v499 = vunpack.c.l.b16 %v481
  %v500 = vunpack.c.l.b16 %v482
  %v501 = vunpack.c.h.b16 %v481
  %v502 = vunpack.c.h.b16 %v482
  %v503 = vunpack.c.l.b16 %v483
  %v504 = vunpack.c.l.b16 %v484
  %v505 = vunpack.c.h.b16 %v483
  %v506 = vunpack.c.h.b16 %v484
  %v507 = vunpack.c.l.b16 %v485
  %v508 = vunpack.c.l.b16 %v486
  %v509 = vunpack.c.h.b16 %v485
  %v510 = vunpack.c.h.b16 %v486
  %v511 = vpack.c.b16 %v496, %v495
  %v512 = vpack.c.b16 %v498, %v497
  %v513 = vpack.c.b16 %v500, %v499
  %v514 = vpack.c.b16 %v502, %v501
  %v515 = vpack.c.b16 %v504, %v503
  %v516 = vpack.c.b16 %v506, %v505
  %v517 = vpack.c.b16 %v508, %v507
  %v518 = vpack.c.b16 %v510, %v509
  %527 = vst [vmem:[%s2] sm:$0xff] %v511
  %528 = vst [vmem:[%s2 + $0x8] sm:$0xff] %v512
  %529 = vst [vmem:[%s2 + $0x10] sm:$0xff] %v513
  %530 = vst [vmem:[%s2 + $0x18] sm:$0xff] %v514
  %531 = vst [vmem:[%s2 + $0x20] sm:$0xff] %v515
  %532 = vst [vmem:[%s2 + $0x28] sm:$0xff] %v516
  %533 = vst [vmem:[%s2 + $0x30] sm:$0xff] %v517
  %534 = vst [vmem:[%s2 + $0x38] sm:$0xff] %v518
  // Predicated region
  $region10: #{_lambda_.11} parent=0 // pred_check
    _
  $region11: #{_lambda_.11} parent=0 // pred_check_branch
    %536 = sbr.rel (0) target = $region13
  $region12: #{_lambda_.11} parent=0 // pred_region
    _
  $region13: #{_lambda_.11} parent=0 // pred_fallthru
    _
  // Predicated region
  $region14: #{_lambda_.11} parent=0 // pred_check
    _
  $region15: #{_lambda_.11} parent=0 // pred_check_branch
    %538 = sbr.rel (0) target = $region17
  $region16: #{_lambda_.11} parent=0 // pred_region
    _
  $region17: #{_lambda_.11} parent=0 // pred_fallthru
    _

// kernel: _lambda_.12
$region0: #{_lambda_.12}
  #allocation0 [shape = 'u32[]', space=smem, size = 0x4, offset = 0x4, fixed_abs, tag = 'smem constant byte address 0x4 - core index']
  #allocation1 [shape = 'u32[144,128]{1,0:T(1,128)}', space=vmem, size = 0x12000, scoped, tag = 'internal scratch']
  %s0 = inlined_call_operand.vmem [shape: bf16[128,576], index: 0, kind: input, shape index: {}]
  %s1 = inlined_call_operand.vmem [shape: bf16[10,128], index: 1, kind: input, shape index: {}]
  %s2 = inlined_call_operand.vmem [shape: bf16[576,128], index: 2, kind: input, shape index: {}]
  %s3 = inlined_call_operand.vmem [shape: bf16[10,128], index: 3, kind: output, shape index: {}]
  %s4 = sld [smem:[#allocation0]]
  $region22: #{_lambda_.12} parent=0
    _
  %s6 = ssub.s32 1, %s4
  %s7 = scalar_select 0, %s6, %s4
  // Predicated region
  $region2: #{_lambda_.12} parent=0 // pred_check
    _
  $region3: #{_lambda_.12} parent=0 // pred_check_branch
    %9 = sbr.rel (0) target = $region5
  $region4: #{_lambda_.12} parent=0 // pred_region
    _
  $region5: #{_lambda_.12} parent=0 // pred_fallthru
    _
  // Predicated region
  $region6: #{_lambda_.12} parent=0 // pred_check
    _
  $region7: #{_lambda_.12} parent=0 // pred_check_branch
    %11 = sbr.rel (0) target = $region9
  $region8: #{_lambda_.12} parent=0 // pred_region
    _
  $region9: #{_lambda_.12} parent=0 // pred_fallthru
    _
  // Predicated region
  $region10: #{_lambda_.12} parent=0 // pred_check
    _
  $region11: #{_lambda_.12} parent=0 // pred_check_branch
    %13 = sbr.rel (0) target = $region13
  $region12: #{_lambda_.12} parent=0 // pred_region
    _
  $region13: #{_lambda_.12} parent=0 // pred_fallthru
    _
  %v15 = vld [vmem:[%s0] sm:$0xff]
  %v16 = vld [vmem:[%s0 + $0x8] sm:$0xff]
  %v17 = vld [vmem:[%s0 + $0x10] sm:$0xf]
  %v18 = vld [vmem:[%s0 + $0x14] sm:$0xff]
  %v19 = vld [vmem:[%s0 + $0x1c] sm:$0xff]
  %v20 = vld [vmem:[%s0 + $0x24] sm:$0xf]
  %v21 = vld [vmem:[%s0 + $0x28] sm:$0xff]
  %v22 = vld [vmem:[%s0 + $0x30] sm:$0xff]
  %v23 = vld [vmem:[%s0 + $0x38] sm:$0xf]
  %v24 = vld [vmem:[%s0 + $0x3c] sm:$0xff]
  %v25 = vld [vmem:[%s0 + $0x44] sm:$0xff]
  %v26 = vld [vmem:[%s0 + $0x4c] sm:$0xf]
  %v27 = vld [vmem:[%s0 + $0x50] sm:$0xff]
  %v28 = vld [vmem:[%s0 + $0x58] sm:$0xff]
  %v29 = vld [vmem:[%s0 + $0x60] sm:$0xf]
  %v30 = vld [vmem:[%s0 + $0x64] sm:$0xff]
  %v31 = vld [vmem:[%s0 + $0x6c] sm:$0xff]
  %v32 = vld [vmem:[%s0 + $0x74] sm:$0xf]
  %v33 = vld [vmem:[%s0 + $0x78] sm:$0xff]
  %v34 = vld [vmem:[%s0 + $0x80] sm:$0xff]
  %v35 = vld [vmem:[%s0 + $0x88] sm:$0xf]
  %v36 = vld [vmem:[%s0 + $0x8c] sm:$0xff]
  %v37 = vld [vmem:[%s0 + $0x94] sm:$0xff]
  %v38 = vld [vmem:[%s0 + $0x9c] sm:$0xf]
  %v39 = vld [vmem:[%s0 + $0xa0] sm:$0xff]
  %v40 = vld [vmem:[%s0 + $0xa8] sm:$0xff]
  %v41 = vld [vmem:[%s0 + $0xb0] sm:$0xf]
  %v42 = vld [vmem:[%s0 + $0xb4] sm:$0xff]
  %v43 = vld [vmem:[%s0 + $0xbc] sm:$0xff]
  %v44 = vld [vmem:[%s0 + $0xc4] sm:$0xf]
  %v45 = vld [vmem:[%s0 + $0xc8] sm:$0xff]
  %v46 = vld [vmem:[%s0 + $0xd0] sm:$0xff]
  %v47 = vld [vmem:[%s0 + $0xd8] sm:$0xf]
  %v48 = vld [vmem:[%s0 + $0xdc] sm:$0xff]
  %v49 = vld [vmem:[%s0 + $0xe4] sm:$0xff]
  %v50 = vld [vmem:[%s0 + $0xec] sm:$0xf]
  %v51 = vld [vmem:[%s0 + $0xf0] sm:$0xff]
  %v52 = vld [vmem:[%s0 + $0xf8] sm:$0xff]
  %v53 = vld [vmem:[%s0 + $0x100] sm:$0xf]
  %v54 = vld [vmem:[%s0 + $0x104] sm:$0xff]
  %v55 = vld [vmem:[%s0 + $0x10c] sm:$0xff]
  %v56 = vld [vmem:[%s0 + $0x114] sm:$0xf]
  %v57 = vld [vmem:[%s0 + $0x118] sm:$0xff]
  %v58 = vld [vmem:[%s0 + $0x120] sm:$0xff]
  %v59 = vld [vmem:[%s0 + $0x128] sm:$0xf]
  %v60 = vld [vmem:[%s0 + $0x12c] sm:$0xff]
  %v61 = vld [vmem:[%s0 + $0x134] sm:$0xff]
  %v62 = vld [vmem:[%s0 + $0x13c] sm:$0xf]
  %v63 = vld [vmem:[%s2] sm:$0xf]
  %v64 = vld [vmem:[%s2 + $0x4] sm:$0xf]
  %v65 = vld [vmem:[%s2 + $0x8] sm:$0xf]
  %v66 = vld [vmem:[%s2 + $0xc] sm:$0xf]
  %v67 = vld [vmem:[%s2 + $0x10] sm:$0xf]
  %v68 = vld [vmem:[%s2 + $0x14] sm:$0xf]
  %v69 = vld [vmem:[%s2 + $0x18] sm:$0xf]
  %v70 = vld [vmem:[%s2 + $0x1c] sm:$0xf]
  %v71 = vld [vmem:[%s2 + $0x20] sm:$0xf]
  %v72 = vld [vmem:[%s2 + $0x24] sm:$0xf]
  %v73 = vld [vmem:[%s2 + $0x28] sm:$0xf]
  %v74 = vld [vmem:[%s2 + $0x2c] sm:$0xf]
  %v75 = vld [vmem:[%s2 + $0x30] sm:$0xf]
  %v76 = vld [vmem:[%s2 + $0x34] sm:$0xf]
  %v77 = vld [vmem:[%s2 + $0x38] sm:$0xf]
  %v78 = vld [vmem:[%s2 + $0x3c] sm:$0xf]
  %v79 = vld [vmem:[%s2 + $0x40] sm:$0xf]
  %v80 = vld [vmem:[%s2 + $0x44] sm:$0xf]
  %v81 = vld [vmem:[%s2 + $0x48] sm:$0xf]
  %v82 = vld [vmem:[%s2 + $0x4c] sm:$0xf]
  %v83 = vld [vmem:[%s2 + $0x50] sm:$0xf]
  %v84 = vld [vmem:[%s2 + $0x54] sm:$0xf]
  %v85 = vld [vmem:[%s2 + $0x58] sm:$0xf]
  %v86 = vld [vmem:[%s2 + $0x5c] sm:$0xf]
  %v87 = vld [vmem:[%s2 + $0x60] sm:$0xf]
  %v88 = vld [vmem:[%s2 + $0x64] sm:$0xf]
  %v89 = vld [vmem:[%s2 + $0x68] sm:$0xf]
  %v90 = vld [vmem:[%s2 + $0x6c] sm:$0xf]
  %v91 = vld [vmem:[%s2 + $0x70] sm:$0xf]
  %v92 = vld [vmem:[%s2 + $0x74] sm:$0xf]
  %v93 = vld [vmem:[%s2 + $0x78] sm:$0xf]
  %v94 = vld [vmem:[%s2 + $0x7c] sm:$0xf]
  %v95 = vld [vmem:[%s2 + $0x80] sm:$0xf]
  %v96 = vld [vmem:[%s2 + $0x84] sm:$0xf]
  %v97 = vld [vmem:[%s2 + $0x88] sm:$0xf]
  %v98 = vld [vmem:[%s2 + $0x8c] sm:$0xf]
  %v99 = vld [vmem:[%s2 + $0x90] sm:$0xf]
  %v100 = vld [vmem:[%s2 + $0x94] sm:$0xf]
  %v101 = vld [vmem:[%s2 + $0x98] sm:$0xf]
  %v102 = vld [vmem:[%s2 + $0x9c] sm:$0xf]
  %v103 = vld [vmem:[%s2 + $0xa0] sm:$0xf]
  %v104 = vld [vmem:[%s2 + $0xa4] sm:$0xf]
  %v105 = vld [vmem:[%s2 + $0xa8] sm:$0xf]
  %v106 = vld [vmem:[%s2 + $0xac] sm:$0xf]
  %v107 = vld [vmem:[%s2 + $0xb0] sm:$0xf]
  %v108 = vld [vmem:[%s2 + $0xb4] sm:$0xf]
  %v109 = vld [vmem:[%s2 + $0xb8] sm:$0xf]
  %v110 = vld [vmem:[%s2 + $0xbc] sm:$0xf]
  %v111 = vld [vmem:[%s2 + $0xc0] sm:$0xf]
  %v112 = vld [vmem:[%s2 + $0xc4] sm:$0xf]
  %v113 = vld [vmem:[%s2 + $0xc8] sm:$0xf]
  %v114 = vld [vmem:[%s2 + $0xcc] sm:$0xf]
  %v115 = vld [vmem:[%s2 + $0xd0] sm:$0xf]
  %v116 = vld [vmem:[%s2 + $0xd4] sm:$0xf]
  %v117 = vld [vmem:[%s2 + $0xd8] sm:$0xf]
  %v118 = vld [vmem:[%s2 + $0xdc] sm:$0xf]
  %v119 = vld [vmem:[%s2 + $0xe0] sm:$0xf]
  %v120 = vld [vmem:[%s2 + $0xe4] sm:$0xf]
  %v121 = vld [vmem:[%s2 + $0xe8] sm:$0xf]
  %v122 = vld [vmem:[%s2 + $0xec] sm:$0xf]
  %v123 = vld [vmem:[%s2 + $0xf0] sm:$0xf]
  %v124 = vld [vmem:[%s2 + $0xf4] sm:$0xf]
  %v125 = vld [vmem:[%s2 + $0xf8] sm:$0xf]
  %v126 = vld [vmem:[%s2 + $0xfc] sm:$0xf]
  %v127 = vld [vmem:[%s2 + $0x100] sm:$0xf]
  %v128 = vld [vmem:[%s2 + $0x104] sm:$0xf]
  %v129 = vld [vmem:[%s2 + $0x108] sm:$0xf]
  %v130 = vld [vmem:[%s2 + $0x10c] sm:$0xf]
  %v131 = vld [vmem:[%s2 + $0x110] sm:$0xf]
  %v132 = vld [vmem:[%s2 + $0x114] sm:$0xf]
  %v133 = vld [vmem:[%s2 + $0x118] sm:$0xf]
  %v134 = vld [vmem:[%s2 + $0x11c] sm:$0xf]
  %v183 = vunpack.c.l.b16 %v15
  %v184 = vunpack.c.h.b16 %v15
  %v185 = vunpack.c.l.b16 %v16
  %v186 = vunpack.c.h.b16 %v16
  %v187 = vunpack.c.l.b16 %v17
  %v188 = vunpack.c.l.b16 %v18
  %v189 = vunpack.c.h.b16 %v18
  %v190 = vunpack.c.l.b16 %v19
  %v191 = vunpack.c.h.b16 %v19
  %v192 = vunpack.c.l.b16 %v20
  %v193 = vunpack.c.l.b16 %v21
  %v194 = vunpack.c.h.b16 %v21
  %v195 = vunpack.c.l.b16 %v22
  %v196 = vunpack.c.h.b16 %v22
  %v197 = vunpack.c.l.b16 %v23
  %v198 = vunpack.c.l.b16 %v24
  %v199 = vunpack.c.h.b16 %v24
  %v200 = vunpack.c.l.b16 %v25
  %v201 = vunpack.c.h.b16 %v25
  %v202 = vunpack.c.l.b16 %v26
  %v203 = vunpack.c.l.b16 %v27
  %v204 = vunpack.c.h.b16 %v27
  %v205 = vunpack.c.l.b16 %v28
  %v206 = vunpack.c.h.b16 %v28
  %v207 = vunpack.c.l.b16 %v29
  %v208 = vunpack.c.l.b16 %v30
  %v209 = vunpack.c.h.b16 %v30
  %v210 = vunpack.c.l.b16 %v31
  %v211 = vunpack.c.h.b16 %v31
  %v212 = vunpack.c.l.b16 %v32
  %v213 = vunpack.c.l.b16 %v33
  %v214 = vunpack.c.h.b16 %v33
  %v215 = vunpack.c.l.b16 %v34
  %v216 = vunpack.c.h.b16 %v34
  %v217 = vunpack.c.l.b16 %v35
  %v218 = vunpack.c.l.b16 %v36
  %v219 = vunpack.c.h.b16 %v36
  %v220 = vunpack.c.l.b16 %v37
  %v221 = vunpack.c.h.b16 %v37
  %v222 = vunpack.c.l.b16 %v38
  %v223 = vunpack.c.l.b16 %v39
  %v224 = vunpack.c.h.b16 %v39
  %v225 = vunpack.c.l.b16 %v40
  %v226 = vunpack.c.h.b16 %v40
  %v227 = vunpack.c.l.b16 %v41
  %v228 = vunpack.c.l.b16 %v42
  %v229 = vunpack.c.h.b16 %v42
  %v230 = vunpack.c.l.b16 %v43
  %v231 = vunpack.c.h.b16 %v43
  %v232 = vunpack.c.l.b16 %v44
  %v233 = vunpack.c.l.b16 %v45
  %v234 = vunpack.c.h.b16 %v45
  %v235 = vunpack.c.l.b16 %v46
  %v236 = vunpack.c.h.b16 %v46
  %v237 = vunpack.c.l.b16 %v47
  %v238 = vunpack.c.l.b16 %v48
  %v239 = vunpack.c.h.b16 %v48
  %v240 = vunpack.c.l.b16 %v49
  %v241 = vunpack.c.h.b16 %v49
  %v242 = vunpack.c.l.b16 %v50
  %v243 = vunpack.c.l.b16 %v51
  %v244 = vunpack.c.h.b16 %v51
  %v245 = vunpack.c.l.b16 %v52
  %v246 = vunpack.c.h.b16 %v52
  %v247 = vunpack.c.l.b16 %v53
  %v248 = vunpack.c.l.b16 %v54
  %v249 = vunpack.c.h.b16 %v54
  %v250 = vunpack.c.l.b16 %v55
  %v251 = vunpack.c.h.b16 %v55
  %v252 = vunpack.c.l.b16 %v56
  %v253 = vunpack.c.l.b16 %v57
  %v254 = vunpack.c.h.b16 %v57
  %v255 = vunpack.c.l.b16 %v58
  %v256 = vunpack.c.h.b16 %v58
  %v257 = vunpack.c.l.b16 %v59
  %v258 = vunpack.c.l.b16 %v60
  %v259 = vunpack.c.h.b16 %v60
  %v260 = vunpack.c.l.b16 %v61
  %v261 = vunpack.c.h.b16 %v61
  %v262 = vunpack.c.l.b16 %v62
  %v263 = vpack.c.b16 %v188, %v183
  %v264 = vpack.c.b16 %v189, %v184
  %v265 = vpack.c.b16 %v190, %v185
  %v266 = vpack.c.b16 %v191, %v186
  %v267 = vpack.c.b16 %v192, %v187
  %v268 = vpack.c.b16 %v198, %v193
  %v269 = vpack.c.b16 %v199, %v194
  %v270 = vpack.c.b16 %v200, %v195
  %v271 = vpack.c.b16 %v201, %v196
  %v272 = vpack.c.b16 %v202, %v197
  %v273 = vpack.c.b16 %v208, %v203
  %v274 = vpack.c.b16 %v209, %v204
  %v275 = vpack.c.b16 %v210, %v205
  %v276 = vpack.c.b16 %v211, %v206
  %v277 = vpack.c.b16 %v212, %v207
  %v278 = vpack.c.b16 %v218, %v213
  %v279 = vpack.c.b16 %v219, %v214
  %v280 = vpack.c.b16 %v220, %v215
  %v281 = vpack.c.b16 %v221, %v216
  %v282 = vpack.c.b16 %v222, %v217
  %v283 = vpack.c.b16 %v228, %v223
  %v284 = vpack.c.b16 %v229, %v224
  %v285 = vpack.c.b16 %v230, %v225
  %v286 = vpack.c.b16 %v231, %v226
  %v287 = vpack.c.b16 %v232, %v227
  %v288 = vpack.c.b16 %v238, %v233
  %v289 = vpack.c.b16 %v239, %v234
  %v290 = vpack.c.b16 %v240, %v235
  %v291 = vpack.c.b16 %v241, %v236
  %v292 = vpack.c.b16 %v242, %v237
  %v293 = vpack.c.b16 %v248, %v243
  %v294 = vpack.c.b16 %v249, %v244
  %v295 = vpack.c.b16 %v250, %v245
  %v296 = vpack.c.b16 %v251, %v246
  %v297 = vpack.c.b16 %v252, %v247
  %v298 = vpack.c.b16 %v258, %v253
  %v299 = vpack.c.b16 %v259, %v254
  %v300 = vpack.c.b16 %v260, %v255
  %v301 = vpack.c.b16 %v261, %v256
  %v302 = vpack.c.b16 %v262, %v257
  %v407 = vunpack.c.l.b16 %v63
  %v408 = vunpack.c.l.b16 %v64
  %v409 = vunpack.c.l.b16 %v65
  %v410 = vunpack.c.l.b16 %v66
  %v411 = vunpack.c.l.b16 %v67
  %v412 = vunpack.c.l.b16 %v68
  %v413 = vunpack.c.l.b16 %v69
  %v414 = vunpack.c.l.b16 %v70
  %v415 = vunpack.c.l.b16 %v71
  %v416 = vunpack.c.l.b16 %v72
  %v417 = vunpack.c.l.b16 %v73
  %v418 = vunpack.c.l.b16 %v74
  %v419 = vunpack.c.l.b16 %v75
  %v420 = vunpack.c.l.b16 %v76
  %v421 = vunpack.c.l.b16 %v77
  %v422 = vunpack.c.l.b16 %v78
  %v423 = vunpack.c.l.b16 %v79
  %v424 = vunpack.c.l.b16 %v80
  %v425 = vunpack.c.l.b16 %v81
  %v426 = vunpack.c.l.b16 %v82
  %v427 = vunpack.c.l.b16 %v83
  %v428 = vunpack.c.l.b16 %v84
  %v429 = vunpack.c.l.b16 %v85
  %v430 = vunpack.c.l.b16 %v86
  %v431 = vunpack.c.l.b16 %v87
  %v432 = vunpack.c.l.b16 %v88
  %v433 = vunpack.c.l.b16 %v89
  %v434 = vunpack.c.l.b16 %v90
  %v435 = vunpack.c.l.b16 %v91
  %v436 = vunpack.c.l.b16 %v92
  %v437 = vunpack.c.l.b16 %v93
  %v438 = vunpack.c.l.b16 %v94
  %v439 = vunpack.c.l.b16 %v95
  %v440 = vunpack.c.l.b16 %v96
  %v441 = vunpack.c.l.b16 %v97
  %v442 = vunpack.c.l.b16 %v98
  %v443 = vunpack.c.l.b16 %v99
  %v444 = vunpack.c.l.b16 %v100
  %v445 = vunpack.c.l.b16 %v101
  %v446 = vunpack.c.l.b16 %v102
  %v447 = vunpack.c.l.b16 %v103
  %v448 = vunpack.c.l.b16 %v104
  %v449 = vunpack.c.l.b16 %v105
  %v450 = vunpack.c.l.b16 %v106
  %v451 = vunpack.c.l.b16 %v107
  %v452 = vunpack.c.l.b16 %v108
  %v453 = vunpack.c.l.b16 %v109
  %v454 = vunpack.c.l.b16 %v110
  %v455 = vunpack.c.l.b16 %v111
  %v456 = vunpack.c.l.b16 %v112
  %v457 = vunpack.c.l.b16 %v113
  %v458 = vunpack.c.l.b16 %v114
  %v459 = vunpack.c.l.b16 %v115
  %v460 = vunpack.c.l.b16 %v116
  %v461 = vunpack.c.l.b16 %v117
  %v462 = vunpack.c.l.b16 %v118
  %v463 = vunpack.c.l.b16 %v119
  %v464 = vunpack.c.l.b16 %v120
  %v465 = vunpack.c.l.b16 %v121
  %v466 = vunpack.c.l.b16 %v122
  %v467 = vunpack.c.l.b16 %v123
  %v468 = vunpack.c.l.b16 %v124
  %v469 = vunpack.c.l.b16 %v125
  %v470 = vunpack.c.l.b16 %v126
  %v471 = vunpack.c.l.b16 %v127
  %v472 = vunpack.c.l.b16 %v128
  %v473 = vunpack.c.l.b16 %v129
  %v474 = vunpack.c.l.b16 %v130
  %v475 = vunpack.c.l.b16 %v131
  %v476 = vunpack.c.l.b16 %v132
  %v477 = vunpack.c.l.b16 %v133
  %v478 = vunpack.c.l.b16 %v134
  %v479 = vpack.c.b16 %v408, %v407
  %v480 = vpack.c.b16 %v410, %v409
  %v481 = vpack.c.b16 %v412, %v411
  %v482 = vpack.c.b16 %v414, %v413
  %v483 = vpack.c.b16 %v416, %v415
  %v484 = vpack.c.b16 %v418, %v417
  %v485 = vpack.c.b16 %v420, %v419
  %v486 = vpack.c.b16 %v422, %v421
  %v487 = vpack.c.b16 %v424, %v423
  %v488 = vpack.c.b16 %v426, %v425
  %v489 = vpack.c.b16 %v428, %v427
  %v490 = vpack.c.b16 %v430, %v429
  %v491 = vpack.c.b16 %v432, %v431
  %v492 = vpack.c.b16 %v434, %v433
  %v493 = vpack.c.b16 %v436, %v435
  %v494 = vpack.c.b16 %v438, %v437
  %v495 = vpack.c.b16 %v440, %v439
  %v496 = vpack.c.b16 %v442, %v441
  %v497 = vpack.c.b16 %v444, %v443
  %v498 = vpack.c.b16 %v446, %v445
  %v499 = vpack.c.b16 %v448, %v447
  %v500 = vpack.c.b16 %v450, %v449
  %v501 = vpack.c.b16 %v452, %v451
  %v502 = vpack.c.b16 %v454, %v453
  %v503 = vpack.c.b16 %v456, %v455
  %v504 = vpack.c.b16 %v458, %v457
  %v505 = vpack.c.b16 %v460, %v459
  %v506 = vpack.c.b16 %v462, %v461
  %v507 = vpack.c.b16 %v464, %v463
  %v508 = vpack.c.b16 %v466, %v465
  %v509 = vpack.c.b16 %v468, %v467
  %v510 = vpack.c.b16 %v470, %v469
  %v511 = vpack.c.b16 %v472, %v471
  %v512 = vpack.c.b16 %v474, %v473
  %v513 = vpack.c.b16 %v476, %v475
  %v514 = vpack.c.b16 %v478, %v477
  %vm551 = vcmask 523264
  %v553 = vsel %vm551, %v267, 0
  %v556 = vsel %vm551, %v272, 0
  %v559 = vsel %vm551, %v277, 0
  %v562 = vsel %vm551, %v282, 0
  %v565 = vsel %vm551, %v287, 0
  %v568 = vsel %vm551, %v292, 0
  %v571 = vsel %vm551, %v297, 0
  %v574 = vsel %vm551, %v302, 0
  %576 = vmatprep.subr.bf16.mxu0 0
  %577 = vmatpush1.bf16.msra.mxu0 %v479
  %578 = vmatprep.subr.bf16.mxu0 0
  %579 = vmatpush1.bf16.msra.mxu0 %v480
  %580 = vmatprep.subr.bf16.mxu0 0
  %581 = vmatpush1.bf16.msra.mxu0 %v481
  %582 = vmatprep.subr.bf16.mxu0 0
  %583 = vmatpush1.bf16.msra.mxu0 %v482
  %584 = vmatprep.subr.bf16.mxu0 0
  %585 = vmatpush1.bf16.msra.mxu0 %v483
  %586 = vmatprep.subr.bf16.mxu0 0
  %587 = vmatpush1.bf16.msra.mxu0 %v484
  %588 = vmatprep.subr.bf16.mxu0 0
  %589 = vmatpush1.bf16.msra.mxu0 %v485
  %590 = vmatprep.subr.bf16.mxu0 0
  %591 = vmatpush1.bf16.msra.mxu0 %v486
  %592 = vmatprep.subr.bf16.mxu0 0
  %593 = vmatpush1.bf16.msra.mxu0 %v487
  %594 = vmatprep.subr.bf16.mxu0 0
  %595 = vmatpush1.bf16.msra.mxu0 %v488
  %596 = vmatprep.subr.bf16.mxu0 0
  %597 = vmatpush1.bf16.msra.mxu0 %v489
  %598 = vmatprep.subr.bf16.mxu0 0
  %599 = vmatpush1.bf16.msra.mxu0 %v490
  %600 = vmatprep.subr.bf16.mxu0 0
  %601 = vmatpush1.bf16.msra.mxu0 %v491
  %602 = vmatprep.subr.bf16.mxu0 0
  %603 = vmatpush1.bf16.msra.mxu0 %v492
  %604 = vmatprep.subr.bf16.mxu0 0
  %605 = vmatpush1.bf16.msra.mxu0 %v493
  %606 = vmatprep.subr.bf16.mxu0 0
  %607 = vmatpush1.bf16.msra.mxu0 %v494
  %608 = vmatprep.mubr.bf16.mxu0 %v264
  %609 = vmatmul.mubr.bf16.gmra.mrb[0].mxu0 %v263
  %v610 = vpop.f32.mrb[0].mxu0
  %v611 = vadd.f32 0.0, %v610
  %v612 = vpop.f32.mrb[0].mxu0
  %v613 = vpop.f32.mrb[0].mxu0
  %v614 = vadd.f32 0.0, %v613
  %v615 = vpop.f32.mrb[0].mxu0
  %616 = vmatprep.mubr.bf16.mxu0 %v269
  %617 = vmatmul.mubr.bf16.gmra.mrb[0].mxu0 %v268
  %v618 = vpop.f32.mrb[0].mxu0
  %v619 = vadd.f32 0.0, %v618
  %v620 = vpop.f32.mrb[0].mxu0
  %v621 = vpop.f32.mrb[0].mxu0
  %v622 = vadd.f32 0.0, %v621
  %v623 = vpop.f32.mrb[0].mxu0
  %624 = vmatprep.mubr.bf16.mxu0 %v274
  %625 = vmatmul.mubr.bf16.gmra.mrb[0].mxu0 %v273
  %v626 = vpop.f32.mrb[0].mxu0
  %v627 = vadd.f32 0.0, %v626
  %v628 = vpop.f32.mrb[0].mxu0
  %v629 = vpop.f32.mrb[0].mxu0
  %v630 = vadd.f32 0.0, %v629
  %v631 = vpop.f32.mrb[0].mxu0
  %632 = vmatprep.mubr.bf16.mxu0 %v279
  %633 = vmatmul.mubr.bf16.gmra.mrb[0].mxu0 %v278
  %v634 = vpop.f32.mrb[0].mxu0
  %v635 = vadd.f32 0.0, %v634
  %v636 = vpop.f32.mrb[0].mxu0
  %v637 = vpop.f32.mrb[0].mxu0
  %v638 = vadd.f32 0.0, %v637
  %v639 = vpop.f32.mrb[0].mxu0
  %640 = vmatprep.mubr.bf16.mxu0 %v284
  %641 = vmatmul.mubr.bf16.gmra.mrb[0].mxu0 %v283
  %v642 = vpop.f32.mrb[0].mxu0
  %v643 = vadd.f32 0.0, %v642
  %v644 = vpop.f32.mrb[0].mxu0
  %v645 = vpop.f32.mrb[0].mxu0
  %v646 = vadd.f32 0.0, %v645
  %v647 = vpop.f32.mrb[0].mxu0
  %648 = vmatprep.mubr.bf16.mxu0 %v289
  %649 = vmatmul.mubr.bf16.gmra.mrb[0].mxu0 %v288
  %v650 = vpop.f32.mrb[0].mxu0
  %v651 = vadd.f32 0.0, %v650
  %v652 = vpop.f32.mrb[0].mxu0
  %v653 = vpop.f32.mrb[0].mxu0
  %v654 = vadd.f32 0.0, %v653
  %v655 = vpop.f32.mrb[0].mxu0
  %656 = vmatprep.mubr.bf16.mxu0 %v294
  %657 = vmatmul.mubr.bf16.gmra.mrb[0].mxu0 %v293
  %v658 = vpop.f32.mrb[0].mxu0
  %v659 = vadd.f32 0.0, %v658
  %v660 = vpop.f32.mrb[0].mxu0
  %v661 = vpop.f32.mrb[0].mxu0
  %v662 = vadd.f32 0.0, %v661
  %v663 = vpop.f32.mrb[0].mxu0
  %664 = vmatprep.mubr.bf16.mxu0 %v299
  %665 = vmatmul.mubr.bf16.gmra.mrb[0].mxu0 %v298
  %v666 = vpop.f32.mrb[0].mxu0
  %v667 = vadd.f32 0.0, %v666
  %v668 = vpop.f32.mrb[0].mxu0
  %v669 = vpop.f32.mrb[0].mxu0
  %v670 = vadd.f32 0.0, %v669
  %v671 = vpop.f32.mrb[0].mxu0
  %672 = vdwg.mxu0
  %673 = vmatprep.subr.bf16.mxu0 0
  %674 = vmatpush1.bf16.msra.mxu0 %v495
  %675 = vmatprep.subr.bf16.mxu0 0
  %676 = vmatpush1.bf16.msra.mxu0 %v496
  %677 = vmatprep.subr.bf16.mxu0 0
  %678 = vmatpush1.bf16.msra.mxu0 %v497
  %679 = vmatprep.subr.bf16.mxu0 0
  %680 = vmatpush1.bf16.msra.mxu0 %v498
  %681 = vmatprep.subr.bf16.mxu0 0
  %682 = vmatpush1.bf16.msra.mxu0 %v499
  %683 = vmatprep.subr.bf16.mxu0 0
  %684 = vmatpush1.bf16.msra.mxu0 %v500
  %685 = vmatprep.subr.bf16.mxu0 0
  %686 = vmatpush1.bf16.msra.mxu0 %v501
  %687 = vmatprep.subr.bf16.mxu0 0
  %688 = vmatpush1.bf16.msra.mxu0 %v502
  %689 = vmatprep.subr.bf16.mxu0 0
  %690 = vmatpush1.bf16.msra.mxu0 %v503
  %691 = vmatprep.subr.bf16.mxu0 0
  %692 = vmatpush1.bf16.msra.mxu0 %v504
  %693 = vmatprep.subr.bf16.mxu0 0
  %694 = vmatpush1.bf16.msra.mxu0 %v505
  %695 = vmatprep.subr.bf16.mxu0 0
  %696 = vmatpush1.bf16.msra.mxu0 %v506
  %697 = vmatprep.subr.bf16.mxu0 0
  %698 = vmatpush1.bf16.msra.mxu0 %v507
  %699 = vmatprep.subr.bf16.mxu0 0
  %700 = vmatpush1.bf16.msra.mxu0 %v508
  %701 = vmatprep.subr.bf16.mxu0 0
  %702 = vmatpush1.bf16.msra.mxu0 %v509
  %703 = vmatprep.subr.bf16.mxu0 0
  %704 = vmatpush1.bf16.msra.mxu0 %v510
  %705 = vmatprep.mubr.bf16.mxu0 %v266
  %706 = vmatmul.mubr.bf16.gmra.mrb[0].mxu0 %v265
  %v707 = vpop.f32.mrb[0].mxu0
  %v708 = vadd.f32 %v611, %v707
  %v709 = vpop.f32.mrb[0].mxu0
  %v710 = vpop.f32.mrb[0].mxu0
  %v711 = vadd.f32 %v614, %v710
  %v712 = vpop.f32.mrb[0].mxu0
  %713 = vmatprep.mubr.bf16.mxu0 %v271
  %714 = vmatmul.mubr.bf16.gmra.mrb[0].mxu0 %v270
  %v715 = vpop.f32.mrb[0].mxu0
  %v716 = vadd.f32 %v619, %v715
  %v717 = vpop.f32.mrb[0].mxu0
  %v718 = vpop.f32.mrb[0].mxu0
  %v719 = vadd.f32 %v622, %v718
  %v720 = vpop.f32.mrb[0].mxu0
  %721 = vmatprep.mubr.bf16.mxu0 %v276
  %722 = vmatmul.mubr.bf16.gmra.mrb[0].mxu0 %v275
  %v723 = vpop.f32.mrb[0].mxu0
  %v724 = vadd.f32 %v627, %v723
  %v725 = vpop.f32.mrb[0].mxu0
  %v726 = vpop.f32.mrb[0].mxu0
  %v727 = vadd.f32 %v630, %v726
  %v728 = vpop.f32.mrb[0].mxu0
  %729 = vmatprep.mubr.bf16.mxu0 %v281
  %730 = vmatmul.mubr.bf16.gmra.mrb[0].mxu0 %v280
  %v731 = vpop.f32.mrb[0].mxu0
  %v732 = vadd.f32 %v635, %v731
  %v733 = vpop.f32.mrb[0].mxu0
  %v734 = vpop.f32.mrb[0].mxu0
  %v735 = vadd.f32 %v638, %v734
  %v736 = vpop.f32.mrb[0].mxu0
  %737 = vmatprep.mubr.bf16.mxu0 %v286
  %738 = vmatmul.mubr.bf16.gmra.mrb[0].mxu0 %v285
  %v739 = vpop.f32.mrb[0].mxu0
  %v740 = vadd.f32 %v643, %v739
  %v741 = vpop.f32.mrb[0].mxu0
  %v742 = vpop.f32.mrb[0].mxu0
  %v743 = vadd.f32 %v646, %v742
  %v744 = vpop.f32.mrb[0].mxu0
  %745 = vmatprep.mubr.bf16.mxu0 %v291
  %746 = vmatmul.mubr.bf16.gmra.mrb[0].mxu0 %v290
  %v747 = vpop.f32.mrb[0].mxu0
  %v748 = vadd.f32 %v651, %v747
  %v749 = vpop.f32.mrb[0].mxu0
  %v750 = vpop.f32.mrb[0].mxu0
  %v751 = vadd.f32 %v654, %v750
  %v752 = vpop.f32.mrb[0].mxu0
  %753 = vmatprep.mubr.bf16.mxu0 %v296
  %754 = vmatmul.mubr.bf16.gmra.mrb[0].mxu0 %v295
  %v755 = vpop.f32.mrb[0].mxu0
  %v756 = vadd.f32 %v659, %v755
  %v757 = vpop.f32.mrb[0].mxu0
  %v758 = vpop.f32.mrb[0].mxu0
  %v759 = vadd.f32 %v662, %v758
  %v760 = vpop.f32.mrb[0].mxu0
  %761 = vmatprep.mubr.bf16.mxu0 %v301
  %762 = vmatmul.mubr.bf16.gmra.mrb[0].mxu0 %v300
  %v763 = vpop.f32.mrb[0].mxu0
  %v764 = vadd.f32 %v667, %v763
  %v765 = vpop.f32.mrb[0].mxu0
  %v766 = vpop.f32.mrb[0].mxu0
  %v767 = vadd.f32 %v670, %v766
  %v768 = vpop.f32.mrb[0].mxu0
  %769 = vdwg.mxu0
  %770 = vmatprep.subr.bf16.mxu0 0
  %771 = vmatpush1.bf16.msra.mxu0 %v511
  %772 = vmatprep.subr.bf16.mxu0 0
  %773 = vmatpush1.bf16.msra.mxu0 %v512
  %774 = vmatprep.subr.bf16.mxu0 0
  %775 = vmatpush1.bf16.msra.mxu0 %v513
  %776 = vmatprep.subr.bf16.mxu0 0
  %777 = vmatpush1.bf16.msra.mxu0 %v514
  %778 = vmatprep.subr.bf16.mxu0 0
  %779 = vmatpush1.bf16.msra.mxu0 0
  %780 = vmatprep.subr.bf16.mxu0 0
  %781 = vmatpush1.bf16.msra.mxu0 0
  %782 = vmatprep.subr.bf16.mxu0 0
  %783 = vmatpush1.bf16.msra.mxu0 0
  %784 = vmatprep.subr.bf16.mxu0 0
  %785 = vmatpush1.bf16.msra.mxu0 0
  %786 = vmatprep.subr.bf16.mxu0 0
  %787 = vmatpush1.bf16.msra.mxu0 0
  %788 = vmatprep.subr.bf16.mxu0 0
  %789 = vmatpush1.bf16.msra.mxu0 0
  %790 = vmatprep.subr.bf16.mxu0 0
  %791 = vmatpush1.bf16.msra.mxu0 0
  %792 = vmatprep.subr.bf16.mxu0 0
  %793 = vmatpush1.bf16.msra.mxu0 0
  %794 = vmatprep.subr.bf16.mxu0 0
  %795 = vmatpush1.bf16.msra.mxu0 0
  %796 = vmatprep.subr.bf16.mxu0 0
  %797 = vmatpush1.bf16.msra.mxu0 0
  %798 = vmatprep.subr.bf16.mxu0 0
  %799 = vmatpush1.bf16.msra.mxu0 0
  %800 = vmatprep.subr.bf16.mxu0 0
  %801 = vmatpush1.bf16.msra.mxu0 0
  %802 = vmatprep.mubr.bf16.mxu0 0
  %803 = vmatmul.mubr.bf16.gmra.mrb[0].mxu0 %v553
  %v804 = vpop.f32.mrb[0].mxu0
  %v805 = vadd.f32 %v708, %v804
  %v806 = vpop.f32.mrb[0].mxu0
  %v807 = vpop.f32.mrb[0].mxu0
  %v808 = vadd.f32 %v711, %v807
  %v809 = vpop.f32.mrb[0].mxu0
  %810 = vmatprep.mubr.bf16.mxu0 0
  %811 = vmatmul.mubr.bf16.gmra.mrb[0].mxu0 %v556
  %v812 = vpop.f32.mrb[0].mxu0
  %v813 = vadd.f32 %v716, %v812
  %v814 = vpop.f32.mrb[0].mxu0
  %v815 = vpop.f32.mrb[0].mxu0
  %v816 = vadd.f32 %v719, %v815
  %v817 = vpop.f32.mrb[0].mxu0
  %818 = vmatprep.mubr.bf16.mxu0 0
  %819 = vmatmul.mubr.bf16.gmra.mrb[0].mxu0 %v559
  %v820 = vpop.f32.mrb[0].mxu0
  %v821 = vadd.f32 %v724, %v820
  %v822 = vpop.f32.mrb[0].mxu0
  %v823 = vpop.f32.mrb[0].mxu0
  %v824 = vadd.f32 %v727, %v823
  %v825 = vpop.f32.mrb[0].mxu0
  %826 = vmatprep.mubr.bf16.mxu0 0
  %827 = vmatmul.mubr.bf16.gmra.mrb[0].mxu0 %v562
  %v828 = vpop.f32.mrb[0].mxu0
  %v829 = vadd.f32 %v732, %v828
  %v830 = vpop.f32.mrb[0].mxu0
  %v831 = vpop.f32.mrb[0].mxu0
  %v832 = vadd.f32 %v735, %v831
  %v833 = vpop.f32.mrb[0].mxu0
  %834 = vmatprep.mubr.bf16.mxu0 0
  %835 = vmatmul.mubr.bf16.gmra.mrb[0].mxu0 %v565
  %v836 = vpop.f32.mrb[0].mxu0
  %v837 = vadd.f32 %v740, %v836
  %v838 = vpop.f32.mrb[0].mxu0
  %v839 = vpop.f32.mrb[0].mxu0
  %v840 = vadd.f32 %v743, %v839
  %v841 = vpop.f32.mrb[0].mxu0
  %842 = vmatprep.mubr.bf16.mxu0 0
  %843 = vmatmul.mubr.bf16.gmra.mrb[0].mxu0 %v568
  %v844 = vpop.f32.mrb[0].mxu0
  %v845 = vadd.f32 %v748, %v844
  %v846 = vpop.f32.mrb[0].mxu0
  %v847 = vpop.f32.mrb[0].mxu0
  %v848 = vadd.f32 %v751, %v847
  %v849 = vpop.f32.mrb[0].mxu0
  %850 = vmatprep.mubr.bf16.mxu0 0
  %851 = vmatmul.mubr.bf16.gmra.mrb[0].mxu0 %v571
  %v852 = vpop.f32.mrb[0].mxu0
  %v853 = vadd.f32 %v756, %v852
  %v854 = vpop.f32.mrb[0].mxu0
  %v855 = vpop.f32.mrb[0].mxu0
  %v856 = vadd.f32 %v759, %v855
  %v857 = vpop.f32.mrb[0].mxu0
  %858 = vmatprep.mubr.bf16.mxu0 0
  %859 = vmatmul.mubr.bf16.gmra.mrb[0].mxu0 %v574
  %v860 = vpop.f32.mrb[0].mxu0
  %v861 = vadd.f32 %v764, %v860
  %v862 = vpop.f32.mrb[0].mxu0
  %v863 = vpop.f32.mrb[0].mxu0
  %v864 = vadd.f32 %v767, %v863
  %v865 = vpop.f32.mrb[0].mxu0
  %866 = vdwg.mxu0
  %v867 = vmax.f32 %v805, 0.0
  %v868 = vmax.f32 %v808, 0.0
  %v869 = vmax.f32 %v813, 0.0
  %v870 = vmax.f32 %v816, 0.0
  %v871 = vmax.f32 %v821, 0.0
  %v872 = vmax.f32 %v824, 0.0
  %v873 = vmax.f32 %v829, 0.0
  %v874 = vmax.f32 %v832, 0.0
  %v875 = vmax.f32 %v837, 0.0
  %v876 = vmax.f32 %v840, 0.0
  %v877 = vmax.f32 %v845, 0.0
  %v878 = vmax.f32 %v848, 0.0
  %v879 = vmax.f32 %v853, 0.0
  %v880 = vmax.f32 %v856, 0.0
  %v881 = vmax.f32 %v861, 0.0
  %v882 = vmax.f32 %v864, 0.0
  %v883 = vpack.c.bf16 %v868, %v867
  %v884 = vpack.c.bf16 %v870, %v869
  %v885 = vpack.c.bf16 %v872, %v871
  %v886 = vpack.c.bf16 %v874, %v873
  %v887 = vpack.c.bf16 %v876, %v875
  %v888 = vpack.c.bf16 %v878, %v877
  %v889 = vpack.c.bf16 %v880, %v879
  %v890 = vpack.c.bf16 %v882, %v881
  %v891 = vld [vmem:[%s1] sm:$0xf]
  %v892 = vld [vmem:[%s1 + $0x4] sm:$0x1]
  %v895 = vunpack.c.l.b16 %v891
  %v896 = vunpack.c.l.b16 %v892
  %v897 = vpack.c.b16 %v896, %v895
  %899 = vmatprep.subr.bf16.mxu0 0
  %900 = vmatpush1.bf16.msra.mxu0 %v883
  %901 = vmatprep.subr.bf16.mxu0 0
  %902 = vmatpush1.bf16.msra.mxu0 %v884
  %903 = vmatprep.subr.bf16.mxu0 0
  %904 = vmatpush1.bf16.msra.mxu0 %v885
  %905 = vmatprep.subr.bf16.mxu0 0
  %906 = vmatpush1.bf16.msra.mxu0 %v886
  %907 = vmatprep.subr.bf16.mxu0 0
  %908 = vmatpush1.bf16.msra.mxu0 %v887
  %909 = vmatprep.subr.bf16.mxu0 0
  %910 = vmatpush1.bf16.msra.mxu0 %v888
  %911 = vmatprep.subr.bf16.mxu0 0
  %912 = vmatpush1.bf16.msra.mxu0 %v889
  %913 = vmatprep.subr.bf16.mxu0 0
  %914 = vmatpush1.bf16.msra.mxu0 %v890
  %915 = vmatprep.subr.bf16.mxu0 0
  %916 = vmatpush1.bf16.msra.mxu0 0
  %917 = vmatprep.subr.bf16.mxu0 0
  %918 = vmatpush1.bf16.msra.mxu0 0
  %919 = vmatprep.subr.bf16.mxu0 0
  %920 = vmatpush1.bf16.msra.mxu0 0
  %921 = vmatprep.subr.bf16.mxu0 0
  %922 = vmatpush1.bf16.msra.mxu0 0
  %923 = vmatprep.subr.bf16.mxu0 0
  %924 = vmatpush1.bf16.msra.mxu0 0
  %925 = vmatprep.subr.bf16.mxu0 0
  %926 = vmatpush1.bf16.msra.mxu0 0
  %927 = vmatprep.subr.bf16.mxu0 0
  %928 = vmatpush1.bf16.msra.mxu0 0
  %929 = vmatprep.subr.bf16.mxu0 0
  %930 = vmatpush1.bf16.msra.mxu0 0
  %931 = vmatprep.mubr.bf16.mxu0 0
  %932 = vmatmul.mubr.bf16.gmra.mrb[0].mxu0 %v897
  %v933 = vpop.f32.mrb[0].mxu0
  %v934 = vadd.f32 0.0, %v933
  %v935 = vpop.f32.mrb[0].mxu0
  %v936 = vpop.f32.mrb[0].mxu0
  %v937 = vadd.f32 0.0, %v936
  %v938 = vpop.f32.mrb[0].mxu0
  %939 = vdwg.mxu0
  %v940 = vmax.f32 %v934, 0.0
  %v941 = vmax.f32 %v937, 0.0
  %v942 = vpack.c.bf16 %v941, %v940
  %v944 = vunpack.c.l.b16 %v942
  %v945 = vunpack.c.h.b16 %v942
  %v946 = vpack.c.b16 %v944, %v944
  %v947 = vpack.c.b16 %v945, %v945
  %950 = vst [vmem:[%s3] sm:$0xf] %v946
  %951 = vst [vmem:[%s3 + $0x4] sm:$0x1] %v947
  // Predicated region
  $region14: #{_lambda_.12} parent=0 // pred_check
    _
  $region15: #{_lambda_.12} parent=0 // pred_check_branch
    %953 = sbr.rel (0) target = $region17
  $region16: #{_lambda_.12} parent=0 // pred_region
    _
  $region17: #{_lambda_.12} parent=0 // pred_fallthru
    _
  // Predicated region
  $region18: #{_lambda_.12} parent=0 // pred_check
    _
  $region19: #{_lambda_.12} parent=0 // pred_check_branch
    %955 = sbr.rel (0) target = $region21
  $region20: #{_lambda_.12} parent=0 // pred_region
    _
  $region21: #{_lambda_.12} parent=0 // pred_fallthru
    _

// kernel: _lambda_.13
$region0: #{_lambda_.13}
  #allocation0 [shape = 'u32[]', space=smem, size = 0x4, offset = 0x4, fixed_abs, tag = 'smem constant byte address 0x4 - core index']
  #allocation1 [shape = 'u32[144,128]{1,0:T(1,128)}', space=vmem, size = 0x12000, scoped, tag = 'internal scratch']
  %s0 = inlined_call_operand.vmem [shape: bf16[8,490], index: 0, kind: input, shape index: {}]
  %s1 = inlined_call_operand.vmem [shape: bf16[490,10], index: 1, kind: input, shape index: {}]
  %s2 = inlined_call_operand.vmem [shape: f32[8,10], index: 2, kind: output, shape index: {}]
  %s3 = sld [smem:[#allocation0]]
  $region18: #{_lambda_.13} parent=0
    _
  %s5 = ssub.s32 1, %s3
  %s6 = scalar_select 0, %s5, %s3
  // Predicated region
  $region2: #{_lambda_.13} parent=0 // pred_check
    _
  $region3: #{_lambda_.13} parent=0 // pred_check_branch
    %8 = sbr.rel (0) target = $region5
  $region4: #{_lambda_.13} parent=0 // pred_region
    _
  $region5: #{_lambda_.13} parent=0 // pred_fallthru
    _
  // Predicated region
  $region6: #{_lambda_.13} parent=0 // pred_check
    _
  $region7: #{_lambda_.13} parent=0 // pred_check_branch
    %10 = sbr.rel (0) target = $region9
  $region8: #{_lambda_.13} parent=0 // pred_region
    _
  $region9: #{_lambda_.13} parent=0 // pred_fallthru
    _
  %v12 = vld [vmem:[%s0] sm:$0xff]
  %v13 = vld [vmem:[%s0 + $0x8] sm:$0xff]
  %v14 = vld [vmem:[%s1] sm:$0xf]
  %v15 = vld [vmem:[%s1 + $0x4] sm:$0xf]
  %v16 = vld [vmem:[%s1 + $0x8] sm:$0xf]
  %v17 = vld [vmem:[%s1 + $0xc] sm:$0xf]
  %v18 = vld [vmem:[%s1 + $0x10] sm:$0xf]
  %v19 = vld [vmem:[%s1 + $0x14] sm:$0xf]
  %v20 = vld [vmem:[%s1 + $0x18] sm:$0xf]
  %v21 = vld [vmem:[%s1 + $0x1c] sm:$0xf]
  %v22 = vld [vmem:[%s1 + $0x20] sm:$0xf]
  %v23 = vld [vmem:[%s1 + $0x24] sm:$0xf]
  %v24 = vld [vmem:[%s1 + $0x28] sm:$0xf]
  %v25 = vld [vmem:[%s1 + $0x2c] sm:$0xf]
  %v26 = vld [vmem:[%s1 + $0x30] sm:$0xf]
  %v27 = vld [vmem:[%s1 + $0x34] sm:$0xf]
  %v28 = vld [vmem:[%s1 + $0x38] sm:$0xf]
  %v29 = vld [vmem:[%s1 + $0x3c] sm:$0xf]
  %v30 = vld [vmem:[%s1 + $0x40] sm:$0xf]
  %v31 = vld [vmem:[%s1 + $0x44] sm:$0xf]
  %v32 = vld [vmem:[%s1 + $0x48] sm:$0xf]
  %v33 = vld [vmem:[%s1 + $0x4c] sm:$0xf]
  %v34 = vld [vmem:[%s1 + $0x50] sm:$0xf]
  %v35 = vld [vmem:[%s1 + $0x54] sm:$0xf]
  %v36 = vld [vmem:[%s1 + $0x58] sm:$0xf]
  %v37 = vld [vmem:[%s1 + $0x5c] sm:$0xf]
  %v38 = vld [vmem:[%s1 + $0x60] sm:$0xf]
  %v39 = vld [vmem:[%s1 + $0x64] sm:$0xf]
  %v40 = vld [vmem:[%s1 + $0x68] sm:$0xf]
  %v41 = vld [vmem:[%s1 + $0x6c] sm:$0xf]
  %v42 = vld [vmem:[%s1 + $0x70] sm:$0xf]
  %v43 = vld [vmem:[%s1 + $0x74] sm:$0xf]
  %v44 = vld [vmem:[%s1 + $0x78] sm:$0xf]
  %v45 = vld [vmem:[%s1 + $0x7c] sm:$0xf]
  %v46 = vld [vmem:[%s1 + $0x80] sm:$0xf]
  %v47 = vld [vmem:[%s1 + $0x84] sm:$0xf]
  %v48 = vld [vmem:[%s1 + $0x88] sm:$0xf]
  %v49 = vld [vmem:[%s1 + $0x8c] sm:$0xf]
  %v50 = vld [vmem:[%s1 + $0x90] sm:$0xf]
  %v51 = vld [vmem:[%s1 + $0x94] sm:$0xf]
  %v52 = vld [vmem:[%s1 + $0x98] sm:$0xf]
  %v53 = vld [vmem:[%s1 + $0x9c] sm:$0xf]
  %v54 = vld [vmem:[%s1 + $0xa0] sm:$0xf]
  %v55 = vld [vmem:[%s1 + $0xa4] sm:$0xf]
  %v56 = vld [vmem:[%s1 + $0xa8] sm:$0xf]
  %v57 = vld [vmem:[%s1 + $0xac] sm:$0xf]
  %v58 = vld [vmem:[%s1 + $0xb0] sm:$0xf]
  %v59 = vld [vmem:[%s1 + $0xb4] sm:$0xf]
  %v60 = vld [vmem:[%s1 + $0xb8] sm:$0xf]
  %v61 = vld [vmem:[%s1 + $0xbc] sm:$0xf]
  %v62 = vld [vmem:[%s1 + $0xc0] sm:$0xf]
  %v63 = vld [vmem:[%s1 + $0xc4] sm:$0xf]
  %v64 = vld [vmem:[%s1 + $0xc8] sm:$0xf]
  %v65 = vld [vmem:[%s1 + $0xcc] sm:$0xf]
  %v66 = vld [vmem:[%s1 + $0xd0] sm:$0xf]
  %v67 = vld [vmem:[%s1 + $0xd4] sm:$0xf]
  %v68 = vld [vmem:[%s1 + $0xd8] sm:$0xf]
  %v69 = vld [vmem:[%s1 + $0xdc] sm:$0xf]
  %v70 = vld [vmem:[%s1 + $0xe0] sm:$0xf]
  %v71 = vld [vmem:[%s1 + $0xe4] sm:$0xf]
  %v72 = vld [vmem:[%s1 + $0xe8] sm:$0xf]
  %v73 = vld [vmem:[%s1 + $0xec] sm:$0xf]
  %v74 = vld [vmem:[%s1 + $0xf0] sm:$0xf]
  %v75 = vld [vmem:[%s1 + $0xf4] sm:$0x1]
  %v78 = vunpack.c.l.b16 %v12
  %v79 = vunpack.c.h.b16 %v12
  %v80 = vunpack.c.l.b16 %v13
  %v81 = vunpack.c.h.b16 %v13
  %v82 = vpack.c.b16 %v78, %v78
  %v83 = vpack.c.b16 %v79, %v79
  %v84 = vpack.c.b16 %v80, %v80
  %v85 = vpack.c.b16 %v81, %v81
  %v151 = vunpack.c.l.b16 %v14
  %v152 = vunpack.c.l.b16 %v15
  %v153 = vunpack.c.l.b16 %v16
  %v154 = vunpack.c.l.b16 %v17
  %v155 = vunpack.c.l.b16 %v18
  %v156 = vunpack.c.l.b16 %v19
  %v157 = vunpack.c.l.b16 %v20
  %v158 = vunpack.c.l.b16 %v21
  %v159 = vunpack.c.l.b16 %v22
  %v160 = vunpack.c.l.b16 %v23
  %v161 = vunpack.c.l.b16 %v24
  %v162 = vunpack.c.l.b16 %v25
  %v163 = vunpack.c.l.b16 %v26
  %v164 = vunpack.c.l.b16 %v27
  %v165 = vunpack.c.l.b16 %v28
  %v166 = vunpack.c.l.b16 %v29
  %v167 = vunpack.c.l.b16 %v30
  %v168 = vunpack.c.l.b16 %v31
  %v169 = vunpack.c.l.b16 %v32
  %v170 = vunpack.c.l.b16 %v33
  %v171 = vunpack.c.l.b16 %v34
  %v172 = vunpack.c.l.b16 %v35
  %v173 = vunpack.c.l.b16 %v36
  %v174 = vunpack.c.l.b16 %v37
  %v175 = vunpack.c.l.b16 %v38
  %v176 = vunpack.c.l.b16 %v39
  %v177 = vunpack.c.l.b16 %v40
  %v178 = vunpack.c.l.b16 %v41
  %v179 = vunpack.c.l.b16 %v42
  %v180 = vunpack.c.l.b16 %v43
  %v181 = vunpack.c.l.b16 %v44
  %v182 = vunpack.c.l.b16 %v45
  %v183 = vunpack.c.l.b16 %v46
  %v184 = vunpack.c.l.b16 %v47
  %v185 = vunpack.c.l.b16 %v48
  %v186 = vunpack.c.l.b16 %v49
  %v187 = vunpack.c.l.b16 %v50
  %v188 = vunpack.c.l.b16 %v51
  %v189 = vunpack.c.l.b16 %v52
  %v190 = vunpack.c.l.b16 %v53
  %v191 = vunpack.c.l.b16 %v54
  %v192 = vunpack.c.l.b16 %v55
  %v193 = vunpack.c.l.b16 %v56
  %v194 = vunpack.c.l.b16 %v57
  %v195 = vunpack.c.l.b16 %v58
  %v196 = vunpack.c.l.b16 %v59
  %v197 = vunpack.c.l.b16 %v60
  %v198 = vunpack.c.l.b16 %v61
  %v199 = vunpack.c.l.b16 %v62
  %v200 = vunpack.c.l.b16 %v63
  %v201 = vunpack.c.l.b16 %v64
  %v202 = vunpack.c.l.b16 %v65
  %v203 = vunpack.c.l.b16 %v66
  %v204 = vunpack.c.l.b16 %v67
  %v205 = vunpack.c.l.b16 %v68
  %v206 = vunpack.c.l.b16 %v69
  %v207 = vunpack.c.l.b16 %v70
  %v208 = vunpack.c.l.b16 %v71
  %v209 = vunpack.c.l.b16 %v72
  %v210 = vunpack.c.l.b16 %v73
  %v211 = vunpack.c.l.b16 %v74
  %v212 = vunpack.c.l.b16 %v75
  %v213 = vpack.c.b16 %v152, %v151
  %v214 = vpack.c.b16 %v154, %v153
  %v215 = vpack.c.b16 %v156, %v155
  %v216 = vpack.c.b16 %v158, %v157
  %v217 = vpack.c.b16 %v160, %v159
  %v218 = vpack.c.b16 %v162, %v161
  %v219 = vpack.c.b16 %v164, %v163
  %v220 = vpack.c.b16 %v166, %v165
  %v221 = vpack.c.b16 %v168, %v167
  %v222 = vpack.c.b16 %v170, %v169
  %v223 = vpack.c.b16 %v172, %v171
  %v224 = vpack.c.b16 %v174, %v173
  %v225 = vpack.c.b16 %v176, %v175
  %v226 = vpack.c.b16 %v178, %v177
  %v227 = vpack.c.b16 %v180, %v179
  %v228 = vpack.c.b16 %v182, %v181
  %v229 = vpack.c.b16 %v184, %v183
  %v230 = vpack.c.b16 %v186, %v185
  %v231 = vpack.c.b16 %v188, %v187
  %v232 = vpack.c.b16 %v190, %v189
  %v233 = vpack.c.b16 %v192, %v191
  %v234 = vpack.c.b16 %v194, %v193
  %v235 = vpack.c.b16 %v196, %v195
  %v236 = vpack.c.b16 %v198, %v197
  %v237 = vpack.c.b16 %v200, %v199
  %v238 = vpack.c.b16 %v202, %v201
  %v239 = vpack.c.b16 %v204, %v203
  %v240 = vpack.c.b16 %v206, %v205
  %v241 = vpack.c.b16 %v208, %v207
  %v242 = vpack.c.b16 %v210, %v209
  %v243 = vpack.c.b16 %v212, %v211
  %vm274 = vcmask 867328
  %v276 = vsel %vm274, %v85, 0
  %vm278 = vcmask 1044480
  %v280 = vsel %vm278, %v243, 0
  %282 = vmatprep.subr.bf16.mxu0 0
  %283 = vmatpush1.bf16.msra.mxu0 %v213
  %284 = vmatprep.subr.bf16.mxu0 0
  %285 = vmatpush1.bf16.msra.mxu0 %v214
  %286 = vmatprep.subr.bf16.mxu0 0
  %287 = vmatpush1.bf16.msra.mxu0 %v215
  %288 = vmatprep.subr.bf16.mxu0 0
  %289 = vmatpush1.bf16.msra.mxu0 %v216
  %290 = vmatprep.subr.bf16.mxu0 0
  %291 = vmatpush1.bf16.msra.mxu0 %v217
  %292 = vmatprep.subr.bf16.mxu0 0
  %293 = vmatpush1.bf16.msra.mxu0 %v218
  %294 = vmatprep.subr.bf16.mxu0 0
  %295 = vmatpush1.bf16.msra.mxu0 %v219
  %296 = vmatprep.subr.bf16.mxu0 0
  %297 = vmatpush1.bf16.msra.mxu0 %v220
  %298 = vmatprep.subr.bf16.mxu0 0
  %299 = vmatpush1.bf16.msra.mxu0 %v221
  %300 = vmatprep.subr.bf16.mxu0 0
  %301 = vmatpush1.bf16.msra.mxu0 %v222
  %302 = vmatprep.subr.bf16.mxu0 0
  %303 = vmatpush1.bf16.msra.mxu0 %v223
  %304 = vmatprep.subr.bf16.mxu0 0
  %305 = vmatpush1.bf16.msra.mxu0 %v224
  %306 = vmatprep.subr.bf16.mxu0 0
  %307 = vmatpush1.bf16.msra.mxu0 %v225
  %308 = vmatprep.subr.bf16.mxu0 0
  %309 = vmatpush1.bf16.msra.mxu0 %v226
  %310 = vmatprep.subr.bf16.mxu0 0
  %311 = vmatpush1.bf16.msra.mxu0 %v227
  %312 = vmatprep.subr.bf16.mxu0 0
  %313 = vmatpush1.bf16.msra.mxu0 %v228
  %314 = vmatprep.mubr.bf16.mxu0 %v83
  %315 = vmatmul.mubr.bf16.gmra.mrb[0].mxu0 %v82
  %v316 = vpop.f32.mrb[0].mxu0
  %v317 = vadd.f32 0.0, %v316
  %v318 = vpop.f32.mrb[0].mxu0
  %v319 = vpop.f32.mrb[0].mxu0
  %v320 = vpop.f32.mrb[0].mxu0
  %321 = vdwg.mxu0
  %322 = vmatprep.subr.bf16.mxu0 0
  %323 = vmatpush1.bf16.msra.mxu0 %v229
  %324 = vmatprep.subr.bf16.mxu0 0
  %325 = vmatpush1.bf16.msra.mxu0 %v230
  %326 = vmatprep.subr.bf16.mxu0 0
  %327 = vmatpush1.bf16.msra.mxu0 %v231
  %328 = vmatprep.subr.bf16.mxu0 0
  %329 = vmatpush1.bf16.msra.mxu0 %v232
  %330 = vmatprep.subr.bf16.mxu0 0
  %331 = vmatpush1.bf16.msra.mxu0 %v233
  %332 = vmatprep.subr.bf16.mxu0 0
  %333 = vmatpush1.bf16.msra.mxu0 %v234
  %334 = vmatprep.subr.bf16.mxu0 0
  %335 = vmatpush1.bf16.msra.mxu0 %v235
  %336 = vmatprep.subr.bf16.mxu0 0
  %337 = vmatpush1.bf16.msra.mxu0 %v236
  %338 = vmatprep.subr.bf16.mxu0 0
  %339 = vmatpush1.bf16.msra.mxu0 %v237
  %340 = vmatprep.subr.bf16.mxu0 0
  %341 = vmatpush1.bf16.msra.mxu0 %v238
  %342 = vmatprep.subr.bf16.mxu0 0
  %343 = vmatpush1.bf16.msra.mxu0 %v239
  %344 = vmatprep.subr.bf16.mxu0 0
  %345 = vmatpush1.bf16.msra.mxu0 %v240
  %346 = vmatprep.subr.bf16.mxu0 0
  %347 = vmatpush1.bf16.msra.mxu0 %v241
  %348 = vmatprep.subr.bf16.mxu0 0
  %349 = vmatpush1.bf16.msra.mxu0 %v242
  %350 = vmatprep.subr.bf16.mxu0 0
  %351 = vmatpush1.bf16.msra.mxu0 %v280
  %352 = vmatprep.subr.bf16.mxu0 0
  %353 = vmatpush1.bf16.msra.mxu0 0
  %354 = vmatprep.mubr.bf16.mxu0 %v276
  %355 = vmatmul.mubr.bf16.gmra.mrb[0].mxu0 %v84
  %v356 = vpop.f32.mrb[0].mxu0
  %v357 = vadd.f32 %v317, %v356
  %v358 = vpop.f32.mrb[0].mxu0
  %v359 = vpop.f32.mrb[0].mxu0
  %v360 = vpop.f32.mrb[0].mxu0
  %361 = vdwg.mxu0
  %vm362 = vcmask 80896
  %v363 = vsel %vm362, %v357, -inf
  %364 = vmax.xlane.f32.xlu0 %v363
  %v365 = vpop.xlane.xlu0 %364
  %v366 = vsub.f32 %v357, %v365
  %v367 = vmul.f32 %v366, 1.442695
  %v368 = vpow.pop %v367
  %v369 = vsel %vm362, %v368, 0.0
  %370 = vadd.xlane.f32.xlu0 %v369
  %v371 = vpop.xlane.xlu0 %370
  %v372 = vlog2.pop %v371
  %v373 = vmul.f32 %v372, 0.6931472
  %v374 = vsub.f32 %v366, %v373
  %375 = vst.msk [vmem:[%s2] sm:$0xff] %vm362, %v374
  // Predicated region
  $region10: #{_lambda_.13} parent=0 // pred_check
    _
  $region11: #{_lambda_.13} parent=0 // pred_check_branch
    %377 = sbr.rel (0) target = $region13
  $region12: #{_lambda_.13} parent=0 // pred_region
    _
  $region13: #{_lambda_.13} parent=0 // pred_fallthru
    _
  // Predicated region
  $region14: #{_lambda_.13} parent=0 // pred_check
    _
  $region15: #{_lambda_.13} parent=0 // pred_check_branch
    %379 = sbr.rel (0) target = $region17
  $region16: #{_lambda_.13} parent=0 // pred_region
    _
  $region17: #{_lambda_.13} parent=0 // pred_fallthru
    _

</llo_original>
